<compile_context>
chip_gen: v7x
topology: tpu7x:2x2x1
jax: 0.10.0
libtpu: 0.0.40
codegen_flags: <defaults>
</compile_context>

<pallas_src>
import jax
import jax.numpy as jnp
from jax.experimental import pallas as pl
from jax.experimental.pallas import tpu as pltpu

BF16 = jnp.bfloat16
F32 = jnp.float32


def _pick_images_per_step(batch):
    # For tiny batches keep one image per grid step so the batch axis stays
    # "parallel" (two TensorCores on v7x); otherwise merge up to 8 images.
    if batch <= 2:
        return 1
    for cand in range(min(8, batch), 0, -1):
        if batch % cand == 0:
            return cand
    return 1


def _make_kernel(nb):
    """Kernel processing `nb` images per grid step.

    Layout convention inside the kernel: image height H lives on sublanes,
    (W, channels) live on lanes, so everything is lane-dense.
    """

    def kernel(x_ref, b1c_ref, b1t_ref, b2c_ref, b2t_ref, wl_ref, sel_ref,
               bfp_ref, o_ref, xpad, h1pad):
        # x_ref  : (nb, 32, 32) f32    input images
        # b1c_ref: (102, 1024) bf16    conv1 Toeplitz weights [dy*34+wp, w*32+co]
        # b1t_ref: (1, 1024)   f32     conv1 bias tiled over w
        # b2c_ref: (1536,1024) bf16    conv2 Toeplitz weights [dy*512+wp*32+ci, w*64+co]
        # b2t_ref: (1, 1024)   f32     conv2 bias tiled over w
        # wl_ref : (512, 128)  bf16    linear weights [w2*64+co, n*8+hp]
        # sel_ref: (128, 128)  f32     0/1 class-group selection matrix
        # bfp_ref: (1, 128)    f32     linear bias padded to 128 lanes
        # o_ref  : (nb, 1, 128) f32    logits (lane-dense output block)
        # xpad   : (nb, 34, 34) bf16   SAME-padded input scratch
        # h1pad  : (nb, 18, 512) bf16  H-padded conv2 input scratch
        feats = []
        for i in range(nb):
            # ---- stage 0: SAME padding of the input (dense, W on lanes) ----
            xpad[i, :, :] = jnp.zeros((34, 34), BF16)
            xpad[i, pl.ds(1, 32), pl.ds(1, 32)] = x_ref[i].astype(BF16)

            # ---- stage 1: conv1 (1->32) as ONE banded MXU matmul ----------
            xc1 = jnp.concatenate(
                [xpad[i, pl.ds(dy, 32), :] for dy in range(3)], axis=1)  # (32,102)
            y1 = jnp.dot(xc1, b1c_ref[...],
                         preferred_element_type=F32)                     # (32,1024)
            y1 = jnp.maximum(y1 + b1t_ref[...], 0.0)

            # ---- stage 2: 2x2 max-pool of conv1 ---------------------------
            # H: layout-preserving sublane-pair reshape + max.
            t1 = jnp.max(y1.reshape(16, 2, 1024), axis=1)                # (16,1024)
            # W: lane-block slice/concat (also compacts lanes to w2*32+ci).
            ev1 = jnp.concatenate(
                [t1[:, 64 * w: 64 * w + 32] for w in range(16)], axis=1)
            od1 = jnp.concatenate(
                [t1[:, 64 * w + 32: 64 * w + 64] for w in range(16)], axis=1)
            h1c = jnp.maximum(ev1, od1)                                  # (16,512)

            # ---- stage 3: H-padded conv2 input (zero only halo rows) ------
            h1pad[i, pl.ds(0, 1), :] = jnp.zeros((1, 512), BF16)
            h1pad[i, pl.ds(17, 1), :] = jnp.zeros((1, 512), BF16)
            h1pad[i, pl.ds(1, 16), :] = h1c.astype(BF16)

            # ---- stage 4: conv2 (32->64) as ONE banded MXU matmul ---------
            xc2 = jnp.concatenate(
                [h1pad[i, pl.ds(dy, 16), :] for dy in range(3)], axis=1)  # (16,1536)
            y2 = jnp.dot(xc2, b2c_ref[...],
                         preferred_element_type=F32)                      # (16,1024)
            y2 = jnp.maximum(y2 + b2t_ref[...], 0.0)

            # ---- stage 5: 2x2 max-pool of conv2 ---------------------------
            t2 = jnp.max(y2.reshape(8, 2, 1024), axis=1)                  # (8,1024)
            ev2 = jnp.concatenate(
                [t2[:, 128 * w: 128 * w + 64] for w in range(8)], axis=1)
            od2 = jnp.concatenate(
                [t2[:, 128 * w + 64: 128 * w + 128] for w in range(8)], axis=1)
            feats.append(jnp.maximum(ev2, od2))                           # (8,512)

        # ---- stage 6: Linear(4096 -> 10), one MXU matmul over all images --
        feat = jnp.concatenate(feats, axis=0)                             # (nb*8,512)
        part = jnp.dot(feat.astype(BF16), wl_ref[...],
                       preferred_element_type=F32)                        # (nb*8,128)
        # Keep only columns whose hp (= col % 8) matches the row's hp.
        rows = jax.lax.broadcasted_iota(jnp.int32, (nb * 8, 128), 0)
        cols = jax.lax.broadcasted_iota(jnp.int32, (nb * 8, 128), 1)
        diag = jnp.where((rows % 8) == (cols % 8), part, 0.0)
        per_img = jnp.sum(diag.reshape(nb, 8, 128), axis=1)               # (nb,128)
        # Sum each 8-lane class group via a tiny (exact) f32 matmul.
        logits = jnp.dot(per_img, sel_ref[...],
                         preferred_element_type=F32,
                         precision=jax.lax.Precision.HIGHEST)             # (nb,128)
        logits = logits + bfp_ref[...]
        for i in range(nb):
            o_ref[pl.ds(i, 1), pl.ds(0, 1), :] = logits[i:i + 1, :].reshape(1, 1, 128)

    return kernel


# ----------------------------------------------------------------------------
# Parameter preparation: done once, offline (zero runtime cost per forward).
# ----------------------------------------------------------------------------
def prepare_params(w1, b1, w2, b2, wf, bf):
    # w1: (3,3,1,32) HWIO,  w2: (3,3,32,64) HWIO
    # wf: (4096, 10) rows in PyTorch NCHW-flatten order (c*64 + 8*h + w), bf: (10,)
    # conv1 banded/Toeplitz weights: [dy*34 + wp, w*32 + co]
    B1 = jnp.zeros((3, 34, 32, 32), F32)
    for dx in range(3):
        for w in range(32):
            B1 = B1.at[:, w + dx, w, :].set(w1[:, dx, 0, :])
    b1cat = B1.reshape(102, 1024).astype(BF16)
    b1t = jnp.tile(b1.reshape(1, 32), (1, 32)).astype(F32)          # (1,1024)

    # conv2 banded/Toeplitz weights: [dy*512 + wp*32 + ci, w*64 + co]
    B2 = jnp.zeros((3, 16, 32, 16, 64), F32)
    for dx in range(3):
        for w in range(16):
            wp = w + dx - 1
            if 0 <= wp < 16:
                B2 = B2.at[:, wp, :, w, :].set(w2[:, dx, :, :])
    b2cat = B2.reshape(1536, 1024).astype(BF16)
    b2t = jnp.tile(b2.reshape(1, 64), (1, 16)).astype(F32)          # (1,1024)

    # Linear weights packed as [w2*64 + co, n*8 + hp] (classes padded to 16).
    wf4 = wf.reshape(64, 8, 8, 10)                                   # [co,hp,wp,n]
    wfp = jnp.transpose(wf4, (2, 0, 3, 1))                           # [wp,co,n,hp]
    wfp = jnp.pad(wfp, ((0, 0), (0, 0), (0, 6), (0, 0)))             # n -> 16
    wl = wfp.reshape(512, 128).astype(BF16)

    # 0/1 selection matrix summing each 8-lane class group.
    sel = (jnp.arange(128)[:, None] // 8 ==
           jnp.arange(128)[None, :]).astype(F32)                     # (128,128)
    bfp = jnp.zeros((1, 128), F32).at[0, :10].set(bf)
    return (b1cat, b1t, b2cat, b2t, wl, sel, bfp)


# ----------------------------------------------------------------------------
# Public entry point: accepts NCHW like the PyTorch module.
# ----------------------------------------------------------------------------
def classifier_forward(x_nchw, prep):
    b1cat, b1t, b2cat, b2t, wl, sel, bfp = prep
    batch = x_nchw.shape[0]
    nb = _pick_images_per_step(batch)
    assert batch % nb == 0
    x = x_nchw[:, 0, :, :]                     # (B,32,32): drop the C=1 dim

    out = pl.pallas_call(
        _make_kernel(nb),
        out_shape=jax.ShapeDtypeStruct((batch, 1, 128), F32),
        grid=(batch // nb,),
        in_specs=[
            pl.BlockSpec((nb, 32, 32), lambda i: (i, 0, 0)),
            pl.BlockSpec((102, 1024), lambda i: (0, 0)),
            pl.BlockSpec((1, 1024), lambda i: (0, 0)),
            pl.BlockSpec((1536, 1024), lambda i: (0, 0)),
            pl.BlockSpec((1, 1024), lambda i: (0, 0)),
            pl.BlockSpec((512, 128), lambda i: (0, 0)),
            pl.BlockSpec((128, 128), lambda i: (0, 0)),
            pl.BlockSpec((1, 128), lambda i: (0, 0)),
        ],
        out_specs=pl.BlockSpec((nb, 1, 128), lambda i: (i, 0, 0)),
        scratch_shapes=[
            pltpu.VMEM((nb, 34, 34), BF16),    # SAME-padded input
            pltpu.VMEM((nb, 18, 512), BF16),   # H-padded pooled conv1 output
        ],
        compiler_params=pltpu.CompilerParams(
            dimension_semantics=("parallel",)),   # batch items independent
    )(x, b1cat, b1t, b2cat, b2t, wl, sel, bfp)
    return out[:, 0, :10]


# ----------------------------------------------------------------------------
# Pure-JAX reference (ground truth).
# ----------------------------------------------------------------------------
def reference_forward(x_nchw, params):
    w1, b1, w2, b2, wf, bf = params

    def conv(x, w, b):
        y = jax.lax.conv_general_dilated(
            x, w, window_strides=(1, 1), padding="SAME",
            dimension_numbers=("NCHW", "HWIO", "NCHW"),
            precision=jax.lax.Precision.HIGHEST)
        return y + b[None, :, None, None]

    def pool(x):
        return jax.lax.reduce_window(
            x, -jnp.inf, jax.lax.max, (1, 1, 2, 2), (1, 1, 2, 2), "VALID")

    h = pool(jax.nn.relu(conv(x_nchw, w1, b1)))
    h = pool(jax.nn.relu(conv(h, w2, b2)))
    h = h.reshape(h.shape[0], -1)                  # NCHW flatten, like nn.Flatten
    return jnp.dot(h, wf, precision=jax.lax.Precision.HIGHEST) + bf


if __name__ == "__main__":
    key = jax.random.PRNGKey(0)
    kx, k1, k2, k3, k4, k5, k6 = jax.random.split(key, 7)
    B = 2
    x = jax.random.normal(kx, (B, 1, 32, 32), jnp.float32)   # NCHW, like PyTorch

    # Synthetic parameters with the module's shapes (HWIO / (in, out)).
    w1 = 0.10 * jax.random.normal(k1, (3, 3, 1, 32), jnp.float32)
    b1 = 0.10 * jax.random.normal(k2, (32,), jnp.float32)
    w2 = 0.05 * jax.random.normal(k3, (3, 3, 32, 64), jnp.float32)
    b2 = 0.05 * jax.random.normal(k4, (64,), jnp.float32)
    wf = 0.02 * jax.random.normal(k5, (64 * 8 * 8, 10), jnp.float32)
    bf = 0.02 * jax.random.normal(k6, (10,), jnp.float32)

    prep = prepare_params(w1, b1, w2, b2, wf, bf)  # offline, outside jit

    fwd = jax.jit(classifier_forward)
    out = jax.block_until_ready(fwd(x, prep))

    ref = reference_forward(x, (w1, b1, w2, b2, wf, bf))
    err = float(jnp.max(jnp.abs(out - ref)))
    assert out.shape == (B, 10)
    # bf16 MXU operands with f32 accumulation: observed error is a few 1e-3.
    assert err < 2e-2, f"max abs err {err}"
    print("KERNEL_OK")
</pallas_src>

<mosaic_0001>
module attributes {stable_mosaic.version = 11 : i64} {
  func.func @kernel(%arg0: i32, %arg1: memref<1x32x32xf32, #tpu.memory_space<vmem>>, %arg2: memref<102x1024xbf16, #tpu.memory_space<vmem>>, %arg3: memref<1x1024xf32, #tpu.memory_space<vmem>>, %arg4: memref<1536x1024xbf16, #tpu.memory_space<vmem>>, %arg5: memref<1x1024xf32, #tpu.memory_space<vmem>>, %arg6: memref<512x128xbf16, #tpu.memory_space<vmem>>, %arg7: memref<128x128xf32, #tpu.memory_space<vmem>>, %arg8: memref<1x128xf32, #tpu.memory_space<vmem>>, %arg9: memref<1x1x128xf32, #tpu.memory_space<vmem>>, %arg10: memref<1x34x34xbf16, #tpu.memory_space<vmem>>, %arg11: memref<1x18x512xbf16, #tpu.memory_space<vmem>>) attributes {dimension_semantics = [#tpu.dimension_semantics<parallel>], iteration_bounds = array<i64: 2>, scalar_prefetch = 0 : i64, scratch_operands = 2 : i64, tpu.core_type = #tpu.core_type<tc>, window_params = [{transform_indices = @transform_0, window_bounds = array<i64: 1, 32, 32>}, {pipeline_mode = #tpu.pipeline_mode<synchronous>, transform_indices = @transform_1, window_bounds = array<i64: 102, 1024>}, {pipeline_mode = #tpu.pipeline_mode<synchronous>, transform_indices = @transform_2, window_bounds = array<i64: 1, 1024>}, {pipeline_mode = #tpu.pipeline_mode<synchronous>, transform_indices = @transform_3, window_bounds = array<i64: 1536, 1024>}, {pipeline_mode = #tpu.pipeline_mode<synchronous>, transform_indices = @transform_4, window_bounds = array<i64: 1, 1024>}, {pipeline_mode = #tpu.pipeline_mode<synchronous>, transform_indices = @transform_5, window_bounds = array<i64: 512, 128>}, {pipeline_mode = #tpu.pipeline_mode<synchronous>, transform_indices = @transform_6, window_bounds = array<i64: 128, 128>}, {pipeline_mode = #tpu.pipeline_mode<synchronous>, transform_indices = @transform_7, window_bounds = array<i64: 1, 128>}, {transform_indices = @transform_8, window_bounds = array<i64: 1, 1, 128>}]} {
    %cst = arith.constant 0.000000e+00 : bf16
    %0 = vector.broadcast %cst : bf16 to vector<34x34xbf16>
    %c0 = arith.constant 0 : index
    %c0_0 = arith.constant 0 : index
    %c0_1 = arith.constant 0 : index
    %1 = vector.load %arg10[%c0, %c0_0, %c0_1] : memref<1x34x34xbf16, #tpu.memory_space<vmem>>, vector<1x34x34xbf16>
    %2 = vector.shape_cast %1 : vector<1x34x34xbf16> to vector<34x34xbf16>
    %3 = vector.shape_cast %0 : vector<34x34xbf16> to vector<1x34x34xbf16>
    tpu.vector_store %arg10[%c0, %c0_0, %c0_1], %3 {strides = array<i32>} : memref<1x34x34xbf16, #tpu.memory_space<vmem>>, vector<1x34x34xbf16>,
    %c0_2 = arith.constant 0 : index
    %c0_3 = arith.constant 0 : index
    %c0_4 = arith.constant 0 : index
    %4 = vector.load %arg1[%c0_2, %c0_3, %c0_4] : memref<1x32x32xf32, #tpu.memory_space<vmem>>, vector<1x32x32xf32>
    %5 = vector.shape_cast %4 : vector<1x32x32xf32> to vector<32x32xf32>
    %6 = arith.truncf %5 : vector<32x32xf32> to vector<32x32xbf16>
    %c0_5 = arith.constant 0 : index
    %c1 = arith.constant 1 : index
    %c1_6 = arith.constant 1 : index
    %7 = vector.load %arg10[%c0_5, %c1, %c1_6] : memref<1x34x34xbf16, #tpu.memory_space<vmem>>, vector<1x32x32xbf16>
    %8 = vector.shape_cast %7 : vector<1x32x32xbf16> to vector<32x32xbf16>
    %9 = vector.shape_cast %6 : vector<32x32xbf16> to vector<1x32x32xbf16>
    tpu.vector_store %arg10[%c0_5, %c1, %c1_6], %9 {strides = array<i32>} : memref<1x34x34xbf16, #tpu.memory_space<vmem>>, vector<1x32x32xbf16>,
    %c0_7 = arith.constant 0 : index
    %c0_8 = arith.constant 0 : index
    %c0_9 = arith.constant 0 : index
    %10 = vector.load %arg10[%c0_7, %c0_8, %c0_9] : memref<1x34x34xbf16, #tpu.memory_space<vmem>>, vector<1x32x34xbf16>
    %11 = vector.shape_cast %10 : vector<1x32x34xbf16> to vector<32x34xbf16>
    %c0_10 = arith.constant 0 : index
    %c1_11 = arith.constant 1 : index
    %c0_12 = arith.constant 0 : index
    %12 = vector.load %arg10[%c0_10, %c1_11, %c0_12] : memref<1x34x34xbf16, #tpu.memory_space<vmem>>, vector<1x32x34xbf16>
    %13 = vector.shape_cast %12 : vector<1x32x34xbf16> to vector<32x34xbf16>
    %c0_13 = arith.constant 0 : index
    %c2 = arith.constant 2 : index
    %c0_14 = arith.constant 0 : index
    %14 = vector.load %arg10[%c0_13, %c2, %c0_14] : memref<1x34x34xbf16, #tpu.memory_space<vmem>>, vector<1x32x34xbf16>
    %15 = vector.shape_cast %14 : vector<1x32x34xbf16> to vector<32x34xbf16>
    %16 = tpu.concatenate %11, %13, %15 in 1 : vector<32x34xbf16>, vector<32x34xbf16>, vector<32x34xbf16> -> vector<32x102xbf16>
    %c0_15 = arith.constant 0 : index
    %c0_16 = arith.constant 0 : index
    %17 = vector.load %arg2[%c0_15, %c0_16] : memref<102x1024xbf16, #tpu.memory_space<vmem>>, vector<102x1024xbf16>
    %cst_17 = arith.constant dense<0.000000e+00> : vector<32x1024xf32>
    %18 = tpu.matmul %16, %17, %cst_17 {dimension_numbers = #tpu.dot_dimension_numbers<[1], [0], [0], [1], [0, 0, 1, 1], [], []>} : vector<32x102xbf16>, vector<102x1024xbf16>, vector<32x1024xf32> -> vector<32x1024xf32>
    %c0_18 = arith.constant 0 : index
    %c0_19 = arith.constant 0 : index
    %19 = vector.load %arg3[%c0_18, %c0_19] : memref<1x1024xf32, #tpu.memory_space<vmem>>, vector<1x1024xf32>
    %20 = vector.broadcast %19 : vector<1x1024xf32> to vector<32x1024xf32>
    %21 = arith.addf %18, %20 : vector<32x1024xf32>
    %cst_20 = arith.constant 0.000000e+00 : f32
    %22 = vector.broadcast %cst_20 : f32 to vector<32x1024xf32>
    %23 = arith.maximumf %21, %22 : vector<32x1024xf32>
    %24 = vector.shape_cast %23 : vector<32x1024xf32> to vector<16x2x1024xf32>
    %cst_21 = arith.constant dense<0xFF800000> : vector<16x1024xf32>
    %25 = vector.multi_reduction <maximumf>, %24, %cst_21 [1] : vector<16x2x1024xf32> to vector<16x1024xf32>
    %26 = vector.extract_strided_slice %25 {offsets = [0, 0], sizes = [16, 32], strides = [1, 1]} : vector<16x1024xf32> to vector<16x32xf32>
    %27 = vector.extract_strided_slice %25 {offsets = [0, 64], sizes = [16, 32], strides = [1, 1]} : vector<16x1024xf32> to vector<16x32xf32>
    %28 = vector.extract_strided_slice %25 {offsets = [0, 128], sizes = [16, 32], strides = [1, 1]} : vector<16x1024xf32> to vector<16x32xf32>
    %29 = vector.extract_strided_slice %25 {offsets = [0, 192], sizes = [16, 32], strides = [1, 1]} : vector<16x1024xf32> to vector<16x32xf32>
    %30 = vector.extract_strided_slice %25 {offsets = [0, 256], sizes = [16, 32], strides = [1, 1]} : vector<16x1024xf32> to vector<16x32xf32>
    %31 = vector.extract_strided_slice %25 {offsets = [0, 320], sizes = [16, 32], strides = [1, 1]} : vector<16x1024xf32> to vector<16x32xf32>
    %32 = vector.extract_strided_slice %25 {offsets = [0, 384], sizes = [16, 32], strides = [1, 1]} : vector<16x1024xf32> to vector<16x32xf32>
    %33 = vector.extract_strided_slice %25 {offsets = [0, 448], sizes = [16, 32], strides = [1, 1]} : vector<16x1024xf32> to vector<16x32xf32>
    %34 = vector.extract_strided_slice %25 {offsets = [0, 512], sizes = [16, 32], strides = [1, 1]} : vector<16x1024xf32> to vector<16x32xf32>
    %35 = vector.extract_strided_slice %25 {offsets = [0, 576], sizes = [16, 32], strides = [1, 1]} : vector<16x1024xf32> to vector<16x32xf32>
    %36 = vector.extract_strided_slice %25 {offsets = [0, 640], sizes = [16, 32], strides = [1, 1]} : vector<16x1024xf32> to vector<16x32xf32>
    %37 = vector.extract_strided_slice %25 {offsets = [0, 704], sizes = [16, 32], strides = [1, 1]} : vector<16x1024xf32> to vector<16x32xf32>
    %38 = vector.extract_strided_slice %25 {offsets = [0, 768], sizes = [16, 32], strides = [1, 1]} : vector<16x1024xf32> to vector<16x32xf32>
    %39 = vector.extract_strided_slice %25 {offsets = [0, 832], sizes = [16, 32], strides = [1, 1]} : vector<16x1024xf32> to vector<16x32xf32>
    %40 = vector.extract_strided_slice %25 {offsets = [0, 896], sizes = [16, 32], strides = [1, 1]} : vector<16x1024xf32> to vector<16x32xf32>
    %41 = vector.extract_strided_slice %25 {offsets = [0, 960], sizes = [16, 32], strides = [1, 1]} : vector<16x1024xf32> to vector<16x32xf32>
    %42 = tpu.concatenate %26, %27, %28, %29, %30, %31, %32, %33, %34, %35, %36, %37, %38, %39, %40, %41 in 1 : vector<16x32xf32>, vector<16x32xf32>, vector<16x32xf32>, vector<16x32xf32>, vector<16x32xf32>, vector<16x32xf32>, vector<16x32xf32>, vector<16x32xf32>, vector<16x32xf32>, vector<16x32xf32>, vector<16x32xf32>, vector<16x32xf32>, vector<16x32xf32>, vector<16x32xf32>, vector<16x32xf32>, vector<16x32xf32> -> vector<16x512xf32>
    %43 = vector.extract_strided_slice %25 {offsets = [0, 32], sizes = [16, 32], strides = [1, 1]} : vector<16x1024xf32> to vector<16x32xf32>
    %44 = vector.extract_strided_slice %25 {offsets = [0, 96], sizes = [16, 32], strides = [1, 1]} : vector<16x1024xf32> to vector<16x32xf32>
    %45 = vector.extract_strided_slice %25 {offsets = [0, 160], sizes = [16, 32], strides = [1, 1]} : vector<16x1024xf32> to vector<16x32xf32>
    %46 = vector.extract_strided_slice %25 {offsets = [0, 224], sizes = [16, 32], strides = [1, 1]} : vector<16x1024xf32> to vector<16x32xf32>
    %47 = vector.extract_strided_slice %25 {offsets = [0, 288], sizes = [16, 32], strides = [1, 1]} : vector<16x1024xf32> to vector<16x32xf32>
    %48 = vector.extract_strided_slice %25 {offsets = [0, 352], sizes = [16, 32], strides = [1, 1]} : vector<16x1024xf32> to vector<16x32xf32>
    %49 = vector.extract_strided_slice %25 {offsets = [0, 416], sizes = [16, 32], strides = [1, 1]} : vector<16x1024xf32> to vector<16x32xf32>
    %50 = vector.extract_strided_slice %25 {offsets = [0, 480], sizes = [16, 32], strides = [1, 1]} : vector<16x1024xf32> to vector<16x32xf32>
    %51 = vector.extract_strided_slice %25 {offsets = [0, 544], sizes = [16, 32], strides = [1, 1]} : vector<16x1024xf32> to vector<16x32xf32>
    %52 = vector.extract_strided_slice %25 {offsets = [0, 608], sizes = [16, 32], strides = [1, 1]} : vector<16x1024xf32> to vector<16x32xf32>
    %53 = vector.extract_strided_slice %25 {offsets = [0, 672], sizes = [16, 32], strides = [1, 1]} : vector<16x1024xf32> to vector<16x32xf32>
    %54 = vector.extract_strided_slice %25 {offsets = [0, 736], sizes = [16, 32], strides = [1, 1]} : vector<16x1024xf32> to vector<16x32xf32>
    %55 = vector.extract_strided_slice %25 {offsets = [0, 800], sizes = [16, 32], strides = [1, 1]} : vector<16x1024xf32> to vector<16x32xf32>
    %56 = vector.extract_strided_slice %25 {offsets = [0, 864], sizes = [16, 32], strides = [1, 1]} : vector<16x1024xf32> to vector<16x32xf32>
    %57 = vector.extract_strided_slice %25 {offsets = [0, 928], sizes = [16, 32], strides = [1, 1]} : vector<16x1024xf32> to vector<16x32xf32>
    %58 = vector.extract_strided_slice %25 {offsets = [0, 992], sizes = [16, 32], strides = [1, 1]} : vector<16x1024xf32> to vector<16x32xf32>
    %59 = tpu.concatenate %43, %44, %45, %46, %47, %48, %49, %50, %51, %52, %53, %54, %55, %56, %57, %58 in 1 : vector<16x32xf32>, vector<16x32xf32>, vector<16x32xf32>, vector<16x32xf32>, vector<16x32xf32>, vector<16x32xf32>, vector<16x32xf32>, vector<16x32xf32>, vector<16x32xf32>, vector<16x32xf32>, vector<16x32xf32>, vector<16x32xf32>, vector<16x32xf32>, vector<16x32xf32>, vector<16x32xf32>, vector<16x32xf32> -> vector<16x512xf32>
    %60 = arith.maximumf %42, %59 : vector<16x512xf32>
    %cst_22 = arith.constant 0.000000e+00 : bf16
    %61 = vector.broadcast %cst_22 : bf16 to vector<1x512xbf16>
    %c0_23 = arith.constant 0 : index
    %c0_24 = arith.constant 0 : index
    %c0_25 = arith.constant 0 : index
    %62 = vector.load %arg11[%c0_23, %c0_24, %c0_25] : memref<1x18x512xbf16, #tpu.memory_space<vmem>>, vector<1x1x512xbf16>
    %63 = vector.shape_cast %62 : vector<1x1x512xbf16> to vector<1x512xbf16>
    %64 = vector.shape_cast %61 : vector<1x512xbf16> to vector<1x1x512xbf16>
    tpu.vector_store %arg11[%c0_23, %c0_24, %c0_25], %64 {strides = array<i32>} : memref<1x18x512xbf16, #tpu.memory_space<vmem>>, vector<1x1x512xbf16>,
    %cst_26 = arith.constant 0.000000e+00 : bf16
    %65 = vector.broadcast %cst_26 : bf16 to vector<1x512xbf16>
    %c0_27 = arith.constant 0 : index
    %c17 = arith.constant 17 : index
    %c0_28 = arith.constant 0 : index
    %66 = vector.load %arg11[%c0_27, %c17, %c0_28] : memref<1x18x512xbf16, #tpu.memory_space<vmem>>, vector<1x1x512xbf16>
    %67 = vector.shape_cast %66 : vector<1x1x512xbf16> to vector<1x512xbf16>
    %68 = vector.shape_cast %65 : vector<1x512xbf16> to vector<1x1x512xbf16>
    tpu.vector_store %arg11[%c0_27, %c17, %c0_28], %68 {strides = array<i32>} : memref<1x18x512xbf16, #tpu.memory_space<vmem>>, vector<1x1x512xbf16>,
    %69 = arith.truncf %60 : vector<16x512xf32> to vector<16x512xbf16>
    %c0_29 = arith.constant 0 : index
    %c1_30 = arith.constant 1 : index
    %c0_31 = arith.constant 0 : index
    %70 = vector.load %arg11[%c0_29, %c1_30, %c0_31] : memref<1x18x512xbf16, #tpu.memory_space<vmem>>, vector<1x16x512xbf16>
    %71 = vector.shape_cast %70 : vector<1x16x512xbf16> to vector<16x512xbf16>
    %72 = vector.shape_cast %69 : vector<16x512xbf16> to vector<1x16x512xbf16>
    tpu.vector_store %arg11[%c0_29, %c1_30, %c0_31], %72 {strides = array<i32>} : memref<1x18x512xbf16, #tpu.memory_space<vmem>>, vector<1x16x512xbf16>,
    %c0_32 = arith.constant 0 : index
    %c0_33 = arith.constant 0 : index
    %c0_34 = arith.constant 0 : index
    %73 = vector.load %arg11[%c0_32, %c0_33, %c0_34] : memref<1x18x512xbf16, #tpu.memory_space<vmem>>, vector<1x16x512xbf16>
    %74 = vector.shape_cast %73 : vector<1x16x512xbf16> to vector<16x512xbf16>
    %c0_35 = arith.constant 0 : index
    %c1_36 = arith.constant 1 : index
    %c0_37 = arith.constant 0 : index
    %75 = vector.load %arg11[%c0_35, %c1_36, %c0_37] : memref<1x18x512xbf16, #tpu.memory_space<vmem>>, vector<1x16x512xbf16>
    %76 = vector.shape_cast %75 : vector<1x16x512xbf16> to vector<16x512xbf16>
    %c0_38 = arith.constant 0 : index
    %c2_39 = arith.constant 2 : index
    %c0_40 = arith.constant 0 : index
    %77 = vector.load %arg11[%c0_38, %c2_39, %c0_40] : memref<1x18x512xbf16, #tpu.memory_space<vmem>>, vector<1x16x512xbf16>
    %78 = vector.shape_cast %77 : vector<1x16x512xbf16> to vector<16x512xbf16>
    %79 = tpu.concatenate %74, %76, %78 in 1 : vector<16x512xbf16>, vector<16x512xbf16>, vector<16x512xbf16> -> vector<16x1536xbf16>
    %c0_41 = arith.constant 0 : index
    %c0_42 = arith.constant 0 : index
    %80 = vector.load %arg4[%c0_41, %c0_42] : memref<1536x1024xbf16, #tpu.memory_space<vmem>>, vector<1536x1024xbf16>
    %cst_43 = arith.constant dense<0.000000e+00> : vector<16x1024xf32>
    %81 = tpu.matmul %79, %80, %cst_43 {dimension_numbers = #tpu.dot_dimension_numbers<[1], [0], [0], [1], [0, 0, 1, 1], [], []>} : vector<16x1536xbf16>, vector<1536x1024xbf16>, vector<16x1024xf32> -> vector<16x1024xf32>
    %c0_44 = arith.constant 0 : index
    %c0_45 = arith.constant 0 : index
    %82 = vector.load %arg5[%c0_44, %c0_45] : memref<1x1024xf32, #tpu.memory_space<vmem>>, vector<1x1024xf32>
    %83 = vector.broadcast %82 : vector<1x1024xf32> to vector<16x1024xf32>
    %84 = arith.addf %81, %83 : vector<16x1024xf32>
    %cst_46 = arith.constant 0.000000e+00 : f32
    %85 = vector.broadcast %cst_46 : f32 to vector<16x1024xf32>
    %86 = arith.maximumf %84, %85 : vector<16x1024xf32>
    %87 = vector.shape_cast %86 : vector<16x1024xf32> to vector<8x2x1024xf32>
    %cst_47 = arith.constant dense<0xFF800000> : vector<8x1024xf32>
    %88 = vector.multi_reduction <maximumf>, %87, %cst_47 [1] : vector<8x2x1024xf32> to vector<8x1024xf32>
    %89 = vector.extract_strided_slice %88 {offsets = [0, 0], sizes = [8, 64], strides = [1, 1]} : vector<8x1024xf32> to vector<8x64xf32>
    %90 = vector.extract_strided_slice %88 {offsets = [0, 128], sizes = [8, 64], strides = [1, 1]} : vector<8x1024xf32> to vector<8x64xf32>
    %91 = vector.extract_strided_slice %88 {offsets = [0, 256], sizes = [8, 64], strides = [1, 1]} : vector<8x1024xf32> to vector<8x64xf32>
    %92 = vector.extract_strided_slice %88 {offsets = [0, 384], sizes = [8, 64], strides = [1, 1]} : vector<8x1024xf32> to vector<8x64xf32>
    %93 = vector.extract_strided_slice %88 {offsets = [0, 512], sizes = [8, 64], strides = [1, 1]} : vector<8x1024xf32> to vector<8x64xf32>
    %94 = vector.extract_strided_slice %88 {offsets = [0, 640], sizes = [8, 64], strides = [1, 1]} : vector<8x1024xf32> to vector<8x64xf32>
    %95 = vector.extract_strided_slice %88 {offsets = [0, 768], sizes = [8, 64], strides = [1, 1]} : vector<8x1024xf32> to vector<8x64xf32>
    %96 = vector.extract_strided_slice %88 {offsets = [0, 896], sizes = [8, 64], strides = [1, 1]} : vector<8x1024xf32> to vector<8x64xf32>
    %97 = tpu.concatenate %89, %90, %91, %92, %93, %94, %95, %96 in 1 : vector<8x64xf32>, vector<8x64xf32>, vector<8x64xf32>, vector<8x64xf32>, vector<8x64xf32>, vector<8x64xf32>, vector<8x64xf32>, vector<8x64xf32> -> vector<8x512xf32>
    %98 = vector.extract_strided_slice %88 {offsets = [0, 64], sizes = [8, 64], strides = [1, 1]} : vector<8x1024xf32> to vector<8x64xf32>
    %99 = vector.extract_strided_slice %88 {offsets = [0, 192], sizes = [8, 64], strides = [1, 1]} : vector<8x1024xf32> to vector<8x64xf32>
    %100 = vector.extract_strided_slice %88 {offsets = [0, 320], sizes = [8, 64], strides = [1, 1]} : vector<8x1024xf32> to vector<8x64xf32>
    %101 = vector.extract_strided_slice %88 {offsets = [0, 448], sizes = [8, 64], strides = [1, 1]} : vector<8x1024xf32> to vector<8x64xf32>
    %102 = vector.extract_strided_slice %88 {offsets = [0, 576], sizes = [8, 64], strides = [1, 1]} : vector<8x1024xf32> to vector<8x64xf32>
    %103 = vector.extract_strided_slice %88 {offsets = [0, 704], sizes = [8, 64], strides = [1, 1]} : vector<8x1024xf32> to vector<8x64xf32>
    %104 = vector.extract_strided_slice %88 {offsets = [0, 832], sizes = [8, 64], strides = [1, 1]} : vector<8x1024xf32> to vector<8x64xf32>
    %105 = vector.extract_strided_slice %88 {offsets = [0, 960], sizes = [8, 64], strides = [1, 1]} : vector<8x1024xf32> to vector<8x64xf32>
    %106 = tpu.concatenate %98, %99, %100, %101, %102, %103, %104, %105 in 1 : vector<8x64xf32>, vector<8x64xf32>, vector<8x64xf32>, vector<8x64xf32>, vector<8x64xf32>, vector<8x64xf32>, vector<8x64xf32>, vector<8x64xf32> -> vector<8x512xf32>
    %107 = arith.maximumf %97, %106 : vector<8x512xf32>
    %108 = arith.truncf %107 : vector<8x512xf32> to vector<8x512xbf16>
    %c0_48 = arith.constant 0 : index
    %c0_49 = arith.constant 0 : index
    %109 = vector.load %arg6[%c0_48, %c0_49] : memref<512x128xbf16, #tpu.memory_space<vmem>>, vector<512x128xbf16>
    %cst_50 = arith.constant dense<0.000000e+00> : vector<8x128xf32>
    %110 = tpu.matmul %108, %109, %cst_50 {dimension_numbers = #tpu.dot_dimension_numbers<[1], [0], [0], [1], [0, 0, 1, 1], [], []>} : vector<8x512xbf16>, vector<512x128xbf16>, vector<8x128xf32> -> vector<8x128xf32>
    %111 = tpu.iota {dimensions = array<i32: 0>} : vector<8x128xi32>
    %112 = tpu.iota {dimensions = array<i32: 1>} : vector<8x128xi32>
    %c8_i32 = arith.constant 8 : i32
    %c0_i32 = arith.constant 0 : i32
    %113 = arith.cmpi eq, %c8_i32, %c0_i32 : i32
    %c1_i32 = arith.constant 1 : i32
    %114 = arith.select %113, %c1_i32, %c8_i32 : i32
    %115 = vector.broadcast %114 : i32 to vector<8x128xi32>
    %116 = arith.remsi %111, %115 : vector<8x128xi32>
    %c0_i32_51 = arith.constant 0 : i32
    %117 = vector.broadcast %c0_i32_51 : i32 to vector<8x128xi32>
    %118 = arith.cmpi ne, %116, %117 : vector<8x128xi32>
    %c0_i32_52 = arith.constant 0 : i32
    %119 = vector.broadcast %c0_i32_52 : i32 to vector<8x128xi32>
    %120 = arith.cmpi slt, %116, %119 : vector<8x128xi32>
    %c0_i32_53 = arith.constant 0 : i32
    %121 = arith.cmpi slt, %114, %c0_i32_53 : i32
    %122 = vector.broadcast %121 : i1 to vector<8x128xi1>
    %123 = vector.broadcast %122 : vector<8x128xi1> to vector<8x128xi1>
    %124 = arith.xori %120, %123 : vector<8x128xi1>
    %125 = arith.andi %124, %118 : vector<8x128xi1>
    %126 = vector.broadcast %114 : i32 to vector<8x128xi32>
    %127 = arith.addi %116, %126 : vector<8x128xi32>
    %128 = arith.select %125, %127, %116 : vector<8x128xi1>, vector<8x128xi32>
    %c8_i32_54 = arith.constant 8 : i32
    %c0_i32_55 = arith.constant 0 : i32
    %129 = arith.cmpi eq, %c8_i32_54, %c0_i32_55 : i32
    %c1_i32_56 = arith.constant 1 : i32
    %130 = arith.select %129, %c1_i32_56, %c8_i32_54 : i32
    %131 = vector.broadcast %130 : i32 to vector<8x128xi32>
    %132 = arith.remsi %112, %131 : vector<8x128xi32>
    %c0_i32_57 = arith.constant 0 : i32
    %133 = vector.broadcast %c0_i32_57 : i32 to vector<8x128xi32>
    %134 = arith.cmpi ne, %132, %133 : vector<8x128xi32>
    %c0_i32_58 = arith.constant 0 : i32
    %135 = vector.broadcast %c0_i32_58 : i32 to vector<8x128xi32>
    %136 = arith.cmpi slt, %132, %135 : vector<8x128xi32>
    %c0_i32_59 = arith.constant 0 : i32
    %137 = arith.cmpi slt, %130, %c0_i32_59 : i32
    %138 = vector.broadcast %137 : i1 to vector<8x128xi1>
    %139 = vector.broadcast %138 : vector<8x128xi1> to vector<8x128xi1>
    %140 = arith.xori %136, %139 : vector<8x128xi1>
    %141 = arith.andi %140, %134 : vector<8x128xi1>
    %142 = vector.broadcast %130 : i32 to vector<8x128xi32>
    %143 = arith.addi %132, %142 : vector<8x128xi32>
    %144 = arith.select %141, %143, %132 : vector<8x128xi1>, vector<8x128xi32>
    %145 = arith.cmpi eq, %128, %144 : vector<8x128xi32>
    %cst_60 = arith.constant 0.000000e+00 : f32
    %146 = vector.broadcast %cst_60 : f32 to vector<8x128xf32>
    %147 = arith.select %145, %110, %146 : vector<8x128xi1>, vector<8x128xf32>
    %148 = vector.shape_cast %147 : vector<8x128xf32> to vector<1x8x128xf32>
    %cst_61 = arith.constant dense<0.000000e+00> : vector<1x128xf32>
    %149 = vector.multi_reduction <add>, %148, %cst_61 [1] : vector<1x8x128xf32> to vector<1x128xf32>
    %c0_62 = arith.constant 0 : index
    %c0_63 = arith.constant 0 : index
    %150 = vector.load %arg7[%c0_62, %c0_63] : memref<128x128xf32, #tpu.memory_space<vmem>>, vector<128x128xf32>
    %cst_64 = arith.constant dense<0.000000e+00> : vector<1x128xf32>
    %151 = tpu.matmul %149, %150, %cst_64 {dimension_numbers = #tpu.dot_dimension_numbers<[1], [0], [0], [1], [0, 0, 1, 1], [], []>, precision = #tpu.contract_precision<fp32>} : vector<1x128xf32>, vector<128x128xf32>, vector<1x128xf32> -> vector<1x128xf32>
    %c0_65 = arith.constant 0 : index
    %c0_66 = arith.constant 0 : index
    %152 = vector.load %arg8[%c0_65, %c0_66] : memref<1x128xf32, #tpu.memory_space<vmem>>, vector<1x128xf32>
    %153 = arith.addf %151, %152 : vector<1x128xf32>
    %154 = vector.shape_cast %153 : vector<1x128xf32> to vector<1x1x128xf32>
    %c0_67 = arith.constant 0 : index
    %c0_68 = arith.constant 0 : index
    %c0_69 = arith.constant 0 : index
    %155 = vector.load %arg9[%c0_67, %c0_68, %c0_69] : memref<1x1x128xf32, #tpu.memory_space<vmem>>, vector<1x1x128xf32>
    tpu.vector_store %arg9[%c0_67, %c0_68, %c0_69], %154 {strides = array<i32>} : memref<1x1x128xf32, #tpu.memory_space<vmem>>, vector<1x1x128xf32>,
    return
  }
  func.func @transform_0(%arg0: i32) -> (i32, i32, i32) {
    %c0_i32 = arith.constant 0 : i32
    %c0_i32_0 = arith.constant 0 : i32
    %c0_i32_1 = arith.constant 0 : i32
    return %arg0, %c0_i32, %c0_i32_0 : i32, i32, i32
  }
  func.func @transform_1(%arg0: i32) -> (i32, i32) {
    %c0_i32 = arith.constant 0 : i32
    %c0_i32_0 = arith.constant 0 : i32
    %c0_i32_1 = arith.constant 0 : i32
    return %c0_i32, %c0_i32_0 : i32, i32
  }
  func.func @transform_2(%arg0: i32) -> (i32, i32) {
    %c0_i32 = arith.constant 0 : i32
    %c0_i32_0 = arith.constant 0 : i32
    %c0_i32_1 = arith.constant 0 : i32
    return %c0_i32, %c0_i32_0 : i32, i32
  }
  func.func @transform_3(%arg0: i32) -> (i32, i32) {
    %c0_i32 = arith.constant 0 : i32
    %c0_i32_0 = arith.constant 0 : i32
    %c0_i32_1 = arith.constant 0 : i32
    return %c0_i32, %c0_i32_0 : i32, i32
  }
  func.func @transform_4(%arg0: i32) -> (i32, i32) {
    %c0_i32 = arith.constant 0 : i32
    %c0_i32_0 = arith.constant 0 : i32
    %c0_i32_1 = arith.constant 0 : i32
    return %c0_i32, %c0_i32_0 : i32, i32
  }
  func.func @transform_5(%arg0: i32) -> (i32, i32) {
    %c0_i32 = arith.constant 0 : i32
    %c0_i32_0 = arith.constant 0 : i32
    %c0_i32_1 = arith.constant 0 : i32
    return %c0_i32, %c0_i32_0 : i32, i32
  }
  func.func @transform_6(%arg0: i32) -> (i32, i32) {
    %c0_i32 = arith.constant 0 : i32
    %c0_i32_0 = arith.constant 0 : i32
    %c0_i32_1 = arith.constant 0 : i32
    return %c0_i32, %c0_i32_0 : i32, i32
  }
  func.func @transform_7(%arg0: i32) -> (i32, i32) {
    %c0_i32 = arith.constant 0 : i32
    %c0_i32_0 = arith.constant 0 : i32
    %c0_i32_1 = arith.constant 0 : i32
    return %c0_i32, %c0_i32_0 : i32, i32
  }
  func.func @transform_8(%arg0: i32) -> (i32, i32, i32) {
    %c0_i32 = arith.constant 0 : i32
    %c0_i32_0 = arith.constant 0 : i32
    %c0_i32_1 = arith.constant 0 : i32
    return %arg0, %c0_i32, %c0_i32_0 : i32, i32, i32
  }
}

</mosaic_0001>

<llo_original>
// kernel: classifier_forward.1
$region0: #{classifier_forward.1}
  #allocation0 [shape = 'u32[]', space=smem, size = 0x4, offset = 0x4, fixed_abs, tag = 'smem constant byte address 0x4 - core index']
  #allocation1 [shape = 'u32[144,128]{1,0:T(1,128)}', space=vmem, size = 0x12000, scoped, tag = 'internal scratch']
  #allocation2 [shape = 'bf16[1,34,34]{2,1,0:T(8,128)(2,1)}', space=vmem, size = 0x2800, scoped, tag = 'scratch operand']
  #allocation3 [shape = 'bf16[1,18,512]{2,1,0:T(8,128)(2,1)}', space=vmem, size = 0x6000, scoped, tag = 'scratch operand']
  %s0 = inlined_call_operand.hbm [shape: f32[2,32,32], index: 0, kind: input, shape index: {}]
  %s1 = inlined_call_operand.hbm [shape: bf16[102,1024], index: 1, kind: input, shape index: {}]
  %s2 = inlined_call_operand.hbm [shape: f32[1,1024], index: 2, kind: input, shape index: {}]
  %s3 = inlined_call_operand.hbm [shape: bf16[1536,1024], index: 3, kind: input, shape index: {}]
  %s4 = inlined_call_operand.hbm [shape: f32[1,1024], index: 4, kind: input, shape index: {}]
  %s5 = inlined_call_operand.hbm [shape: bf16[512,128], index: 5, kind: input, shape index: {}]
  %s6 = inlined_call_operand.hbm [shape: f32[128,128], index: 6, kind: input, shape index: {}]
  %s7 = inlined_call_operand.hbm [shape: f32[1,128], index: 7, kind: input, shape index: {}]
  %s8 = inlined_call_operand.hbm [shape: f32[2,1,128], index: 8, kind: output, shape index: {}]
  %s9 = sld [smem:[#allocation0]]
  $region97: #{classifier_forward.1} parent=0
    _
  %s11 = ssub.s32 1, %s9
  %s12 = scalar_select 0, %s11, %s9
  $region1: #{classifier_forward.1} parent=0
    #allocation4 [shape = 'u8[32768]{0}', space=vmem, size = 0x8000, scoped, tag = 'input window, operand 0']
    #allocation5 [shape = 's32[2]{0}', space=sflag, size = 0x8, scoped, tag = 'scoped memory for classifier_forward.1']
    #allocation6 [shape = 's32[2]{0}', space=sflag, size = 0x8, scoped, tag = 'scoped memory for classifier_forward.1']
    #allocation7 [shape = 'u8[212992]{0}', space=vmem, size = 0x34000, scoped, tag = 'input window, operand 1, single buffered']
    #allocation8 [shape = 's32[1]{0}', space=sflag, size = 0x4, scoped, tag = 'scoped memory for classifier_forward.1']
    #allocation9 [shape = 'u8[4096]{0}', space=vmem, size = 0x1000, scoped, tag = 'input window, operand 2, single buffered']
    #allocation10 [shape = 'u8[3145728]{0}', space=vmem, size = 0x300000, scoped, tag = 'input window, operand 3, single buffered']
    #allocation11 [shape = 's32[1]{0}', space=sflag, size = 0x4, scoped, tag = 'scoped memory for classifier_forward.1']
    #allocation12 [shape = 'u8[4096]{0}', space=vmem, size = 0x1000, scoped, tag = 'input window, operand 4, single buffered']
    #allocation13 [shape = 'u8[131072]{0}', space=vmem, size = 0x20000, scoped, tag = 'input window, operand 5, single buffered']
    #allocation14 [shape = 's32[1]{0}', space=sflag, size = 0x4, scoped, tag = 'scoped memory for classifier_forward.1']
    #allocation15 [shape = 'u8[65536]{0}', space=vmem, size = 0x10000, scoped, tag = 'input window, operand 6, single buffered']
    #allocation16 [shape = 'u8[512]{0}', space=vmem, size = 0x400, scoped, tag = 'input window, operand 7, single buffered']
    #allocation17 [shape = 's32[1]{0}', space=sflag, size = 0x4, scoped, tag = 'scoped memory for classifier_forward.1']
    #allocation18 [shape = 'u8[1024]{0}', space=vmem, size = 0x400, scoped, tag = 'output window, operand 0']
    %13 = vsyncpa [#allocation5], 0
    %s14 = scalar_lea.sflag [#allocation5], 1
    %15 = vsyncpa %s14, 0
    %16 = vsyncpa [#allocation8], 0
    %17 = vsyncpa [#allocation11], 0
    %18 = vsyncpa [#allocation14], 0
    %19 = vsyncpa [#allocation17], 0
    %20 = vsyncpa [#allocation6], 0
    %s21 = scalar_lea.sflag [#allocation6], 1
    %22 = vsyncpa %s21, 0
    loop: start=0, step=1, limit=4
    $region2: #{classifier_forward.1} parent=1 // loop_pre_header
      _
    $region3: #{classifier_forward.1} parent=1 // loop_header
      %s24 = sphi 0, %s28
      %p25 = scmp.ge.s32.totalorder %s24, 4
      %s34 = sphi 0, %s36
      %s37 = sphi 0, %s34
      %s38 = sphi 0, %s37
      %s54 = sphi 0, %s38
      %s58 = sphi 0, %s58
      %s60 = sphi 0, %s58
      %s61 = sphi 0, %s60
      %s75 = sphi 0, %s61
      %s79 = sphi 0, %s79
      %s81 = sphi 0, %s79
      %s82 = sphi 0, %s81
      %s96 = sphi 0, %s82
      %s100 = sphi 0, %s100
      %s102 = sphi 0, %s100
      %s103 = sphi 0, %s102
      %s117 = sphi 0, %s103
      %s121 = sphi 0, %s121
      %s123 = sphi 0, %s121
      %s124 = sphi 0, %s123
      %s138 = sphi 0, %s124
      %s142 = sphi 0, %s142
      %s144 = sphi 0, %s142
      %s145 = sphi 0, %s144
      %s159 = sphi 0, %s145
      %s163 = sphi 0, %s163
      %s165 = sphi 0, %s163
      %s166 = sphi 0, %s165
      %s180 = sphi 0, %s166
      %s184 = sphi 0, %s184
      %s186 = sphi 0, %s184
      %s187 = sphi 0, %s186
      %s201 = sphi 0, %s187
      %s207 = sphi 0, %s209
      %s210 = sphi 0, %s207
      %s211 = sphi 0, %s210
      %s227 = sphi 0, %s211
    $region4: #{classifier_forward.1} parent=1 // loop_header_branch
      %27 = sbr.rel (%p25) target = $region8
    $region5: #{classifier_forward.1} parent=1 // loop_body
      %s29 = ssub.s32 %s24, 1
      %s30 = ssub.s32 %s24, 2
      %s31 = sadd.s32 %s24, 1
      %s32 = ssub.s32 %s24, %s31
      %p33 = scmp.eq.s32.totalorder %s32, 0
      %s35 = sadd.s32 %s34, 1
      %s36 = scalar_select %p33, %s34, %s35
      %p39 = pneg %p33
      %p40 = scmp.eq.s32.totalorder %s24, 1
      %p41 = por %p39, %p40
      %p42 = scmp.ne.s32.totalorder %s34, %s37
      %p43 = scmp.eq.s32.totalorder %s24, 0
      %p44 = por %p42, %p43
      %p45 = scmp.ne.s32.totalorder %s34, %s37
      %p46 = scmp.eq.s32.totalorder %s29, 1
      %p47 = por %p45, %p46
      %p48 = scmp.ne.s32.totalorder %s37, %s38
      %p49 = scmp.eq.s32.totalorder %s29, 0
      %p50 = por %p48, %p49
      %p51 = scmp.ne.s32.totalorder %s37, %s38
      %p52 = scmp.eq.s32.totalorder %s30, 1
      %p53 = por %p51, %p52
      %p55 = scmp.ne.s32.totalorder %s38, %s54
      %p56 = scmp.eq.s32.totalorder %s30, 0
      %p57 = por %p55, %p56
      %s59 = sadd.s32 %s58, 1
      %p62 = scmp.eq.s32.totalorder %s24, 1
      %p63 = scmp.ne.s32.totalorder %s58, %s60
      %p64 = scmp.eq.s32.totalorder %s24, 0
      %p65 = por %p63, %p64
      %p66 = scmp.ne.s32.totalorder %s58, %s60
      %p67 = scmp.eq.s32.totalorder %s29, 1
      %p68 = por %p66, %p67
      %p69 = scmp.ne.s32.totalorder %s60, %s61
      %p70 = scmp.eq.s32.totalorder %s29, 0
      %p71 = por %p69, %p70
      %p72 = scmp.ne.s32.totalorder %s60, %s61
      %p73 = scmp.eq.s32.totalorder %s30, 1
      %p74 = por %p72, %p73
      %p76 = scmp.ne.s32.totalorder %s61, %s75
      %p77 = scmp.eq.s32.totalorder %s30, 0
      %p78 = por %p76, %p77
      %s80 = sadd.s32 %s79, 1
      %p83 = scmp.eq.s32.totalorder %s24, 1
      %p84 = scmp.ne.s32.totalorder %s79, %s81
      %p85 = scmp.eq.s32.totalorder %s24, 0
      %p86 = por %p84, %p85
      %p87 = scmp.ne.s32.totalorder %s79, %s81
      %p88 = scmp.eq.s32.totalorder %s29, 1
      %p89 = por %p87, %p88
      %p90 = scmp.ne.s32.totalorder %s81, %s82
      %p91 = scmp.eq.s32.totalorder %s29, 0
      %p92 = por %p90, %p91
      %p93 = scmp.ne.s32.totalorder %s81, %s82
      %p94 = scmp.eq.s32.totalorder %s30, 1
      %p95 = por %p93, %p94
      %p97 = scmp.ne.s32.totalorder %s82, %s96
      %p98 = scmp.eq.s32.totalorder %s30, 0
      %p99 = por %p97, %p98
      %s101 = sadd.s32 %s100, 1
      %p104 = scmp.eq.s32.totalorder %s24, 1
      %p105 = scmp.ne.s32.totalorder %s100, %s102
      %p106 = scmp.eq.s32.totalorder %s24, 0
      %p107 = por %p105, %p106
      %p108 = scmp.ne.s32.totalorder %s100, %s102
      %p109 = scmp.eq.s32.totalorder %s29, 1
      %p110 = por %p108, %p109
      %p111 = scmp.ne.s32.totalorder %s102, %s103
      %p112 = scmp.eq.s32.totalorder %s29, 0
      %p113 = por %p111, %p112
      %p114 = scmp.ne.s32.totalorder %s102, %s103
      %p115 = scmp.eq.s32.totalorder %s30, 1
      %p116 = por %p114, %p115
      %p118 = scmp.ne.s32.totalorder %s103, %s117
      %p119 = scmp.eq.s32.totalorder %s30, 0
      %p120 = por %p118, %p119
      %s122 = sadd.s32 %s121, 1
      %p125 = scmp.eq.s32.totalorder %s24, 1
      %p126 = scmp.ne.s32.totalorder %s121, %s123
      %p127 = scmp.eq.s32.totalorder %s24, 0
      %p128 = por %p126, %p127
      %p129 = scmp.ne.s32.totalorder %s121, %s123
      %p130 = scmp.eq.s32.totalorder %s29, 1
      %p131 = por %p129, %p130
      %p132 = scmp.ne.s32.totalorder %s123, %s124
      %p133 = scmp.eq.s32.totalorder %s29, 0
      %p134 = por %p132, %p133
      %p135 = scmp.ne.s32.totalorder %s123, %s124
      %p136 = scmp.eq.s32.totalorder %s30, 1
      %p137 = por %p135, %p136
      %p139 = scmp.ne.s32.totalorder %s124, %s138
      %p140 = scmp.eq.s32.totalorder %s30, 0
      %p141 = por %p139, %p140
      %s143 = sadd.s32 %s142, 1
      %p146 = scmp.eq.s32.totalorder %s24, 1
      %p147 = scmp.ne.s32.totalorder %s142, %s144
      %p148 = scmp.eq.s32.totalorder %s24, 0
      %p149 = por %p147, %p148
      %p150 = scmp.ne.s32.totalorder %s142, %s144
      %p151 = scmp.eq.s32.totalorder %s29, 1
      %p152 = por %p150, %p151
      %p153 = scmp.ne.s32.totalorder %s144, %s145
      %p154 = scmp.eq.s32.totalorder %s29, 0
      %p155 = por %p153, %p154
      %p156 = scmp.ne.s32.totalorder %s144, %s145
      %p157 = scmp.eq.s32.totalorder %s30, 1
      %p158 = por %p156, %p157
      %p160 = scmp.ne.s32.totalorder %s145, %s159
      %p161 = scmp.eq.s32.totalorder %s30, 0
      %p162 = por %p160, %p161
      %s164 = sadd.s32 %s163, 1
      %p167 = scmp.eq.s32.totalorder %s24, 1
      %p168 = scmp.ne.s32.totalorder %s163, %s165
      %p169 = scmp.eq.s32.totalorder %s24, 0
      %p170 = por %p168, %p169
      %p171 = scmp.ne.s32.totalorder %s163, %s165
      %p172 = scmp.eq.s32.totalorder %s29, 1
      %p173 = por %p171, %p172
      %p174 = scmp.ne.s32.totalorder %s165, %s166
      %p175 = scmp.eq.s32.totalorder %s29, 0
      %p176 = por %p174, %p175
      %p177 = scmp.ne.s32.totalorder %s165, %s166
      %p178 = scmp.eq.s32.totalorder %s30, 1
      %p179 = por %p177, %p178
      %p181 = scmp.ne.s32.totalorder %s166, %s180
      %p182 = scmp.eq.s32.totalorder %s30, 0
      %p183 = por %p181, %p182
      %s185 = sadd.s32 %s184, 1
      %p188 = scmp.eq.s32.totalorder %s24, 1
      %p189 = scmp.ne.s32.totalorder %s184, %s186
      %p190 = scmp.eq.s32.totalorder %s24, 0
      %p191 = por %p189, %p190
      %p192 = scmp.ne.s32.totalorder %s184, %s186
      %p193 = scmp.eq.s32.totalorder %s29, 1
      %p194 = por %p192, %p193
      %p195 = scmp.ne.s32.totalorder %s186, %s187
      %p196 = scmp.eq.s32.totalorder %s29, 0
      %p197 = por %p195, %p196
      %p198 = scmp.ne.s32.totalorder %s186, %s187
      %p199 = scmp.eq.s32.totalorder %s30, 1
      %p200 = por %p198, %p199
      %p202 = scmp.ne.s32.totalorder %s187, %s201
      %p203 = scmp.eq.s32.totalorder %s30, 0
      %p204 = por %p202, %p203
      %s205 = ssub.s32 %s24, %s31
      %p206 = scmp.eq.s32.totalorder %s205, 0
      %s208 = sadd.s32 %s207, 1
      %s209 = scalar_select %p206, %s207, %s208
      %p212 = pneg %p206
      %p213 = scmp.eq.s32.totalorder %s24, 1
      %p214 = por %p212, %p213
      %p215 = scmp.ne.s32.totalorder %s207, %s210
      %p216 = scmp.eq.s32.totalorder %s24, 0
      %p217 = por %p215, %p216
      %p218 = scmp.ne.s32.totalorder %s207, %s210
      %p219 = scmp.eq.s32.totalorder %s29, 1
      %p220 = por %p218, %p219
      %p221 = scmp.ne.s32.totalorder %s210, %s211
      %p222 = scmp.eq.s32.totalorder %s29, 0
      %p223 = por %p221, %p222
      %p224 = scmp.ne.s32.totalorder %s210, %s211
      %p225 = scmp.eq.s32.totalorder %s30, 1
      %p226 = por %p224, %p225
      %p228 = scmp.ne.s32.totalorder %s211, %s227
      %p229 = scmp.eq.s32.totalorder %s30, 0
      %p230 = por %p228, %p229
      %p231 = scmp.le.s32.totalorder 1, %s24
      %p232 = scmp.lt.s32.totalorder %s24, 3
      %p233 = pnand %p231, %p232
      %p234 = pneg %p233
      // Predicated region
      $region9: #{classifier_forward.1} parent=5 // pred_check
        _
      $region10: #{classifier_forward.1} parent=5 // pred_check_branch
        %236 = sbr.rel (%p233) target = $region12
      $region11: #{classifier_forward.1} parent=5 // pred_region
        %s237 = ssub.s32 %s24, 1
        // Predicated region
        $region13: #{classifier_forward.1} parent=11 // pred_check
          %p238 = pneg %p71
        $region14: #{classifier_forward.1} parent=11 // pred_check_branch
          %240 = sbr.rel (%p238) target = $region16
        $region15: #{classifier_forward.1} parent=11 // pred_region
          %s242 = ssub.s32 6656, 6656
          %243 = vsyncadd [#allocation8], %s242
          %s244 = sshll.u32 [#allocation7], 4
          %s245 = int_to_ptr.vmem [resolvable:$true] %s244
          %250 = dma.hbm_to_vmem [thread:$0]  %s1, 6656, %s245, [#allocation8], 512, 512, 32
        $region16: #{classifier_forward.1} parent=11 // pred_fallthru
          _
        // Predicated region
        $region17: #{classifier_forward.1} parent=11 // pred_check
          %p251 = pneg %p92
        $region18: #{classifier_forward.1} parent=11 // pred_check_branch
          %253 = sbr.rel (%p251) target = $region20
        $region19: #{classifier_forward.1} parent=11 // pred_region
          %s255 = ssub.s32 128, 128
          %256 = vsyncadd [#allocation8], %s255
          %s258 = sshll.u32 [#allocation9], 4
          %s259 = int_to_ptr.vmem [resolvable:$true] %s258
          %261 = dma.hbm_to_vmem [thread:$0]  %s2, 128, %s259, [#allocation8]
        $region20: #{classifier_forward.1} parent=11 // pred_fallthru
          _
        // Predicated region
        $region21: #{classifier_forward.1} parent=11 // pred_check
          %p262 = pneg %p113
        $region22: #{classifier_forward.1} parent=11 // pred_check_branch
          %264 = sbr.rel (%p262) target = $region24
        $region23: #{classifier_forward.1} parent=11 // pred_region
          %s266 = ssub.s32 98304, 98304
          %267 = vsyncadd [#allocation11], %s266
          %s268 = sshll.u32 [#allocation10], 4
          %s269 = int_to_ptr.vmem [resolvable:$true] %s268
          %274 = dma.hbm_to_vmem [thread:$0]  %s3, 98304, %s269, [#allocation11], 512, 512, 32
        $region24: #{classifier_forward.1} parent=11 // pred_fallthru
          _
        // Predicated region
        $region25: #{classifier_forward.1} parent=11 // pred_check
          %p275 = pneg %p134
        $region26: #{classifier_forward.1} parent=11 // pred_check_branch
          %277 = sbr.rel (%p275) target = $region28
        $region27: #{classifier_forward.1} parent=11 // pred_region
          %s279 = ssub.s32 128, 128
          %280 = vsyncadd [#allocation11], %s279
          %s282 = sshll.u32 [#allocation12], 4
          %s283 = int_to_ptr.vmem [resolvable:$true] %s282
          %285 = dma.hbm_to_vmem [thread:$0]  %s4, 128, %s283, [#allocation11]
        $region28: #{classifier_forward.1} parent=11 // pred_fallthru
          _
        // Predicated region
        $region29: #{classifier_forward.1} parent=11 // pred_check
          %p286 = pneg %p155
        $region30: #{classifier_forward.1} parent=11 // pred_check_branch
          %288 = sbr.rel (%p286) target = $region32
        $region31: #{classifier_forward.1} parent=11 // pred_region
          %s290 = ssub.s32 4096, 4096
          %291 = vsyncadd [#allocation14], %s290
          %s292 = sshll.u32 [#allocation13], 4
          %s293 = int_to_ptr.vmem [resolvable:$true] %s292
          %298 = dma.hbm_to_vmem [thread:$0]  %s5, 4096, %s293, [#allocation14], 64, 64, 4
        $region32: #{classifier_forward.1} parent=11 // pred_fallthru
          _
        // Predicated region
        $region33: #{classifier_forward.1} parent=11 // pred_check
          %p299 = pneg %p176
        $region34: #{classifier_forward.1} parent=11 // pred_check_branch
          %301 = sbr.rel (%p299) target = $region36
        $region35: #{classifier_forward.1} parent=11 // pred_region
          %s303 = ssub.s32 2048, 2048
          %304 = vsyncadd [#allocation14], %s303
          %s305 = sshll.u32 [#allocation15], 4
          %s306 = int_to_ptr.vmem [resolvable:$true] %s305
          %311 = dma.hbm_to_vmem [thread:$0]  %s6, 2048, %s306, [#allocation14], 128, 128, 8
        $region36: #{classifier_forward.1} parent=11 // pred_fallthru
          _
        // Predicated region
        $region37: #{classifier_forward.1} parent=11 // pred_check
          %p312 = pneg %p197
        $region38: #{classifier_forward.1} parent=11 // pred_check_branch
          %314 = sbr.rel (%p312) target = $region40
        $region39: #{classifier_forward.1} parent=11 // pred_region
          %s316 = ssub.s32 16, 16
          %317 = vsyncadd [#allocation17], %s316
          %s319 = sshll.u32 [#allocation16], 4
          %s320 = int_to_ptr.vmem [resolvable:$true] %s319
          %322 = dma.hbm_to_vmem [thread:$0]  %s7, 16, %s320, [#allocation17]
        $region40: #{classifier_forward.1} parent=11 // pred_fallthru
          _
      $region12: #{classifier_forward.1} parent=5 // pred_fallthru
        _
      %p323 = scmp.lt.s32.totalorder %s24, 2
      // Predicated region
      $region41: #{classifier_forward.1} parent=5 // pred_check
        %p324 = pneg %p323
      $region42: #{classifier_forward.1} parent=5 // pred_check_branch
        %326 = sbr.rel (%p324) target = $region44
      $region43: #{classifier_forward.1} parent=5 // pred_region
        // Predicated region
        $region45: #{classifier_forward.1} parent=43 // pred_check
          %p327 = pneg %p44
        $region46: #{classifier_forward.1} parent=43 // pred_check_branch
          %329 = sbr.rel (%p327) target = $region48
        $region47: #{classifier_forward.1} parent=43 // pred_region
          %s330 = sand.u32 %s34, 1
          %s331 = scalar_lea.sflag [#allocation5], %s330
          %s332 = sand.u32 %s34, 1
          %s333 = smul.addr %s332, 32
          %s334 = scalar_lea.vmem [#allocation4], %s333
          %s336 = ssub.s32 512, 512
          %337 = vsyncadd %s331, %s336
          %s338 = smul.addr %s24, 4
          %s339 = smul.addr %s338, 128
          %s340 = scalar_lea.hbm %s0, %s339
          %s341 = sshll.u32 %s334, 4
          %s342 = int_to_ptr.vmem [resolvable:$true] %s341
          %347 = dma.hbm_to_vmem [thread:$0]  %s340, 512, %s342, %s331, 128, 128, 8
        $region48: #{classifier_forward.1} parent=43 // pred_fallthru
          _
      $region44: #{classifier_forward.1} parent=5 // pred_fallthru
        _
      %p348 = scmp.le.s32.totalorder 1, %s24
      %p349 = scmp.lt.s32.totalorder %s24, 3
      %p350 = pnand %p348, %p349
      %p351 = pneg %p350
      // Predicated region
      $region49: #{classifier_forward.1} parent=5 // pred_check
        _
      $region50: #{classifier_forward.1} parent=5 // pred_check_branch
        %353 = sbr.rel (%p350) target = $region52
      $region51: #{classifier_forward.1} parent=5 // pred_region
        %s354 = ssub.s32 %s24, 1
        %s355 = sand.u32 %s37, 1
        %s356 = scalar_lea.sflag [#allocation5], %s355
        %s357 = sand.u32 %s37, 1
        %s358 = smul.addr %s357, 32
        %s359 = scalar_lea.vmem [#allocation4], %s358
        // Predicated region
        $region53: #{classifier_forward.1} parent=51 // pred_check
          %p360 = pneg %p50
        $region54: #{classifier_forward.1} parent=51 // pred_check_branch
          %362 = sbr.rel (%p360) target = $region56
        $region55: #{classifier_forward.1} parent=51 // pred_region
          %363 = dma.done %s356, 512
        $region56: #{classifier_forward.1} parent=51 // pred_fallthru
          _
        // Predicated region
        $region57: #{classifier_forward.1} parent=51 // pred_check
          %p364 = pneg %p71
        $region58: #{classifier_forward.1} parent=51 // pred_check_branch
          %366 = sbr.rel (%p364) target = $region60
        $region59: #{classifier_forward.1} parent=51 // pred_region
          %367 = dma.done [#allocation8], 6656
        $region60: #{classifier_forward.1} parent=51 // pred_fallthru
          _
        // Predicated region
        $region61: #{classifier_forward.1} parent=51 // pred_check
          %p368 = pneg %p92
        $region62: #{classifier_forward.1} parent=51 // pred_check_branch
          %370 = sbr.rel (%p368) target = $region64
        $region63: #{classifier_forward.1} parent=51 // pred_region
          %371 = dma.done [#allocation8], 128
        $region64: #{classifier_forward.1} parent=51 // pred_fallthru
          _
        // Predicated region
        $region65: #{classifier_forward.1} parent=51 // pred_check
          %p372 = pneg %p113
        $region66: #{classifier_forward.1} parent=51 // pred_check_branch
          %374 = sbr.rel (%p372) target = $region68
        $region67: #{classifier_forward.1} parent=51 // pred_region
          %375 = dma.done [#allocation11], 98304
        $region68: #{classifier_forward.1} parent=51 // pred_fallthru
          _
        // Predicated region
        $region69: #{classifier_forward.1} parent=51 // pred_check
          %p376 = pneg %p134
        $region70: #{classifier_forward.1} parent=51 // pred_check_branch
          %378 = sbr.rel (%p376) target = $region72
        $region71: #{classifier_forward.1} parent=51 // pred_region
          %379 = dma.done [#allocation11], 128
        $region72: #{classifier_forward.1} parent=51 // pred_fallthru
          _
        // Predicated region
        $region73: #{classifier_forward.1} parent=51 // pred_check
          %p380 = pneg %p155
        $region74: #{classifier_forward.1} parent=51 // pred_check_branch
          %382 = sbr.rel (%p380) target = $region76
        $region75: #{classifier_forward.1} parent=51 // pred_region
          %383 = dma.done [#allocation14], 4096
        $region76: #{classifier_forward.1} parent=51 // pred_fallthru
          _
        // Predicated region
        $region77: #{classifier_forward.1} parent=51 // pred_check
          %p384 = pneg %p176
        $region78: #{classifier_forward.1} parent=51 // pred_check_branch
          %386 = sbr.rel (%p384) target = $region80
        $region79: #{classifier_forward.1} parent=51 // pred_region
          %387 = dma.done [#allocation14], 2048
        $region80: #{classifier_forward.1} parent=51 // pred_fallthru
          _
        // Predicated region
        $region81: #{classifier_forward.1} parent=51 // pred_check
          %p388 = pneg %p197
        $region82: #{classifier_forward.1} parent=51 // pred_check_branch
          %390 = sbr.rel (%p388) target = $region84
        $region83: #{classifier_forward.1} parent=51 // pred_region
          %391 = dma.done [#allocation17], 16
        $region84: #{classifier_forward.1} parent=51 // pred_fallthru
          _
        %s392 = sand.u32 %s37, 1
        %s393 = scalar_lea.sflag [#allocation5], %s392
        %s394 = sand.u32 %s37, 1
        %s395 = smul.addr %s394, 32
        %s396 = scalar_lea.vmem [#allocation4], %s395
        %p397 = pneg %p50
        %p398 = pneg %p47
        %p399 = pneg %p71
        %p400 = pneg %p68
        %p401 = pneg %p92
        %p402 = pneg %p89
        %p403 = pneg %p113
        %p404 = pneg %p110
        %p405 = pneg %p134
        %p406 = pneg %p131
        %p407 = pneg %p155
        %p408 = pneg %p152
        %p409 = pneg %p176
        %p410 = pneg %p173
        %p411 = pneg %p197
        %p412 = pneg %p194
        %p413 = pneg %p223
        %p414 = pneg %p220
        %s415 = sand.u32 %s210, 1
        %s416 = scalar_lea.sflag [#allocation6], %s415
        %s417 = sand.u32 %s210, 1
        %s418 = scalar_lea.vmem [#allocation18], %s417
        %vm420 = vcmask 273408
        %421 = vst.msk [vmem:[#allocation2] sm:$0xf] %vm420, 0
        %422 = vst.msk [vmem:[#allocation2 + $0x4] sm:$0xf] %vm420, 0
        %423 = vst.msk [vmem:[#allocation2 + $0x8] sm:$0xf] %vm420, 0
        %424 = vst.msk [vmem:[#allocation2 + $0xc] sm:$0xf] %vm420, 0
        %vm425 = vcmask 270336
        %426 = vst.msk [vmem:[#allocation2 + $0x10] sm:$0x1] %vm425, 0
        %v427 = vld [vmem:[%s359] sm:$0xff]
        %v428 = vld [vmem:[%s359 + $0x8] sm:$0xff]
        %v429 = vld [vmem:[%s359 + $0x10] sm:$0xff]
        %v430 = vld [vmem:[%s359 + $0x18] sm:$0xff]
        %v431 = vpack.c.bf16 %v428, %v427
        %v432 = vpack.c.bf16 %v430, %v429
        %v435 = vunpack.c.l.b16 %v431
        %v436 = vunpack.c.h.b16 %v431
        %v437 = vunpack.c.l.b16 %v432
        %v438 = vunpack.c.h.b16 %v432
        %v439 = vpack.c.b16 %v435, %v435
        %v440 = vpack.c.b16 %v436, %v436
        %v441 = vpack.c.b16 %v437, %v437
        %v442 = vpack.c.b16 %v438, %v438
        %vm443 = vsmask.f32 256
        %vm444 = vsmask.f32 4368
        %vm445 = vmor %vm443, %vm444
        %v447 = vshrl.u32 %v439, 16
        %v449 = vrot.slane %v447, 7
        %v450 = vshll.u32 %v439, 16
        %v452 = vor.u32 %v449, %v450
        %v453 = vrot.slane %v449, 4
        %v455 = vshrl.u32 %v440, 16
        %v457 = vrot.slane %v455, 7
        %v458 = vshll.u32 %v440, 16
        %v460 = vor.u32 %v457, %v458
        %v461 = vsel %vm445, %v453, %v460
        %v462 = vrot.slane %v457, 4
        %v464 = vshrl.u32 %v441, 16
        %v466 = vrot.slane %v464, 7
        %v467 = vshll.u32 %v441, 16
        %v469 = vor.u32 %v466, %v467
        %v470 = vsel %vm445, %v462, %v469
        %v471 = vrot.slane %v466, 4
        %v473 = vshrl.u32 %v442, 16
        %v475 = vrot.slane %v473, 7
        %v476 = vshll.u32 %v442, 16
        %v478 = vor.u32 %v475, %v476
        %v479 = vsel %vm445, %v471, %v478
        %v480 = vrot.slane %v475, 4
        %481 = vrot.lane.b32.xlu0 %v452, 1
        %v482 = vpop.permute.xlu0 %481
        %483 = vrot.lane.b32.xlu0 %v461, 1
        %v484 = vpop.permute.xlu0 %483
        %485 = vrot.lane.b32.xlu0 %v470, 1
        %v486 = vpop.permute.xlu0 %485
        %487 = vrot.lane.b32.xlu0 %v479, 1
        %v488 = vpop.permute.xlu0 %487
        %489 = vrot.lane.b32.xlu0 %v480, 1
        %v490 = vpop.permute.xlu0 %489
        %vm496 = vcmask 265224
        %vm497 = vsmask.f32 7938
        %vm498 = vmand %vm496, %vm497
        %v499 = vld [vmem:[#allocation2] sm:$0xf]
        %v500 = vsel %vm498, %v482, %v499
        %501 = vst [vmem:[#allocation2] sm:$0xf] %v500
        %vm502 = vcmask 265224
        %503 = vst.msk [vmem:[#allocation2 + $0x4] sm:$0xf] %vm502, %v484
        %504 = vst.msk [vmem:[#allocation2 + $0x8] sm:$0xf] %vm502, %v486
        %505 = vst.msk [vmem:[#allocation2 + $0xc] sm:$0xf] %vm502, %v488
        %vm506 = vcmask 262152
        %vm507 = vmand %vm506, %vm443
        %v508 = vld [vmem:[#allocation2 + $0x10] sm:$0x1]
        %v509 = vsel %vm507, %v490, %v508
        %510 = vst [vmem:[#allocation2 + $0x10] sm:$0x1] %v509
        %v511 = vld [vmem:[#allocation2] sm:$0xf]
        %v512 = vld [vmem:[#allocation2 + $0x4] sm:$0xf]
        %v513 = vld [vmem:[#allocation2 + $0x8] sm:$0xf]
        %v514 = vld [vmem:[#allocation2 + $0xc] sm:$0xf]
        %v515 = vld [vmem:[#allocation2 + $0x10] sm:$0x1]
        %v516 = vld [vmem:[#allocation2] sm:$0xe]
        %v521 = vunpack.c.l.b16 %v511
        %v522 = vunpack.c.l.b16 %v512
        %v523 = vunpack.c.l.b16 %v513
        %v524 = vunpack.c.l.b16 %v514
        %v525 = vpack.c.b16 %v522, %v521
        %v526 = vpack.c.b16 %v524, %v523
        %v528 = vunpack.c.l.b16 %v515
        %v529 = vpack.c.b16 %v528, %v528
        %vm530 = vsmask.f32 7424
        %v532 = vshrl.u32 %v525, 16
        %v534 = vshll.u32 %v525, 16
        %v536 = vrot.slane %v534, 1
        %v537 = vor.u32 %v532, %v536
        %v539 = vshll.u32 %v526, 16
        %v541 = vrot.slane %v539, 1
        %v542 = vsel %vm530, %v537, %v541
        %v543 = vshrl.u32 %v526, 16
        %v545 = vor.u32 %v543, %v541
        %v547 = vshll.u32 %v529, 16
        %v549 = vrot.slane %v547, 1
        %v550 = vsel %vm530, %v545, %v549
        %551 = vrot.lane.b32.xlu0 %v542, 34
        %v552 = vpop.permute.xlu0 %551
        %553 = vrot.lane.b32.xlu0 %v550, 34
        %v554 = vpop.permute.xlu0 %553
        %v556 = vunpack.c.l.b16 %v516
        %v557 = vpack.c.b16 %v522, %v556
        %vm558 = vcmask 1046528
        %v559 = vrot.slane %v557, 1
        %v560 = vrot.slane %v526, 1
        %v561 = vsel %vm558, %v559, %v560
        %v562 = vrot.slane %v529, 1
        %v563 = vsel %vm558, %v560, %v562
        %564 = vrot.lane.b32.xlu0 %v561, 68
        %v565 = vpop.permute.xlu0 %564
        %566 = vrot.lane.b32.xlu0 %v563, 68
        %v567 = vpop.permute.xlu0 %566
        %vm568 = vcmask 277504
        %v570 = vsel %vm568, %v525, %v552
        %v572 = vsel %vm568, %v526, %v554
        %vm573 = vcmask 556032
        %v575 = vsel %vm573, %v570, %v565
        %v577 = vsel %vm573, %v572, %v567
        %v578 = vld [vmem:[#allocation7] sm:$0xff]
        %v579 = vld [vmem:[#allocation7 + $0x8] sm:$0xff]
        %v580 = vld [vmem:[#allocation7 + $0x10] sm:$0xff]
        %v581 = vld [vmem:[#allocation7 + $0x18] sm:$0xff]
        %v582 = vld [vmem:[#allocation7 + $0x20] sm:$0xff]
        %v583 = vld [vmem:[#allocation7 + $0x28] sm:$0xff]
        %v584 = vld [vmem:[#allocation7 + $0x30] sm:$0xff]
        %v585 = vld [vmem:[#allocation7 + $0x38] sm:$0xff]
        %v586 = vld [vmem:[#allocation7 + $0x40] sm:$0xff]
        %v587 = vld [vmem:[#allocation7 + $0x48] sm:$0xff]
        %v588 = vld [vmem:[#allocation7 + $0x50] sm:$0xff]
        %v589 = vld [vmem:[#allocation7 + $0x58] sm:$0xff]
        %v590 = vld [vmem:[#allocation7 + $0x60] sm:$0xff]
        %v591 = vld [vmem:[#allocation7 + $0x68] sm:$0xff]
        %v592 = vld [vmem:[#allocation7 + $0x70] sm:$0xff]
        %v593 = vld [vmem:[#allocation7 + $0x78] sm:$0xff]
        %v594 = vld [vmem:[#allocation7 + $0x80] sm:$0xff]
        %v595 = vld [vmem:[#allocation7 + $0x88] sm:$0xff]
        %v596 = vld [vmem:[#allocation7 + $0x90] sm:$0xff]
        %v597 = vld [vmem:[#allocation7 + $0x98] sm:$0xff]
        %v598 = vld [vmem:[#allocation7 + $0xa0] sm:$0xff]
        %v599 = vld [vmem:[#allocation7 + $0xa8] sm:$0xff]
        %v600 = vld [vmem:[#allocation7 + $0xb0] sm:$0xff]
        %v601 = vld [vmem:[#allocation7 + $0xb8] sm:$0xff]
        %v602 = vld [vmem:[#allocation7 + $0xc0] sm:$0xff]
        %v603 = vld [vmem:[#allocation7 + $0xc8] sm:$0xff]
        %v604 = vld [vmem:[#allocation7 + $0xd0] sm:$0xff]
        %v605 = vld [vmem:[#allocation7 + $0xd8] sm:$0xff]
        %v606 = vld [vmem:[#allocation7 + $0xe0] sm:$0xff]
        %v607 = vld [vmem:[#allocation7 + $0xe8] sm:$0xff]
        %v608 = vld [vmem:[#allocation7 + $0xf0] sm:$0xff]
        %v609 = vld [vmem:[#allocation7 + $0xf8] sm:$0xff]
        %v610 = vld [vmem:[#allocation7 + $0x100] sm:$0xff]
        %v611 = vld [vmem:[#allocation7 + $0x108] sm:$0xff]
        %v612 = vld [vmem:[#allocation7 + $0x110] sm:$0xff]
        %v613 = vld [vmem:[#allocation7 + $0x118] sm:$0xff]
        %v614 = vld [vmem:[#allocation7 + $0x120] sm:$0xff]
        %v615 = vld [vmem:[#allocation7 + $0x128] sm:$0xff]
        %v616 = vld [vmem:[#allocation7 + $0x130] sm:$0xff]
        %v617 = vld [vmem:[#allocation7 + $0x138] sm:$0xff]
        %v618 = vld [vmem:[#allocation7 + $0x140] sm:$0xff]
        %v619 = vld [vmem:[#allocation7 + $0x148] sm:$0xff]
        %v620 = vld [vmem:[#allocation7 + $0x150] sm:$0xff]
        %v621 = vld [vmem:[#allocation7 + $0x158] sm:$0xff]
        %v622 = vld [vmem:[#allocation7 + $0x160] sm:$0xff]
        %v623 = vld [vmem:[#allocation7 + $0x168] sm:$0xff]
        %v624 = vld [vmem:[#allocation7 + $0x170] sm:$0xff]
        %v625 = vld [vmem:[#allocation7 + $0x178] sm:$0xff]
        %v626 = vld [vmem:[#allocation7 + $0x180] sm:$0x77]
        %v627 = vld [vmem:[#allocation7 + $0x188] sm:$0x77]
        %v628 = vld [vmem:[#allocation7 + $0x190] sm:$0x77]
        %v629 = vld [vmem:[#allocation7 + $0x198] sm:$0x77]
        %v630 = vld [vmem:[#allocation9] sm:$0xff]
        %v632 = vlaneseq
        %v633 = vshrl.u32 %v632, 7
        %v634 = vsub.s32 0, %v633
        %v635 = vrot.slane %v630, %v634
        %v636 = vlaneseq
        %v637 = vshrl.u32 %v636, 7
        %v638 = vsub.s32 1, %v637
        %v639 = vrot.slane %v630, %v638
        %v640 = vlaneseq
        %v641 = vshrl.u32 %v640, 7
        %v642 = vsub.s32 2, %v641
        %v643 = vrot.slane %v630, %v642
        %v644 = vlaneseq
        %v645 = vshrl.u32 %v644, 7
        %v646 = vsub.s32 3, %v645
        %v647 = vrot.slane %v630, %v646
        %v648 = vlaneseq
        %v649 = vshrl.u32 %v648, 7
        %v650 = vsub.s32 4, %v649
        %v651 = vrot.slane %v630, %v650
        %v652 = vlaneseq
        %v653 = vshrl.u32 %v652, 7
        %v654 = vsub.s32 5, %v653
        %v655 = vrot.slane %v630, %v654
        %v656 = vlaneseq
        %v657 = vshrl.u32 %v656, 7
        %v658 = vsub.s32 6, %v657
        %v659 = vrot.slane %v630, %v658
        %v660 = vlaneseq
        %v661 = vshrl.u32 %v660, 7
        %v662 = vsub.s32 7, %v661
        %v663 = vrot.slane %v630, %v662
        %v724 = vunpack.c.l.b16 %v578
        %v725 = vunpack.c.h.b16 %v578
        %v726 = vunpack.c.l.b16 %v579
        %v727 = vunpack.c.h.b16 %v579
        %v728 = vunpack.c.l.b16 %v580
        %v729 = vunpack.c.h.b16 %v580
        %v730 = vunpack.c.l.b16 %v581
        %v731 = vunpack.c.h.b16 %v581
        %v732 = vunpack.c.l.b16 %v582
        %v733 = vunpack.c.h.b16 %v582
        %v734 = vunpack.c.l.b16 %v583
        %v735 = vunpack.c.h.b16 %v583
        %v736 = vunpack.c.l.b16 %v584
        %v737 = vunpack.c.h.b16 %v584
        %v738 = vunpack.c.l.b16 %v585
        %v739 = vunpack.c.h.b16 %v585
        %v740 = vunpack.c.l.b16 %v586
        %v741 = vunpack.c.h.b16 %v586
        %v742 = vunpack.c.l.b16 %v587
        %v743 = vunpack.c.h.b16 %v587
        %v744 = vunpack.c.l.b16 %v588
        %v745 = vunpack.c.h.b16 %v588
        %v746 = vunpack.c.l.b16 %v589
        %v747 = vunpack.c.h.b16 %v589
        %v748 = vunpack.c.l.b16 %v590
        %v749 = vunpack.c.h.b16 %v590
        %v750 = vunpack.c.l.b16 %v591
        %v751 = vunpack.c.h.b16 %v591
        %v752 = vunpack.c.l.b16 %v592
        %v753 = vunpack.c.h.b16 %v592
        %v754 = vunpack.c.l.b16 %v593
        %v755 = vunpack.c.h.b16 %v593
        %v756 = vunpack.c.l.b16 %v594
        %v757 = vunpack.c.h.b16 %v594
        %v758 = vunpack.c.l.b16 %v595
        %v759 = vunpack.c.h.b16 %v595
        %v760 = vunpack.c.l.b16 %v596
        %v761 = vunpack.c.h.b16 %v596
        %v762 = vunpack.c.l.b16 %v597
        %v763 = vunpack.c.h.b16 %v597
        %v764 = vunpack.c.l.b16 %v598
        %v765 = vunpack.c.h.b16 %v598
        %v766 = vunpack.c.l.b16 %v599
        %v767 = vunpack.c.h.b16 %v599
        %v768 = vunpack.c.l.b16 %v600
        %v769 = vunpack.c.h.b16 %v600
        %v770 = vunpack.c.l.b16 %v601
        %v771 = vunpack.c.h.b16 %v601
        %v772 = vunpack.c.l.b16 %v602
        %v773 = vunpack.c.h.b16 %v602
        %v774 = vunpack.c.l.b16 %v603
        %v775 = vunpack.c.h.b16 %v603
        %v776 = vunpack.c.l.b16 %v604
        %v777 = vunpack.c.h.b16 %v604
        %v778 = vunpack.c.l.b16 %v605
        %v779 = vunpack.c.h.b16 %v605
        %v780 = vunpack.c.l.b16 %v606
        %v781 = vunpack.c.h.b16 %v606
        %v782 = vunpack.c.l.b16 %v607
        %v783 = vunpack.c.h.b16 %v607
        %v784 = vunpack.c.l.b16 %v608
        %v785 = vunpack.c.h.b16 %v608
        %v786 = vunpack.c.l.b16 %v609
        %v787 = vunpack.c.h.b16 %v609
        %v788 = vunpack.c.l.b16 %v610
        %v789 = vunpack.c.h.b16 %v610
        %v790 = vunpack.c.l.b16 %v611
        %v791 = vunpack.c.h.b16 %v611
        %v792 = vunpack.c.l.b16 %v612
        %v793 = vunpack.c.h.b16 %v612
        %v794 = vunpack.c.l.b16 %v613
        %v795 = vunpack.c.h.b16 %v613
        %v796 = vunpack.c.l.b16 %v614
        %v797 = vunpack.c.h.b16 %v614
        %v798 = vunpack.c.l.b16 %v615
        %v799 = vunpack.c.h.b16 %v615
        %v800 = vunpack.c.l.b16 %v616
        %v801 = vunpack.c.h.b16 %v616
        %v802 = vunpack.c.l.b16 %v617
        %v803 = vunpack.c.h.b16 %v617
        %v804 = vunpack.c.l.b16 %v618
        %v805 = vunpack.c.h.b16 %v618
        %v806 = vunpack.c.l.b16 %v619
        %v807 = vunpack.c.h.b16 %v619
        %v808 = vunpack.c.l.b16 %v620
        %v809 = vunpack.c.h.b16 %v620
        %v810 = vunpack.c.l.b16 %v621
        %v811 = vunpack.c.h.b16 %v621
        %v812 = vunpack.c.l.b16 %v622
        %v813 = vunpack.c.h.b16 %v622
        %v814 = vunpack.c.l.b16 %v623
        %v815 = vunpack.c.h.b16 %v623
        %v816 = vunpack.c.l.b16 %v624
        %v817 = vunpack.c.h.b16 %v624
        %v818 = vunpack.c.l.b16 %v625
        %v819 = vunpack.c.h.b16 %v625
        %v820 = vunpack.c.l.b16 %v626
        %v821 = vunpack.c.h.b16 %v626
        %v822 = vunpack.c.l.b16 %v627
        %v823 = vunpack.c.h.b16 %v627
        %v824 = vunpack.c.l.b16 %v628
        %v825 = vunpack.c.h.b16 %v628
        %v826 = vunpack.c.l.b16 %v629
        %v827 = vunpack.c.h.b16 %v629
        %v828 = vpack.c.b16 %v732, %v724
        %v829 = vpack.c.b16 %v733, %v725
        %v830 = vpack.c.b16 %v734, %v726
        %v831 = vpack.c.b16 %v735, %v727
        %v832 = vpack.c.b16 %v736, %v728
        %v833 = vpack.c.b16 %v737, %v729
        %v834 = vpack.c.b16 %v738, %v730
        %v835 = vpack.c.b16 %v739, %v731
        %v836 = vpack.c.b16 %v748, %v740
        %v837 = vpack.c.b16 %v749, %v741
        %v838 = vpack.c.b16 %v750, %v742
        %v839 = vpack.c.b16 %v751, %v743
        %v840 = vpack.c.b16 %v752, %v744
        %v841 = vpack.c.b16 %v753, %v745
        %v842 = vpack.c.b16 %v754, %v746
        %v843 = vpack.c.b16 %v755, %v747
        %v844 = vpack.c.b16 %v764, %v756
        %v845 = vpack.c.b16 %v765, %v757
        %v846 = vpack.c.b16 %v766, %v758
        %v847 = vpack.c.b16 %v767, %v759
        %v848 = vpack.c.b16 %v768, %v760
        %v849 = vpack.c.b16 %v769, %v761
        %v850 = vpack.c.b16 %v770, %v762
        %v851 = vpack.c.b16 %v771, %v763
        %v852 = vpack.c.b16 %v780, %v772
        %v853 = vpack.c.b16 %v781, %v773
        %v854 = vpack.c.b16 %v782, %v774
        %v855 = vpack.c.b16 %v783, %v775
        %v856 = vpack.c.b16 %v784, %v776
        %v857 = vpack.c.b16 %v785, %v777
        %v858 = vpack.c.b16 %v786, %v778
        %v859 = vpack.c.b16 %v787, %v779
        %v860 = vpack.c.b16 %v796, %v788
        %v861 = vpack.c.b16 %v797, %v789
        %v862 = vpack.c.b16 %v798, %v790
        %v863 = vpack.c.b16 %v799, %v791
        %v864 = vpack.c.b16 %v800, %v792
        %v865 = vpack.c.b16 %v801, %v793
        %v866 = vpack.c.b16 %v802, %v794
        %v867 = vpack.c.b16 %v803, %v795
        %v868 = vpack.c.b16 %v812, %v804
        %v869 = vpack.c.b16 %v813, %v805
        %v870 = vpack.c.b16 %v814, %v806
        %v871 = vpack.c.b16 %v815, %v807
        %v872 = vpack.c.b16 %v816, %v808
        %v873 = vpack.c.b16 %v817, %v809
        %v874 = vpack.c.b16 %v818, %v810
        %v875 = vpack.c.b16 %v819, %v811
        %v876 = vpack.c.b16 %v820, %v820
        %v877 = vpack.c.b16 %v821, %v821
        %v878 = vpack.c.b16 %v822, %v822
        %v879 = vpack.c.b16 %v823, %v823
        %v880 = vpack.c.b16 %v824, %v824
        %v881 = vpack.c.b16 %v825, %v825
        %v882 = vpack.c.b16 %v826, %v826
        %v883 = vpack.c.b16 %v827, %v827
        %vm932 = vcmask 834560
        %v933 = vsel %vm932, %v575, 0
        %v935 = vsel %vm932, %v577, 0
        %vm937 = vcmask 1042432
        %v939 = vsel %vm937, %v876, 0
        %v942 = vsel %vm937, %v877, 0
        %v945 = vsel %vm937, %v878, 0
        %v948 = vsel %vm937, %v879, 0
        %v951 = vsel %vm937, %v880, 0
        %v954 = vsel %vm937, %v881, 0
        %v957 = vsel %vm937, %v882, 0
        %v960 = vsel %vm937, %v883, 0
        %962 = vmatprep.subr.bf16.mxu0 %v829
        %963 = vmatpush1.bf16.msra.mxu0 %v828
        %964 = vmatprep.subr.bf16.mxu0 %v837
        %965 = vmatpush1.bf16.msra.mxu0 %v836
        %966 = vmatprep.subr.bf16.mxu0 %v845
        %967 = vmatpush1.bf16.msra.mxu0 %v844
        %968 = vmatprep.subr.bf16.mxu0 %v853
        %969 = vmatpush1.bf16.msra.mxu0 %v852
        %970 = vmatprep.subr.bf16.mxu0 %v861
        %971 = vmatpush1.bf16.msra.mxu0 %v860
        %972 = vmatprep.subr.bf16.mxu0 %v869
        %973 = vmatpush1.bf16.msra.mxu0 %v868
        %974 = vmatprep.subr.bf16.mxu0 %v942
        %975 = vmatpush1.bf16.msra.mxu0 %v939
        %976 = vmatprep.subr.bf16.mxu0 0
        %977 = vmatpush1.bf16.msra.mxu0 0
        %978 = vmatprep.subr.bf16.mxu0 0
        %979 = vmatpush1.bf16.msra.mxu0 0
        %980 = vmatprep.subr.bf16.mxu0 0
        %981 = vmatpush1.bf16.msra.mxu0 0
        %982 = vmatprep.subr.bf16.mxu0 0
        %983 = vmatpush1.bf16.msra.mxu0 0
        %984 = vmatprep.subr.bf16.mxu0 0
        %985 = vmatpush1.bf16.msra.mxu0 0
        %986 = vmatprep.subr.bf16.mxu0 0
        %987 = vmatpush1.bf16.msra.mxu0 0
        %988 = vmatprep.subr.bf16.mxu0 0
        %989 = vmatpush1.bf16.msra.mxu0 0
        %990 = vmatprep.subr.bf16.mxu0 0
        %991 = vmatpush1.bf16.msra.mxu0 0
        %992 = vmatprep.subr.bf16.mxu0 0
        %993 = vmatpush1.bf16.msra.mxu0 0
        %994 = vmatprep.mubr.bf16.mxu0 0
        %995 = vmatmul.mubr.bf16.gmra.mrb[0].mxu0 %v933
        %v996 = vpop.f32.mrb[0].mxu0
        %v997 = vadd.f32 %v635, %v996
        %v998 = vpop.f32.mrb[0].mxu0
        %v999 = vadd.f32 %v639, %v998
        %v1000 = vpop.f32.mrb[0].mxu0
        %v1001 = vadd.f32 %v635, %v1000
        %v1002 = vpop.f32.mrb[0].mxu0
        %v1003 = vadd.f32 %v639, %v1002
        %1004 = vmatprep.mubr.bf16.mxu0 0
        %1005 = vmatmul.mubr.bf16.gmra.mrb[0].mxu0 %v935
        %v1006 = vpop.f32.mrb[0].mxu0
        %v1007 = vadd.f32 %v635, %v1006
        %v1008 = vpop.f32.mrb[0].mxu0
        %v1009 = vadd.f32 %v639, %v1008
        %v1010 = vpop.f32.mrb[0].mxu0
        %v1011 = vadd.f32 %v635, %v1010
        %v1012 = vpop.f32.mrb[0].mxu0
        %v1013 = vadd.f32 %v639, %v1012
        %1014 = vdwg.mxu0
        %1015 = vmatprep.subr.bf16.mxu0 %v831
        %1016 = vmatpush1.bf16.msra.mxu0 %v830
        %1017 = vmatprep.subr.bf16.mxu0 %v839
        %1018 = vmatpush1.bf16.msra.mxu0 %v838
        %1019 = vmatprep.subr.bf16.mxu0 %v847
        %1020 = vmatpush1.bf16.msra.mxu0 %v846
        %1021 = vmatprep.subr.bf16.mxu0 %v855
        %1022 = vmatpush1.bf16.msra.mxu0 %v854
        %1023 = vmatprep.subr.bf16.mxu0 %v863
        %1024 = vmatpush1.bf16.msra.mxu0 %v862
        %1025 = vmatprep.subr.bf16.mxu0 %v871
        %1026 = vmatpush1.bf16.msra.mxu0 %v870
        %1027 = vmatprep.subr.bf16.mxu0 %v948
        %1028 = vmatpush1.bf16.msra.mxu0 %v945
        %1029 = vmatprep.subr.bf16.mxu0 0
        %1030 = vmatpush1.bf16.msra.mxu0 0
        %1031 = vmatprep.subr.bf16.mxu0 0
        %1032 = vmatpush1.bf16.msra.mxu0 0
        %1033 = vmatprep.subr.bf16.mxu0 0
        %1034 = vmatpush1.bf16.msra.mxu0 0
        %1035 = vmatprep.subr.bf16.mxu0 0
        %1036 = vmatpush1.bf16.msra.mxu0 0
        %1037 = vmatprep.subr.bf16.mxu0 0
        %1038 = vmatpush1.bf16.msra.mxu0 0
        %1039 = vmatprep.subr.bf16.mxu0 0
        %1040 = vmatpush1.bf16.msra.mxu0 0
        %1041 = vmatprep.subr.bf16.mxu0 0
        %1042 = vmatpush1.bf16.msra.mxu0 0
        %1043 = vmatprep.subr.bf16.mxu0 0
        %1044 = vmatpush1.bf16.msra.mxu0 0
        %1045 = vmatprep.subr.bf16.mxu0 0
        %1046 = vmatpush1.bf16.msra.mxu0 0
        %1047 = vmatprep.mubr.bf16.mxu0 0
        %1048 = vmatmul.mubr.bf16.gmra.mrb[0].mxu0 %v933
        %v1049 = vpop.f32.mrb[0].mxu0
        %v1050 = vadd.f32 %v643, %v1049
        %v1051 = vpop.f32.mrb[0].mxu0
        %v1052 = vadd.f32 %v647, %v1051
        %v1053 = vpop.f32.mrb[0].mxu0
        %v1054 = vadd.f32 %v643, %v1053
        %v1055 = vpop.f32.mrb[0].mxu0
        %v1056 = vadd.f32 %v647, %v1055
        %1057 = vmatprep.mubr.bf16.mxu0 0
        %1058 = vmatmul.mubr.bf16.gmra.mrb[0].mxu0 %v935
        %v1059 = vpop.f32.mrb[0].mxu0
        %v1060 = vadd.f32 %v643, %v1059
        %v1061 = vpop.f32.mrb[0].mxu0
        %v1062 = vadd.f32 %v647, %v1061
        %v1063 = vpop.f32.mrb[0].mxu0
        %v1064 = vadd.f32 %v643, %v1063
        %v1065 = vpop.f32.mrb[0].mxu0
        %v1066 = vadd.f32 %v647, %v1065
        %1067 = vdwg.mxu0
        %1068 = vmatprep.subr.bf16.mxu0 %v833
        %1069 = vmatpush1.bf16.msra.mxu0 %v832
        %1070 = vmatprep.subr.bf16.mxu0 %v841
        %1071 = vmatpush1.bf16.msra.mxu0 %v840
        %1072 = vmatprep.subr.bf16.mxu0 %v849
        %1073 = vmatpush1.bf16.msra.mxu0 %v848
        %1074 = vmatprep.subr.bf16.mxu0 %v857
        %1075 = vmatpush1.bf16.msra.mxu0 %v856
        %1076 = vmatprep.subr.bf16.mxu0 %v865
        %1077 = vmatpush1.bf16.msra.mxu0 %v864
        %1078 = vmatprep.subr.bf16.mxu0 %v873
        %1079 = vmatpush1.bf16.msra.mxu0 %v872
        %1080 = vmatprep.subr.bf16.mxu0 %v954
        %1081 = vmatpush1.bf16.msra.mxu0 %v951
        %1082 = vmatprep.subr.bf16.mxu0 0
        %1083 = vmatpush1.bf16.msra.mxu0 0
        %1084 = vmatprep.subr.bf16.mxu0 0
        %1085 = vmatpush1.bf16.msra.mxu0 0
        %1086 = vmatprep.subr.bf16.mxu0 0
        %1087 = vmatpush1.bf16.msra.mxu0 0
        %1088 = vmatprep.subr.bf16.mxu0 0
        %1089 = vmatpush1.bf16.msra.mxu0 0
        %1090 = vmatprep.subr.bf16.mxu0 0
        %1091 = vmatpush1.bf16.msra.mxu0 0
        %1092 = vmatprep.subr.bf16.mxu0 0
        %1093 = vmatpush1.bf16.msra.mxu0 0
        %1094 = vmatprep.subr.bf16.mxu0 0
        %1095 = vmatpush1.bf16.msra.mxu0 0
        %1096 = vmatprep.subr.bf16.mxu0 0
        %1097 = vmatpush1.bf16.msra.mxu0 0
        %1098 = vmatprep.subr.bf16.mxu0 0
        %1099 = vmatpush1.bf16.msra.mxu0 0
        %1100 = vmatprep.mubr.bf16.mxu0 0
        %1101 = vmatmul.mubr.bf16.gmra.mrb[0].mxu0 %v933
        %v1102 = vpop.f32.mrb[0].mxu0
        %v1103 = vadd.f32 %v651, %v1102
        %v1104 = vpop.f32.mrb[0].mxu0
        %v1105 = vadd.f32 %v655, %v1104
        %v1106 = vpop.f32.mrb[0].mxu0
        %v1107 = vadd.f32 %v651, %v1106
        %v1108 = vpop.f32.mrb[0].mxu0
        %v1109 = vadd.f32 %v655, %v1108
        %1110 = vmatprep.mubr.bf16.mxu0 0
        %1111 = vmatmul.mubr.bf16.gmra.mrb[0].mxu0 %v935
        %v1112 = vpop.f32.mrb[0].mxu0
        %v1113 = vadd.f32 %v651, %v1112
        %v1114 = vpop.f32.mrb[0].mxu0
        %v1115 = vadd.f32 %v655, %v1114
        %v1116 = vpop.f32.mrb[0].mxu0
        %v1117 = vadd.f32 %v651, %v1116
        %v1118 = vpop.f32.mrb[0].mxu0
        %v1119 = vadd.f32 %v655, %v1118
        %1120 = vdwg.mxu0
        %1121 = vmatprep.subr.bf16.mxu0 %v835
        %1122 = vmatpush1.bf16.msra.mxu0 %v834
        %1123 = vmatprep.subr.bf16.mxu0 %v843
        %1124 = vmatpush1.bf16.msra.mxu0 %v842
        %1125 = vmatprep.subr.bf16.mxu0 %v851
        %1126 = vmatpush1.bf16.msra.mxu0 %v850
        %1127 = vmatprep.subr.bf16.mxu0 %v859
        %1128 = vmatpush1.bf16.msra.mxu0 %v858
        %1129 = vmatprep.subr.bf16.mxu0 %v867
        %1130 = vmatpush1.bf16.msra.mxu0 %v866
        %1131 = vmatprep.subr.bf16.mxu0 %v875
        %1132 = vmatpush1.bf16.msra.mxu0 %v874
        %1133 = vmatprep.subr.bf16.mxu0 %v960
        %1134 = vmatpush1.bf16.msra.mxu0 %v957
        %1135 = vmatprep.subr.bf16.mxu0 0
        %1136 = vmatpush1.bf16.msra.mxu0 0
        %1137 = vmatprep.subr.bf16.mxu0 0
        %1138 = vmatpush1.bf16.msra.mxu0 0
        %1139 = vmatprep.subr.bf16.mxu0 0
        %1140 = vmatpush1.bf16.msra.mxu0 0
        %1141 = vmatprep.subr.bf16.mxu0 0
        %1142 = vmatpush1.bf16.msra.mxu0 0
        %1143 = vmatprep.subr.bf16.mxu0 0
        %1144 = vmatpush1.bf16.msra.mxu0 0
        %1145 = vmatprep.subr.bf16.mxu0 0
        %1146 = vmatpush1.bf16.msra.mxu0 0
        %1147 = vmatprep.subr.bf16.mxu0 0
        %1148 = vmatpush1.bf16.msra.mxu0 0
        %1149 = vmatprep.subr.bf16.mxu0 0
        %1150 = vmatpush1.bf16.msra.mxu0 0
        %1151 = vmatprep.subr.bf16.mxu0 0
        %1152 = vmatpush1.bf16.msra.mxu0 0
        %1153 = vmatprep.mubr.bf16.mxu0 0
        %1154 = vmatmul.mubr.bf16.gmra.mrb[0].mxu0 %v933
        %v1155 = vpop.f32.mrb[0].mxu0
        %v1156 = vadd.f32 %v659, %v1155
        %v1157 = vpop.f32.mrb[0].mxu0
        %v1158 = vadd.f32 %v663, %v1157
        %v1159 = vpop.f32.mrb[0].mxu0
        %v1160 = vadd.f32 %v659, %v1159
        %v1161 = vpop.f32.mrb[0].mxu0
        %v1162 = vadd.f32 %v663, %v1161
        %1163 = vmatprep.mubr.bf16.mxu0 0
        %1164 = vmatmul.mubr.bf16.gmra.mrb[0].mxu0 %v935
        %v1165 = vpop.f32.mrb[0].mxu0
        %v1166 = vadd.f32 %v659, %v1165
        %v1167 = vpop.f32.mrb[0].mxu0
        %v1168 = vadd.f32 %v663, %v1167
        %v1169 = vpop.f32.mrb[0].mxu0
        %v1170 = vadd.f32 %v659, %v1169
        %v1171 = vpop.f32.mrb[0].mxu0
        %v1172 = vadd.f32 %v663, %v1171
        %1173 = vdwg.mxu0
        %v1174 = vmax.f32 %v997, 0.0
        %v1175 = vmax.f32 %v999, 0.0
        %v1176 = vmax.f32 %v1050, 0.0
        %v1177 = vmax.f32 %v1052, 0.0
        %v1178 = vmax.f32 %v1103, 0.0
        %v1179 = vmax.f32 %v1105, 0.0
        %v1180 = vmax.f32 %v1156, 0.0
        %v1181 = vmax.f32 %v1158, 0.0
        %v1182 = vmax.f32 %v1001, 0.0
        %v1183 = vmax.f32 %v1003, 0.0
        %v1184 = vmax.f32 %v1054, 0.0
        %v1185 = vmax.f32 %v1056, 0.0
        %v1186 = vmax.f32 %v1107, 0.0
        %v1187 = vmax.f32 %v1109, 0.0
        %v1188 = vmax.f32 %v1160, 0.0
        %v1189 = vmax.f32 %v1162, 0.0
        %v1190 = vmax.f32 %v1007, 0.0
        %v1191 = vmax.f32 %v1009, 0.0
        %v1192 = vmax.f32 %v1060, 0.0
        %v1193 = vmax.f32 %v1062, 0.0
        %v1194 = vmax.f32 %v1113, 0.0
        %v1195 = vmax.f32 %v1115, 0.0
        %v1196 = vmax.f32 %v1166, 0.0
        %v1197 = vmax.f32 %v1168, 0.0
        %v1198 = vmax.f32 %v1011, 0.0
        %v1199 = vmax.f32 %v1013, 0.0
        %v1200 = vmax.f32 %v1064, 0.0
        %v1201 = vmax.f32 %v1066, 0.0
        %v1202 = vmax.f32 %v1117, 0.0
        %v1203 = vmax.f32 %v1119, 0.0
        %v1204 = vmax.f32 %v1170, 0.0
        %v1205 = vmax.f32 %v1172, 0.0
        %v1238 = vcombine.low %v1174, %v1175
        %v1239 = vcombine.high %v1174, %v1175
        %v1240 = vcombine.low %v1176, %v1177
        %v1241 = vcombine.high %v1176, %v1177
        %v1243 = vunpack.c.l.s4 1983009808
        %v1244 = vunpack.c.0.s8 %v1243
        %v1245 = vlaneseq
        %v1246 = vshrl.u32 %v1245, 7
        %v1247 = vsub.s32 %v1244, %v1246
        %v1248 = vrot.slane %v1238, %v1247
        %v1250 = vunpack.c.l.s4 1983009808
        %v1251 = vunpack.c.0.s8 %v1250
        %v1252 = vlaneseq
        %v1253 = vshrl.u32 %v1252, 7
        %v1254 = vsub.s32 %v1251, %v1253
        %v1255 = vrot.slane %v1239, %v1254
        %v1257 = vunpack.c.l.s4 1983009808
        %v1258 = vunpack.c.0.s8 %v1257
        %v1259 = vlaneseq
        %v1260 = vshrl.u32 %v1259, 7
        %v1261 = vsub.s32 %v1258, %v1260
        %v1262 = vrot.slane %v1240, %v1261
        %v1264 = vunpack.c.l.s4 1983009808
        %v1265 = vunpack.c.0.s8 %v1264
        %v1266 = vlaneseq
        %v1267 = vshrl.u32 %v1266, 7
        %v1268 = vsub.s32 %v1265, %v1267
        %v1269 = vrot.slane %v1241, %v1268
        %v1270 = vcombine.low %v1248, %v1262
        %v1271 = vcombine.high %v1248, %v1262
        %v1272 = vcombine.low %v1255, %v1269
        %v1273 = vcombine.high %v1255, %v1269
        %v1274 = vcombine.low %v1178, %v1179
        %v1275 = vcombine.high %v1178, %v1179
        %v1276 = vcombine.low %v1180, %v1181
        %v1277 = vcombine.high %v1180, %v1181
        %v1279 = vunpack.c.l.s4 1983009808
        %v1280 = vunpack.c.0.s8 %v1279
        %v1281 = vlaneseq
        %v1282 = vshrl.u32 %v1281, 7
        %v1283 = vsub.s32 %v1280, %v1282
        %v1284 = vrot.slane %v1274, %v1283
        %v1286 = vunpack.c.l.s4 1983009808
        %v1287 = vunpack.c.0.s8 %v1286
        %v1288 = vlaneseq
        %v1289 = vshrl.u32 %v1288, 7
        %v1290 = vsub.s32 %v1287, %v1289
        %v1291 = vrot.slane %v1275, %v1290
        %v1293 = vunpack.c.l.s4 1983009808
        %v1294 = vunpack.c.0.s8 %v1293
        %v1295 = vlaneseq
        %v1296 = vshrl.u32 %v1295, 7
        %v1297 = vsub.s32 %v1294, %v1296
        %v1298 = vrot.slane %v1276, %v1297
        %v1300 = vunpack.c.l.s4 1983009808
        %v1301 = vunpack.c.0.s8 %v1300
        %v1302 = vlaneseq
        %v1303 = vshrl.u32 %v1302, 7
        %v1304 = vsub.s32 %v1301, %v1303
        %v1305 = vrot.slane %v1277, %v1304
        %v1306 = vcombine.low %v1284, %v1298
        %v1307 = vcombine.high %v1284, %v1298
        %v1308 = vcombine.low %v1291, %v1305
        %v1309 = vcombine.high %v1291, %v1305
        %v1310 = vcombine.low %v1182, %v1183
        %v1311 = vcombine.high %v1182, %v1183
        %v1312 = vcombine.low %v1184, %v1185
        %v1313 = vcombine.high %v1184, %v1185
        %v1315 = vunpack.c.l.s4 1983009808
        %v1316 = vunpack.c.0.s8 %v1315
        %v1317 = vlaneseq
        %v1318 = vshrl.u32 %v1317, 7
        %v1319 = vsub.s32 %v1316, %v1318
        %v1320 = vrot.slane %v1310, %v1319
        %v1322 = vunpack.c.l.s4 1983009808
        %v1323 = vunpack.c.0.s8 %v1322
        %v1324 = vlaneseq
        %v1325 = vshrl.u32 %v1324, 7
        %v1326 = vsub.s32 %v1323, %v1325
        %v1327 = vrot.slane %v1311, %v1326
        %v1329 = vunpack.c.l.s4 1983009808
        %v1330 = vunpack.c.0.s8 %v1329
        %v1331 = vlaneseq
        %v1332 = vshrl.u32 %v1331, 7
        %v1333 = vsub.s32 %v1330, %v1332
        %v1334 = vrot.slane %v1312, %v1333
        %v1336 = vunpack.c.l.s4 1983009808
        %v1337 = vunpack.c.0.s8 %v1336
        %v1338 = vlaneseq
        %v1339 = vshrl.u32 %v1338, 7
        %v1340 = vsub.s32 %v1337, %v1339
        %v1341 = vrot.slane %v1313, %v1340
        %v1342 = vcombine.low %v1320, %v1334
        %v1343 = vcombine.high %v1320, %v1334
        %v1344 = vcombine.low %v1327, %v1341
        %v1345 = vcombine.high %v1327, %v1341
        %v1346 = vcombine.low %v1186, %v1187
        %v1347 = vcombine.high %v1186, %v1187
        %v1348 = vcombine.low %v1188, %v1189
        %v1349 = vcombine.high %v1188, %v1189
        %v1351 = vunpack.c.l.s4 1983009808
        %v1352 = vunpack.c.0.s8 %v1351
        %v1353 = vlaneseq
        %v1354 = vshrl.u32 %v1353, 7
        %v1355 = vsub.s32 %v1352, %v1354
        %v1356 = vrot.slane %v1346, %v1355
        %v1358 = vunpack.c.l.s4 1983009808
        %v1359 = vunpack.c.0.s8 %v1358
        %v1360 = vlaneseq
        %v1361 = vshrl.u32 %v1360, 7
        %v1362 = vsub.s32 %v1359, %v1361
        %v1363 = vrot.slane %v1347, %v1362
        %v1365 = vunpack.c.l.s4 1983009808
        %v1366 = vunpack.c.0.s8 %v1365
        %v1367 = vlaneseq
        %v1368 = vshrl.u32 %v1367, 7
        %v1369 = vsub.s32 %v1366, %v1368
        %v1370 = vrot.slane %v1348, %v1369
        %v1372 = vunpack.c.l.s4 1983009808
        %v1373 = vunpack.c.0.s8 %v1372
        %v1374 = vlaneseq
        %v1375 = vshrl.u32 %v1374, 7
        %v1376 = vsub.s32 %v1373, %v1375
        %v1377 = vrot.slane %v1349, %v1376
        %v1378 = vcombine.low %v1356, %v1370
        %v1379 = vcombine.high %v1356, %v1370
        %v1380 = vcombine.low %v1363, %v1377
        %v1381 = vcombine.high %v1363, %v1377
        %v1382 = vcombine.low %v1190, %v1191
        %v1383 = vcombine.high %v1190, %v1191
        %v1384 = vcombine.low %v1192, %v1193
        %v1385 = vcombine.high %v1192, %v1193
        %v1387 = vunpack.c.l.s4 1983009808
        %v1388 = vunpack.c.0.s8 %v1387
        %v1389 = vlaneseq
        %v1390 = vshrl.u32 %v1389, 7
        %v1391 = vsub.s32 %v1388, %v1390
        %v1392 = vrot.slane %v1382, %v1391
        %v1394 = vunpack.c.l.s4 1983009808
        %v1395 = vunpack.c.0.s8 %v1394
        %v1396 = vlaneseq
        %v1397 = vshrl.u32 %v1396, 7
        %v1398 = vsub.s32 %v1395, %v1397
        %v1399 = vrot.slane %v1383, %v1398
        %v1401 = vunpack.c.l.s4 1983009808
        %v1402 = vunpack.c.0.s8 %v1401
        %v1403 = vlaneseq
        %v1404 = vshrl.u32 %v1403, 7
        %v1405 = vsub.s32 %v1402, %v1404
        %v1406 = vrot.slane %v1384, %v1405
        %v1408 = vunpack.c.l.s4 1983009808
        %v1409 = vunpack.c.0.s8 %v1408
        %v1410 = vlaneseq
        %v1411 = vshrl.u32 %v1410, 7
        %v1412 = vsub.s32 %v1409, %v1411
        %v1413 = vrot.slane %v1385, %v1412
        %v1414 = vcombine.low %v1392, %v1406
        %v1415 = vcombine.high %v1392, %v1406
        %v1416 = vcombine.low %v1399, %v1413
        %v1417 = vcombine.high %v1399, %v1413
        %v1418 = vcombine.low %v1194, %v1195
        %v1419 = vcombine.high %v1194, %v1195
        %v1420 = vcombine.low %v1196, %v1197
        %v1421 = vcombine.high %v1196, %v1197
        %v1423 = vunpack.c.l.s4 1983009808
        %v1424 = vunpack.c.0.s8 %v1423
        %v1425 = vlaneseq
        %v1426 = vshrl.u32 %v1425, 7
        %v1427 = vsub.s32 %v1424, %v1426
        %v1428 = vrot.slane %v1418, %v1427
        %v1430 = vunpack.c.l.s4 1983009808
        %v1431 = vunpack.c.0.s8 %v1430
        %v1432 = vlaneseq
        %v1433 = vshrl.u32 %v1432, 7
        %v1434 = vsub.s32 %v1431, %v1433
        %v1435 = vrot.slane %v1419, %v1434
        %v1437 = vunpack.c.l.s4 1983009808
        %v1438 = vunpack.c.0.s8 %v1437
        %v1439 = vlaneseq
        %v1440 = vshrl.u32 %v1439, 7
        %v1441 = vsub.s32 %v1438, %v1440
        %v1442 = vrot.slane %v1420, %v1441
        %v1444 = vunpack.c.l.s4 1983009808
        %v1445 = vunpack.c.0.s8 %v1444
        %v1446 = vlaneseq
        %v1447 = vshrl.u32 %v1446, 7
        %v1448 = vsub.s32 %v1445, %v1447
        %v1449 = vrot.slane %v1421, %v1448
        %v1450 = vcombine.low %v1428, %v1442
        %v1451 = vcombine.high %v1428, %v1442
        %v1452 = vcombine.low %v1435, %v1449
        %v1453 = vcombine.high %v1435, %v1449
        %v1454 = vcombine.low %v1198, %v1199
        %v1455 = vcombine.high %v1198, %v1199
        %v1456 = vcombine.low %v1200, %v1201
        %v1457 = vcombine.high %v1200, %v1201
        %v1459 = vunpack.c.l.s4 1983009808
        %v1460 = vunpack.c.0.s8 %v1459
        %v1461 = vlaneseq
        %v1462 = vshrl.u32 %v1461, 7
        %v1463 = vsub.s32 %v1460, %v1462
        %v1464 = vrot.slane %v1454, %v1463
        %v1466 = vunpack.c.l.s4 1983009808
        %v1467 = vunpack.c.0.s8 %v1466
        %v1468 = vlaneseq
        %v1469 = vshrl.u32 %v1468, 7
        %v1470 = vsub.s32 %v1467, %v1469
        %v1471 = vrot.slane %v1455, %v1470
        %v1473 = vunpack.c.l.s4 1983009808
        %v1474 = vunpack.c.0.s8 %v1473
        %v1475 = vlaneseq
        %v1476 = vshrl.u32 %v1475, 7
        %v1477 = vsub.s32 %v1474, %v1476
        %v1478 = vrot.slane %v1456, %v1477
        %v1480 = vunpack.c.l.s4 1983009808
        %v1481 = vunpack.c.0.s8 %v1480
        %v1482 = vlaneseq
        %v1483 = vshrl.u32 %v1482, 7
        %v1484 = vsub.s32 %v1481, %v1483
        %v1485 = vrot.slane %v1457, %v1484
        %v1486 = vcombine.low %v1464, %v1478
        %v1487 = vcombine.high %v1464, %v1478
        %v1488 = vcombine.low %v1471, %v1485
        %v1489 = vcombine.high %v1471, %v1485
        %v1490 = vcombine.low %v1202, %v1203
        %v1491 = vcombine.high %v1202, %v1203
        %v1492 = vcombine.low %v1204, %v1205
        %v1493 = vcombine.high %v1204, %v1205
        %v1495 = vunpack.c.l.s4 1983009808
        %v1496 = vunpack.c.0.s8 %v1495
        %v1497 = vlaneseq
        %v1498 = vshrl.u32 %v1497, 7
        %v1499 = vsub.s32 %v1496, %v1498
        %v1500 = vrot.slane %v1490, %v1499
        %v1502 = vunpack.c.l.s4 1983009808
        %v1503 = vunpack.c.0.s8 %v1502
        %v1504 = vlaneseq
        %v1505 = vshrl.u32 %v1504, 7
        %v1506 = vsub.s32 %v1503, %v1505
        %v1507 = vrot.slane %v1491, %v1506
        %v1509 = vunpack.c.l.s4 1983009808
        %v1510 = vunpack.c.0.s8 %v1509
        %v1511 = vlaneseq
        %v1512 = vshrl.u32 %v1511, 7
        %v1513 = vsub.s32 %v1510, %v1512
        %v1514 = vrot.slane %v1492, %v1513
        %v1516 = vunpack.c.l.s4 1983009808
        %v1517 = vunpack.c.0.s8 %v1516
        %v1518 = vlaneseq
        %v1519 = vshrl.u32 %v1518, 7
        %v1520 = vsub.s32 %v1517, %v1519
        %v1521 = vrot.slane %v1493, %v1520
        %v1522 = vcombine.low %v1500, %v1514
        %v1523 = vcombine.high %v1500, %v1514
        %v1524 = vcombine.low %v1507, %v1521
        %v1525 = vcombine.high %v1507, %v1521
        %v1526 = vcombine.high %v1270, %v1270
        %v1528 = vunpack.c.l.s4 1983009808
        %v1529 = vunpack.c.0.s8 %v1528
        %v1530 = vlaneseq
        %v1531 = vshrl.u32 %v1530, 7
        %v1532 = vsub.s32 %v1529, %v1531
        %v1533 = vrot.slane %v1270, %v1532
        %v1535 = vunpack.c.l.s4 1983009808
        %v1536 = vunpack.c.0.s8 %v1535
        %v1537 = vlaneseq
        %v1538 = vshrl.u32 %v1537, 7
        %v1539 = vsub.s32 %v1536, %v1538
        %v1540 = vrot.slane %v1526, %v1539
        %v1541 = vcombine.high %v1533, %v1533
        %v1542 = vcombine.high %v1540, %v1540
        %v1543 = vcombine.high %v1306, %v1306
        %v1545 = vunpack.c.l.s4 1983009808
        %v1546 = vunpack.c.0.s8 %v1545
        %v1547 = vlaneseq
        %v1548 = vshrl.u32 %v1547, 7
        %v1549 = vsub.s32 %v1546, %v1548
        %v1550 = vrot.slane %v1306, %v1549
        %v1552 = vunpack.c.l.s4 1983009808
        %v1553 = vunpack.c.0.s8 %v1552
        %v1554 = vlaneseq
        %v1555 = vshrl.u32 %v1554, 7
        %v1556 = vsub.s32 %v1553, %v1555
        %v1557 = vrot.slane %v1543, %v1556
        %v1558 = vcombine.high %v1550, %v1550
        %v1559 = vcombine.high %v1557, %v1557
        %v1560 = vcombine.high %v1271, %v1271
        %v1562 = vunpack.c.l.s4 1983009808
        %v1563 = vunpack.c.0.s8 %v1562
        %v1564 = vlaneseq
        %v1565 = vshrl.u32 %v1564, 7
        %v1566 = vsub.s32 %v1563, %v1565
        %v1567 = vrot.slane %v1271, %v1566
        %v1569 = vunpack.c.l.s4 1983009808
        %v1570 = vunpack.c.0.s8 %v1569
        %v1571 = vlaneseq
        %v1572 = vshrl.u32 %v1571, 7
        %v1573 = vsub.s32 %v1570, %v1572
        %v1574 = vrot.slane %v1560, %v1573
        %v1575 = vcombine.high %v1567, %v1567
        %v1576 = vcombine.high %v1574, %v1574
        %v1577 = vcombine.high %v1307, %v1307
        %v1579 = vunpack.c.l.s4 1983009808
        %v1580 = vunpack.c.0.s8 %v1579
        %v1581 = vlaneseq
        %v1582 = vshrl.u32 %v1581, 7
        %v1583 = vsub.s32 %v1580, %v1582
        %v1584 = vrot.slane %v1307, %v1583
        %v1586 = vunpack.c.l.s4 1983009808
        %v1587 = vunpack.c.0.s8 %v1586
        %v1588 = vlaneseq
        %v1589 = vshrl.u32 %v1588, 7
        %v1590 = vsub.s32 %v1587, %v1589
        %v1591 = vrot.slane %v1577, %v1590
        %v1592 = vcombine.high %v1584, %v1584
        %v1593 = vcombine.high %v1591, %v1591
        %v1594 = vcombine.high %v1272, %v1272
        %v1596 = vunpack.c.l.s4 1983009808
        %v1597 = vunpack.c.0.s8 %v1596
        %v1598 = vlaneseq
        %v1599 = vshrl.u32 %v1598, 7
        %v1600 = vsub.s32 %v1597, %v1599
        %v1601 = vrot.slane %v1272, %v1600
        %v1603 = vunpack.c.l.s4 1983009808
        %v1604 = vunpack.c.0.s8 %v1603
        %v1605 = vlaneseq
        %v1606 = vshrl.u32 %v1605, 7
        %v1607 = vsub.s32 %v1604, %v1606
        %v1608 = vrot.slane %v1594, %v1607
        %v1609 = vcombine.high %v1601, %v1601
        %v1610 = vcombine.high %v1608, %v1608
        %v1611 = vcombine.high %v1308, %v1308
        %v1613 = vunpack.c.l.s4 1983009808
        %v1614 = vunpack.c.0.s8 %v1613
        %v1615 = vlaneseq
        %v1616 = vshrl.u32 %v1615, 7
        %v1617 = vsub.s32 %v1614, %v1616
        %v1618 = vrot.slane %v1308, %v1617
        %v1620 = vunpack.c.l.s4 1983009808
        %v1621 = vunpack.c.0.s8 %v1620
        %v1622 = vlaneseq
        %v1623 = vshrl.u32 %v1622, 7
        %v1624 = vsub.s32 %v1621, %v1623
        %v1625 = vrot.slane %v1611, %v1624
        %v1626 = vcombine.high %v1618, %v1618
        %v1627 = vcombine.high %v1625, %v1625
        %v1628 = vcombine.high %v1273, %v1273
        %v1630 = vunpack.c.l.s4 1983009808
        %v1631 = vunpack.c.0.s8 %v1630
        %v1632 = vlaneseq
        %v1633 = vshrl.u32 %v1632, 7
        %v1634 = vsub.s32 %v1631, %v1633
        %v1635 = vrot.slane %v1273, %v1634
        %v1637 = vunpack.c.l.s4 1983009808
        %v1638 = vunpack.c.0.s8 %v1637
        %v1639 = vlaneseq
        %v1640 = vshrl.u32 %v1639, 7
        %v1641 = vsub.s32 %v1638, %v1640
        %v1642 = vrot.slane %v1628, %v1641
        %v1643 = vcombine.high %v1635, %v1635
        %v1644 = vcombine.high %v1642, %v1642
        %v1645 = vcombine.high %v1309, %v1309
        %v1647 = vunpack.c.l.s4 1983009808
        %v1648 = vunpack.c.0.s8 %v1647
        %v1649 = vlaneseq
        %v1650 = vshrl.u32 %v1649, 7
        %v1651 = vsub.s32 %v1648, %v1650
        %v1652 = vrot.slane %v1309, %v1651
        %v1654 = vunpack.c.l.s4 1983009808
        %v1655 = vunpack.c.0.s8 %v1654
        %v1656 = vlaneseq
        %v1657 = vshrl.u32 %v1656, 7
        %v1658 = vsub.s32 %v1655, %v1657
        %v1659 = vrot.slane %v1645, %v1658
        %v1660 = vcombine.high %v1652, %v1652
        %v1661 = vcombine.high %v1659, %v1659
        %v1662 = vcombine.high %v1342, %v1342
        %v1664 = vunpack.c.l.s4 1983009808
        %v1665 = vunpack.c.0.s8 %v1664
        %v1666 = vlaneseq
        %v1667 = vshrl.u32 %v1666, 7
        %v1668 = vsub.s32 %v1665, %v1667
        %v1669 = vrot.slane %v1342, %v1668
        %v1671 = vunpack.c.l.s4 1983009808
        %v1672 = vunpack.c.0.s8 %v1671
        %v1673 = vlaneseq
        %v1674 = vshrl.u32 %v1673, 7
        %v1675 = vsub.s32 %v1672, %v1674
        %v1676 = vrot.slane %v1662, %v1675
        %v1677 = vcombine.high %v1669, %v1669
        %v1678 = vcombine.high %v1676, %v1676
        %v1679 = vcombine.high %v1378, %v1378
        %v1681 = vunpack.c.l.s4 1983009808
        %v1682 = vunpack.c.0.s8 %v1681
        %v1683 = vlaneseq
        %v1684 = vshrl.u32 %v1683, 7
        %v1685 = vsub.s32 %v1682, %v1684
        %v1686 = vrot.slane %v1378, %v1685
        %v1688 = vunpack.c.l.s4 1983009808
        %v1689 = vunpack.c.0.s8 %v1688
        %v1690 = vlaneseq
        %v1691 = vshrl.u32 %v1690, 7
        %v1692 = vsub.s32 %v1689, %v1691
        %v1693 = vrot.slane %v1679, %v1692
        %v1694 = vcombine.high %v1686, %v1686
        %v1695 = vcombine.high %v1693, %v1693
        %v1696 = vcombine.high %v1343, %v1343
        %v1698 = vunpack.c.l.s4 1983009808
        %v1699 = vunpack.c.0.s8 %v1698
        %v1700 = vlaneseq
        %v1701 = vshrl.u32 %v1700, 7
        %v1702 = vsub.s32 %v1699, %v1701
        %v1703 = vrot.slane %v1343, %v1702
        %v1705 = vunpack.c.l.s4 1983009808
        %v1706 = vunpack.c.0.s8 %v1705
        %v1707 = vlaneseq
        %v1708 = vshrl.u32 %v1707, 7
        %v1709 = vsub.s32 %v1706, %v1708
        %v1710 = vrot.slane %v1696, %v1709
        %v1711 = vcombine.high %v1703, %v1703
        %v1712 = vcombine.high %v1710, %v1710
        %v1713 = vcombine.high %v1379, %v1379
        %v1715 = vunpack.c.l.s4 1983009808
        %v1716 = vunpack.c.0.s8 %v1715
        %v1717 = vlaneseq
        %v1718 = vshrl.u32 %v1717, 7
        %v1719 = vsub.s32 %v1716, %v1718
        %v1720 = vrot.slane %v1379, %v1719
        %v1722 = vunpack.c.l.s4 1983009808
        %v1723 = vunpack.c.0.s8 %v1722
        %v1724 = vlaneseq
        %v1725 = vshrl.u32 %v1724, 7
        %v1726 = vsub.s32 %v1723, %v1725
        %v1727 = vrot.slane %v1713, %v1726
        %v1728 = vcombine.high %v1720, %v1720
        %v1729 = vcombine.high %v1727, %v1727
        %v1730 = vcombine.high %v1344, %v1344
        %v1732 = vunpack.c.l.s4 1983009808
        %v1733 = vunpack.c.0.s8 %v1732
        %v1734 = vlaneseq
        %v1735 = vshrl.u32 %v1734, 7
        %v1736 = vsub.s32 %v1733, %v1735
        %v1737 = vrot.slane %v1344, %v1736
        %v1739 = vunpack.c.l.s4 1983009808
        %v1740 = vunpack.c.0.s8 %v1739
        %v1741 = vlaneseq
        %v1742 = vshrl.u32 %v1741, 7
        %v1743 = vsub.s32 %v1740, %v1742
        %v1744 = vrot.slane %v1730, %v1743
        %v1745 = vcombine.high %v1737, %v1737
        %v1746 = vcombine.high %v1744, %v1744
        %v1747 = vcombine.high %v1380, %v1380
        %v1749 = vunpack.c.l.s4 1983009808
        %v1750 = vunpack.c.0.s8 %v1749
        %v1751 = vlaneseq
        %v1752 = vshrl.u32 %v1751, 7
        %v1753 = vsub.s32 %v1750, %v1752
        %v1754 = vrot.slane %v1380, %v1753
        %v1756 = vunpack.c.l.s4 1983009808
        %v1757 = vunpack.c.0.s8 %v1756
        %v1758 = vlaneseq
        %v1759 = vshrl.u32 %v1758, 7
        %v1760 = vsub.s32 %v1757, %v1759
        %v1761 = vrot.slane %v1747, %v1760
        %v1762 = vcombine.high %v1754, %v1754
        %v1763 = vcombine.high %v1761, %v1761
        %v1764 = vcombine.high %v1345, %v1345
        %v1766 = vunpack.c.l.s4 1983009808
        %v1767 = vunpack.c.0.s8 %v1766
        %v1768 = vlaneseq
        %v1769 = vshrl.u32 %v1768, 7
        %v1770 = vsub.s32 %v1767, %v1769
        %v1771 = vrot.slane %v1345, %v1770
        %v1773 = vunpack.c.l.s4 1983009808
        %v1774 = vunpack.c.0.s8 %v1773
        %v1775 = vlaneseq
        %v1776 = vshrl.u32 %v1775, 7
        %v1777 = vsub.s32 %v1774, %v1776
        %v1778 = vrot.slane %v1764, %v1777
        %v1779 = vcombine.high %v1771, %v1771
        %v1780 = vcombine.high %v1778, %v1778
        %v1781 = vcombine.high %v1381, %v1381
        %v1783 = vunpack.c.l.s4 1983009808
        %v1784 = vunpack.c.0.s8 %v1783
        %v1785 = vlaneseq
        %v1786 = vshrl.u32 %v1785, 7
        %v1787 = vsub.s32 %v1784, %v1786
        %v1788 = vrot.slane %v1381, %v1787
        %v1790 = vunpack.c.l.s4 1983009808
        %v1791 = vunpack.c.0.s8 %v1790
        %v1792 = vlaneseq
        %v1793 = vshrl.u32 %v1792, 7
        %v1794 = vsub.s32 %v1791, %v1793
        %v1795 = vrot.slane %v1781, %v1794
        %v1796 = vcombine.high %v1788, %v1788
        %v1797 = vcombine.high %v1795, %v1795
        %v1798 = vcombine.high %v1414, %v1414
        %v1800 = vunpack.c.l.s4 1983009808
        %v1801 = vunpack.c.0.s8 %v1800
        %v1802 = vlaneseq
        %v1803 = vshrl.u32 %v1802, 7
        %v1804 = vsub.s32 %v1801, %v1803
        %v1805 = vrot.slane %v1414, %v1804
        %v1807 = vunpack.c.l.s4 1983009808
        %v1808 = vunpack.c.0.s8 %v1807
        %v1809 = vlaneseq
        %v1810 = vshrl.u32 %v1809, 7
        %v1811 = vsub.s32 %v1808, %v1810
        %v1812 = vrot.slane %v1798, %v1811
        %v1813 = vcombine.high %v1805, %v1805
        %v1814 = vcombine.high %v1812, %v1812
        %v1815 = vcombine.high %v1450, %v1450
        %v1817 = vunpack.c.l.s4 1983009808
        %v1818 = vunpack.c.0.s8 %v1817
        %v1819 = vlaneseq
        %v1820 = vshrl.u32 %v1819, 7
        %v1821 = vsub.s32 %v1818, %v1820
        %v1822 = vrot.slane %v1450, %v1821
        %v1824 = vunpack.c.l.s4 1983009808
        %v1825 = vunpack.c.0.s8 %v1824
        %v1826 = vlaneseq
        %v1827 = vshrl.u32 %v1826, 7
        %v1828 = vsub.s32 %v1825, %v1827
        %v1829 = vrot.slane %v1815, %v1828
        %v1830 = vcombine.high %v1822, %v1822
        %v1831 = vcombine.high %v1829, %v1829
        %v1832 = vcombine.high %v1415, %v1415
        %v1834 = vunpack.c.l.s4 1983009808
        %v1835 = vunpack.c.0.s8 %v1834
        %v1836 = vlaneseq
        %v1837 = vshrl.u32 %v1836, 7
        %v1838 = vsub.s32 %v1835, %v1837
        %v1839 = vrot.slane %v1415, %v1838
        %v1841 = vunpack.c.l.s4 1983009808
        %v1842 = vunpack.c.0.s8 %v1841
        %v1843 = vlaneseq
        %v1844 = vshrl.u32 %v1843, 7
        %v1845 = vsub.s32 %v1842, %v1844
        %v1846 = vrot.slane %v1832, %v1845
        %v1847 = vcombine.high %v1839, %v1839
        %v1848 = vcombine.high %v1846, %v1846
        %v1849 = vcombine.high %v1451, %v1451
        %v1851 = vunpack.c.l.s4 1983009808
        %v1852 = vunpack.c.0.s8 %v1851
        %v1853 = vlaneseq
        %v1854 = vshrl.u32 %v1853, 7
        %v1855 = vsub.s32 %v1852, %v1854
        %v1856 = vrot.slane %v1451, %v1855
        %v1858 = vunpack.c.l.s4 1983009808
        %v1859 = vunpack.c.0.s8 %v1858
        %v1860 = vlaneseq
        %v1861 = vshrl.u32 %v1860, 7
        %v1862 = vsub.s32 %v1859, %v1861
        %v1863 = vrot.slane %v1849, %v1862
        %v1864 = vcombine.high %v1856, %v1856
        %v1865 = vcombine.high %v1863, %v1863
        %v1866 = vcombine.high %v1416, %v1416
        %v1868 = vunpack.c.l.s4 1983009808
        %v1869 = vunpack.c.0.s8 %v1868
        %v1870 = vlaneseq
        %v1871 = vshrl.u32 %v1870, 7
        %v1872 = vsub.s32 %v1869, %v1871
        %v1873 = vrot.slane %v1416, %v1872
        %v1875 = vunpack.c.l.s4 1983009808
        %v1876 = vunpack.c.0.s8 %v1875
        %v1877 = vlaneseq
        %v1878 = vshrl.u32 %v1877, 7
        %v1879 = vsub.s32 %v1876, %v1878
        %v1880 = vrot.slane %v1866, %v1879
        %v1881 = vcombine.high %v1873, %v1873
        %v1882 = vcombine.high %v1880, %v1880
        %v1883 = vcombine.high %v1452, %v1452
        %v1885 = vunpack.c.l.s4 1983009808
        %v1886 = vunpack.c.0.s8 %v1885
        %v1887 = vlaneseq
        %v1888 = vshrl.u32 %v1887, 7
        %v1889 = vsub.s32 %v1886, %v1888
        %v1890 = vrot.slane %v1452, %v1889
        %v1892 = vunpack.c.l.s4 1983009808
        %v1893 = vunpack.c.0.s8 %v1892
        %v1894 = vlaneseq
        %v1895 = vshrl.u32 %v1894, 7
        %v1896 = vsub.s32 %v1893, %v1895
        %v1897 = vrot.slane %v1883, %v1896
        %v1898 = vcombine.high %v1890, %v1890
        %v1899 = vcombine.high %v1897, %v1897
        %v1900 = vcombine.high %v1417, %v1417
        %v1902 = vunpack.c.l.s4 1983009808
        %v1903 = vunpack.c.0.s8 %v1902
        %v1904 = vlaneseq
        %v1905 = vshrl.u32 %v1904, 7
        %v1906 = vsub.s32 %v1903, %v1905
        %v1907 = vrot.slane %v1417, %v1906
        %v1909 = vunpack.c.l.s4 1983009808
        %v1910 = vunpack.c.0.s8 %v1909
        %v1911 = vlaneseq
        %v1912 = vshrl.u32 %v1911, 7
        %v1913 = vsub.s32 %v1910, %v1912
        %v1914 = vrot.slane %v1900, %v1913
        %v1915 = vcombine.high %v1907, %v1907
        %v1916 = vcombine.high %v1914, %v1914
        %v1917 = vcombine.high %v1453, %v1453
        %v1919 = vunpack.c.l.s4 1983009808
        %v1920 = vunpack.c.0.s8 %v1919
        %v1921 = vlaneseq
        %v1922 = vshrl.u32 %v1921, 7
        %v1923 = vsub.s32 %v1920, %v1922
        %v1924 = vrot.slane %v1453, %v1923
        %v1926 = vunpack.c.l.s4 1983009808
        %v1927 = vunpack.c.0.s8 %v1926
        %v1928 = vlaneseq
        %v1929 = vshrl.u32 %v1928, 7
        %v1930 = vsub.s32 %v1927, %v1929
        %v1931 = vrot.slane %v1917, %v1930
        %v1932 = vcombine.high %v1924, %v1924
        %v1933 = vcombine.high %v1931, %v1931
        %v1934 = vcombine.high %v1486, %v1486
        %v1936 = vunpack.c.l.s4 1983009808
        %v1937 = vunpack.c.0.s8 %v1936
        %v1938 = vlaneseq
        %v1939 = vshrl.u32 %v1938, 7
        %v1940 = vsub.s32 %v1937, %v1939
        %v1941 = vrot.slane %v1486, %v1940
        %v1943 = vunpack.c.l.s4 1983009808
        %v1944 = vunpack.c.0.s8 %v1943
        %v1945 = vlaneseq
        %v1946 = vshrl.u32 %v1945, 7
        %v1947 = vsub.s32 %v1944, %v1946
        %v1948 = vrot.slane %v1934, %v1947
        %v1949 = vcombine.high %v1941, %v1941
        %v1950 = vcombine.high %v1948, %v1948
        %v1951 = vcombine.high %v1522, %v1522
        %v1953 = vunpack.c.l.s4 1983009808
        %v1954 = vunpack.c.0.s8 %v1953
        %v1955 = vlaneseq
        %v1956 = vshrl.u32 %v1955, 7
        %v1957 = vsub.s32 %v1954, %v1956
        %v1958 = vrot.slane %v1522, %v1957
        %v1960 = vunpack.c.l.s4 1983009808
        %v1961 = vunpack.c.0.s8 %v1960
        %v1962 = vlaneseq
        %v1963 = vshrl.u32 %v1962, 7
        %v1964 = vsub.s32 %v1961, %v1963
        %v1965 = vrot.slane %v1951, %v1964
        %v1966 = vcombine.high %v1958, %v1958
        %v1967 = vcombine.high %v1965, %v1965
        %v1968 = vcombine.high %v1487, %v1487
        %v1970 = vunpack.c.l.s4 1983009808
        %v1971 = vunpack.c.0.s8 %v1970
        %v1972 = vlaneseq
        %v1973 = vshrl.u32 %v1972, 7
        %v1974 = vsub.s32 %v1971, %v1973
        %v1975 = vrot.slane %v1487, %v1974
        %v1977 = vunpack.c.l.s4 1983009808
        %v1978 = vunpack.c.0.s8 %v1977
        %v1979 = vlaneseq
        %v1980 = vshrl.u32 %v1979, 7
        %v1981 = vsub.s32 %v1978, %v1980
        %v1982 = vrot.slane %v1968, %v1981
        %v1983 = vcombine.high %v1975, %v1975
        %v1984 = vcombine.high %v1982, %v1982
        %v1985 = vcombine.high %v1523, %v1523
        %v1987 = vunpack.c.l.s4 1983009808
        %v1988 = vunpack.c.0.s8 %v1987
        %v1989 = vlaneseq
        %v1990 = vshrl.u32 %v1989, 7
        %v1991 = vsub.s32 %v1988, %v1990
        %v1992 = vrot.slane %v1523, %v1991
        %v1994 = vunpack.c.l.s4 1983009808
        %v1995 = vunpack.c.0.s8 %v1994
        %v1996 = vlaneseq
        %v1997 = vshrl.u32 %v1996, 7
        %v1998 = vsub.s32 %v1995, %v1997
        %v1999 = vrot.slane %v1985, %v1998
        %v2000 = vcombine.high %v1992, %v1992
        %v2001 = vcombine.high %v1999, %v1999
        %v2002 = vcombine.high %v1488, %v1488
        %v2004 = vunpack.c.l.s4 1983009808
        %v2005 = vunpack.c.0.s8 %v2004
        %v2006 = vlaneseq
        %v2007 = vshrl.u32 %v2006, 7
        %v2008 = vsub.s32 %v2005, %v2007
        %v2009 = vrot.slane %v1488, %v2008
        %v2011 = vunpack.c.l.s4 1983009808
        %v2012 = vunpack.c.0.s8 %v2011
        %v2013 = vlaneseq
        %v2014 = vshrl.u32 %v2013, 7
        %v2015 = vsub.s32 %v2012, %v2014
        %v2016 = vrot.slane %v2002, %v2015
        %v2017 = vcombine.high %v2009, %v2009
        %v2018 = vcombine.high %v2016, %v2016
        %v2019 = vcombine.high %v1524, %v1524
        %v2021 = vunpack.c.l.s4 1983009808
        %v2022 = vunpack.c.0.s8 %v2021
        %v2023 = vlaneseq
        %v2024 = vshrl.u32 %v2023, 7
        %v2025 = vsub.s32 %v2022, %v2024
        %v2026 = vrot.slane %v1524, %v2025
        %v2028 = vunpack.c.l.s4 1983009808
        %v2029 = vunpack.c.0.s8 %v2028
        %v2030 = vlaneseq
        %v2031 = vshrl.u32 %v2030, 7
        %v2032 = vsub.s32 %v2029, %v2031
        %v2033 = vrot.slane %v2019, %v2032
        %v2034 = vcombine.high %v2026, %v2026
        %v2035 = vcombine.high %v2033, %v2033
        %v2036 = vcombine.high %v1489, %v1489
        %v2038 = vunpack.c.l.s4 1983009808
        %v2039 = vunpack.c.0.s8 %v2038
        %v2040 = vlaneseq
        %v2041 = vshrl.u32 %v2040, 7
        %v2042 = vsub.s32 %v2039, %v2041
        %v2043 = vrot.slane %v1489, %v2042
        %v2045 = vunpack.c.l.s4 1983009808
        %v2046 = vunpack.c.0.s8 %v2045
        %v2047 = vlaneseq
        %v2048 = vshrl.u32 %v2047, 7
        %v2049 = vsub.s32 %v2046, %v2048
        %v2050 = vrot.slane %v2036, %v2049
        %v2051 = vcombine.high %v2043, %v2043
        %v2052 = vcombine.high %v2050, %v2050
        %v2053 = vcombine.high %v1525, %v1525
        %v2055 = vunpack.c.l.s4 1983009808
        %v2056 = vunpack.c.0.s8 %v2055
        %v2057 = vlaneseq
        %v2058 = vshrl.u32 %v2057, 7
        %v2059 = vsub.s32 %v2056, %v2058
        %v2060 = vrot.slane %v1525, %v2059
        %v2062 = vunpack.c.l.s4 1983009808
        %v2063 = vunpack.c.0.s8 %v2062
        %v2064 = vlaneseq
        %v2065 = vshrl.u32 %v2064, 7
        %v2066 = vsub.s32 %v2063, %v2065
        %v2067 = vrot.slane %v2053, %v2066
        %v2068 = vcombine.high %v2060, %v2060
        %v2069 = vcombine.high %v2067, %v2067
        %vm2198 = vcmask 1041408
        %v2199 = vsel %vm2198, %v1533, -inf
        %v2200 = vrot.slane %v2199, 4
        %v2201 = vmax.f32 %v2199, %v2200
        %v2202 = vrot.slane %v2201, 2
        %v2203 = vmax.f32 %v2201, %v2202
        %v2204 = vrot.slane %v2203, 1
        %v2205 = vmax.f32 %v2203, %v2204
        %v2206 = vsel %vm2198, %v1541, -inf
        %v2207 = vrot.slane %v2206, 4
        %v2208 = vmax.f32 %v2206, %v2207
        %v2209 = vrot.slane %v2208, 2
        %v2210 = vmax.f32 %v2208, %v2209
        %v2211 = vrot.slane %v2210, 1
        %v2212 = vmax.f32 %v2210, %v2211
        %v2213 = vsel %vm2198, %v1540, -inf
        %v2214 = vrot.slane %v2213, 4
        %v2215 = vmax.f32 %v2213, %v2214
        %v2216 = vrot.slane %v2215, 2
        %v2217 = vmax.f32 %v2215, %v2216
        %v2218 = vrot.slane %v2217, 1
        %v2219 = vmax.f32 %v2217, %v2218
        %v2220 = vsel %vm2198, %v1542, -inf
        %v2221 = vrot.slane %v2220, 4
        %v2222 = vmax.f32 %v2220, %v2221
        %v2223 = vrot.slane %v2222, 2
        %v2224 = vmax.f32 %v2222, %v2223
        %v2225 = vrot.slane %v2224, 1
        %v2226 = vmax.f32 %v2224, %v2225
        %v2227 = vsel %vm2198, %v1550, -inf
        %v2228 = vrot.slane %v2227, 4
        %v2229 = vmax.f32 %v2227, %v2228
        %v2230 = vrot.slane %v2229, 2
        %v2231 = vmax.f32 %v2229, %v2230
        %v2232 = vrot.slane %v2231, 1
        %v2233 = vmax.f32 %v2231, %v2232
        %v2234 = vsel %vm2198, %v1558, -inf
        %v2235 = vrot.slane %v2234, 4
        %v2236 = vmax.f32 %v2234, %v2235
        %v2237 = vrot.slane %v2236, 2
        %v2238 = vmax.f32 %v2236, %v2237
        %v2239 = vrot.slane %v2238, 1
        %v2240 = vmax.f32 %v2238, %v2239
        %v2241 = vsel %vm2198, %v1557, -inf
        %v2242 = vrot.slane %v2241, 4
        %v2243 = vmax.f32 %v2241, %v2242
        %v2244 = vrot.slane %v2243, 2
        %v2245 = vmax.f32 %v2243, %v2244
        %v2246 = vrot.slane %v2245, 1
        %v2247 = vmax.f32 %v2245, %v2246
        %v2248 = vsel %vm2198, %v1559, -inf
        %v2249 = vrot.slane %v2248, 4
        %v2250 = vmax.f32 %v2248, %v2249
        %v2251 = vrot.slane %v2250, 2
        %v2252 = vmax.f32 %v2250, %v2251
        %v2253 = vrot.slane %v2252, 1
        %v2254 = vmax.f32 %v2252, %v2253
        %v2255 = vsel %vm2198, %v1567, -inf
        %v2256 = vrot.slane %v2255, 4
        %v2257 = vmax.f32 %v2255, %v2256
        %v2258 = vrot.slane %v2257, 2
        %v2259 = vmax.f32 %v2257, %v2258
        %v2260 = vrot.slane %v2259, 1
        %v2261 = vmax.f32 %v2259, %v2260
        %v2262 = vsel %vm2198, %v1575, -inf
        %v2263 = vrot.slane %v2262, 4
        %v2264 = vmax.f32 %v2262, %v2263
        %v2265 = vrot.slane %v2264, 2
        %v2266 = vmax.f32 %v2264, %v2265
        %v2267 = vrot.slane %v2266, 1
        %v2268 = vmax.f32 %v2266, %v2267
        %v2269 = vsel %vm2198, %v1574, -inf
        %v2270 = vrot.slane %v2269, 4
        %v2271 = vmax.f32 %v2269, %v2270
        %v2272 = vrot.slane %v2271, 2
        %v2273 = vmax.f32 %v2271, %v2272
        %v2274 = vrot.slane %v2273, 1
        %v2275 = vmax.f32 %v2273, %v2274
        %v2276 = vsel %vm2198, %v1576, -inf
        %v2277 = vrot.slane %v2276, 4
        %v2278 = vmax.f32 %v2276, %v2277
        %v2279 = vrot.slane %v2278, 2
        %v2280 = vmax.f32 %v2278, %v2279
        %v2281 = vrot.slane %v2280, 1
        %v2282 = vmax.f32 %v2280, %v2281
        %v2283 = vsel %vm2198, %v1584, -inf
        %v2284 = vrot.slane %v2283, 4
        %v2285 = vmax.f32 %v2283, %v2284
        %v2286 = vrot.slane %v2285, 2
        %v2287 = vmax.f32 %v2285, %v2286
        %v2288 = vrot.slane %v2287, 1
        %v2289 = vmax.f32 %v2287, %v2288
        %v2290 = vsel %vm2198, %v1592, -inf
        %v2291 = vrot.slane %v2290, 4
        %v2292 = vmax.f32 %v2290, %v2291
        %v2293 = vrot.slane %v2292, 2
        %v2294 = vmax.f32 %v2292, %v2293
        %v2295 = vrot.slane %v2294, 1
        %v2296 = vmax.f32 %v2294, %v2295
        %v2297 = vsel %vm2198, %v1591, -inf
        %v2298 = vrot.slane %v2297, 4
        %v2299 = vmax.f32 %v2297, %v2298
        %v2300 = vrot.slane %v2299, 2
        %v2301 = vmax.f32 %v2299, %v2300
        %v2302 = vrot.slane %v2301, 1
        %v2303 = vmax.f32 %v2301, %v2302
        %v2304 = vsel %vm2198, %v1593, -inf
        %v2305 = vrot.slane %v2304, 4
        %v2306 = vmax.f32 %v2304, %v2305
        %v2307 = vrot.slane %v2306, 2
        %v2308 = vmax.f32 %v2306, %v2307
        %v2309 = vrot.slane %v2308, 1
        %v2310 = vmax.f32 %v2308, %v2309
        %v2311 = vsel %vm2198, %v1601, -inf
        %v2312 = vrot.slane %v2311, 4
        %v2313 = vmax.f32 %v2311, %v2312
        %v2314 = vrot.slane %v2313, 2
        %v2315 = vmax.f32 %v2313, %v2314
        %v2316 = vrot.slane %v2315, 1
        %v2317 = vmax.f32 %v2315, %v2316
        %v2318 = vsel %vm2198, %v1609, -inf
        %v2319 = vrot.slane %v2318, 4
        %v2320 = vmax.f32 %v2318, %v2319
        %v2321 = vrot.slane %v2320, 2
        %v2322 = vmax.f32 %v2320, %v2321
        %v2323 = vrot.slane %v2322, 1
        %v2324 = vmax.f32 %v2322, %v2323
        %v2325 = vsel %vm2198, %v1608, -inf
        %v2326 = vrot.slane %v2325, 4
        %v2327 = vmax.f32 %v2325, %v2326
        %v2328 = vrot.slane %v2327, 2
        %v2329 = vmax.f32 %v2327, %v2328
        %v2330 = vrot.slane %v2329, 1
        %v2331 = vmax.f32 %v2329, %v2330
        %v2332 = vsel %vm2198, %v1610, -inf
        %v2333 = vrot.slane %v2332, 4
        %v2334 = vmax.f32 %v2332, %v2333
        %v2335 = vrot.slane %v2334, 2
        %v2336 = vmax.f32 %v2334, %v2335
        %v2337 = vrot.slane %v2336, 1
        %v2338 = vmax.f32 %v2336, %v2337
        %v2339 = vsel %vm2198, %v1618, -inf
        %v2340 = vrot.slane %v2339, 4
        %v2341 = vmax.f32 %v2339, %v2340
        %v2342 = vrot.slane %v2341, 2
        %v2343 = vmax.f32 %v2341, %v2342
        %v2344 = vrot.slane %v2343, 1
        %v2345 = vmax.f32 %v2343, %v2344
        %v2346 = vsel %vm2198, %v1626, -inf
        %v2347 = vrot.slane %v2346, 4
        %v2348 = vmax.f32 %v2346, %v2347
        %v2349 = vrot.slane %v2348, 2
        %v2350 = vmax.f32 %v2348, %v2349
        %v2351 = vrot.slane %v2350, 1
        %v2352 = vmax.f32 %v2350, %v2351
        %v2353 = vsel %vm2198, %v1625, -inf
        %v2354 = vrot.slane %v2353, 4
        %v2355 = vmax.f32 %v2353, %v2354
        %v2356 = vrot.slane %v2355, 2
        %v2357 = vmax.f32 %v2355, %v2356
        %v2358 = vrot.slane %v2357, 1
        %v2359 = vmax.f32 %v2357, %v2358
        %v2360 = vsel %vm2198, %v1627, -inf
        %v2361 = vrot.slane %v2360, 4
        %v2362 = vmax.f32 %v2360, %v2361
        %v2363 = vrot.slane %v2362, 2
        %v2364 = vmax.f32 %v2362, %v2363
        %v2365 = vrot.slane %v2364, 1
        %v2366 = vmax.f32 %v2364, %v2365
        %v2367 = vsel %vm2198, %v1635, -inf
        %v2368 = vrot.slane %v2367, 4
        %v2369 = vmax.f32 %v2367, %v2368
        %v2370 = vrot.slane %v2369, 2
        %v2371 = vmax.f32 %v2369, %v2370
        %v2372 = vrot.slane %v2371, 1
        %v2373 = vmax.f32 %v2371, %v2372
        %v2374 = vsel %vm2198, %v1643, -inf
        %v2375 = vrot.slane %v2374, 4
        %v2376 = vmax.f32 %v2374, %v2375
        %v2377 = vrot.slane %v2376, 2
        %v2378 = vmax.f32 %v2376, %v2377
        %v2379 = vrot.slane %v2378, 1
        %v2380 = vmax.f32 %v2378, %v2379
        %v2381 = vsel %vm2198, %v1642, -inf
        %v2382 = vrot.slane %v2381, 4
        %v2383 = vmax.f32 %v2381, %v2382
        %v2384 = vrot.slane %v2383, 2
        %v2385 = vmax.f32 %v2383, %v2384
        %v2386 = vrot.slane %v2385, 1
        %v2387 = vmax.f32 %v2385, %v2386
        %v2388 = vsel %vm2198, %v1644, -inf
        %v2389 = vrot.slane %v2388, 4
        %v2390 = vmax.f32 %v2388, %v2389
        %v2391 = vrot.slane %v2390, 2
        %v2392 = vmax.f32 %v2390, %v2391
        %v2393 = vrot.slane %v2392, 1
        %v2394 = vmax.f32 %v2392, %v2393
        %v2395 = vsel %vm2198, %v1652, -inf
        %v2396 = vrot.slane %v2395, 4
        %v2397 = vmax.f32 %v2395, %v2396
        %v2398 = vrot.slane %v2397, 2
        %v2399 = vmax.f32 %v2397, %v2398
        %v2400 = vrot.slane %v2399, 1
        %v2401 = vmax.f32 %v2399, %v2400
        %v2402 = vsel %vm2198, %v1660, -inf
        %v2403 = vrot.slane %v2402, 4
        %v2404 = vmax.f32 %v2402, %v2403
        %v2405 = vrot.slane %v2404, 2
        %v2406 = vmax.f32 %v2404, %v2405
        %v2407 = vrot.slane %v2406, 1
        %v2408 = vmax.f32 %v2406, %v2407
        %v2409 = vsel %vm2198, %v1659, -inf
        %v2410 = vrot.slane %v2409, 4
        %v2411 = vmax.f32 %v2409, %v2410
        %v2412 = vrot.slane %v2411, 2
        %v2413 = vmax.f32 %v2411, %v2412
        %v2414 = vrot.slane %v2413, 1
        %v2415 = vmax.f32 %v2413, %v2414
        %v2416 = vsel %vm2198, %v1661, -inf
        %v2417 = vrot.slane %v2416, 4
        %v2418 = vmax.f32 %v2416, %v2417
        %v2419 = vrot.slane %v2418, 2
        %v2420 = vmax.f32 %v2418, %v2419
        %v2421 = vrot.slane %v2420, 1
        %v2422 = vmax.f32 %v2420, %v2421
        %v2423 = vsel %vm2198, %v1669, -inf
        %v2424 = vrot.slane %v2423, 4
        %v2425 = vmax.f32 %v2423, %v2424
        %v2426 = vrot.slane %v2425, 2
        %v2427 = vmax.f32 %v2425, %v2426
        %v2428 = vrot.slane %v2427, 1
        %v2429 = vmax.f32 %v2427, %v2428
        %v2430 = vsel %vm2198, %v1677, -inf
        %v2431 = vrot.slane %v2430, 4
        %v2432 = vmax.f32 %v2430, %v2431
        %v2433 = vrot.slane %v2432, 2
        %v2434 = vmax.f32 %v2432, %v2433
        %v2435 = vrot.slane %v2434, 1
        %v2436 = vmax.f32 %v2434, %v2435
        %v2437 = vsel %vm2198, %v1676, -inf
        %v2438 = vrot.slane %v2437, 4
        %v2439 = vmax.f32 %v2437, %v2438
        %v2440 = vrot.slane %v2439, 2
        %v2441 = vmax.f32 %v2439, %v2440
        %v2442 = vrot.slane %v2441, 1
        %v2443 = vmax.f32 %v2441, %v2442
        %v2444 = vsel %vm2198, %v1678, -inf
        %v2445 = vrot.slane %v2444, 4
        %v2446 = vmax.f32 %v2444, %v2445
        %v2447 = vrot.slane %v2446, 2
        %v2448 = vmax.f32 %v2446, %v2447
        %v2449 = vrot.slane %v2448, 1
        %v2450 = vmax.f32 %v2448, %v2449
        %v2451 = vsel %vm2198, %v1686, -inf
        %v2452 = vrot.slane %v2451, 4
        %v2453 = vmax.f32 %v2451, %v2452
        %v2454 = vrot.slane %v2453, 2
        %v2455 = vmax.f32 %v2453, %v2454
        %v2456 = vrot.slane %v2455, 1
        %v2457 = vmax.f32 %v2455, %v2456
        %v2458 = vsel %vm2198, %v1694, -inf
        %v2459 = vrot.slane %v2458, 4
        %v2460 = vmax.f32 %v2458, %v2459
        %v2461 = vrot.slane %v2460, 2
        %v2462 = vmax.f32 %v2460, %v2461
        %v2463 = vrot.slane %v2462, 1
        %v2464 = vmax.f32 %v2462, %v2463
        %v2465 = vsel %vm2198, %v1693, -inf
        %v2466 = vrot.slane %v2465, 4
        %v2467 = vmax.f32 %v2465, %v2466
        %v2468 = vrot.slane %v2467, 2
        %v2469 = vmax.f32 %v2467, %v2468
        %v2470 = vrot.slane %v2469, 1
        %v2471 = vmax.f32 %v2469, %v2470
        %v2472 = vsel %vm2198, %v1695, -inf
        %v2473 = vrot.slane %v2472, 4
        %v2474 = vmax.f32 %v2472, %v2473
        %v2475 = vrot.slane %v2474, 2
        %v2476 = vmax.f32 %v2474, %v2475
        %v2477 = vrot.slane %v2476, 1
        %v2478 = vmax.f32 %v2476, %v2477
        %v2479 = vsel %vm2198, %v1703, -inf
        %v2480 = vrot.slane %v2479, 4
        %v2481 = vmax.f32 %v2479, %v2480
        %v2482 = vrot.slane %v2481, 2
        %v2483 = vmax.f32 %v2481, %v2482
        %v2484 = vrot.slane %v2483, 1
        %v2485 = vmax.f32 %v2483, %v2484
        %v2486 = vsel %vm2198, %v1711, -inf
        %v2487 = vrot.slane %v2486, 4
        %v2488 = vmax.f32 %v2486, %v2487
        %v2489 = vrot.slane %v2488, 2
        %v2490 = vmax.f32 %v2488, %v2489
        %v2491 = vrot.slane %v2490, 1
        %v2492 = vmax.f32 %v2490, %v2491
        %v2493 = vsel %vm2198, %v1710, -inf
        %v2494 = vrot.slane %v2493, 4
        %v2495 = vmax.f32 %v2493, %v2494
        %v2496 = vrot.slane %v2495, 2
        %v2497 = vmax.f32 %v2495, %v2496
        %v2498 = vrot.slane %v2497, 1
        %v2499 = vmax.f32 %v2497, %v2498
        %v2500 = vsel %vm2198, %v1712, -inf
        %v2501 = vrot.slane %v2500, 4
        %v2502 = vmax.f32 %v2500, %v2501
        %v2503 = vrot.slane %v2502, 2
        %v2504 = vmax.f32 %v2502, %v2503
        %v2505 = vrot.slane %v2504, 1
        %v2506 = vmax.f32 %v2504, %v2505
        %v2507 = vsel %vm2198, %v1720, -inf
        %v2508 = vrot.slane %v2507, 4
        %v2509 = vmax.f32 %v2507, %v2508
        %v2510 = vrot.slane %v2509, 2
        %v2511 = vmax.f32 %v2509, %v2510
        %v2512 = vrot.slane %v2511, 1
        %v2513 = vmax.f32 %v2511, %v2512
        %v2514 = vsel %vm2198, %v1728, -inf
        %v2515 = vrot.slane %v2514, 4
        %v2516 = vmax.f32 %v2514, %v2515
        %v2517 = vrot.slane %v2516, 2
        %v2518 = vmax.f32 %v2516, %v2517
        %v2519 = vrot.slane %v2518, 1
        %v2520 = vmax.f32 %v2518, %v2519
        %v2521 = vsel %vm2198, %v1727, -inf
        %v2522 = vrot.slane %v2521, 4
        %v2523 = vmax.f32 %v2521, %v2522
        %v2524 = vrot.slane %v2523, 2
        %v2525 = vmax.f32 %v2523, %v2524
        %v2526 = vrot.slane %v2525, 1
        %v2527 = vmax.f32 %v2525, %v2526
        %v2528 = vsel %vm2198, %v1729, -inf
        %v2529 = vrot.slane %v2528, 4
        %v2530 = vmax.f32 %v2528, %v2529
        %v2531 = vrot.slane %v2530, 2
        %v2532 = vmax.f32 %v2530, %v2531
        %v2533 = vrot.slane %v2532, 1
        %v2534 = vmax.f32 %v2532, %v2533
        %v2535 = vsel %vm2198, %v1737, -inf
        %v2536 = vrot.slane %v2535, 4
        %v2537 = vmax.f32 %v2535, %v2536
        %v2538 = vrot.slane %v2537, 2
        %v2539 = vmax.f32 %v2537, %v2538
        %v2540 = vrot.slane %v2539, 1
        %v2541 = vmax.f32 %v2539, %v2540
        %v2542 = vsel %vm2198, %v1745, -inf
        %v2543 = vrot.slane %v2542, 4
        %v2544 = vmax.f32 %v2542, %v2543
        %v2545 = vrot.slane %v2544, 2
        %v2546 = vmax.f32 %v2544, %v2545
        %v2547 = vrot.slane %v2546, 1
        %v2548 = vmax.f32 %v2546, %v2547
        %v2549 = vsel %vm2198, %v1744, -inf
        %v2550 = vrot.slane %v2549, 4
        %v2551 = vmax.f32 %v2549, %v2550
        %v2552 = vrot.slane %v2551, 2
        %v2553 = vmax.f32 %v2551, %v2552
        %v2554 = vrot.slane %v2553, 1
        %v2555 = vmax.f32 %v2553, %v2554
        %v2556 = vsel %vm2198, %v1746, -inf
        %v2557 = vrot.slane %v2556, 4
        %v2558 = vmax.f32 %v2556, %v2557
        %v2559 = vrot.slane %v2558, 2
        %v2560 = vmax.f32 %v2558, %v2559
        %v2561 = vrot.slane %v2560, 1
        %v2562 = vmax.f32 %v2560, %v2561
        %v2563 = vsel %vm2198, %v1754, -inf
        %v2564 = vrot.slane %v2563, 4
        %v2565 = vmax.f32 %v2563, %v2564
        %v2566 = vrot.slane %v2565, 2
        %v2567 = vmax.f32 %v2565, %v2566
        %v2568 = vrot.slane %v2567, 1
        %v2569 = vmax.f32 %v2567, %v2568
        %v2570 = vsel %vm2198, %v1762, -inf
        %v2571 = vrot.slane %v2570, 4
        %v2572 = vmax.f32 %v2570, %v2571
        %v2573 = vrot.slane %v2572, 2
        %v2574 = vmax.f32 %v2572, %v2573
        %v2575 = vrot.slane %v2574, 1
        %v2576 = vmax.f32 %v2574, %v2575
        %v2577 = vsel %vm2198, %v1761, -inf
        %v2578 = vrot.slane %v2577, 4
        %v2579 = vmax.f32 %v2577, %v2578
        %v2580 = vrot.slane %v2579, 2
        %v2581 = vmax.f32 %v2579, %v2580
        %v2582 = vrot.slane %v2581, 1
        %v2583 = vmax.f32 %v2581, %v2582
        %v2584 = vsel %vm2198, %v1763, -inf
        %v2585 = vrot.slane %v2584, 4
        %v2586 = vmax.f32 %v2584, %v2585
        %v2587 = vrot.slane %v2586, 2
        %v2588 = vmax.f32 %v2586, %v2587
        %v2589 = vrot.slane %v2588, 1
        %v2590 = vmax.f32 %v2588, %v2589
        %v2591 = vsel %vm2198, %v1771, -inf
        %v2592 = vrot.slane %v2591, 4
        %v2593 = vmax.f32 %v2591, %v2592
        %v2594 = vrot.slane %v2593, 2
        %v2595 = vmax.f32 %v2593, %v2594
        %v2596 = vrot.slane %v2595, 1
        %v2597 = vmax.f32 %v2595, %v2596
        %v2598 = vsel %vm2198, %v1779, -inf
        %v2599 = vrot.slane %v2598, 4
        %v2600 = vmax.f32 %v2598, %v2599
        %v2601 = vrot.slane %v2600, 2
        %v2602 = vmax.f32 %v2600, %v2601
        %v2603 = vrot.slane %v2602, 1
        %v2604 = vmax.f32 %v2602, %v2603
        %v2605 = vsel %vm2198, %v1778, -inf
        %v2606 = vrot.slane %v2605, 4
        %v2607 = vmax.f32 %v2605, %v2606
        %v2608 = vrot.slane %v2607, 2
        %v2609 = vmax.f32 %v2607, %v2608
        %v2610 = vrot.slane %v2609, 1
        %v2611 = vmax.f32 %v2609, %v2610
        %v2612 = vsel %vm2198, %v1780, -inf
        %v2613 = vrot.slane %v2612, 4
        %v2614 = vmax.f32 %v2612, %v2613
        %v2615 = vrot.slane %v2614, 2
        %v2616 = vmax.f32 %v2614, %v2615
        %v2617 = vrot.slane %v2616, 1
        %v2618 = vmax.f32 %v2616, %v2617
        %v2619 = vsel %vm2198, %v1788, -inf
        %v2620 = vrot.slane %v2619, 4
        %v2621 = vmax.f32 %v2619, %v2620
        %v2622 = vrot.slane %v2621, 2
        %v2623 = vmax.f32 %v2621, %v2622
        %v2624 = vrot.slane %v2623, 1
        %v2625 = vmax.f32 %v2623, %v2624
        %v2626 = vsel %vm2198, %v1796, -inf
        %v2627 = vrot.slane %v2626, 4
        %v2628 = vmax.f32 %v2626, %v2627
        %v2629 = vrot.slane %v2628, 2
        %v2630 = vmax.f32 %v2628, %v2629
        %v2631 = vrot.slane %v2630, 1
        %v2632 = vmax.f32 %v2630, %v2631
        %v2633 = vsel %vm2198, %v1795, -inf
        %v2634 = vrot.slane %v2633, 4
        %v2635 = vmax.f32 %v2633, %v2634
        %v2636 = vrot.slane %v2635, 2
        %v2637 = vmax.f32 %v2635, %v2636
        %v2638 = vrot.slane %v2637, 1
        %v2639 = vmax.f32 %v2637, %v2638
        %v2640 = vsel %vm2198, %v1797, -inf
        %v2641 = vrot.slane %v2640, 4
        %v2642 = vmax.f32 %v2640, %v2641
        %v2643 = vrot.slane %v2642, 2
        %v2644 = vmax.f32 %v2642, %v2643
        %v2645 = vrot.slane %v2644, 1
        %v2646 = vmax.f32 %v2644, %v2645
        %v2647 = vsel %vm2198, %v1805, -inf
        %v2648 = vrot.slane %v2647, 4
        %v2649 = vmax.f32 %v2647, %v2648
        %v2650 = vrot.slane %v2649, 2
        %v2651 = vmax.f32 %v2649, %v2650
        %v2652 = vrot.slane %v2651, 1
        %v2653 = vmax.f32 %v2651, %v2652
        %v2654 = vsel %vm2198, %v1813, -inf
        %v2655 = vrot.slane %v2654, 4
        %v2656 = vmax.f32 %v2654, %v2655
        %v2657 = vrot.slane %v2656, 2
        %v2658 = vmax.f32 %v2656, %v2657
        %v2659 = vrot.slane %v2658, 1
        %v2660 = vmax.f32 %v2658, %v2659
        %v2661 = vsel %vm2198, %v1812, -inf
        %v2662 = vrot.slane %v2661, 4
        %v2663 = vmax.f32 %v2661, %v2662
        %v2664 = vrot.slane %v2663, 2
        %v2665 = vmax.f32 %v2663, %v2664
        %v2666 = vrot.slane %v2665, 1
        %v2667 = vmax.f32 %v2665, %v2666
        %v2668 = vsel %vm2198, %v1814, -inf
        %v2669 = vrot.slane %v2668, 4
        %v2670 = vmax.f32 %v2668, %v2669
        %v2671 = vrot.slane %v2670, 2
        %v2672 = vmax.f32 %v2670, %v2671
        %v2673 = vrot.slane %v2672, 1
        %v2674 = vmax.f32 %v2672, %v2673
        %v2675 = vsel %vm2198, %v1822, -inf
        %v2676 = vrot.slane %v2675, 4
        %v2677 = vmax.f32 %v2675, %v2676
        %v2678 = vrot.slane %v2677, 2
        %v2679 = vmax.f32 %v2677, %v2678
        %v2680 = vrot.slane %v2679, 1
        %v2681 = vmax.f32 %v2679, %v2680
        %v2682 = vsel %vm2198, %v1830, -inf
        %v2683 = vrot.slane %v2682, 4
        %v2684 = vmax.f32 %v2682, %v2683
        %v2685 = vrot.slane %v2684, 2
        %v2686 = vmax.f32 %v2684, %v2685
        %v2687 = vrot.slane %v2686, 1
        %v2688 = vmax.f32 %v2686, %v2687
        %v2689 = vsel %vm2198, %v1829, -inf
        %v2690 = vrot.slane %v2689, 4
        %v2691 = vmax.f32 %v2689, %v2690
        %v2692 = vrot.slane %v2691, 2
        %v2693 = vmax.f32 %v2691, %v2692
        %v2694 = vrot.slane %v2693, 1
        %v2695 = vmax.f32 %v2693, %v2694
        %v2696 = vsel %vm2198, %v1831, -inf
        %v2697 = vrot.slane %v2696, 4
        %v2698 = vmax.f32 %v2696, %v2697
        %v2699 = vrot.slane %v2698, 2
        %v2700 = vmax.f32 %v2698, %v2699
        %v2701 = vrot.slane %v2700, 1
        %v2702 = vmax.f32 %v2700, %v2701
        %v2703 = vsel %vm2198, %v1839, -inf
        %v2704 = vrot.slane %v2703, 4
        %v2705 = vmax.f32 %v2703, %v2704
        %v2706 = vrot.slane %v2705, 2
        %v2707 = vmax.f32 %v2705, %v2706
        %v2708 = vrot.slane %v2707, 1
        %v2709 = vmax.f32 %v2707, %v2708
        %v2710 = vsel %vm2198, %v1847, -inf
        %v2711 = vrot.slane %v2710, 4
        %v2712 = vmax.f32 %v2710, %v2711
        %v2713 = vrot.slane %v2712, 2
        %v2714 = vmax.f32 %v2712, %v2713
        %v2715 = vrot.slane %v2714, 1
        %v2716 = vmax.f32 %v2714, %v2715
        %v2717 = vsel %vm2198, %v1846, -inf
        %v2718 = vrot.slane %v2717, 4
        %v2719 = vmax.f32 %v2717, %v2718
        %v2720 = vrot.slane %v2719, 2
        %v2721 = vmax.f32 %v2719, %v2720
        %v2722 = vrot.slane %v2721, 1
        %v2723 = vmax.f32 %v2721, %v2722
        %v2724 = vsel %vm2198, %v1848, -inf
        %v2725 = vrot.slane %v2724, 4
        %v2726 = vmax.f32 %v2724, %v2725
        %v2727 = vrot.slane %v2726, 2
        %v2728 = vmax.f32 %v2726, %v2727
        %v2729 = vrot.slane %v2728, 1
        %v2730 = vmax.f32 %v2728, %v2729
        %v2731 = vsel %vm2198, %v1856, -inf
        %v2732 = vrot.slane %v2731, 4
        %v2733 = vmax.f32 %v2731, %v2732
        %v2734 = vrot.slane %v2733, 2
        %v2735 = vmax.f32 %v2733, %v2734
        %v2736 = vrot.slane %v2735, 1
        %v2737 = vmax.f32 %v2735, %v2736
        %v2738 = vsel %vm2198, %v1864, -inf
        %v2739 = vrot.slane %v2738, 4
        %v2740 = vmax.f32 %v2738, %v2739
        %v2741 = vrot.slane %v2740, 2
        %v2742 = vmax.f32 %v2740, %v2741
        %v2743 = vrot.slane %v2742, 1
        %v2744 = vmax.f32 %v2742, %v2743
        %v2745 = vsel %vm2198, %v1863, -inf
        %v2746 = vrot.slane %v2745, 4
        %v2747 = vmax.f32 %v2745, %v2746
        %v2748 = vrot.slane %v2747, 2
        %v2749 = vmax.f32 %v2747, %v2748
        %v2750 = vrot.slane %v2749, 1
        %v2751 = vmax.f32 %v2749, %v2750
        %v2752 = vsel %vm2198, %v1865, -inf
        %v2753 = vrot.slane %v2752, 4
        %v2754 = vmax.f32 %v2752, %v2753
        %v2755 = vrot.slane %v2754, 2
        %v2756 = vmax.f32 %v2754, %v2755
        %v2757 = vrot.slane %v2756, 1
        %v2758 = vmax.f32 %v2756, %v2757
        %v2759 = vsel %vm2198, %v1873, -inf
        %v2760 = vrot.slane %v2759, 4
        %v2761 = vmax.f32 %v2759, %v2760
        %v2762 = vrot.slane %v2761, 2
        %v2763 = vmax.f32 %v2761, %v2762
        %v2764 = vrot.slane %v2763, 1
        %v2765 = vmax.f32 %v2763, %v2764
        %v2766 = vsel %vm2198, %v1881, -inf
        %v2767 = vrot.slane %v2766, 4
        %v2768 = vmax.f32 %v2766, %v2767
        %v2769 = vrot.slane %v2768, 2
        %v2770 = vmax.f32 %v2768, %v2769
        %v2771 = vrot.slane %v2770, 1
        %v2772 = vmax.f32 %v2770, %v2771
        %v2773 = vsel %vm2198, %v1880, -inf
        %v2774 = vrot.slane %v2773, 4
        %v2775 = vmax.f32 %v2773, %v2774
        %v2776 = vrot.slane %v2775, 2
        %v2777 = vmax.f32 %v2775, %v2776
        %v2778 = vrot.slane %v2777, 1
        %v2779 = vmax.f32 %v2777, %v2778
        %v2780 = vsel %vm2198, %v1882, -inf
        %v2781 = vrot.slane %v2780, 4
        %v2782 = vmax.f32 %v2780, %v2781
        %v2783 = vrot.slane %v2782, 2
        %v2784 = vmax.f32 %v2782, %v2783
        %v2785 = vrot.slane %v2784, 1
        %v2786 = vmax.f32 %v2784, %v2785
        %v2787 = vsel %vm2198, %v1890, -inf
        %v2788 = vrot.slane %v2787, 4
        %v2789 = vmax.f32 %v2787, %v2788
        %v2790 = vrot.slane %v2789, 2
        %v2791 = vmax.f32 %v2789, %v2790
        %v2792 = vrot.slane %v2791, 1
        %v2793 = vmax.f32 %v2791, %v2792
        %v2794 = vsel %vm2198, %v1898, -inf
        %v2795 = vrot.slane %v2794, 4
        %v2796 = vmax.f32 %v2794, %v2795
        %v2797 = vrot.slane %v2796, 2
        %v2798 = vmax.f32 %v2796, %v2797
        %v2799 = vrot.slane %v2798, 1
        %v2800 = vmax.f32 %v2798, %v2799
        %v2801 = vsel %vm2198, %v1897, -inf
        %v2802 = vrot.slane %v2801, 4
        %v2803 = vmax.f32 %v2801, %v2802
        %v2804 = vrot.slane %v2803, 2
        %v2805 = vmax.f32 %v2803, %v2804
        %v2806 = vrot.slane %v2805, 1
        %v2807 = vmax.f32 %v2805, %v2806
        %v2808 = vsel %vm2198, %v1899, -inf
        %v2809 = vrot.slane %v2808, 4
        %v2810 = vmax.f32 %v2808, %v2809
        %v2811 = vrot.slane %v2810, 2
        %v2812 = vmax.f32 %v2810, %v2811
        %v2813 = vrot.slane %v2812, 1
        %v2814 = vmax.f32 %v2812, %v2813
        %v2815 = vsel %vm2198, %v1907, -inf
        %v2816 = vrot.slane %v2815, 4
        %v2817 = vmax.f32 %v2815, %v2816
        %v2818 = vrot.slane %v2817, 2
        %v2819 = vmax.f32 %v2817, %v2818
        %v2820 = vrot.slane %v2819, 1
        %v2821 = vmax.f32 %v2819, %v2820
        %v2822 = vsel %vm2198, %v1915, -inf
        %v2823 = vrot.slane %v2822, 4
        %v2824 = vmax.f32 %v2822, %v2823
        %v2825 = vrot.slane %v2824, 2
        %v2826 = vmax.f32 %v2824, %v2825
        %v2827 = vrot.slane %v2826, 1
        %v2828 = vmax.f32 %v2826, %v2827
        %v2829 = vsel %vm2198, %v1914, -inf
        %v2830 = vrot.slane %v2829, 4
        %v2831 = vmax.f32 %v2829, %v2830
        %v2832 = vrot.slane %v2831, 2
        %v2833 = vmax.f32 %v2831, %v2832
        %v2834 = vrot.slane %v2833, 1
        %v2835 = vmax.f32 %v2833, %v2834
        %v2836 = vsel %vm2198, %v1916, -inf
        %v2837 = vrot.slane %v2836, 4
        %v2838 = vmax.f32 %v2836, %v2837
        %v2839 = vrot.slane %v2838, 2
        %v2840 = vmax.f32 %v2838, %v2839
        %v2841 = vrot.slane %v2840, 1
        %v2842 = vmax.f32 %v2840, %v2841
        %v2843 = vsel %vm2198, %v1924, -inf
        %v2844 = vrot.slane %v2843, 4
        %v2845 = vmax.f32 %v2843, %v2844
        %v2846 = vrot.slane %v2845, 2
        %v2847 = vmax.f32 %v2845, %v2846
        %v2848 = vrot.slane %v2847, 1
        %v2849 = vmax.f32 %v2847, %v2848
        %v2850 = vsel %vm2198, %v1932, -inf
        %v2851 = vrot.slane %v2850, 4
        %v2852 = vmax.f32 %v2850, %v2851
        %v2853 = vrot.slane %v2852, 2
        %v2854 = vmax.f32 %v2852, %v2853
        %v2855 = vrot.slane %v2854, 1
        %v2856 = vmax.f32 %v2854, %v2855
        %v2857 = vsel %vm2198, %v1931, -inf
        %v2858 = vrot.slane %v2857, 4
        %v2859 = vmax.f32 %v2857, %v2858
        %v2860 = vrot.slane %v2859, 2
        %v2861 = vmax.f32 %v2859, %v2860
        %v2862 = vrot.slane %v2861, 1
        %v2863 = vmax.f32 %v2861, %v2862
        %v2864 = vsel %vm2198, %v1933, -inf
        %v2865 = vrot.slane %v2864, 4
        %v2866 = vmax.f32 %v2864, %v2865
        %v2867 = vrot.slane %v2866, 2
        %v2868 = vmax.f32 %v2866, %v2867
        %v2869 = vrot.slane %v2868, 1
        %v2870 = vmax.f32 %v2868, %v2869
        %v2871 = vsel %vm2198, %v1941, -inf
        %v2872 = vrot.slane %v2871, 4
        %v2873 = vmax.f32 %v2871, %v2872
        %v2874 = vrot.slane %v2873, 2
        %v2875 = vmax.f32 %v2873, %v2874
        %v2876 = vrot.slane %v2875, 1
        %v2877 = vmax.f32 %v2875, %v2876
        %v2878 = vsel %vm2198, %v1949, -inf
        %v2879 = vrot.slane %v2878, 4
        %v2880 = vmax.f32 %v2878, %v2879
        %v2881 = vrot.slane %v2880, 2
        %v2882 = vmax.f32 %v2880, %v2881
        %v2883 = vrot.slane %v2882, 1
        %v2884 = vmax.f32 %v2882, %v2883
        %v2885 = vsel %vm2198, %v1948, -inf
        %v2886 = vrot.slane %v2885, 4
        %v2887 = vmax.f32 %v2885, %v2886
        %v2888 = vrot.slane %v2887, 2
        %v2889 = vmax.f32 %v2887, %v2888
        %v2890 = vrot.slane %v2889, 1
        %v2891 = vmax.f32 %v2889, %v2890
        %v2892 = vsel %vm2198, %v1950, -inf
        %v2893 = vrot.slane %v2892, 4
        %v2894 = vmax.f32 %v2892, %v2893
        %v2895 = vrot.slane %v2894, 2
        %v2896 = vmax.f32 %v2894, %v2895
        %v2897 = vrot.slane %v2896, 1
        %v2898 = vmax.f32 %v2896, %v2897
        %v2899 = vsel %vm2198, %v1958, -inf
        %v2900 = vrot.slane %v2899, 4
        %v2901 = vmax.f32 %v2899, %v2900
        %v2902 = vrot.slane %v2901, 2
        %v2903 = vmax.f32 %v2901, %v2902
        %v2904 = vrot.slane %v2903, 1
        %v2905 = vmax.f32 %v2903, %v2904
        %v2906 = vsel %vm2198, %v1966, -inf
        %v2907 = vrot.slane %v2906, 4
        %v2908 = vmax.f32 %v2906, %v2907
        %v2909 = vrot.slane %v2908, 2
        %v2910 = vmax.f32 %v2908, %v2909
        %v2911 = vrot.slane %v2910, 1
        %v2912 = vmax.f32 %v2910, %v2911
        %v2913 = vsel %vm2198, %v1965, -inf
        %v2914 = vrot.slane %v2913, 4
        %v2915 = vmax.f32 %v2913, %v2914
        %v2916 = vrot.slane %v2915, 2
        %v2917 = vmax.f32 %v2915, %v2916
        %v2918 = vrot.slane %v2917, 1
        %v2919 = vmax.f32 %v2917, %v2918
        %v2920 = vsel %vm2198, %v1967, -inf
        %v2921 = vrot.slane %v2920, 4
        %v2922 = vmax.f32 %v2920, %v2921
        %v2923 = vrot.slane %v2922, 2
        %v2924 = vmax.f32 %v2922, %v2923
        %v2925 = vrot.slane %v2924, 1
        %v2926 = vmax.f32 %v2924, %v2925
        %v2927 = vsel %vm2198, %v1975, -inf
        %v2928 = vrot.slane %v2927, 4
        %v2929 = vmax.f32 %v2927, %v2928
        %v2930 = vrot.slane %v2929, 2
        %v2931 = vmax.f32 %v2929, %v2930
        %v2932 = vrot.slane %v2931, 1
        %v2933 = vmax.f32 %v2931, %v2932
        %v2934 = vsel %vm2198, %v1983, -inf
        %v2935 = vrot.slane %v2934, 4
        %v2936 = vmax.f32 %v2934, %v2935
        %v2937 = vrot.slane %v2936, 2
        %v2938 = vmax.f32 %v2936, %v2937
        %v2939 = vrot.slane %v2938, 1
        %v2940 = vmax.f32 %v2938, %v2939
        %v2941 = vsel %vm2198, %v1982, -inf
        %v2942 = vrot.slane %v2941, 4
        %v2943 = vmax.f32 %v2941, %v2942
        %v2944 = vrot.slane %v2943, 2
        %v2945 = vmax.f32 %v2943, %v2944
        %v2946 = vrot.slane %v2945, 1
        %v2947 = vmax.f32 %v2945, %v2946
        %v2948 = vsel %vm2198, %v1984, -inf
        %v2949 = vrot.slane %v2948, 4
        %v2950 = vmax.f32 %v2948, %v2949
        %v2951 = vrot.slane %v2950, 2
        %v2952 = vmax.f32 %v2950, %v2951
        %v2953 = vrot.slane %v2952, 1
        %v2954 = vmax.f32 %v2952, %v2953
        %v2955 = vsel %vm2198, %v1992, -inf
        %v2956 = vrot.slane %v2955, 4
        %v2957 = vmax.f32 %v2955, %v2956
        %v2958 = vrot.slane %v2957, 2
        %v2959 = vmax.f32 %v2957, %v2958
        %v2960 = vrot.slane %v2959, 1
        %v2961 = vmax.f32 %v2959, %v2960
        %v2962 = vsel %vm2198, %v2000, -inf
        %v2963 = vrot.slane %v2962, 4
        %v2964 = vmax.f32 %v2962, %v2963
        %v2965 = vrot.slane %v2964, 2
        %v2966 = vmax.f32 %v2964, %v2965
        %v2967 = vrot.slane %v2966, 1
        %v2968 = vmax.f32 %v2966, %v2967
        %v2969 = vsel %vm2198, %v1999, -inf
        %v2970 = vrot.slane %v2969, 4
        %v2971 = vmax.f32 %v2969, %v2970
        %v2972 = vrot.slane %v2971, 2
        %v2973 = vmax.f32 %v2971, %v2972
        %v2974 = vrot.slane %v2973, 1
        %v2975 = vmax.f32 %v2973, %v2974
        %v2976 = vsel %vm2198, %v2001, -inf
        %v2977 = vrot.slane %v2976, 4
        %v2978 = vmax.f32 %v2976, %v2977
        %v2979 = vrot.slane %v2978, 2
        %v2980 = vmax.f32 %v2978, %v2979
        %v2981 = vrot.slane %v2980, 1
        %v2982 = vmax.f32 %v2980, %v2981
        %v2983 = vsel %vm2198, %v2009, -inf
        %v2984 = vrot.slane %v2983, 4
        %v2985 = vmax.f32 %v2983, %v2984
        %v2986 = vrot.slane %v2985, 2
        %v2987 = vmax.f32 %v2985, %v2986
        %v2988 = vrot.slane %v2987, 1
        %v2989 = vmax.f32 %v2987, %v2988
        %v2990 = vsel %vm2198, %v2017, -inf
        %v2991 = vrot.slane %v2990, 4
        %v2992 = vmax.f32 %v2990, %v2991
        %v2993 = vrot.slane %v2992, 2
        %v2994 = vmax.f32 %v2992, %v2993
        %v2995 = vrot.slane %v2994, 1
        %v2996 = vmax.f32 %v2994, %v2995
        %v2997 = vsel %vm2198, %v2016, -inf
        %v2998 = vrot.slane %v2997, 4
        %v2999 = vmax.f32 %v2997, %v2998
        %v3000 = vrot.slane %v2999, 2
        %v3001 = vmax.f32 %v2999, %v3000
        %v3002 = vrot.slane %v3001, 1
        %v3003 = vmax.f32 %v3001, %v3002
        %v3004 = vsel %vm2198, %v2018, -inf
        %v3005 = vrot.slane %v3004, 4
        %v3006 = vmax.f32 %v3004, %v3005
        %v3007 = vrot.slane %v3006, 2
        %v3008 = vmax.f32 %v3006, %v3007
        %v3009 = vrot.slane %v3008, 1
        %v3010 = vmax.f32 %v3008, %v3009
        %v3011 = vsel %vm2198, %v2026, -inf
        %v3012 = vrot.slane %v3011, 4
        %v3013 = vmax.f32 %v3011, %v3012
        %v3014 = vrot.slane %v3013, 2
        %v3015 = vmax.f32 %v3013, %v3014
        %v3016 = vrot.slane %v3015, 1
        %v3017 = vmax.f32 %v3015, %v3016
        %v3018 = vsel %vm2198, %v2034, -inf
        %v3019 = vrot.slane %v3018, 4
        %v3020 = vmax.f32 %v3018, %v3019
        %v3021 = vrot.slane %v3020, 2
        %v3022 = vmax.f32 %v3020, %v3021
        %v3023 = vrot.slane %v3022, 1
        %v3024 = vmax.f32 %v3022, %v3023
        %v3025 = vsel %vm2198, %v2033, -inf
        %v3026 = vrot.slane %v3025, 4
        %v3027 = vmax.f32 %v3025, %v3026
        %v3028 = vrot.slane %v3027, 2
        %v3029 = vmax.f32 %v3027, %v3028
        %v3030 = vrot.slane %v3029, 1
        %v3031 = vmax.f32 %v3029, %v3030
        %v3032 = vsel %vm2198, %v2035, -inf
        %v3033 = vrot.slane %v3032, 4
        %v3034 = vmax.f32 %v3032, %v3033
        %v3035 = vrot.slane %v3034, 2
        %v3036 = vmax.f32 %v3034, %v3035
        %v3037 = vrot.slane %v3036, 1
        %v3038 = vmax.f32 %v3036, %v3037
        %v3039 = vsel %vm2198, %v2043, -inf
        %v3040 = vrot.slane %v3039, 4
        %v3041 = vmax.f32 %v3039, %v3040
        %v3042 = vrot.slane %v3041, 2
        %v3043 = vmax.f32 %v3041, %v3042
        %v3044 = vrot.slane %v3043, 1
        %v3045 = vmax.f32 %v3043, %v3044
        %v3046 = vsel %vm2198, %v2051, -inf
        %v3047 = vrot.slane %v3046, 4
        %v3048 = vmax.f32 %v3046, %v3047
        %v3049 = vrot.slane %v3048, 2
        %v3050 = vmax.f32 %v3048, %v3049
        %v3051 = vrot.slane %v3050, 1
        %v3052 = vmax.f32 %v3050, %v3051
        %v3053 = vsel %vm2198, %v2050, -inf
        %v3054 = vrot.slane %v3053, 4
        %v3055 = vmax.f32 %v3053, %v3054
        %v3056 = vrot.slane %v3055, 2
        %v3057 = vmax.f32 %v3055, %v3056
        %v3058 = vrot.slane %v3057, 1
        %v3059 = vmax.f32 %v3057, %v3058
        %v3060 = vsel %vm2198, %v2052, -inf
        %v3061 = vrot.slane %v3060, 4
        %v3062 = vmax.f32 %v3060, %v3061
        %v3063 = vrot.slane %v3062, 2
        %v3064 = vmax.f32 %v3062, %v3063
        %v3065 = vrot.slane %v3064, 1
        %v3066 = vmax.f32 %v3064, %v3065
        %v3067 = vsel %vm2198, %v2060, -inf
        %v3068 = vrot.slane %v3067, 4
        %v3069 = vmax.f32 %v3067, %v3068
        %v3070 = vrot.slane %v3069, 2
        %v3071 = vmax.f32 %v3069, %v3070
        %v3072 = vrot.slane %v3071, 1
        %v3073 = vmax.f32 %v3071, %v3072
        %v3074 = vsel %vm2198, %v2068, -inf
        %v3075 = vrot.slane %v3074, 4
        %v3076 = vmax.f32 %v3074, %v3075
        %v3077 = vrot.slane %v3076, 2
        %v3078 = vmax.f32 %v3076, %v3077
        %v3079 = vrot.slane %v3078, 1
        %v3080 = vmax.f32 %v3078, %v3079
        %v3081 = vsel %vm2198, %v2067, -inf
        %v3082 = vrot.slane %v3081, 4
        %v3083 = vmax.f32 %v3081, %v3082
        %v3084 = vrot.slane %v3083, 2
        %v3085 = vmax.f32 %v3083, %v3084
        %v3086 = vrot.slane %v3085, 1
        %v3087 = vmax.f32 %v3085, %v3086
        %v3088 = vsel %vm2198, %v2069, -inf
        %v3089 = vrot.slane %v3088, 4
        %v3090 = vmax.f32 %v3088, %v3089
        %v3091 = vrot.slane %v3090, 2
        %v3092 = vmax.f32 %v3090, %v3091
        %v3093 = vrot.slane %v3092, 1
        %v3094 = vmax.f32 %v3092, %v3093
        %vm3111 = vcmask 1041409
        %v3112 = vsel %vm3111, %v2261, %v2205
        %vm3113 = vcmask 1042434
        %v3114 = vsel %vm3113, %v2317, %v3112
        %vm3115 = vcmask 1043459
        %v3116 = vsel %vm3115, %v2373, %v3114
        %vm3117 = vcmask 1044484
        %v3118 = vsel %vm3117, %v2429, %v3116
        %vm3119 = vcmask 1045509
        %v3120 = vsel %vm3119, %v2485, %v3118
        %vm3121 = vcmask 1046534
        %v3122 = vsel %vm3121, %v2541, %v3120
        %vm3123 = vcmask 1047559
        %v3124 = vsel %vm3123, %v2597, %v3122
        %v3125 = vsel %vm3111, %v2709, %v2653
        %v3126 = vsel %vm3113, %v2765, %v3125
        %v3127 = vsel %vm3115, %v2821, %v3126
        %v3128 = vsel %vm3117, %v2877, %v3127
        %v3129 = vsel %vm3119, %v2933, %v3128
        %v3130 = vsel %vm3121, %v2989, %v3129
        %v3131 = vsel %vm3123, %v3045, %v3130
        %3134 = vrot.lane.b32.xlu0 %v3124, 96
        %v3135 = vpop.permute.xlu0 %3134
        %3136 = vrot.lane.b32.xlu0 %v3131, 96
        %v3137 = vpop.permute.xlu0 %3136
        %v3156 = vsel %vm3111, %v2268, %v2212
        %v3157 = vsel %vm3113, %v2324, %v3156
        %v3158 = vsel %vm3115, %v2380, %v3157
        %v3159 = vsel %vm3117, %v2436, %v3158
        %v3160 = vsel %vm3119, %v2492, %v3159
        %v3161 = vsel %vm3121, %v2548, %v3160
        %v3162 = vsel %vm3123, %v2604, %v3161
        %v3163 = vsel %vm3111, %v2716, %v2660
        %v3164 = vsel %vm3113, %v2772, %v3163
        %v3165 = vsel %vm3115, %v2828, %v3164
        %v3166 = vsel %vm3117, %v2884, %v3165
        %v3167 = vsel %vm3119, %v2940, %v3166
        %v3168 = vsel %vm3121, %v2996, %v3167
        %v3169 = vsel %vm3123, %v3052, %v3168
        %3170 = vrot.lane.b32.xlu0 %v3162, 64
        %v3171 = vpop.permute.xlu0 %3170
        %3172 = vrot.lane.b32.xlu0 %v3169, 64
        %v3173 = vpop.permute.xlu0 %3172
        %3176 = vrot.lane.b32.xlu0 %v3162, 32
        %v3177 = vpop.permute.xlu0 %3176
        %3178 = vrot.lane.b32.xlu0 %v3169, 32
        %v3179 = vpop.permute.xlu0 %3178
        %v3198 = vsel %vm3111, %v2275, %v2219
        %v3199 = vsel %vm3113, %v2331, %v3198
        %v3200 = vsel %vm3115, %v2387, %v3199
        %v3201 = vsel %vm3117, %v2443, %v3200
        %v3202 = vsel %vm3119, %v2499, %v3201
        %v3203 = vsel %vm3121, %v2555, %v3202
        %v3204 = vsel %vm3123, %v2611, %v3203
        %v3205 = vsel %vm3111, %v2723, %v2667
        %v3206 = vsel %vm3113, %v2779, %v3205
        %v3207 = vsel %vm3115, %v2835, %v3206
        %v3208 = vsel %vm3117, %v2891, %v3207
        %v3209 = vsel %vm3119, %v2947, %v3208
        %v3210 = vsel %vm3121, %v3003, %v3209
        %v3211 = vsel %vm3123, %v3059, %v3210
        %3214 = vrot.lane.b32.xlu0 %v3204, 96
        %v3215 = vpop.permute.xlu0 %3214
        %3216 = vrot.lane.b32.xlu0 %v3211, 96
        %v3217 = vpop.permute.xlu0 %3216
        %v3236 = vsel %vm3111, %v2282, %v2226
        %v3237 = vsel %vm3113, %v2338, %v3236
        %v3238 = vsel %vm3115, %v2394, %v3237
        %v3239 = vsel %vm3117, %v2450, %v3238
        %v3240 = vsel %vm3119, %v2506, %v3239
        %v3241 = vsel %vm3121, %v2562, %v3240
        %v3242 = vsel %vm3123, %v2618, %v3241
        %v3243 = vsel %vm3111, %v2730, %v2674
        %v3244 = vsel %vm3113, %v2786, %v3243
        %v3245 = vsel %vm3115, %v2842, %v3244
        %v3246 = vsel %vm3117, %v2898, %v3245
        %v3247 = vsel %vm3119, %v2954, %v3246
        %v3248 = vsel %vm3121, %v3010, %v3247
        %v3249 = vsel %vm3123, %v3066, %v3248
        %3250 = vrot.lane.b32.xlu0 %v3242, 64
        %v3251 = vpop.permute.xlu0 %3250
        %3252 = vrot.lane.b32.xlu0 %v3249, 64
        %v3253 = vpop.permute.xlu0 %3252
        %3256 = vrot.lane.b32.xlu0 %v3242, 32
        %v3257 = vpop.permute.xlu0 %3256
        %3258 = vrot.lane.b32.xlu0 %v3249, 32
        %v3259 = vpop.permute.xlu0 %3258
        %v3278 = vsel %vm3111, %v2289, %v2233
        %v3279 = vsel %vm3113, %v2345, %v3278
        %v3280 = vsel %vm3115, %v2401, %v3279
        %v3281 = vsel %vm3117, %v2457, %v3280
        %v3282 = vsel %vm3119, %v2513, %v3281
        %v3283 = vsel %vm3121, %v2569, %v3282
        %v3284 = vsel %vm3123, %v2625, %v3283
        %v3285 = vsel %vm3111, %v2737, %v2681
        %v3286 = vsel %vm3113, %v2793, %v3285
        %v3287 = vsel %vm3115, %v2849, %v3286
        %v3288 = vsel %vm3117, %v2905, %v3287
        %v3289 = vsel %vm3119, %v2961, %v3288
        %v3290 = vsel %vm3121, %v3017, %v3289
        %v3291 = vsel %vm3123, %v3073, %v3290
        %3294 = vrot.lane.b32.xlu0 %v3284, 96
        %v3295 = vpop.permute.xlu0 %3294
        %3296 = vrot.lane.b32.xlu0 %v3291, 96
        %v3297 = vpop.permute.xlu0 %3296
        %v3316 = vsel %vm3111, %v2296, %v2240
        %v3317 = vsel %vm3113, %v2352, %v3316
        %v3318 = vsel %vm3115, %v2408, %v3317
        %v3319 = vsel %vm3117, %v2464, %v3318
        %v3320 = vsel %vm3119, %v2520, %v3319
        %v3321 = vsel %vm3121, %v2576, %v3320
        %v3322 = vsel %vm3123, %v2632, %v3321
        %v3323 = vsel %vm3111, %v2744, %v2688
        %v3324 = vsel %vm3113, %v2800, %v3323
        %v3325 = vsel %vm3115, %v2856, %v3324
        %v3326 = vsel %vm3117, %v2912, %v3325
        %v3327 = vsel %vm3119, %v2968, %v3326
        %v3328 = vsel %vm3121, %v3024, %v3327
        %v3329 = vsel %vm3123, %v3080, %v3328
        %3330 = vrot.lane.b32.xlu0 %v3322, 64
        %v3331 = vpop.permute.xlu0 %3330
        %3332 = vrot.lane.b32.xlu0 %v3329, 64
        %v3333 = vpop.permute.xlu0 %3332
        %3336 = vrot.lane.b32.xlu0 %v3322, 32
        %v3337 = vpop.permute.xlu0 %3336
        %3338 = vrot.lane.b32.xlu0 %v3329, 32
        %v3339 = vpop.permute.xlu0 %3338
        %v3358 = vsel %vm3111, %v2303, %v2247
        %v3359 = vsel %vm3113, %v2359, %v3358
        %v3360 = vsel %vm3115, %v2415, %v3359
        %v3361 = vsel %vm3117, %v2471, %v3360
        %v3362 = vsel %vm3119, %v2527, %v3361
        %v3363 = vsel %vm3121, %v2583, %v3362
        %v3364 = vsel %vm3123, %v2639, %v3363
        %v3365 = vsel %vm3111, %v2751, %v2695
        %v3366 = vsel %vm3113, %v2807, %v3365
        %v3367 = vsel %vm3115, %v2863, %v3366
        %v3368 = vsel %vm3117, %v2919, %v3367
        %v3369 = vsel %vm3119, %v2975, %v3368
        %v3370 = vsel %vm3121, %v3031, %v3369
        %v3371 = vsel %vm3123, %v3087, %v3370
        %3374 = vrot.lane.b32.xlu0 %v3364, 96
        %v3375 = vpop.permute.xlu0 %3374
        %3376 = vrot.lane.b32.xlu0 %v3371, 96
        %v3377 = vpop.permute.xlu0 %3376
        %v3396 = vsel %vm3111, %v2310, %v2254
        %v3397 = vsel %vm3113, %v2366, %v3396
        %v3398 = vsel %vm3115, %v2422, %v3397
        %v3399 = vsel %vm3117, %v2478, %v3398
        %v3400 = vsel %vm3119, %v2534, %v3399
        %v3401 = vsel %vm3121, %v2590, %v3400
        %v3402 = vsel %vm3123, %v2646, %v3401
        %v3403 = vsel %vm3111, %v2758, %v2702
        %v3404 = vsel %vm3113, %v2814, %v3403
        %v3405 = vsel %vm3115, %v2870, %v3404
        %v3406 = vsel %vm3117, %v2926, %v3405
        %v3407 = vsel %vm3119, %v2982, %v3406
        %v3408 = vsel %vm3121, %v3038, %v3407
        %v3409 = vsel %vm3123, %v3094, %v3408
        %3410 = vrot.lane.b32.xlu0 %v3402, 64
        %v3411 = vpop.permute.xlu0 %3410
        %3412 = vrot.lane.b32.xlu0 %v3409, 64
        %v3413 = vpop.permute.xlu0 %3412
        %3416 = vrot.lane.b32.xlu0 %v3402, 32
        %v3417 = vpop.permute.xlu0 %3416
        %3418 = vrot.lane.b32.xlu0 %v3409, 32
        %v3419 = vpop.permute.xlu0 %3418
        %vm3422 = vcmask 261120
        %v3423 = vsel %vm3422, %v3124, %v3135
        %v3424 = vsel %vm3422, %v3131, %v3137
        %vm3425 = vcmask 523264
        %v3426 = vsel %vm3425, %v3423, %v3171
        %v3427 = vsel %vm3425, %v3424, %v3173
        %vm3428 = vcmask 785408
        %v3429 = vsel %vm3428, %v3426, %v3177
        %v3430 = vsel %vm3428, %v3427, %v3179
        %v3431 = vsel %vm3422, %v3204, %v3215
        %v3432 = vsel %vm3422, %v3211, %v3217
        %v3433 = vsel %vm3425, %v3431, %v3251
        %v3434 = vsel %vm3425, %v3432, %v3253
        %v3435 = vsel %vm3428, %v3433, %v3257
        %v3436 = vsel %vm3428, %v3434, %v3259
        %v3437 = vsel %vm3422, %v3284, %v3295
        %v3438 = vsel %vm3422, %v3291, %v3297
        %v3439 = vsel %vm3425, %v3437, %v3331
        %v3440 = vsel %vm3425, %v3438, %v3333
        %v3441 = vsel %vm3428, %v3439, %v3337
        %v3442 = vsel %vm3428, %v3440, %v3339
        %v3443 = vsel %vm3422, %v3364, %v3375
        %v3444 = vsel %vm3422, %v3371, %v3377
        %v3445 = vsel %vm3425, %v3443, %v3411
        %v3446 = vsel %vm3425, %v3444, %v3413
        %v3447 = vsel %vm3428, %v3445, %v3417
        %v3448 = vsel %vm3428, %v3446, %v3419
        %3449 = vrot.lane.b32.xlu0 %v3124, 64
        %v3450 = vpop.permute.xlu0 %3449
        %3451 = vrot.lane.b32.xlu0 %v3131, 64
        %v3452 = vpop.permute.xlu0 %3451
        %3457 = vrot.lane.b32.xlu0 %v3204, 64
        %v3458 = vpop.permute.xlu0 %3457
        %3459 = vrot.lane.b32.xlu0 %v3211, 64
        %v3460 = vpop.permute.xlu0 %3459
        %3465 = vrot.lane.b32.xlu0 %v3284, 64
        %v3466 = vpop.permute.xlu0 %3465
        %3467 = vrot.lane.b32.xlu0 %v3291, 64
        %v3468 = vpop.permute.xlu0 %3467
        %3473 = vrot.lane.b32.xlu0 %v3364, 64
        %v3474 = vpop.permute.xlu0 %3473
        %3475 = vrot.lane.b32.xlu0 %v3371, 64
        %v3476 = vpop.permute.xlu0 %3475
        %v3481 = vsel %vm3422, %v3135, %v3450
        %v3482 = vsel %vm3422, %v3137, %v3452
        %v3483 = vsel %vm3425, %v3481, %v3177
        %v3484 = vsel %vm3425, %v3482, %v3179
        %v3485 = vsel %vm3428, %v3483, %v3162
        %v3486 = vsel %vm3428, %v3484, %v3169
        %v3487 = vsel %vm3422, %v3215, %v3458
        %v3488 = vsel %vm3422, %v3217, %v3460
        %v3489 = vsel %vm3425, %v3487, %v3257
        %v3490 = vsel %vm3425, %v3488, %v3259
        %v3491 = vsel %vm3428, %v3489, %v3242
        %v3492 = vsel %vm3428, %v3490, %v3249
        %v3493 = vsel %vm3422, %v3295, %v3466
        %v3494 = vsel %vm3422, %v3297, %v3468
        %v3495 = vsel %vm3425, %v3493, %v3337
        %v3496 = vsel %vm3425, %v3494, %v3339
        %v3497 = vsel %vm3428, %v3495, %v3322
        %v3498 = vsel %vm3428, %v3496, %v3329
        %v3499 = vsel %vm3422, %v3375, %v3474
        %v3500 = vsel %vm3422, %v3377, %v3476
        %v3501 = vsel %vm3425, %v3499, %v3417
        %v3502 = vsel %vm3425, %v3500, %v3419
        %v3503 = vsel %vm3428, %v3501, %v3402
        %v3504 = vsel %vm3428, %v3502, %v3409
        %v3505 = vmax.f32 %v3429, %v3485
        %v3506 = vmax.f32 %v3435, %v3491
        %v3507 = vmax.f32 %v3441, %v3497
        %v3508 = vmax.f32 %v3447, %v3503
        %v3509 = vmax.f32 %v3430, %v3486
        %v3510 = vmax.f32 %v3436, %v3492
        %v3511 = vmax.f32 %v3442, %v3498
        %v3512 = vmax.f32 %v3448, %v3504
        %vm3513 = vcmask 1040384
        %vm3514 = vmand %vm3513, %vm443
        %vm3515 = vcmask 1044484
        %vm3516 = vsmask.f32 4352
        %vm3517 = vmand %vm3515, %vm3516
        %vm3518 = vmor %vm3517, %vm3514
        %v3519 = vld [vmem:[#allocation3] sm:$0x11]
        %v3520 = vsel %vm3518, 0, %v3519
        %3521 = vst [vmem:[#allocation3] sm:$0x11] %v3520
        %v3522 = vld [vmem:[#allocation3 + $0x8] sm:$0x11]
        %v3523 = vsel %vm3518, 0, %v3522
        %3524 = vst [vmem:[#allocation3 + $0x8] sm:$0x11] %v3523
        %vm3525 = vmand %vm3513, %vm497
        %vm3526 = vsmask.f32 7954
        %vm3527 = vmand %vm3515, %vm3526
        %vm3528 = vmor %vm3527, %vm3525
        %v3529 = vld [vmem:[#allocation3 + $0x20] sm:$0x11]
        %v3530 = vsel %vm3528, 0, %v3529
        %3531 = vst [vmem:[#allocation3 + $0x20] sm:$0x11] %v3530
        %v3532 = vld [vmem:[#allocation3 + $0x28] sm:$0x11]
        %v3533 = vsel %vm3528, 0, %v3532
        %3534 = vst [vmem:[#allocation3 + $0x28] sm:$0x11] %v3533
        %v3535 = vpack.c.bf16 %v3509, %v3505
        %v3536 = vpack.c.bf16 %v3510, %v3506
        %v3537 = vpack.c.bf16 %v3511, %v3507
        %v3538 = vpack.c.bf16 %v3512, %v3508
        %v3543 = vunpack.c.l.b16 %v3535
        %v3544 = vunpack.c.l.b16 %v3536
        %v3545 = vunpack.c.l.b16 %v3537
        %v3546 = vunpack.c.l.b16 %v3538
        %v3547 = vunpack.c.h.b16 %v3535
        %v3548 = vunpack.c.h.b16 %v3536
        %v3549 = vunpack.c.h.b16 %v3537
        %v3550 = vunpack.c.h.b16 %v3538
        %v3551 = vpack.c.b16 %v3544, %v3543
        %v3552 = vpack.c.b16 %v3546, %v3545
        %v3553 = vpack.c.b16 %v3548, %v3547
        %v3554 = vpack.c.b16 %v3550, %v3549
        %v3556 = vshrl.u32 %v3551, 16
        %v3558 = vrot.slane %v3556, 7
        %v3559 = vshll.u32 %v3551, 16
        %v3561 = vor.u32 %v3558, %v3559
        %v3563 = vshrl.u32 %v3552, 16
        %v3565 = vrot.slane %v3563, 7
        %v3566 = vshll.u32 %v3552, 16
        %v3568 = vor.u32 %v3565, %v3566
        %v3569 = vrot.slane %v3558, 4
        %v3571 = vshrl.u32 %v3553, 16
        %v3573 = vrot.slane %v3571, 7
        %v3574 = vshll.u32 %v3553, 16
        %v3576 = vor.u32 %v3573, %v3574
        %v3577 = vsel %vm445, %v3569, %v3576
        %v3578 = vrot.slane %v3565, 4
        %v3580 = vshrl.u32 %v3554, 16
        %v3582 = vrot.slane %v3580, 7
        %v3583 = vshll.u32 %v3554, 16
        %v3585 = vor.u32 %v3582, %v3583
        %v3586 = vsel %vm445, %v3578, %v3585
        %v3587 = vrot.slane %v3573, 4
        %v3588 = vrot.slane %v3582, 4
        %vm3595 = vcmask 1043456
        %vm3596 = vmand %vm3595, %vm497
        %vm3597 = vcmask 1047556
        %vm3598 = vmand %vm3597, %vm3526
        %vm3599 = vmor %vm3598, %vm3596
        %v3600 = vld [vmem:[#allocation3] sm:$0xff]
        %v3601 = vsel %vm3599, %v3561, %v3600
        %3602 = vst [vmem:[#allocation3] sm:$0xff] %v3601
        %v3603 = vld [vmem:[#allocation3 + $0x8] sm:$0xff]
        %v3604 = vsel %vm3599, %v3568, %v3603
        %3605 = vst [vmem:[#allocation3 + $0x8] sm:$0xff] %v3604
        %3606 = vst [vmem:[#allocation3 + $0x10] sm:$0xff] %v3577
        %3607 = vst [vmem:[#allocation3 + $0x18] sm:$0xff] %v3586
        %v3608 = vld [vmem:[#allocation3 + $0x20] sm:$0x11]
        %v3609 = vsel %vm3518, %v3587, %v3608
        %3610 = vst [vmem:[#allocation3 + $0x20] sm:$0x11] %v3609
        %v3611 = vld [vmem:[#allocation3 + $0x28] sm:$0x11]
        %v3612 = vsel %vm3518, %v3588, %v3611
        %3613 = vst [vmem:[#allocation3 + $0x28] sm:$0x11] %v3612
        %v3614 = vld [vmem:[#allocation3] sm:$0xff]
        %v3615 = vld [vmem:[#allocation3 + $0x8] sm:$0xff]
        %v3616 = vld [vmem:[#allocation3 + $0x10] sm:$0xff]
        %v3617 = vld [vmem:[#allocation3 + $0x18] sm:$0xff]
        %v3618 = vld [vmem:[#allocation3 + $0x20] sm:$0x11]
        %v3619 = vld [vmem:[#allocation3 + $0x28] sm:$0x11]
        %v3620 = vld [vmem:[#allocation3] sm:$0xee]
        %v3621 = vld [vmem:[#allocation3 + $0x8] sm:$0xee]
        %v3626 = vunpack.c.l.b16 %v3614
        %v3627 = vunpack.c.h.b16 %v3614
        %v3628 = vunpack.c.l.b16 %v3615
        %v3629 = vunpack.c.h.b16 %v3615
        %v3630 = vunpack.c.l.b16 %v3616
        %v3631 = vunpack.c.h.b16 %v3616
        %v3632 = vunpack.c.l.b16 %v3617
        %v3633 = vunpack.c.h.b16 %v3617
        %v3634 = vpack.c.b16 %v3630, %v3626
        %v3635 = vpack.c.b16 %v3631, %v3627
        %v3636 = vpack.c.b16 %v3632, %v3628
        %v3637 = vpack.c.b16 %v3633, %v3629
        %v3644 = vunpack.c.l.b16 %v3618
        %v3645 = vunpack.c.h.b16 %v3618
        %v3646 = vunpack.c.l.b16 %v3619
        %v3647 = vunpack.c.h.b16 %v3619
        %v3648 = vpack.c.b16 %v3644, %v3644
        %v3649 = vpack.c.b16 %v3645, %v3645
        %v3650 = vpack.c.b16 %v3646, %v3646
        %v3651 = vpack.c.b16 %v3647, %v3647
        %v3653 = vshrl.u32 %v3634, 16
        %v3655 = vshll.u32 %v3634, 16
        %v3657 = vrot.slane %v3655, 1
        %v3658 = vor.u32 %v3653, %v3657
        %v3660 = vshll.u32 %v3648, 16
        %v3662 = vrot.slane %v3660, 1
        %v3663 = vsel %vm530, %v3658, %v3662
        %v3665 = vshrl.u32 %v3635, 16
        %v3667 = vshll.u32 %v3635, 16
        %v3669 = vrot.slane %v3667, 1
        %v3670 = vor.u32 %v3665, %v3669
        %v3672 = vshll.u32 %v3649, 16
        %v3674 = vrot.slane %v3672, 1
        %v3675 = vsel %vm530, %v3670, %v3674
        %v3677 = vshrl.u32 %v3636, 16
        %v3679 = vshll.u32 %v3636, 16
        %v3681 = vrot.slane %v3679, 1
        %v3682 = vor.u32 %v3677, %v3681
        %v3684 = vshll.u32 %v3650, 16
        %v3686 = vrot.slane %v3684, 1
        %v3687 = vsel %vm530, %v3682, %v3686
        %v3689 = vshrl.u32 %v3637, 16
        %v3691 = vshll.u32 %v3637, 16
        %v3693 = vrot.slane %v3691, 1
        %v3694 = vor.u32 %v3689, %v3693
        %v3696 = vshll.u32 %v3651, 16
        %v3698 = vrot.slane %v3696, 1
        %v3699 = vsel %vm530, %v3694, %v3698
        %v3706 = vunpack.c.l.b16 %v3620
        %v3707 = vunpack.c.h.b16 %v3620
        %v3708 = vunpack.c.l.b16 %v3621
        %v3709 = vunpack.c.h.b16 %v3621
        %v3710 = vpack.c.b16 %v3630, %v3706
        %v3711 = vpack.c.b16 %v3631, %v3707
        %v3712 = vpack.c.b16 %v3632, %v3708
        %v3713 = vpack.c.b16 %v3633, %v3709
        %v3714 = vrot.slane %v3710, 1
        %v3715 = vrot.slane %v3648, 1
        %v3716 = vsel %vm558, %v3714, %v3715
        %v3717 = vrot.slane %v3711, 1
        %v3718 = vrot.slane %v3649, 1
        %v3719 = vsel %vm558, %v3717, %v3718
        %v3720 = vrot.slane %v3712, 1
        %v3721 = vrot.slane %v3650, 1
        %v3722 = vsel %vm558, %v3720, %v3721
        %v3723 = vrot.slane %v3713, 1
        %v3724 = vrot.slane %v3651, 1
        %v3725 = vsel %vm558, %v3723, %v3724
        %v3730 = vld [vmem:[#allocation10] sm:$0xff]
        %v3731 = vld [vmem:[#allocation10 + $0x8] sm:$0xff]
        %v3732 = vld [vmem:[#allocation10 + $0x10] sm:$0xff]
        %v3733 = vld [vmem:[#allocation10 + $0x18] sm:$0xff]
        %v3734 = vld [vmem:[#allocation10 + $0x20] sm:$0xff]
        %v3735 = vld [vmem:[#allocation10 + $0x28] sm:$0xff]
        %v3736 = vld [vmem:[#allocation10 + $0x30] sm:$0xff]
        %v3737 = vld [vmem:[#allocation10 + $0x38] sm:$0xff]
        %v3738 = vld [vmem:[#allocation10 + $0x40] sm:$0xff]
        %v3739 = vld [vmem:[#allocation10 + $0x48] sm:$0xff]
        %v3740 = vld [vmem:[#allocation10 + $0x50] sm:$0xff]
        %v3741 = vld [vmem:[#allocation10 + $0x58] sm:$0xff]
        %v3742 = vld [vmem:[#allocation10 + $0x60] sm:$0xff]
        %v3743 = vld [vmem:[#allocation10 + $0x68] sm:$0xff]
        %v3744 = vld [vmem:[#allocation10 + $0x70] sm:$0xff]
        %v3745 = vld [vmem:[#allocation10 + $0x78] sm:$0xff]
        %v3746 = vld [vmem:[#allocation10 + $0x80] sm:$0xff]
        %v3747 = vld [vmem:[#allocation10 + $0x88] sm:$0xff]
        %v3748 = vld [vmem:[#allocation10 + $0x90] sm:$0xff]
        %v3749 = vld [vmem:[#allocation10 + $0x98] sm:$0xff]
        %v3750 = vld [vmem:[#allocation10 + $0xa0] sm:$0xff]
        %v3751 = vld [vmem:[#allocation10 + $0xa8] sm:$0xff]
        %v3752 = vld [vmem:[#allocation10 + $0xb0] sm:$0xff]
        %v3753 = vld [vmem:[#allocation10 + $0xb8] sm:$0xff]
        %v3754 = vld [vmem:[#allocation10 + $0xc0] sm:$0xff]
        %v3755 = vld [vmem:[#allocation10 + $0xc8] sm:$0xff]
        %v3756 = vld [vmem:[#allocation10 + $0xd0] sm:$0xff]
        %v3757 = vld [vmem:[#allocation10 + $0xd8] sm:$0xff]
        %v3758 = vld [vmem:[#allocation10 + $0xe0] sm:$0xff]
        %v3759 = vld [vmem:[#allocation10 + $0xe8] sm:$0xff]
        %v3760 = vld [vmem:[#allocation10 + $0xf0] sm:$0xff]
        %v3761 = vld [vmem:[#allocation10 + $0xf8] sm:$0xff]
        %v3762 = vld [vmem:[#allocation10 + $0x100] sm:$0xff]
        %v3763 = vld [vmem:[#allocation10 + $0x108] sm:$0xff]
        %v3764 = vld [vmem:[#allocation10 + $0x110] sm:$0xff]
        %v3765 = vld [vmem:[#allocation10 + $0x118] sm:$0xff]
        %v3766 = vld [vmem:[#allocation10 + $0x120] sm:$0xff]
        %v3767 = vld [vmem:[#allocation10 + $0x128] sm:$0xff]
        %v3768 = vld [vmem:[#allocation10 + $0x130] sm:$0xff]
        %v3769 = vld [vmem:[#allocation10 + $0x138] sm:$0xff]
        %v3770 = vld [vmem:[#allocation10 + $0x140] sm:$0xff]
        %v3771 = vld [vmem:[#allocation10 + $0x148] sm:$0xff]
        %v3772 = vld [vmem:[#allocation10 + $0x150] sm:$0xff]
        %v3773 = vld [vmem:[#allocation10 + $0x158] sm:$0xff]
        %v3774 = vld [vmem:[#allocation10 + $0x160] sm:$0xff]
        %v3775 = vld [vmem:[#allocation10 + $0x168] sm:$0xff]
        %v3776 = vld [vmem:[#allocation10 + $0x170] sm:$0xff]
        %v3777 = vld [vmem:[#allocation10 + $0x178] sm:$0xff]
        %v3778 = vld [vmem:[#allocation10 + $0x180] sm:$0xff]
        %v3779 = vld [vmem:[#allocation10 + $0x188] sm:$0xff]
        %v3780 = vld [vmem:[#allocation10 + $0x190] sm:$0xff]
        %v3781 = vld [vmem:[#allocation10 + $0x198] sm:$0xff]
        %v3782 = vld [vmem:[#allocation10 + $0x1a0] sm:$0xff]
        %v3783 = vld [vmem:[#allocation10 + $0x1a8] sm:$0xff]
        %v3784 = vld [vmem:[#allocation10 + $0x1b0] sm:$0xff]
        %v3785 = vld [vmem:[#allocation10 + $0x1b8] sm:$0xff]
        %v3786 = vld [vmem:[#allocation10 + $0x1c0] sm:$0xff]
        %v3787 = vld [vmem:[#allocation10 + $0x1c8] sm:$0xff]
        %v3788 = vld [vmem:[#allocation10 + $0x1d0] sm:$0xff]
        %v3789 = vld [vmem:[#allocation10 + $0x1d8] sm:$0xff]
        %v3790 = vld [vmem:[#allocation10 + $0x1e0] sm:$0xff]
        %v3791 = vld [vmem:[#allocation10 + $0x1e8] sm:$0xff]
        %v3792 = vld [vmem:[#allocation10 + $0x1f0] sm:$0xff]
        %v3793 = vld [vmem:[#allocation10 + $0x1f8] sm:$0xff]
        %v3794 = vld [vmem:[#allocation10 + $0x200] sm:$0xff]
        %v3795 = vld [vmem:[#allocation10 + $0x208] sm:$0xff]
        %v3796 = vld [vmem:[#allocation10 + $0x210] sm:$0xff]
        %v3797 = vld [vmem:[#allocation10 + $0x218] sm:$0xff]
        %v3798 = vld [vmem:[#allocation10 + $0x220] sm:$0xff]
        %v3799 = vld [vmem:[#allocation10 + $0x228] sm:$0xff]
        %v3800 = vld [vmem:[#allocation10 + $0x230] sm:$0xff]
        %v3801 = vld [vmem:[#allocation10 + $0x238] sm:$0xff]
        %v3802 = vld [vmem:[#allocation10 + $0x240] sm:$0xff]
        %v3803 = vld [vmem:[#allocation10 + $0x248] sm:$0xff]
        %v3804 = vld [vmem:[#allocation10 + $0x250] sm:$0xff]
        %v3805 = vld [vmem:[#allocation10 + $0x258] sm:$0xff]
        %v3806 = vld [vmem:[#allocation10 + $0x260] sm:$0xff]
        %v3807 = vld [vmem:[#allocation10 + $0x268] sm:$0xff]
        %v3808 = vld [vmem:[#allocation10 + $0x270] sm:$0xff]
        %v3809 = vld [vmem:[#allocation10 + $0x278] sm:$0xff]
        %v3810 = vld [vmem:[#allocation10 + $0x280] sm:$0xff]
        %v3811 = vld [vmem:[#allocation10 + $0x288] sm:$0xff]
        %v3812 = vld [vmem:[#allocation10 + $0x290] sm:$0xff]
        %v3813 = vld [vmem:[#allocation10 + $0x298] sm:$0xff]
        %v3814 = vld [vmem:[#allocation10 + $0x2a0] sm:$0xff]
        %v3815 = vld [vmem:[#allocation10 + $0x2a8] sm:$0xff]
        %v3816 = vld [vmem:[#allocation10 + $0x2b0] sm:$0xff]
        %v3817 = vld [vmem:[#allocation10 + $0x2b8] sm:$0xff]
        %v3818 = vld [vmem:[#allocation10 + $0x2c0] sm:$0xff]
        %v3819 = vld [vmem:[#allocation10 + $0x2c8] sm:$0xff]
        %v3820 = vld [vmem:[#allocation10 + $0x2d0] sm:$0xff]
        %v3821 = vld [vmem:[#allocation10 + $0x2d8] sm:$0xff]
        %v3822 = vld [vmem:[#allocation10 + $0x2e0] sm:$0xff]
        %v3823 = vld [vmem:[#allocation10 + $0x2e8] sm:$0xff]
        %v3824 = vld [vmem:[#allocation10 + $0x2f0] sm:$0xff]
        %v3825 = vld [vmem:[#allocation10 + $0x2f8] sm:$0xff]
        %v3826 = vld [vmem:[#allocation10 + $0x300] sm:$0xff]
        %v3827 = vld [vmem:[#allocation10 + $0x308] sm:$0xff]
        %v3828 = vld [vmem:[#allocation10 + $0x310] sm:$0xff]
        %v3829 = vld [vmem:[#allocation10 + $0x318] sm:$0xff]
        %v3830 = vld [vmem:[#allocation10 + $0x320] sm:$0xff]
        %v3831 = vld [vmem:[#allocation10 + $0x328] sm:$0xff]
        %v3832 = vld [vmem:[#allocation10 + $0x330] sm:$0xff]
        %v3833 = vld [vmem:[#allocation10 + $0x338] sm:$0xff]
        %v3834 = vld [vmem:[#allocation10 + $0x340] sm:$0xff]
        %v3835 = vld [vmem:[#allocation10 + $0x348] sm:$0xff]
        %v3836 = vld [vmem:[#allocation10 + $0x350] sm:$0xff]
        %v3837 = vld [vmem:[#allocation10 + $0x358] sm:$0xff]
        %v3838 = vld [vmem:[#allocation10 + $0x360] sm:$0xff]
        %v3839 = vld [vmem:[#allocation10 + $0x368] sm:$0xff]
        %v3840 = vld [vmem:[#allocation10 + $0x370] sm:$0xff]
        %v3841 = vld [vmem:[#allocation10 + $0x378] sm:$0xff]
        %v3842 = vld [vmem:[#allocation10 + $0x380] sm:$0xff]
        %v3843 = vld [vmem:[#allocation10 + $0x388] sm:$0xff]
        %v3844 = vld [vmem:[#allocation10 + $0x390] sm:$0xff]
        %v3845 = vld [vmem:[#allocation10 + $0x398] sm:$0xff]
        %v3846 = vld [vmem:[#allocation10 + $0x3a0] sm:$0xff]
        %v3847 = vld [vmem:[#allocation10 + $0x3a8] sm:$0xff]
        %v3848 = vld [vmem:[#allocation10 + $0x3b0] sm:$0xff]
        %v3849 = vld [vmem:[#allocation10 + $0x3b8] sm:$0xff]
        %v3850 = vld [vmem:[#allocation10 + $0x3c0] sm:$0xff]
        %v3851 = vld [vmem:[#allocation10 + $0x3c8] sm:$0xff]
        %v3852 = vld [vmem:[#allocation10 + $0x3d0] sm:$0xff]
        %v3853 = vld [vmem:[#allocation10 + $0x3d8] sm:$0xff]
        %v3854 = vld [vmem:[#allocation10 + $0x3e0] sm:$0xff]
        %v3855 = vld [vmem:[#allocation10 + $0x3e8] sm:$0xff]
        %v3856 = vld [vmem:[#allocation10 + $0x3f0] sm:$0xff]
        %v3857 = vld [vmem:[#allocation10 + $0x3f8] sm:$0xff]
        %v3858 = vld [vmem:[#allocation10 + $0x400] sm:$0xff]
        %v3859 = vld [vmem:[#allocation10 + $0x408] sm:$0xff]
        %v3860 = vld [vmem:[#allocation10 + $0x410] sm:$0xff]
        %v3861 = vld [vmem:[#allocation10 + $0x418] sm:$0xff]
        %v3862 = vld [vmem:[#allocation10 + $0x420] sm:$0xff]
        %v3863 = vld [vmem:[#allocation10 + $0x428] sm:$0xff]
        %v3864 = vld [vmem:[#allocation10 + $0x430] sm:$0xff]
        %v3865 = vld [vmem:[#allocation10 + $0x438] sm:$0xff]
        %v3866 = vld [vmem:[#allocation10 + $0x440] sm:$0xff]
        %v3867 = vld [vmem:[#allocation10 + $0x448] sm:$0xff]
        %v3868 = vld [vmem:[#allocation10 + $0x450] sm:$0xff]
        %v3869 = vld [vmem:[#allocation10 + $0x458] sm:$0xff]
        %v3870 = vld [vmem:[#allocation10 + $0x460] sm:$0xff]
        %v3871 = vld [vmem:[#allocation10 + $0x468] sm:$0xff]
        %v3872 = vld [vmem:[#allocation10 + $0x470] sm:$0xff]
        %v3873 = vld [vmem:[#allocation10 + $0x478] sm:$0xff]
        %v3874 = vld [vmem:[#allocation10 + $0x480] sm:$0xff]
        %v3875 = vld [vmem:[#allocation10 + $0x488] sm:$0xff]
        %v3876 = vld [vmem:[#allocation10 + $0x490] sm:$0xff]
        %v3877 = vld [vmem:[#allocation10 + $0x498] sm:$0xff]
        %v3878 = vld [vmem:[#allocation10 + $0x4a0] sm:$0xff]
        %v3879 = vld [vmem:[#allocation10 + $0x4a8] sm:$0xff]
        %v3880 = vld [vmem:[#allocation10 + $0x4b0] sm:$0xff]
        %v3881 = vld [vmem:[#allocation10 + $0x4b8] sm:$0xff]
        %v3882 = vld [vmem:[#allocation10 + $0x4c0] sm:$0xff]
        %v3883 = vld [vmem:[#allocation10 + $0x4c8] sm:$0xff]
        %v3884 = vld [vmem:[#allocation10 + $0x4d0] sm:$0xff]
        %v3885 = vld [vmem:[#allocation10 + $0x4d8] sm:$0xff]
        %v3886 = vld [vmem:[#allocation10 + $0x4e0] sm:$0xff]
        %v3887 = vld [vmem:[#allocation10 + $0x4e8] sm:$0xff]
        %v3888 = vld [vmem:[#allocation10 + $0x4f0] sm:$0xff]
        %v3889 = vld [vmem:[#allocation10 + $0x4f8] sm:$0xff]
        %v3890 = vld [vmem:[#allocation10 + $0x500] sm:$0xff]
        %v3891 = vld [vmem:[#allocation10 + $0x508] sm:$0xff]
        %v3892 = vld [vmem:[#allocation10 + $0x510] sm:$0xff]
        %v3893 = vld [vmem:[#allocation10 + $0x518] sm:$0xff]
        %v3894 = vld [vmem:[#allocation10 + $0x520] sm:$0xff]
        %v3895 = vld [vmem:[#allocation10 + $0x528] sm:$0xff]
        %v3896 = vld [vmem:[#allocation10 + $0x530] sm:$0xff]
        %v3897 = vld [vmem:[#allocation10 + $0x538] sm:$0xff]
        %v3898 = vld [vmem:[#allocation10 + $0x540] sm:$0xff]
        %v3899 = vld [vmem:[#allocation10 + $0x548] sm:$0xff]
        %v3900 = vld [vmem:[#allocation10 + $0x550] sm:$0xff]
        %v3901 = vld [vmem:[#allocation10 + $0x558] sm:$0xff]
        %v3902 = vld [vmem:[#allocation10 + $0x560] sm:$0xff]
        %v3903 = vld [vmem:[#allocation10 + $0x568] sm:$0xff]
        %v3904 = vld [vmem:[#allocation10 + $0x570] sm:$0xff]
        %v3905 = vld [vmem:[#allocation10 + $0x578] sm:$0xff]
        %v3906 = vld [vmem:[#allocation10 + $0x580] sm:$0xff]
        %v3907 = vld [vmem:[#allocation10 + $0x588] sm:$0xff]
        %v3908 = vld [vmem:[#allocation10 + $0x590] sm:$0xff]
        %v3909 = vld [vmem:[#allocation10 + $0x598] sm:$0xff]
        %v3910 = vld [vmem:[#allocation10 + $0x5a0] sm:$0xff]
        %v3911 = vld [vmem:[#allocation10 + $0x5a8] sm:$0xff]
        %v3912 = vld [vmem:[#allocation10 + $0x5b0] sm:$0xff]
        %v3913 = vld [vmem:[#allocation10 + $0x5b8] sm:$0xff]
        %v3914 = vld [vmem:[#allocation10 + $0x5c0] sm:$0xff]
        %v3915 = vld [vmem:[#allocation10 + $0x5c8] sm:$0xff]
        %v3916 = vld [vmem:[#allocation10 + $0x5d0] sm:$0xff]
        %v3917 = vld [vmem:[#allocation10 + $0x5d8] sm:$0xff]
        %v3918 = vld [vmem:[#allocation10 + $0x5e0] sm:$0xff]
        %v3919 = vld [vmem:[#allocation10 + $0x5e8] sm:$0xff]
        %v3920 = vld [vmem:[#allocation10 + $0x5f0] sm:$0xff]
        %v3921 = vld [vmem:[#allocation10 + $0x5f8] sm:$0xff]
        %v3922 = vld [vmem:[#allocation10 + $0x600] sm:$0xff]
        %v3923 = vld [vmem:[#allocation10 + $0x608] sm:$0xff]
        %v3924 = vld [vmem:[#allocation10 + $0x610] sm:$0xff]
        %v3925 = vld [vmem:[#allocation10 + $0x618] sm:$0xff]
        %v3926 = vld [vmem:[#allocation10 + $0x620] sm:$0xff]
        %v3927 = vld [vmem:[#allocation10 + $0x628] sm:$0xff]
        %v3928 = vld [vmem:[#allocation10 + $0x630] sm:$0xff]
        %v3929 = vld [vmem:[#allocation10 + $0x638] sm:$0xff]
        %v3930 = vld [vmem:[#allocation10 + $0x640] sm:$0xff]
        %v3931 = vld [vmem:[#allocation10 + $0x648] sm:$0xff]
        %v3932 = vld [vmem:[#allocation10 + $0x650] sm:$0xff]
        %v3933 = vld [vmem:[#allocation10 + $0x658] sm:$0xff]
        %v3934 = vld [vmem:[#allocation10 + $0x660] sm:$0xff]
        %v3935 = vld [vmem:[#allocation10 + $0x668] sm:$0xff]
        %v3936 = vld [vmem:[#allocation10 + $0x670] sm:$0xff]
        %v3937 = vld [vmem:[#allocation10 + $0x678] sm:$0xff]
        %v3938 = vld [vmem:[#allocation10 + $0x680] sm:$0xff]
        %v3939 = vld [vmem:[#allocation10 + $0x688] sm:$0xff]
        %v3940 = vld [vmem:[#allocation10 + $0x690] sm:$0xff]
        %v3941 = vld [vmem:[#allocation10 + $0x698] sm:$0xff]
        %v3942 = vld [vmem:[#allocation10 + $0x6a0] sm:$0xff]
        %v3943 = vld [vmem:[#allocation10 + $0x6a8] sm:$0xff]
        %v3944 = vld [vmem:[#allocation10 + $0x6b0] sm:$0xff]
        %v3945 = vld [vmem:[#allocation10 + $0x6b8] sm:$0xff]
        %v3946 = vld [vmem:[#allocation10 + $0x6c0] sm:$0xff]
        %v3947 = vld [vmem:[#allocation10 + $0x6c8] sm:$0xff]
        %v3948 = vld [vmem:[#allocation10 + $0x6d0] sm:$0xff]
        %v3949 = vld [vmem:[#allocation10 + $0x6d8] sm:$0xff]
        %v3950 = vld [vmem:[#allocation10 + $0x6e0] sm:$0xff]
        %v3951 = vld [vmem:[#allocation10 + $0x6e8] sm:$0xff]
        %v3952 = vld [vmem:[#allocation10 + $0x6f0] sm:$0xff]
        %v3953 = vld [vmem:[#allocation10 + $0x6f8] sm:$0xff]
        %v3954 = vld [vmem:[#allocation10 + $0x700] sm:$0xff]
        %v3955 = vld [vmem:[#allocation10 + $0x708] sm:$0xff]
        %v3956 = vld [vmem:[#allocation10 + $0x710] sm:$0xff]
        %v3957 = vld [vmem:[#allocation10 + $0x718] sm:$0xff]
        %v3958 = vld [vmem:[#allocation10 + $0x720] sm:$0xff]
        %v3959 = vld [vmem:[#allocation10 + $0x728] sm:$0xff]
        %v3960 = vld [vmem:[#allocation10 + $0x730] sm:$0xff]
        %v3961 = vld [vmem:[#allocation10 + $0x738] sm:$0xff]
        %v3962 = vld [vmem:[#allocation10 + $0x740] sm:$0xff]
        %v3963 = vld [vmem:[#allocation10 + $0x748] sm:$0xff]
        %v3964 = vld [vmem:[#allocation10 + $0x750] sm:$0xff]
        %v3965 = vld [vmem:[#allocation10 + $0x758] sm:$0xff]
        %v3966 = vld [vmem:[#allocation10 + $0x760] sm:$0xff]
        %v3967 = vld [vmem:[#allocation10 + $0x768] sm:$0xff]
        %v3968 = vld [vmem:[#allocation10 + $0x770] sm:$0xff]
        %v3969 = vld [vmem:[#allocation10 + $0x778] sm:$0xff]
        %v3970 = vld [vmem:[#allocation10 + $0x780] sm:$0xff]
        %v3971 = vld [vmem:[#allocation10 + $0x788] sm:$0xff]
        %v3972 = vld [vmem:[#allocation10 + $0x790] sm:$0xff]
        %v3973 = vld [vmem:[#allocation10 + $0x798] sm:$0xff]
        %v3974 = vld [vmem:[#allocation10 + $0x7a0] sm:$0xff]
        %v3975 = vld [vmem:[#allocation10 + $0x7a8] sm:$0xff]
        %v3976 = vld [vmem:[#allocation10 + $0x7b0] sm:$0xff]
        %v3977 = vld [vmem:[#allocation10 + $0x7b8] sm:$0xff]
        %v3978 = vld [vmem:[#allocation10 + $0x7c0] sm:$0xff]
        %v3979 = vld [vmem:[#allocation10 + $0x7c8] sm:$0xff]
        %v3980 = vld [vmem:[#allocation10 + $0x7d0] sm:$0xff]
        %v3981 = vld [vmem:[#allocation10 + $0x7d8] sm:$0xff]
        %v3982 = vld [vmem:[#allocation10 + $0x7e0] sm:$0xff]
        %v3983 = vld [vmem:[#allocation10 + $0x7e8] sm:$0xff]
        %v3984 = vld [vmem:[#allocation10 + $0x7f0] sm:$0xff]
        %v3985 = vld [vmem:[#allocation10 + $0x7f8] sm:$0xff]
        %v3986 = vld [vmem:[#allocation10 + $0x800] sm:$0xff]
        %v3987 = vld [vmem:[#allocation10 + $0x808] sm:$0xff]
        %v3988 = vld [vmem:[#allocation10 + $0x810] sm:$0xff]
        %v3989 = vld [vmem:[#allocation10 + $0x818] sm:$0xff]
        %v3990 = vld [vmem:[#allocation10 + $0x820] sm:$0xff]
        %v3991 = vld [vmem:[#allocation10 + $0x828] sm:$0xff]
        %v3992 = vld [vmem:[#allocation10 + $0x830] sm:$0xff]
        %v3993 = vld [vmem:[#allocation10 + $0x838] sm:$0xff]
        %v3994 = vld [vmem:[#allocation10 + $0x840] sm:$0xff]
        %v3995 = vld [vmem:[#allocation10 + $0x848] sm:$0xff]
        %v3996 = vld [vmem:[#allocation10 + $0x850] sm:$0xff]
        %v3997 = vld [vmem:[#allocation10 + $0x858] sm:$0xff]
        %v3998 = vld [vmem:[#allocation10 + $0x860] sm:$0xff]
        %v3999 = vld [vmem:[#allocation10 + $0x868] sm:$0xff]
        %v4000 = vld [vmem:[#allocation10 + $0x870] sm:$0xff]
        %v4001 = vld [vmem:[#allocation10 + $0x878] sm:$0xff]
        %v4002 = vld [vmem:[#allocation10 + $0x880] sm:$0xff]
        %v4003 = vld [vmem:[#allocation10 + $0x888] sm:$0xff]
        %v4004 = vld [vmem:[#allocation10 + $0x890] sm:$0xff]
        %v4005 = vld [vmem:[#allocation10 + $0x898] sm:$0xff]
        %v4006 = vld [vmem:[#allocation10 + $0x8a0] sm:$0xff]
        %v4007 = vld [vmem:[#allocation10 + $0x8a8] sm:$0xff]
        %v4008 = vld [vmem:[#allocation10 + $0x8b0] sm:$0xff]
        %v4009 = vld [vmem:[#allocation10 + $0x8b8] sm:$0xff]
        %v4010 = vld [vmem:[#allocation10 + $0x8c0] sm:$0xff]
        %v4011 = vld [vmem:[#allocation10 + $0x8c8] sm:$0xff]
        %v4012 = vld [vmem:[#allocation10 + $0x8d0] sm:$0xff]
        %v4013 = vld [vmem:[#allocation10 + $0x8d8] sm:$0xff]
        %v4014 = vld [vmem:[#allocation10 + $0x8e0] sm:$0xff]
        %v4015 = vld [vmem:[#allocation10 + $0x8e8] sm:$0xff]
        %v4016 = vld [vmem:[#allocation10 + $0x8f0] sm:$0xff]
        %v4017 = vld [vmem:[#allocation10 + $0x8f8] sm:$0xff]
        %v4018 = vld [vmem:[#allocation10 + $0x900] sm:$0xff]
        %v4019 = vld [vmem:[#allocation10 + $0x908] sm:$0xff]
        %v4020 = vld [vmem:[#allocation10 + $0x910] sm:$0xff]
        %v4021 = vld [vmem:[#allocation10 + $0x918] sm:$0xff]
        %v4022 = vld [vmem:[#allocation10 + $0x920] sm:$0xff]
        %v4023 = vld [vmem:[#allocation10 + $0x928] sm:$0xff]
        %v4024 = vld [vmem:[#allocation10 + $0x930] sm:$0xff]
        %v4025 = vld [vmem:[#allocation10 + $0x938] sm:$0xff]
        %v4026 = vld [vmem:[#allocation10 + $0x940] sm:$0xff]
        %v4027 = vld [vmem:[#allocation10 + $0x948] sm:$0xff]
        %v4028 = vld [vmem:[#allocation10 + $0x950] sm:$0xff]
        %v4029 = vld [vmem:[#allocation10 + $0x958] sm:$0xff]
        %v4030 = vld [vmem:[#allocation10 + $0x960] sm:$0xff]
        %v4031 = vld [vmem:[#allocation10 + $0x968] sm:$0xff]
        %v4032 = vld [vmem:[#allocation10 + $0x970] sm:$0xff]
        %v4033 = vld [vmem:[#allocation10 + $0x978] sm:$0xff]
        %v4034 = vld [vmem:[#allocation10 + $0x980] sm:$0xff]
        %v4035 = vld [vmem:[#allocation10 + $0x988] sm:$0xff]
        %v4036 = vld [vmem:[#allocation10 + $0x990] sm:$0xff]
        %v4037 = vld [vmem:[#allocation10 + $0x998] sm:$0xff]
        %v4038 = vld [vmem:[#allocation10 + $0x9a0] sm:$0xff]
        %v4039 = vld [vmem:[#allocation10 + $0x9a8] sm:$0xff]
        %v4040 = vld [vmem:[#allocation10 + $0x9b0] sm:$0xff]
        %v4041 = vld [vmem:[#allocation10 + $0x9b8] sm:$0xff]
        %v4042 = vld [vmem:[#allocation10 + $0x9c0] sm:$0xff]
        %v4043 = vld [vmem:[#allocation10 + $0x9c8] sm:$0xff]
        %v4044 = vld [vmem:[#allocation10 + $0x9d0] sm:$0xff]
        %v4045 = vld [vmem:[#allocation10 + $0x9d8] sm:$0xff]
        %v4046 = vld [vmem:[#allocation10 + $0x9e0] sm:$0xff]
        %v4047 = vld [vmem:[#allocation10 + $0x9e8] sm:$0xff]
        %v4048 = vld [vmem:[#allocation10 + $0x9f0] sm:$0xff]
        %v4049 = vld [vmem:[#allocation10 + $0x9f8] sm:$0xff]
        %v4050 = vld [vmem:[#allocation10 + $0xa00] sm:$0xff]
        %v4051 = vld [vmem:[#allocation10 + $0xa08] sm:$0xff]
        %v4052 = vld [vmem:[#allocation10 + $0xa10] sm:$0xff]
        %v4053 = vld [vmem:[#allocation10 + $0xa18] sm:$0xff]
        %v4054 = vld [vmem:[#allocation10 + $0xa20] sm:$0xff]
        %v4055 = vld [vmem:[#allocation10 + $0xa28] sm:$0xff]
        %v4056 = vld [vmem:[#allocation10 + $0xa30] sm:$0xff]
        %v4057 = vld [vmem:[#allocation10 + $0xa38] sm:$0xff]
        %v4058 = vld [vmem:[#allocation10 + $0xa40] sm:$0xff]
        %v4059 = vld [vmem:[#allocation10 + $0xa48] sm:$0xff]
        %v4060 = vld [vmem:[#allocation10 + $0xa50] sm:$0xff]
        %v4061 = vld [vmem:[#allocation10 + $0xa58] sm:$0xff]
        %v4062 = vld [vmem:[#allocation10 + $0xa60] sm:$0xff]
        %v4063 = vld [vmem:[#allocation10 + $0xa68] sm:$0xff]
        %v4064 = vld [vmem:[#allocation10 + $0xa70] sm:$0xff]
        %v4065 = vld [vmem:[#allocation10 + $0xa78] sm:$0xff]
        %v4066 = vld [vmem:[#allocation10 + $0xa80] sm:$0xff]
        %v4067 = vld [vmem:[#allocation10 + $0xa88] sm:$0xff]
        %v4068 = vld [vmem:[#allocation10 + $0xa90] sm:$0xff]
        %v4069 = vld [vmem:[#allocation10 + $0xa98] sm:$0xff]
        %v4070 = vld [vmem:[#allocation10 + $0xaa0] sm:$0xff]
        %v4071 = vld [vmem:[#allocation10 + $0xaa8] sm:$0xff]
        %v4072 = vld [vmem:[#allocation10 + $0xab0] sm:$0xff]
        %v4073 = vld [vmem:[#allocation10 + $0xab8] sm:$0xff]
        %v4074 = vld [vmem:[#allocation10 + $0xac0] sm:$0xff]
        %v4075 = vld [vmem:[#allocation10 + $0xac8] sm:$0xff]
        %v4076 = vld [vmem:[#allocation10 + $0xad0] sm:$0xff]
        %v4077 = vld [vmem:[#allocation10 + $0xad8] sm:$0xff]
        %v4078 = vld [vmem:[#allocation10 + $0xae0] sm:$0xff]
        %v4079 = vld [vmem:[#allocation10 + $0xae8] sm:$0xff]
        %v4080 = vld [vmem:[#allocation10 + $0xaf0] sm:$0xff]
        %v4081 = vld [vmem:[#allocation10 + $0xaf8] sm:$0xff]
        %v4082 = vld [vmem:[#allocation10 + $0xb00] sm:$0xff]
        %v4083 = vld [vmem:[#allocation10 + $0xb08] sm:$0xff]
        %v4084 = vld [vmem:[#allocation10 + $0xb10] sm:$0xff]
        %v4085 = vld [vmem:[#allocation10 + $0xb18] sm:$0xff]
        %v4086 = vld [vmem:[#allocation10 + $0xb20] sm:$0xff]
        %v4087 = vld [vmem:[#allocation10 + $0xb28] sm:$0xff]
        %v4088 = vld [vmem:[#allocation10 + $0xb30] sm:$0xff]
        %v4089 = vld [vmem:[#allocation10 + $0xb38] sm:$0xff]
        %v4090 = vld [vmem:[#allocation10 + $0xb40] sm:$0xff]
        %v4091 = vld [vmem:[#allocation10 + $0xb48] sm:$0xff]
        %v4092 = vld [vmem:[#allocation10 + $0xb50] sm:$0xff]
        %v4093 = vld [vmem:[#allocation10 + $0xb58] sm:$0xff]
        %v4094 = vld [vmem:[#allocation10 + $0xb60] sm:$0xff]
        %v4095 = vld [vmem:[#allocation10 + $0xb68] sm:$0xff]
        %v4096 = vld [vmem:[#allocation10 + $0xb70] sm:$0xff]
        %v4097 = vld [vmem:[#allocation10 + $0xb78] sm:$0xff]
        %v4098 = vld [vmem:[#allocation10 + $0xb80] sm:$0xff]
        %v4099 = vld [vmem:[#allocation10 + $0xb88] sm:$0xff]
        %v4100 = vld [vmem:[#allocation10 + $0xb90] sm:$0xff]
        %v4101 = vld [vmem:[#allocation10 + $0xb98] sm:$0xff]
        %v4102 = vld [vmem:[#allocation10 + $0xba0] sm:$0xff]
        %v4103 = vld [vmem:[#allocation10 + $0xba8] sm:$0xff]
        %v4104 = vld [vmem:[#allocation10 + $0xbb0] sm:$0xff]
        %v4105 = vld [vmem:[#allocation10 + $0xbb8] sm:$0xff]
        %v4106 = vld [vmem:[#allocation10 + $0xbc0] sm:$0xff]
        %v4107 = vld [vmem:[#allocation10 + $0xbc8] sm:$0xff]
        %v4108 = vld [vmem:[#allocation10 + $0xbd0] sm:$0xff]
        %v4109 = vld [vmem:[#allocation10 + $0xbd8] sm:$0xff]
        %v4110 = vld [vmem:[#allocation10 + $0xbe0] sm:$0xff]
        %v4111 = vld [vmem:[#allocation10 + $0xbe8] sm:$0xff]
        %v4112 = vld [vmem:[#allocation10 + $0xbf0] sm:$0xff]
        %v4113 = vld [vmem:[#allocation10 + $0xbf8] sm:$0xff]
        %v4114 = vld [vmem:[#allocation10 + $0xc00] sm:$0xff]
        %v4115 = vld [vmem:[#allocation10 + $0xc08] sm:$0xff]
        %v4116 = vld [vmem:[#allocation10 + $0xc10] sm:$0xff]
        %v4117 = vld [vmem:[#allocation10 + $0xc18] sm:$0xff]
        %v4118 = vld [vmem:[#allocation10 + $0xc20] sm:$0xff]
        %v4119 = vld [vmem:[#allocation10 + $0xc28] sm:$0xff]
        %v4120 = vld [vmem:[#allocation10 + $0xc30] sm:$0xff]
        %v4121 = vld [vmem:[#allocation10 + $0xc38] sm:$0xff]
        %v4122 = vld [vmem:[#allocation10 + $0xc40] sm:$0xff]
        %v4123 = vld [vmem:[#allocation10 + $0xc48] sm:$0xff]
        %v4124 = vld [vmem:[#allocation10 + $0xc50] sm:$0xff]
        %v4125 = vld [vmem:[#allocation10 + $0xc58] sm:$0xff]
        %v4126 = vld [vmem:[#allocation10 + $0xc60] sm:$0xff]
        %v4127 = vld [vmem:[#allocation10 + $0xc68] sm:$0xff]
        %v4128 = vld [vmem:[#allocation10 + $0xc70] sm:$0xff]
        %v4129 = vld [vmem:[#allocation10 + $0xc78] sm:$0xff]
        %v4130 = vld [vmem:[#allocation10 + $0xc80] sm:$0xff]
        %v4131 = vld [vmem:[#allocation10 + $0xc88] sm:$0xff]
        %v4132 = vld [vmem:[#allocation10 + $0xc90] sm:$0xff]
        %v4133 = vld [vmem:[#allocation10 + $0xc98] sm:$0xff]
        %v4134 = vld [vmem:[#allocation10 + $0xca0] sm:$0xff]
        %v4135 = vld [vmem:[#allocation10 + $0xca8] sm:$0xff]
        %v4136 = vld [vmem:[#allocation10 + $0xcb0] sm:$0xff]
        %v4137 = vld [vmem:[#allocation10 + $0xcb8] sm:$0xff]
        %v4138 = vld [vmem:[#allocation10 + $0xcc0] sm:$0xff]
        %v4139 = vld [vmem:[#allocation10 + $0xcc8] sm:$0xff]
        %v4140 = vld [vmem:[#allocation10 + $0xcd0] sm:$0xff]
        %v4141 = vld [vmem:[#allocation10 + $0xcd8] sm:$0xff]
        %v4142 = vld [vmem:[#allocation10 + $0xce0] sm:$0xff]
        %v4143 = vld [vmem:[#allocation10 + $0xce8] sm:$0xff]
        %v4144 = vld [vmem:[#allocation10 + $0xcf0] sm:$0xff]
        %v4145 = vld [vmem:[#allocation10 + $0xcf8] sm:$0xff]
        %v4146 = vld [vmem:[#allocation10 + $0xd00] sm:$0xff]
        %v4147 = vld [vmem:[#allocation10 + $0xd08] sm:$0xff]
        %v4148 = vld [vmem:[#allocation10 + $0xd10] sm:$0xff]
        %v4149 = vld [vmem:[#allocation10 + $0xd18] sm:$0xff]
        %v4150 = vld [vmem:[#allocation10 + $0xd20] sm:$0xff]
        %v4151 = vld [vmem:[#allocation10 + $0xd28] sm:$0xff]
        %v4152 = vld [vmem:[#allocation10 + $0xd30] sm:$0xff]
        %v4153 = vld [vmem:[#allocation10 + $0xd38] sm:$0xff]
        %v4154 = vld [vmem:[#allocation10 + $0xd40] sm:$0xff]
        %v4155 = vld [vmem:[#allocation10 + $0xd48] sm:$0xff]
        %v4156 = vld [vmem:[#allocation10 + $0xd50] sm:$0xff]
        %v4157 = vld [vmem:[#allocation10 + $0xd58] sm:$0xff]
        %v4158 = vld [vmem:[#allocation10 + $0xd60] sm:$0xff]
        %v4159 = vld [vmem:[#allocation10 + $0xd68] sm:$0xff]
        %v4160 = vld [vmem:[#allocation10 + $0xd70] sm:$0xff]
        %v4161 = vld [vmem:[#allocation10 + $0xd78] sm:$0xff]
        %v4162 = vld [vmem:[#allocation10 + $0xd80] sm:$0xff]
        %v4163 = vld [vmem:[#allocation10 + $0xd88] sm:$0xff]
        %v4164 = vld [vmem:[#allocation10 + $0xd90] sm:$0xff]
        %v4165 = vld [vmem:[#allocation10 + $0xd98] sm:$0xff]
        %v4166 = vld [vmem:[#allocation10 + $0xda0] sm:$0xff]
        %v4167 = vld [vmem:[#allocation10 + $0xda8] sm:$0xff]
        %v4168 = vld [vmem:[#allocation10 + $0xdb0] sm:$0xff]
        %v4169 = vld [vmem:[#allocation10 + $0xdb8] sm:$0xff]
        %v4170 = vld [vmem:[#allocation10 + $0xdc0] sm:$0xff]
        %v4171 = vld [vmem:[#allocation10 + $0xdc8] sm:$0xff]
        %v4172 = vld [vmem:[#allocation10 + $0xdd0] sm:$0xff]
        %v4173 = vld [vmem:[#allocation10 + $0xdd8] sm:$0xff]
        %v4174 = vld [vmem:[#allocation10 + $0xde0] sm:$0xff]
        %v4175 = vld [vmem:[#allocation10 + $0xde8] sm:$0xff]
        %v4176 = vld [vmem:[#allocation10 + $0xdf0] sm:$0xff]
        %v4177 = vld [vmem:[#allocation10 + $0xdf8] sm:$0xff]
        %v4178 = vld [vmem:[#allocation10 + $0xe00] sm:$0xff]
        %v4179 = vld [vmem:[#allocation10 + $0xe08] sm:$0xff]
        %v4180 = vld [vmem:[#allocation10 + $0xe10] sm:$0xff]
        %v4181 = vld [vmem:[#allocation10 + $0xe18] sm:$0xff]
        %v4182 = vld [vmem:[#allocation10 + $0xe20] sm:$0xff]
        %v4183 = vld [vmem:[#allocation10 + $0xe28] sm:$0xff]
        %v4184 = vld [vmem:[#allocation10 + $0xe30] sm:$0xff]
        %v4185 = vld [vmem:[#allocation10 + $0xe38] sm:$0xff]
        %v4186 = vld [vmem:[#allocation10 + $0xe40] sm:$0xff]
        %v4187 = vld [vmem:[#allocation10 + $0xe48] sm:$0xff]
        %v4188 = vld [vmem:[#allocation10 + $0xe50] sm:$0xff]
        %v4189 = vld [vmem:[#allocation10 + $0xe58] sm:$0xff]
        %v4190 = vld [vmem:[#allocation10 + $0xe60] sm:$0xff]
        %v4191 = vld [vmem:[#allocation10 + $0xe68] sm:$0xff]
        %v4192 = vld [vmem:[#allocation10 + $0xe70] sm:$0xff]
        %v4193 = vld [vmem:[#allocation10 + $0xe78] sm:$0xff]
        %v4194 = vld [vmem:[#allocation10 + $0xe80] sm:$0xff]
        %v4195 = vld [vmem:[#allocation10 + $0xe88] sm:$0xff]
        %v4196 = vld [vmem:[#allocation10 + $0xe90] sm:$0xff]
        %v4197 = vld [vmem:[#allocation10 + $0xe98] sm:$0xff]
        %v4198 = vld [vmem:[#allocation10 + $0xea0] sm:$0xff]
        %v4199 = vld [vmem:[#allocation10 + $0xea8] sm:$0xff]
        %v4200 = vld [vmem:[#allocation10 + $0xeb0] sm:$0xff]
        %v4201 = vld [vmem:[#allocation10 + $0xeb8] sm:$0xff]
        %v4202 = vld [vmem:[#allocation10 + $0xec0] sm:$0xff]
        %v4203 = vld [vmem:[#allocation10 + $0xec8] sm:$0xff]
        %v4204 = vld [vmem:[#allocation10 + $0xed0] sm:$0xff]
        %v4205 = vld [vmem:[#allocation10 + $0xed8] sm:$0xff]
        %v4206 = vld [vmem:[#allocation10 + $0xee0] sm:$0xff]
        %v4207 = vld [vmem:[#allocation10 + $0xee8] sm:$0xff]
        %v4208 = vld [vmem:[#allocation10 + $0xef0] sm:$0xff]
        %v4209 = vld [vmem:[#allocation10 + $0xef8] sm:$0xff]
        %v4210 = vld [vmem:[#allocation10 + $0xf00] sm:$0xff]
        %v4211 = vld [vmem:[#allocation10 + $0xf08] sm:$0xff]
        %v4212 = vld [vmem:[#allocation10 + $0xf10] sm:$0xff]
        %v4213 = vld [vmem:[#allocation10 + $0xf18] sm:$0xff]
        %v4214 = vld [vmem:[#allocation10 + $0xf20] sm:$0xff]
        %v4215 = vld [vmem:[#allocation10 + $0xf28] sm:$0xff]
        %v4216 = vld [vmem:[#allocation10 + $0xf30] sm:$0xff]
        %v4217 = vld [vmem:[#allocation10 + $0xf38] sm:$0xff]
        %v4218 = vld [vmem:[#allocation10 + $0xf40] sm:$0xff]
        %v4219 = vld [vmem:[#allocation10 + $0xf48] sm:$0xff]
        %v4220 = vld [vmem:[#allocation10 + $0xf50] sm:$0xff]
        %v4221 = vld [vmem:[#allocation10 + $0xf58] sm:$0xff]
        %v4222 = vld [vmem:[#allocation10 + $0xf60] sm:$0xff]
        %v4223 = vld [vmem:[#allocation10 + $0xf68] sm:$0xff]
        %v4224 = vld [vmem:[#allocation10 + $0xf70] sm:$0xff]
        %v4225 = vld [vmem:[#allocation10 + $0xf78] sm:$0xff]
        %v4226 = vld [vmem:[#allocation10 + $0xf80] sm:$0xff]
        %v4227 = vld [vmem:[#allocation10 + $0xf88] sm:$0xff]
        %v4228 = vld [vmem:[#allocation10 + $0xf90] sm:$0xff]
        %v4229 = vld [vmem:[#allocation10 + $0xf98] sm:$0xff]
        %v4230 = vld [vmem:[#allocation10 + $0xfa0] sm:$0xff]
        %v4231 = vld [vmem:[#allocation10 + $0xfa8] sm:$0xff]
        %v4232 = vld [vmem:[#allocation10 + $0xfb0] sm:$0xff]
        %v4233 = vld [vmem:[#allocation10 + $0xfb8] sm:$0xff]
        %v4234 = vld [vmem:[#allocation10 + $0xfc0] sm:$0xff]
        %v4235 = vld [vmem:[#allocation10 + $0xfc8] sm:$0xff]
        %v4236 = vld [vmem:[#allocation10 + $0xfd0] sm:$0xff]
        %v4237 = vld [vmem:[#allocation10 + $0xfd8] sm:$0xff]
        %v4238 = vld [vmem:[#allocation10 + $0xfe0] sm:$0xff]
        %v4239 = vld [vmem:[#allocation10 + $0xfe8] sm:$0xff]
        %v4240 = vld [vmem:[#allocation10 + $0xff0] sm:$0xff]
        %v4241 = vld [vmem:[#allocation10 + $0xff8] sm:$0xff]
        %v4242 = vld [vmem:[#allocation10 + $0x1000] sm:$0xff]
        %v4243 = vld [vmem:[#allocation10 + $0x1008] sm:$0xff]
        %v4244 = vld [vmem:[#allocation10 + $0x1010] sm:$0xff]
        %v4245 = vld [vmem:[#allocation10 + $0x1018] sm:$0xff]
        %v4246 = vld [vmem:[#allocation10 + $0x1020] sm:$0xff]
        %v4247 = vld [vmem:[#allocation10 + $0x1028] sm:$0xff]
        %v4248 = vld [vmem:[#allocation10 + $0x1030] sm:$0xff]
        %v4249 = vld [vmem:[#allocation10 + $0x1038] sm:$0xff]
        %v4250 = vld [vmem:[#allocation10 + $0x1040] sm:$0xff]
        %v4251 = vld [vmem:[#allocation10 + $0x1048] sm:$0xff]
        %v4252 = vld [vmem:[#allocation10 + $0x1050] sm:$0xff]
        %v4253 = vld [vmem:[#allocation10 + $0x1058] sm:$0xff]
        %v4254 = vld [vmem:[#allocation10 + $0x1060] sm:$0xff]
        %v4255 = vld [vmem:[#allocation10 + $0x1068] sm:$0xff]
        %v4256 = vld [vmem:[#allocation10 + $0x1070] sm:$0xff]
        %v4257 = vld [vmem:[#allocation10 + $0x1078] sm:$0xff]
        %v4258 = vld [vmem:[#allocation10 + $0x1080] sm:$0xff]
        %v4259 = vld [vmem:[#allocation10 + $0x1088] sm:$0xff]
        %v4260 = vld [vmem:[#allocation10 + $0x1090] sm:$0xff]
        %v4261 = vld [vmem:[#allocation10 + $0x1098] sm:$0xff]
        %v4262 = vld [vmem:[#allocation10 + $0x10a0] sm:$0xff]
        %v4263 = vld [vmem:[#allocation10 + $0x10a8] sm:$0xff]
        %v4264 = vld [vmem:[#allocation10 + $0x10b0] sm:$0xff]
        %v4265 = vld [vmem:[#allocation10 + $0x10b8] sm:$0xff]
        %v4266 = vld [vmem:[#allocation10 + $0x10c0] sm:$0xff]
        %v4267 = vld [vmem:[#allocation10 + $0x10c8] sm:$0xff]
        %v4268 = vld [vmem:[#allocation10 + $0x10d0] sm:$0xff]
        %v4269 = vld [vmem:[#allocation10 + $0x10d8] sm:$0xff]
        %v4270 = vld [vmem:[#allocation10 + $0x10e0] sm:$0xff]
        %v4271 = vld [vmem:[#allocation10 + $0x10e8] sm:$0xff]
        %v4272 = vld [vmem:[#allocation10 + $0x10f0] sm:$0xff]
        %v4273 = vld [vmem:[#allocation10 + $0x10f8] sm:$0xff]
        %v4274 = vld [vmem:[#allocation10 + $0x1100] sm:$0xff]
        %v4275 = vld [vmem:[#allocation10 + $0x1108] sm:$0xff]
        %v4276 = vld [vmem:[#allocation10 + $0x1110] sm:$0xff]
        %v4277 = vld [vmem:[#allocation10 + $0x1118] sm:$0xff]
        %v4278 = vld [vmem:[#allocation10 + $0x1120] sm:$0xff]
        %v4279 = vld [vmem:[#allocation10 + $0x1128] sm:$0xff]
        %v4280 = vld [vmem:[#allocation10 + $0x1130] sm:$0xff]
        %v4281 = vld [vmem:[#allocation10 + $0x1138] sm:$0xff]
        %v4282 = vld [vmem:[#allocation10 + $0x1140] sm:$0xff]
        %v4283 = vld [vmem:[#allocation10 + $0x1148] sm:$0xff]
        %v4284 = vld [vmem:[#allocation10 + $0x1150] sm:$0xff]
        %v4285 = vld [vmem:[#allocation10 + $0x1158] sm:$0xff]
        %v4286 = vld [vmem:[#allocation10 + $0x1160] sm:$0xff]
        %v4287 = vld [vmem:[#allocation10 + $0x1168] sm:$0xff]
        %v4288 = vld [vmem:[#allocation10 + $0x1170] sm:$0xff]
        %v4289 = vld [vmem:[#allocation10 + $0x1178] sm:$0xff]
        %v4290 = vld [vmem:[#allocation10 + $0x1180] sm:$0xff]
        %v4291 = vld [vmem:[#allocation10 + $0x1188] sm:$0xff]
        %v4292 = vld [vmem:[#allocation10 + $0x1190] sm:$0xff]
        %v4293 = vld [vmem:[#allocation10 + $0x1198] sm:$0xff]
        %v4294 = vld [vmem:[#allocation10 + $0x11a0] sm:$0xff]
        %v4295 = vld [vmem:[#allocation10 + $0x11a8] sm:$0xff]
        %v4296 = vld [vmem:[#allocation10 + $0x11b0] sm:$0xff]
        %v4297 = vld [vmem:[#allocation10 + $0x11b8] sm:$0xff]
        %v4298 = vld [vmem:[#allocation10 + $0x11c0] sm:$0xff]
        %v4299 = vld [vmem:[#allocation10 + $0x11c8] sm:$0xff]
        %v4300 = vld [vmem:[#allocation10 + $0x11d0] sm:$0xff]
        %v4301 = vld [vmem:[#allocation10 + $0x11d8] sm:$0xff]
        %v4302 = vld [vmem:[#allocation10 + $0x11e0] sm:$0xff]
        %v4303 = vld [vmem:[#allocation10 + $0x11e8] sm:$0xff]
        %v4304 = vld [vmem:[#allocation10 + $0x11f0] sm:$0xff]
        %v4305 = vld [vmem:[#allocation10 + $0x11f8] sm:$0xff]
        %v4306 = vld [vmem:[#allocation10 + $0x1200] sm:$0xff]
        %v4307 = vld [vmem:[#allocation10 + $0x1208] sm:$0xff]
        %v4308 = vld [vmem:[#allocation10 + $0x1210] sm:$0xff]
        %v4309 = vld [vmem:[#allocation10 + $0x1218] sm:$0xff]
        %v4310 = vld [vmem:[#allocation10 + $0x1220] sm:$0xff]
        %v4311 = vld [vmem:[#allocation10 + $0x1228] sm:$0xff]
        %v4312 = vld [vmem:[#allocation10 + $0x1230] sm:$0xff]
        %v4313 = vld [vmem:[#allocation10 + $0x1238] sm:$0xff]
        %v4314 = vld [vmem:[#allocation10 + $0x1240] sm:$0xff]
        %v4315 = vld [vmem:[#allocation10 + $0x1248] sm:$0xff]
        %v4316 = vld [vmem:[#allocation10 + $0x1250] sm:$0xff]
        %v4317 = vld [vmem:[#allocation10 + $0x1258] sm:$0xff]
        %v4318 = vld [vmem:[#allocation10 + $0x1260] sm:$0xff]
        %v4319 = vld [vmem:[#allocation10 + $0x1268] sm:$0xff]
        %v4320 = vld [vmem:[#allocation10 + $0x1270] sm:$0xff]
        %v4321 = vld [vmem:[#allocation10 + $0x1278] sm:$0xff]
        %v4322 = vld [vmem:[#allocation10 + $0x1280] sm:$0xff]
        %v4323 = vld [vmem:[#allocation10 + $0x1288] sm:$0xff]
        %v4324 = vld [vmem:[#allocation10 + $0x1290] sm:$0xff]
        %v4325 = vld [vmem:[#allocation10 + $0x1298] sm:$0xff]
        %v4326 = vld [vmem:[#allocation10 + $0x12a0] sm:$0xff]
        %v4327 = vld [vmem:[#allocation10 + $0x12a8] sm:$0xff]
        %v4328 = vld [vmem:[#allocation10 + $0x12b0] sm:$0xff]
        %v4329 = vld [vmem:[#allocation10 + $0x12b8] sm:$0xff]
        %v4330 = vld [vmem:[#allocation10 + $0x12c0] sm:$0xff]
        %v4331 = vld [vmem:[#allocation10 + $0x12c8] sm:$0xff]
        %v4332 = vld [vmem:[#allocation10 + $0x12d0] sm:$0xff]
        %v4333 = vld [vmem:[#allocation10 + $0x12d8] sm:$0xff]
        %v4334 = vld [vmem:[#allocation10 + $0x12e0] sm:$0xff]
        %v4335 = vld [vmem:[#allocation10 + $0x12e8] sm:$0xff]
        %v4336 = vld [vmem:[#allocation10 + $0x12f0] sm:$0xff]
        %v4337 = vld [vmem:[#allocation10 + $0x12f8] sm:$0xff]
        %v4338 = vld [vmem:[#allocation10 + $0x1300] sm:$0xff]
        %v4339 = vld [vmem:[#allocation10 + $0x1308] sm:$0xff]
        %v4340 = vld [vmem:[#allocation10 + $0x1310] sm:$0xff]
        %v4341 = vld [vmem:[#allocation10 + $0x1318] sm:$0xff]
        %v4342 = vld [vmem:[#allocation10 + $0x1320] sm:$0xff]
        %v4343 = vld [vmem:[#allocation10 + $0x1328] sm:$0xff]
        %v4344 = vld [vmem:[#allocation10 + $0x1330] sm:$0xff]
        %v4345 = vld [vmem:[#allocation10 + $0x1338] sm:$0xff]
        %v4346 = vld [vmem:[#allocation10 + $0x1340] sm:$0xff]
        %v4347 = vld [vmem:[#allocation10 + $0x1348] sm:$0xff]
        %v4348 = vld [vmem:[#allocation10 + $0x1350] sm:$0xff]
        %v4349 = vld [vmem:[#allocation10 + $0x1358] sm:$0xff]
        %v4350 = vld [vmem:[#allocation10 + $0x1360] sm:$0xff]
        %v4351 = vld [vmem:[#allocation10 + $0x1368] sm:$0xff]
        %v4352 = vld [vmem:[#allocation10 + $0x1370] sm:$0xff]
        %v4353 = vld [vmem:[#allocation10 + $0x1378] sm:$0xff]
        %v4354 = vld [vmem:[#allocation10 + $0x1380] sm:$0xff]
        %v4355 = vld [vmem:[#allocation10 + $0x1388] sm:$0xff]
        %v4356 = vld [vmem:[#allocation10 + $0x1390] sm:$0xff]
        %v4357 = vld [vmem:[#allocation10 + $0x1398] sm:$0xff]
        %v4358 = vld [vmem:[#allocation10 + $0x13a0] sm:$0xff]
        %v4359 = vld [vmem:[#allocation10 + $0x13a8] sm:$0xff]
        %v4360 = vld [vmem:[#allocation10 + $0x13b0] sm:$0xff]
        %v4361 = vld [vmem:[#allocation10 + $0x13b8] sm:$0xff]
        %v4362 = vld [vmem:[#allocation10 + $0x13c0] sm:$0xff]
        %v4363 = vld [vmem:[#allocation10 + $0x13c8] sm:$0xff]
        %v4364 = vld [vmem:[#allocation10 + $0x13d0] sm:$0xff]
        %v4365 = vld [vmem:[#allocation10 + $0x13d8] sm:$0xff]
        %v4366 = vld [vmem:[#allocation10 + $0x13e0] sm:$0xff]
        %v4367 = vld [vmem:[#allocation10 + $0x13e8] sm:$0xff]
        %v4368 = vld [vmem:[#allocation10 + $0x13f0] sm:$0xff]
        %v4369 = vld [vmem:[#allocation10 + $0x13f8] sm:$0xff]
        %v4370 = vld [vmem:[#allocation10 + $0x1400] sm:$0xff]
        %v4371 = vld [vmem:[#allocation10 + $0x1408] sm:$0xff]
        %v4372 = vld [vmem:[#allocation10 + $0x1410] sm:$0xff]
        %v4373 = vld [vmem:[#allocation10 + $0x1418] sm:$0xff]
        %v4374 = vld [vmem:[#allocation10 + $0x1420] sm:$0xff]
        %v4375 = vld [vmem:[#allocation10 + $0x1428] sm:$0xff]
        %v4376 = vld [vmem:[#allocation10 + $0x1430] sm:$0xff]
        %v4377 = vld [vmem:[#allocation10 + $0x1438] sm:$0xff]
        %v4378 = vld [vmem:[#allocation10 + $0x1440] sm:$0xff]
        %v4379 = vld [vmem:[#allocation10 + $0x1448] sm:$0xff]
        %v4380 = vld [vmem:[#allocation10 + $0x1450] sm:$0xff]
        %v4381 = vld [vmem:[#allocation10 + $0x1458] sm:$0xff]
        %v4382 = vld [vmem:[#allocation10 + $0x1460] sm:$0xff]
        %v4383 = vld [vmem:[#allocation10 + $0x1468] sm:$0xff]
        %v4384 = vld [vmem:[#allocation10 + $0x1470] sm:$0xff]
        %v4385 = vld [vmem:[#allocation10 + $0x1478] sm:$0xff]
        %v4386 = vld [vmem:[#allocation10 + $0x1480] sm:$0xff]
        %v4387 = vld [vmem:[#allocation10 + $0x1488] sm:$0xff]
        %v4388 = vld [vmem:[#allocation10 + $0x1490] sm:$0xff]
        %v4389 = vld [vmem:[#allocation10 + $0x1498] sm:$0xff]
        %v4390 = vld [vmem:[#allocation10 + $0x14a0] sm:$0xff]
        %v4391 = vld [vmem:[#allocation10 + $0x14a8] sm:$0xff]
        %v4392 = vld [vmem:[#allocation10 + $0x14b0] sm:$0xff]
        %v4393 = vld [vmem:[#allocation10 + $0x14b8] sm:$0xff]
        %v4394 = vld [vmem:[#allocation10 + $0x14c0] sm:$0xff]
        %v4395 = vld [vmem:[#allocation10 + $0x14c8] sm:$0xff]
        %v4396 = vld [vmem:[#allocation10 + $0x14d0] sm:$0xff]
        %v4397 = vld [vmem:[#allocation10 + $0x14d8] sm:$0xff]
        %v4398 = vld [vmem:[#allocation10 + $0x14e0] sm:$0xff]
        %v4399 = vld [vmem:[#allocation10 + $0x14e8] sm:$0xff]
        %v4400 = vld [vmem:[#allocation10 + $0x14f0] sm:$0xff]
        %v4401 = vld [vmem:[#allocation10 + $0x14f8] sm:$0xff]
        %v4402 = vld [vmem:[#allocation10 + $0x1500] sm:$0xff]
        %v4403 = vld [vmem:[#allocation10 + $0x1508] sm:$0xff]
        %v4404 = vld [vmem:[#allocation10 + $0x1510] sm:$0xff]
        %v4405 = vld [vmem:[#allocation10 + $0x1518] sm:$0xff]
        %v4406 = vld [vmem:[#allocation10 + $0x1520] sm:$0xff]
        %v4407 = vld [vmem:[#allocation10 + $0x1528] sm:$0xff]
        %v4408 = vld [vmem:[#allocation10 + $0x1530] sm:$0xff]
        %v4409 = vld [vmem:[#allocation10 + $0x1538] sm:$0xff]
        %v4410 = vld [vmem:[#allocation10 + $0x1540] sm:$0xff]
        %v4411 = vld [vmem:[#allocation10 + $0x1548] sm:$0xff]
        %v4412 = vld [vmem:[#allocation10 + $0x1550] sm:$0xff]
        %v4413 = vld [vmem:[#allocation10 + $0x1558] sm:$0xff]
        %v4414 = vld [vmem:[#allocation10 + $0x1560] sm:$0xff]
        %v4415 = vld [vmem:[#allocation10 + $0x1568] sm:$0xff]
        %v4416 = vld [vmem:[#allocation10 + $0x1570] sm:$0xff]
        %v4417 = vld [vmem:[#allocation10 + $0x1578] sm:$0xff]
        %v4418 = vld [vmem:[#allocation10 + $0x1580] sm:$0xff]
        %v4419 = vld [vmem:[#allocation10 + $0x1588] sm:$0xff]
        %v4420 = vld [vmem:[#allocation10 + $0x1590] sm:$0xff]
        %v4421 = vld [vmem:[#allocation10 + $0x1598] sm:$0xff]
        %v4422 = vld [vmem:[#allocation10 + $0x15a0] sm:$0xff]
        %v4423 = vld [vmem:[#allocation10 + $0x15a8] sm:$0xff]
        %v4424 = vld [vmem:[#allocation10 + $0x15b0] sm:$0xff]
        %v4425 = vld [vmem:[#allocation10 + $0x15b8] sm:$0xff]
        %v4426 = vld [vmem:[#allocation10 + $0x15c0] sm:$0xff]
        %v4427 = vld [vmem:[#allocation10 + $0x15c8] sm:$0xff]
        %v4428 = vld [vmem:[#allocation10 + $0x15d0] sm:$0xff]
        %v4429 = vld [vmem:[#allocation10 + $0x15d8] sm:$0xff]
        %v4430 = vld [vmem:[#allocation10 + $0x15e0] sm:$0xff]
        %v4431 = vld [vmem:[#allocation10 + $0x15e8] sm:$0xff]
        %v4432 = vld [vmem:[#allocation10 + $0x15f0] sm:$0xff]
        %v4433 = vld [vmem:[#allocation10 + $0x15f8] sm:$0xff]
        %v4434 = vld [vmem:[#allocation10 + $0x1600] sm:$0xff]
        %v4435 = vld [vmem:[#allocation10 + $0x1608] sm:$0xff]
        %v4436 = vld [vmem:[#allocation10 + $0x1610] sm:$0xff]
        %v4437 = vld [vmem:[#allocation10 + $0x1618] sm:$0xff]
        %v4438 = vld [vmem:[#allocation10 + $0x1620] sm:$0xff]
        %v4439 = vld [vmem:[#allocation10 + $0x1628] sm:$0xff]
        %v4440 = vld [vmem:[#allocation10 + $0x1630] sm:$0xff]
        %v4441 = vld [vmem:[#allocation10 + $0x1638] sm:$0xff]
        %v4442 = vld [vmem:[#allocation10 + $0x1640] sm:$0xff]
        %v4443 = vld [vmem:[#allocation10 + $0x1648] sm:$0xff]
        %v4444 = vld [vmem:[#allocation10 + $0x1650] sm:$0xff]
        %v4445 = vld [vmem:[#allocation10 + $0x1658] sm:$0xff]
        %v4446 = vld [vmem:[#allocation10 + $0x1660] sm:$0xff]
        %v4447 = vld [vmem:[#allocation10 + $0x1668] sm:$0xff]
        %v4448 = vld [vmem:[#allocation10 + $0x1670] sm:$0xff]
        %v4449 = vld [vmem:[#allocation10 + $0x1678] sm:$0xff]
        %v4450 = vld [vmem:[#allocation10 + $0x1680] sm:$0xff]
        %v4451 = vld [vmem:[#allocation10 + $0x1688] sm:$0xff]
        %v4452 = vld [vmem:[#allocation10 + $0x1690] sm:$0xff]
        %v4453 = vld [vmem:[#allocation10 + $0x1698] sm:$0xff]
        %v4454 = vld [vmem:[#allocation10 + $0x16a0] sm:$0xff]
        %v4455 = vld [vmem:[#allocation10 + $0x16a8] sm:$0xff]
        %v4456 = vld [vmem:[#allocation10 + $0x16b0] sm:$0xff]
        %v4457 = vld [vmem:[#allocation10 + $0x16b8] sm:$0xff]
        %v4458 = vld [vmem:[#allocation10 + $0x16c0] sm:$0xff]
        %v4459 = vld [vmem:[#allocation10 + $0x16c8] sm:$0xff]
        %v4460 = vld [vmem:[#allocation10 + $0x16d0] sm:$0xff]
        %v4461 = vld [vmem:[#allocation10 + $0x16d8] sm:$0xff]
        %v4462 = vld [vmem:[#allocation10 + $0x16e0] sm:$0xff]
        %v4463 = vld [vmem:[#allocation10 + $0x16e8] sm:$0xff]
        %v4464 = vld [vmem:[#allocation10 + $0x16f0] sm:$0xff]
        %v4465 = vld [vmem:[#allocation10 + $0x16f8] sm:$0xff]
        %v4466 = vld [vmem:[#allocation10 + $0x1700] sm:$0xff]
        %v4467 = vld [vmem:[#allocation10 + $0x1708] sm:$0xff]
        %v4468 = vld [vmem:[#allocation10 + $0x1710] sm:$0xff]
        %v4469 = vld [vmem:[#allocation10 + $0x1718] sm:$0xff]
        %v4470 = vld [vmem:[#allocation10 + $0x1720] sm:$0xff]
        %v4471 = vld [vmem:[#allocation10 + $0x1728] sm:$0xff]
        %v4472 = vld [vmem:[#allocation10 + $0x1730] sm:$0xff]
        %v4473 = vld [vmem:[#allocation10 + $0x1738] sm:$0xff]
        %v4474 = vld [vmem:[#allocation10 + $0x1740] sm:$0xff]
        %v4475 = vld [vmem:[#allocation10 + $0x1748] sm:$0xff]
        %v4476 = vld [vmem:[#allocation10 + $0x1750] sm:$0xff]
        %v4477 = vld [vmem:[#allocation10 + $0x1758] sm:$0xff]
        %v4478 = vld [vmem:[#allocation10 + $0x1760] sm:$0xff]
        %v4479 = vld [vmem:[#allocation10 + $0x1768] sm:$0xff]
        %v4480 = vld [vmem:[#allocation10 + $0x1770] sm:$0xff]
        %v4481 = vld [vmem:[#allocation10 + $0x1778] sm:$0xff]
        %v4482 = vld [vmem:[#allocation10 + $0x1780] sm:$0xff]
        %v4483 = vld [vmem:[#allocation10 + $0x1788] sm:$0xff]
        %v4484 = vld [vmem:[#allocation10 + $0x1790] sm:$0xff]
        %v4485 = vld [vmem:[#allocation10 + $0x1798] sm:$0xff]
        %v4486 = vld [vmem:[#allocation10 + $0x17a0] sm:$0xff]
        %v4487 = vld [vmem:[#allocation10 + $0x17a8] sm:$0xff]
        %v4488 = vld [vmem:[#allocation10 + $0x17b0] sm:$0xff]
        %v4489 = vld [vmem:[#allocation10 + $0x17b8] sm:$0xff]
        %v4490 = vld [vmem:[#allocation10 + $0x17c0] sm:$0xff]
        %v4491 = vld [vmem:[#allocation10 + $0x17c8] sm:$0xff]
        %v4492 = vld [vmem:[#allocation10 + $0x17d0] sm:$0xff]
        %v4493 = vld [vmem:[#allocation10 + $0x17d8] sm:$0xff]
        %v4494 = vld [vmem:[#allocation10 + $0x17e0] sm:$0xff]
        %v4495 = vld [vmem:[#allocation10 + $0x17e8] sm:$0xff]
        %v4496 = vld [vmem:[#allocation10 + $0x17f0] sm:$0xff]
        %v4497 = vld [vmem:[#allocation10 + $0x17f8] sm:$0xff]
        %v4498 = vld [vmem:[#allocation12] sm:$0xff]
        %v4500 = vlaneseq
        %v4501 = vshrl.u32 %v4500, 7
        %v4502 = vsub.s32 0, %v4501
        %v4503 = vrot.slane %v4498, %v4502
        %v4504 = vlaneseq
        %v4505 = vshrl.u32 %v4504, 7
        %v4506 = vsub.s32 1, %v4505
        %v4507 = vrot.slane %v4498, %v4506
        %v4508 = vlaneseq
        %v4509 = vshrl.u32 %v4508, 7
        %v4510 = vsub.s32 2, %v4509
        %v4511 = vrot.slane %v4498, %v4510
        %v4512 = vlaneseq
        %v4513 = vshrl.u32 %v4512, 7
        %v4514 = vsub.s32 3, %v4513
        %v4515 = vrot.slane %v4498, %v4514
        %v4516 = vlaneseq
        %v4517 = vshrl.u32 %v4516, 7
        %v4518 = vsub.s32 4, %v4517
        %v4519 = vrot.slane %v4498, %v4518
        %v4520 = vlaneseq
        %v4521 = vshrl.u32 %v4520, 7
        %v4522 = vsub.s32 5, %v4521
        %v4523 = vrot.slane %v4498, %v4522
        %v4524 = vlaneseq
        %v4525 = vshrl.u32 %v4524, 7
        %v4526 = vsub.s32 6, %v4525
        %v4527 = vrot.slane %v4498, %v4526
        %v4528 = vlaneseq
        %v4529 = vshrl.u32 %v4528, 7
        %v4530 = vsub.s32 7, %v4529
        %v4531 = vrot.slane %v4498, %v4530
        %v5308 = vunpack.c.l.b16 %v3730
        %v5309 = vunpack.c.h.b16 %v3730
        %v5310 = vunpack.c.l.b16 %v3731
        %v5311 = vunpack.c.h.b16 %v3731
        %v5312 = vunpack.c.l.b16 %v3732
        %v5313 = vunpack.c.h.b16 %v3732
        %v5314 = vunpack.c.l.b16 %v3733
        %v5315 = vunpack.c.h.b16 %v3733
        %v5316 = vunpack.c.l.b16 %v3734
        %v5317 = vunpack.c.h.b16 %v3734
        %v5318 = vunpack.c.l.b16 %v3735
        %v5319 = vunpack.c.h.b16 %v3735
        %v5320 = vunpack.c.l.b16 %v3736
        %v5321 = vunpack.c.h.b16 %v3736
        %v5322 = vunpack.c.l.b16 %v3737
        %v5323 = vunpack.c.h.b16 %v3737
        %v5324 = vunpack.c.l.b16 %v3738
        %v5325 = vunpack.c.h.b16 %v3738
        %v5326 = vunpack.c.l.b16 %v3739
        %v5327 = vunpack.c.h.b16 %v3739
        %v5328 = vunpack.c.l.b16 %v3740
        %v5329 = vunpack.c.h.b16 %v3740
        %v5330 = vunpack.c.l.b16 %v3741
        %v5331 = vunpack.c.h.b16 %v3741
        %v5332 = vunpack.c.l.b16 %v3742
        %v5333 = vunpack.c.h.b16 %v3742
        %v5334 = vunpack.c.l.b16 %v3743
        %v5335 = vunpack.c.h.b16 %v3743
        %v5336 = vunpack.c.l.b16 %v3744
        %v5337 = vunpack.c.h.b16 %v3744
        %v5338 = vunpack.c.l.b16 %v3745
        %v5339 = vunpack.c.h.b16 %v3745
        %v5340 = vunpack.c.l.b16 %v3746
        %v5341 = vunpack.c.h.b16 %v3746
        %v5342 = vunpack.c.l.b16 %v3747
        %v5343 = vunpack.c.h.b16 %v3747
        %v5344 = vunpack.c.l.b16 %v3748
        %v5345 = vunpack.c.h.b16 %v3748
        %v5346 = vunpack.c.l.b16 %v3749
        %v5347 = vunpack.c.h.b16 %v3749
        %v5348 = vunpack.c.l.b16 %v3750
        %v5349 = vunpack.c.h.b16 %v3750
        %v5350 = vunpack.c.l.b16 %v3751
        %v5351 = vunpack.c.h.b16 %v3751
        %v5352 = vunpack.c.l.b16 %v3752
        %v5353 = vunpack.c.h.b16 %v3752
        %v5354 = vunpack.c.l.b16 %v3753
        %v5355 = vunpack.c.h.b16 %v3753
        %v5356 = vunpack.c.l.b16 %v3754
        %v5357 = vunpack.c.h.b16 %v3754
        %v5358 = vunpack.c.l.b16 %v3755
        %v5359 = vunpack.c.h.b16 %v3755
        %v5360 = vunpack.c.l.b16 %v3756
        %v5361 = vunpack.c.h.b16 %v3756
        %v5362 = vunpack.c.l.b16 %v3757
        %v5363 = vunpack.c.h.b16 %v3757
        %v5364 = vunpack.c.l.b16 %v3758
        %v5365 = vunpack.c.h.b16 %v3758
        %v5366 = vunpack.c.l.b16 %v3759
        %v5367 = vunpack.c.h.b16 %v3759
        %v5368 = vunpack.c.l.b16 %v3760
        %v5369 = vunpack.c.h.b16 %v3760
        %v5370 = vunpack.c.l.b16 %v3761
        %v5371 = vunpack.c.h.b16 %v3761
        %v5372 = vunpack.c.l.b16 %v3762
        %v5373 = vunpack.c.h.b16 %v3762
        %v5374 = vunpack.c.l.b16 %v3763
        %v5375 = vunpack.c.h.b16 %v3763
        %v5376 = vunpack.c.l.b16 %v3764
        %v5377 = vunpack.c.h.b16 %v3764
        %v5378 = vunpack.c.l.b16 %v3765
        %v5379 = vunpack.c.h.b16 %v3765
        %v5380 = vunpack.c.l.b16 %v3766
        %v5381 = vunpack.c.h.b16 %v3766
        %v5382 = vunpack.c.l.b16 %v3767
        %v5383 = vunpack.c.h.b16 %v3767
        %v5384 = vunpack.c.l.b16 %v3768
        %v5385 = vunpack.c.h.b16 %v3768
        %v5386 = vunpack.c.l.b16 %v3769
        %v5387 = vunpack.c.h.b16 %v3769
        %v5388 = vunpack.c.l.b16 %v3770
        %v5389 = vunpack.c.h.b16 %v3770
        %v5390 = vunpack.c.l.b16 %v3771
        %v5391 = vunpack.c.h.b16 %v3771
        %v5392 = vunpack.c.l.b16 %v3772
        %v5393 = vunpack.c.h.b16 %v3772
        %v5394 = vunpack.c.l.b16 %v3773
        %v5395 = vunpack.c.h.b16 %v3773
        %v5396 = vunpack.c.l.b16 %v3774
        %v5397 = vunpack.c.h.b16 %v3774
        %v5398 = vunpack.c.l.b16 %v3775
        %v5399 = vunpack.c.h.b16 %v3775
        %v5400 = vunpack.c.l.b16 %v3776
        %v5401 = vunpack.c.h.b16 %v3776
        %v5402 = vunpack.c.l.b16 %v3777
        %v5403 = vunpack.c.h.b16 %v3777
        %v5404 = vunpack.c.l.b16 %v3778
        %v5405 = vunpack.c.h.b16 %v3778
        %v5406 = vunpack.c.l.b16 %v3779
        %v5407 = vunpack.c.h.b16 %v3779
        %v5408 = vunpack.c.l.b16 %v3780
        %v5409 = vunpack.c.h.b16 %v3780
        %v5410 = vunpack.c.l.b16 %v3781
        %v5411 = vunpack.c.h.b16 %v3781
        %v5412 = vunpack.c.l.b16 %v3782
        %v5413 = vunpack.c.h.b16 %v3782
        %v5414 = vunpack.c.l.b16 %v3783
        %v5415 = vunpack.c.h.b16 %v3783
        %v5416 = vunpack.c.l.b16 %v3784
        %v5417 = vunpack.c.h.b16 %v3784
        %v5418 = vunpack.c.l.b16 %v3785
        %v5419 = vunpack.c.h.b16 %v3785
        %v5420 = vunpack.c.l.b16 %v3786
        %v5421 = vunpack.c.h.b16 %v3786
        %v5422 = vunpack.c.l.b16 %v3787
        %v5423 = vunpack.c.h.b16 %v3787
        %v5424 = vunpack.c.l.b16 %v3788
        %v5425 = vunpack.c.h.b16 %v3788
        %v5426 = vunpack.c.l.b16 %v3789
        %v5427 = vunpack.c.h.b16 %v3789
        %v5428 = vunpack.c.l.b16 %v3790
        %v5429 = vunpack.c.h.b16 %v3790
        %v5430 = vunpack.c.l.b16 %v3791
        %v5431 = vunpack.c.h.b16 %v3791
        %v5432 = vunpack.c.l.b16 %v3792
        %v5433 = vunpack.c.h.b16 %v3792
        %v5434 = vunpack.c.l.b16 %v3793
        %v5435 = vunpack.c.h.b16 %v3793
        %v5436 = vunpack.c.l.b16 %v3794
        %v5437 = vunpack.c.h.b16 %v3794
        %v5438 = vunpack.c.l.b16 %v3795
        %v5439 = vunpack.c.h.b16 %v3795
        %v5440 = vunpack.c.l.b16 %v3796
        %v5441 = vunpack.c.h.b16 %v3796
        %v5442 = vunpack.c.l.b16 %v3797
        %v5443 = vunpack.c.h.b16 %v3797
        %v5444 = vunpack.c.l.b16 %v3798
        %v5445 = vunpack.c.h.b16 %v3798
        %v5446 = vunpack.c.l.b16 %v3799
        %v5447 = vunpack.c.h.b16 %v3799
        %v5448 = vunpack.c.l.b16 %v3800
        %v5449 = vunpack.c.h.b16 %v3800
        %v5450 = vunpack.c.l.b16 %v3801
        %v5451 = vunpack.c.h.b16 %v3801
        %v5452 = vunpack.c.l.b16 %v3802
        %v5453 = vunpack.c.h.b16 %v3802
        %v5454 = vunpack.c.l.b16 %v3803
        %v5455 = vunpack.c.h.b16 %v3803
        %v5456 = vunpack.c.l.b16 %v3804
        %v5457 = vunpack.c.h.b16 %v3804
        %v5458 = vunpack.c.l.b16 %v3805
        %v5459 = vunpack.c.h.b16 %v3805
        %v5460 = vunpack.c.l.b16 %v3806
        %v5461 = vunpack.c.h.b16 %v3806
        %v5462 = vunpack.c.l.b16 %v3807
        %v5463 = vunpack.c.h.b16 %v3807
        %v5464 = vunpack.c.l.b16 %v3808
        %v5465 = vunpack.c.h.b16 %v3808
        %v5466 = vunpack.c.l.b16 %v3809
        %v5467 = vunpack.c.h.b16 %v3809
        %v5468 = vunpack.c.l.b16 %v3810
        %v5469 = vunpack.c.h.b16 %v3810
        %v5470 = vunpack.c.l.b16 %v3811
        %v5471 = vunpack.c.h.b16 %v3811
        %v5472 = vunpack.c.l.b16 %v3812
        %v5473 = vunpack.c.h.b16 %v3812
        %v5474 = vunpack.c.l.b16 %v3813
        %v5475 = vunpack.c.h.b16 %v3813
        %v5476 = vunpack.c.l.b16 %v3814
        %v5477 = vunpack.c.h.b16 %v3814
        %v5478 = vunpack.c.l.b16 %v3815
        %v5479 = vunpack.c.h.b16 %v3815
        %v5480 = vunpack.c.l.b16 %v3816
        %v5481 = vunpack.c.h.b16 %v3816
        %v5482 = vunpack.c.l.b16 %v3817
        %v5483 = vunpack.c.h.b16 %v3817
        %v5484 = vunpack.c.l.b16 %v3818
        %v5485 = vunpack.c.h.b16 %v3818
        %v5486 = vunpack.c.l.b16 %v3819
        %v5487 = vunpack.c.h.b16 %v3819
        %v5488 = vunpack.c.l.b16 %v3820
        %v5489 = vunpack.c.h.b16 %v3820
        %v5490 = vunpack.c.l.b16 %v3821
        %v5491 = vunpack.c.h.b16 %v3821
        %v5492 = vunpack.c.l.b16 %v3822
        %v5493 = vunpack.c.h.b16 %v3822
        %v5494 = vunpack.c.l.b16 %v3823
        %v5495 = vunpack.c.h.b16 %v3823
        %v5496 = vunpack.c.l.b16 %v3824
        %v5497 = vunpack.c.h.b16 %v3824
        %v5498 = vunpack.c.l.b16 %v3825
        %v5499 = vunpack.c.h.b16 %v3825
        %v5500 = vunpack.c.l.b16 %v3826
        %v5501 = vunpack.c.h.b16 %v3826
        %v5502 = vunpack.c.l.b16 %v3827
        %v5503 = vunpack.c.h.b16 %v3827
        %v5504 = vunpack.c.l.b16 %v3828
        %v5505 = vunpack.c.h.b16 %v3828
        %v5506 = vunpack.c.l.b16 %v3829
        %v5507 = vunpack.c.h.b16 %v3829
        %v5508 = vunpack.c.l.b16 %v3830
        %v5509 = vunpack.c.h.b16 %v3830
        %v5510 = vunpack.c.l.b16 %v3831
        %v5511 = vunpack.c.h.b16 %v3831
        %v5512 = vunpack.c.l.b16 %v3832
        %v5513 = vunpack.c.h.b16 %v3832
        %v5514 = vunpack.c.l.b16 %v3833
        %v5515 = vunpack.c.h.b16 %v3833
        %v5516 = vunpack.c.l.b16 %v3834
        %v5517 = vunpack.c.h.b16 %v3834
        %v5518 = vunpack.c.l.b16 %v3835
        %v5519 = vunpack.c.h.b16 %v3835
        %v5520 = vunpack.c.l.b16 %v3836
        %v5521 = vunpack.c.h.b16 %v3836
        %v5522 = vunpack.c.l.b16 %v3837
        %v5523 = vunpack.c.h.b16 %v3837
        %v5524 = vunpack.c.l.b16 %v3838
        %v5525 = vunpack.c.h.b16 %v3838
        %v5526 = vunpack.c.l.b16 %v3839
        %v5527 = vunpack.c.h.b16 %v3839
        %v5528 = vunpack.c.l.b16 %v3840
        %v5529 = vunpack.c.h.b16 %v3840
        %v5530 = vunpack.c.l.b16 %v3841
        %v5531 = vunpack.c.h.b16 %v3841
        %v5532 = vunpack.c.l.b16 %v3842
        %v5533 = vunpack.c.h.b16 %v3842
        %v5534 = vunpack.c.l.b16 %v3843
        %v5535 = vunpack.c.h.b16 %v3843
        %v5536 = vunpack.c.l.b16 %v3844
        %v5537 = vunpack.c.h.b16 %v3844
        %v5538 = vunpack.c.l.b16 %v3845
        %v5539 = vunpack.c.h.b16 %v3845
        %v5540 = vunpack.c.l.b16 %v3846
        %v5541 = vunpack.c.h.b16 %v3846
        %v5542 = vunpack.c.l.b16 %v3847
        %v5543 = vunpack.c.h.b16 %v3847
        %v5544 = vunpack.c.l.b16 %v3848
        %v5545 = vunpack.c.h.b16 %v3848
        %v5546 = vunpack.c.l.b16 %v3849
        %v5547 = vunpack.c.h.b16 %v3849
        %v5548 = vunpack.c.l.b16 %v3850
        %v5549 = vunpack.c.h.b16 %v3850
        %v5550 = vunpack.c.l.b16 %v3851
        %v5551 = vunpack.c.h.b16 %v3851
        %v5552 = vunpack.c.l.b16 %v3852
        %v5553 = vunpack.c.h.b16 %v3852
        %v5554 = vunpack.c.l.b16 %v3853
        %v5555 = vunpack.c.h.b16 %v3853
        %v5556 = vunpack.c.l.b16 %v3854
        %v5557 = vunpack.c.h.b16 %v3854
        %v5558 = vunpack.c.l.b16 %v3855
        %v5559 = vunpack.c.h.b16 %v3855
        %v5560 = vunpack.c.l.b16 %v3856
        %v5561 = vunpack.c.h.b16 %v3856
        %v5562 = vunpack.c.l.b16 %v3857
        %v5563 = vunpack.c.h.b16 %v3857
        %v5564 = vunpack.c.l.b16 %v3858
        %v5565 = vunpack.c.h.b16 %v3858
        %v5566 = vunpack.c.l.b16 %v3859
        %v5567 = vunpack.c.h.b16 %v3859
        %v5568 = vunpack.c.l.b16 %v3860
        %v5569 = vunpack.c.h.b16 %v3860
        %v5570 = vunpack.c.l.b16 %v3861
        %v5571 = vunpack.c.h.b16 %v3861
        %v5572 = vunpack.c.l.b16 %v3862
        %v5573 = vunpack.c.h.b16 %v3862
        %v5574 = vunpack.c.l.b16 %v3863
        %v5575 = vunpack.c.h.b16 %v3863
        %v5576 = vunpack.c.l.b16 %v3864
        %v5577 = vunpack.c.h.b16 %v3864
        %v5578 = vunpack.c.l.b16 %v3865
        %v5579 = vunpack.c.h.b16 %v3865
        %v5580 = vunpack.c.l.b16 %v3866
        %v5581 = vunpack.c.h.b16 %v3866
        %v5582 = vunpack.c.l.b16 %v3867
        %v5583 = vunpack.c.h.b16 %v3867
        %v5584 = vunpack.c.l.b16 %v3868
        %v5585 = vunpack.c.h.b16 %v3868
        %v5586 = vunpack.c.l.b16 %v3869
        %v5587 = vunpack.c.h.b16 %v3869
        %v5588 = vunpack.c.l.b16 %v3870
        %v5589 = vunpack.c.h.b16 %v3870
        %v5590 = vunpack.c.l.b16 %v3871
        %v5591 = vunpack.c.h.b16 %v3871
        %v5592 = vunpack.c.l.b16 %v3872
        %v5593 = vunpack.c.h.b16 %v3872
        %v5594 = vunpack.c.l.b16 %v3873
        %v5595 = vunpack.c.h.b16 %v3873
        %v5596 = vunpack.c.l.b16 %v3874
        %v5597 = vunpack.c.h.b16 %v3874
        %v5598 = vunpack.c.l.b16 %v3875
        %v5599 = vunpack.c.h.b16 %v3875
        %v5600 = vunpack.c.l.b16 %v3876
        %v5601 = vunpack.c.h.b16 %v3876
        %v5602 = vunpack.c.l.b16 %v3877
        %v5603 = vunpack.c.h.b16 %v3877
        %v5604 = vunpack.c.l.b16 %v3878
        %v5605 = vunpack.c.h.b16 %v3878
        %v5606 = vunpack.c.l.b16 %v3879
        %v5607 = vunpack.c.h.b16 %v3879
        %v5608 = vunpack.c.l.b16 %v3880
        %v5609 = vunpack.c.h.b16 %v3880
        %v5610 = vunpack.c.l.b16 %v3881
        %v5611 = vunpack.c.h.b16 %v3881
        %v5612 = vunpack.c.l.b16 %v3882
        %v5613 = vunpack.c.h.b16 %v3882
        %v5614 = vunpack.c.l.b16 %v3883
        %v5615 = vunpack.c.h.b16 %v3883
        %v5616 = vunpack.c.l.b16 %v3884
        %v5617 = vunpack.c.h.b16 %v3884
        %v5618 = vunpack.c.l.b16 %v3885
        %v5619 = vunpack.c.h.b16 %v3885
        %v5620 = vunpack.c.l.b16 %v3886
        %v5621 = vunpack.c.h.b16 %v3886
        %v5622 = vunpack.c.l.b16 %v3887
        %v5623 = vunpack.c.h.b16 %v3887
        %v5624 = vunpack.c.l.b16 %v3888
        %v5625 = vunpack.c.h.b16 %v3888
        %v5626 = vunpack.c.l.b16 %v3889
        %v5627 = vunpack.c.h.b16 %v3889
        %v5628 = vunpack.c.l.b16 %v3890
        %v5629 = vunpack.c.h.b16 %v3890
        %v5630 = vunpack.c.l.b16 %v3891
        %v5631 = vunpack.c.h.b16 %v3891
        %v5632 = vunpack.c.l.b16 %v3892
        %v5633 = vunpack.c.h.b16 %v3892
        %v5634 = vunpack.c.l.b16 %v3893
        %v5635 = vunpack.c.h.b16 %v3893
        %v5636 = vunpack.c.l.b16 %v3894
        %v5637 = vunpack.c.h.b16 %v3894
        %v5638 = vunpack.c.l.b16 %v3895
        %v5639 = vunpack.c.h.b16 %v3895
        %v5640 = vunpack.c.l.b16 %v3896
        %v5641 = vunpack.c.h.b16 %v3896
        %v5642 = vunpack.c.l.b16 %v3897
        %v5643 = vunpack.c.h.b16 %v3897
        %v5644 = vunpack.c.l.b16 %v3898
        %v5645 = vunpack.c.h.b16 %v3898
        %v5646 = vunpack.c.l.b16 %v3899
        %v5647 = vunpack.c.h.b16 %v3899
        %v5648 = vunpack.c.l.b16 %v3900
        %v5649 = vunpack.c.h.b16 %v3900
        %v5650 = vunpack.c.l.b16 %v3901
        %v5651 = vunpack.c.h.b16 %v3901
        %v5652 = vunpack.c.l.b16 %v3902
        %v5653 = vunpack.c.h.b16 %v3902
        %v5654 = vunpack.c.l.b16 %v3903
        %v5655 = vunpack.c.h.b16 %v3903
        %v5656 = vunpack.c.l.b16 %v3904
        %v5657 = vunpack.c.h.b16 %v3904
        %v5658 = vunpack.c.l.b16 %v3905
        %v5659 = vunpack.c.h.b16 %v3905
        %v5660 = vunpack.c.l.b16 %v3906
        %v5661 = vunpack.c.h.b16 %v3906
        %v5662 = vunpack.c.l.b16 %v3907
        %v5663 = vunpack.c.h.b16 %v3907
        %v5664 = vunpack.c.l.b16 %v3908
        %v5665 = vunpack.c.h.b16 %v3908
        %v5666 = vunpack.c.l.b16 %v3909
        %v5667 = vunpack.c.h.b16 %v3909
        %v5668 = vunpack.c.l.b16 %v3910
        %v5669 = vunpack.c.h.b16 %v3910
        %v5670 = vunpack.c.l.b16 %v3911
        %v5671 = vunpack.c.h.b16 %v3911
        %v5672 = vunpack.c.l.b16 %v3912
        %v5673 = vunpack.c.h.b16 %v3912
        %v5674 = vunpack.c.l.b16 %v3913
        %v5675 = vunpack.c.h.b16 %v3913
        %v5676 = vunpack.c.l.b16 %v3914
        %v5677 = vunpack.c.h.b16 %v3914
        %v5678 = vunpack.c.l.b16 %v3915
        %v5679 = vunpack.c.h.b16 %v3915
        %v5680 = vunpack.c.l.b16 %v3916
        %v5681 = vunpack.c.h.b16 %v3916
        %v5682 = vunpack.c.l.b16 %v3917
        %v5683 = vunpack.c.h.b16 %v3917
        %v5684 = vunpack.c.l.b16 %v3918
        %v5685 = vunpack.c.h.b16 %v3918
        %v5686 = vunpack.c.l.b16 %v3919
        %v5687 = vunpack.c.h.b16 %v3919
        %v5688 = vunpack.c.l.b16 %v3920
        %v5689 = vunpack.c.h.b16 %v3920
        %v5690 = vunpack.c.l.b16 %v3921
        %v5691 = vunpack.c.h.b16 %v3921
        %v5692 = vunpack.c.l.b16 %v3922
        %v5693 = vunpack.c.h.b16 %v3922
        %v5694 = vunpack.c.l.b16 %v3923
        %v5695 = vunpack.c.h.b16 %v3923
        %v5696 = vunpack.c.l.b16 %v3924
        %v5697 = vunpack.c.h.b16 %v3924
        %v5698 = vunpack.c.l.b16 %v3925
        %v5699 = vunpack.c.h.b16 %v3925
        %v5700 = vunpack.c.l.b16 %v3926
        %v5701 = vunpack.c.h.b16 %v3926
        %v5702 = vunpack.c.l.b16 %v3927
        %v5703 = vunpack.c.h.b16 %v3927
        %v5704 = vunpack.c.l.b16 %v3928
        %v5705 = vunpack.c.h.b16 %v3928
        %v5706 = vunpack.c.l.b16 %v3929
        %v5707 = vunpack.c.h.b16 %v3929
        %v5708 = vunpack.c.l.b16 %v3930
        %v5709 = vunpack.c.h.b16 %v3930
        %v5710 = vunpack.c.l.b16 %v3931
        %v5711 = vunpack.c.h.b16 %v3931
        %v5712 = vunpack.c.l.b16 %v3932
        %v5713 = vunpack.c.h.b16 %v3932
        %v5714 = vunpack.c.l.b16 %v3933
        %v5715 = vunpack.c.h.b16 %v3933
        %v5716 = vunpack.c.l.b16 %v3934
        %v5717 = vunpack.c.h.b16 %v3934
        %v5718 = vunpack.c.l.b16 %v3935
        %v5719 = vunpack.c.h.b16 %v3935
        %v5720 = vunpack.c.l.b16 %v3936
        %v5721 = vunpack.c.h.b16 %v3936
        %v5722 = vunpack.c.l.b16 %v3937
        %v5723 = vunpack.c.h.b16 %v3937
        %v5724 = vunpack.c.l.b16 %v3938
        %v5725 = vunpack.c.h.b16 %v3938
        %v5726 = vunpack.c.l.b16 %v3939
        %v5727 = vunpack.c.h.b16 %v3939
        %v5728 = vunpack.c.l.b16 %v3940
        %v5729 = vunpack.c.h.b16 %v3940
        %v5730 = vunpack.c.l.b16 %v3941
        %v5731 = vunpack.c.h.b16 %v3941
        %v5732 = vunpack.c.l.b16 %v3942
        %v5733 = vunpack.c.h.b16 %v3942
        %v5734 = vunpack.c.l.b16 %v3943
        %v5735 = vunpack.c.h.b16 %v3943
        %v5736 = vunpack.c.l.b16 %v3944
        %v5737 = vunpack.c.h.b16 %v3944
        %v5738 = vunpack.c.l.b16 %v3945
        %v5739 = vunpack.c.h.b16 %v3945
        %v5740 = vunpack.c.l.b16 %v3946
        %v5741 = vunpack.c.h.b16 %v3946
        %v5742 = vunpack.c.l.b16 %v3947
        %v5743 = vunpack.c.h.b16 %v3947
        %v5744 = vunpack.c.l.b16 %v3948
        %v5745 = vunpack.c.h.b16 %v3948
        %v5746 = vunpack.c.l.b16 %v3949
        %v5747 = vunpack.c.h.b16 %v3949
        %v5748 = vunpack.c.l.b16 %v3950
        %v5749 = vunpack.c.h.b16 %v3950
        %v5750 = vunpack.c.l.b16 %v3951
        %v5751 = vunpack.c.h.b16 %v3951
        %v5752 = vunpack.c.l.b16 %v3952
        %v5753 = vunpack.c.h.b16 %v3952
        %v5754 = vunpack.c.l.b16 %v3953
        %v5755 = vunpack.c.h.b16 %v3953
        %v5756 = vunpack.c.l.b16 %v3954
        %v5757 = vunpack.c.h.b16 %v3954
        %v5758 = vunpack.c.l.b16 %v3955
        %v5759 = vunpack.c.h.b16 %v3955
        %v5760 = vunpack.c.l.b16 %v3956
        %v5761 = vunpack.c.h.b16 %v3956
        %v5762 = vunpack.c.l.b16 %v3957
        %v5763 = vunpack.c.h.b16 %v3957
        %v5764 = vunpack.c.l.b16 %v3958
        %v5765 = vunpack.c.h.b16 %v3958
        %v5766 = vunpack.c.l.b16 %v3959
        %v5767 = vunpack.c.h.b16 %v3959
        %v5768 = vunpack.c.l.b16 %v3960
        %v5769 = vunpack.c.h.b16 %v3960
        %v5770 = vunpack.c.l.b16 %v3961
        %v5771 = vunpack.c.h.b16 %v3961
        %v5772 = vunpack.c.l.b16 %v3962
        %v5773 = vunpack.c.h.b16 %v3962
        %v5774 = vunpack.c.l.b16 %v3963
        %v5775 = vunpack.c.h.b16 %v3963
        %v5776 = vunpack.c.l.b16 %v3964
        %v5777 = vunpack.c.h.b16 %v3964
        %v5778 = vunpack.c.l.b16 %v3965
        %v5779 = vunpack.c.h.b16 %v3965
        %v5780 = vunpack.c.l.b16 %v3966
        %v5781 = vunpack.c.h.b16 %v3966
        %v5782 = vunpack.c.l.b16 %v3967
        %v5783 = vunpack.c.h.b16 %v3967
        %v5784 = vunpack.c.l.b16 %v3968
        %v5785 = vunpack.c.h.b16 %v3968
        %v5786 = vunpack.c.l.b16 %v3969
        %v5787 = vunpack.c.h.b16 %v3969
        %v5788 = vunpack.c.l.b16 %v3970
        %v5789 = vunpack.c.h.b16 %v3970
        %v5790 = vunpack.c.l.b16 %v3971
        %v5791 = vunpack.c.h.b16 %v3971
        %v5792 = vunpack.c.l.b16 %v3972
        %v5793 = vunpack.c.h.b16 %v3972
        %v5794 = vunpack.c.l.b16 %v3973
        %v5795 = vunpack.c.h.b16 %v3973
        %v5796 = vunpack.c.l.b16 %v3974
        %v5797 = vunpack.c.h.b16 %v3974
        %v5798 = vunpack.c.l.b16 %v3975
        %v5799 = vunpack.c.h.b16 %v3975
        %v5800 = vunpack.c.l.b16 %v3976
        %v5801 = vunpack.c.h.b16 %v3976
        %v5802 = vunpack.c.l.b16 %v3977
        %v5803 = vunpack.c.h.b16 %v3977
        %v5804 = vunpack.c.l.b16 %v3978
        %v5805 = vunpack.c.h.b16 %v3978
        %v5806 = vunpack.c.l.b16 %v3979
        %v5807 = vunpack.c.h.b16 %v3979
        %v5808 = vunpack.c.l.b16 %v3980
        %v5809 = vunpack.c.h.b16 %v3980
        %v5810 = vunpack.c.l.b16 %v3981
        %v5811 = vunpack.c.h.b16 %v3981
        %v5812 = vunpack.c.l.b16 %v3982
        %v5813 = vunpack.c.h.b16 %v3982
        %v5814 = vunpack.c.l.b16 %v3983
        %v5815 = vunpack.c.h.b16 %v3983
        %v5816 = vunpack.c.l.b16 %v3984
        %v5817 = vunpack.c.h.b16 %v3984
        %v5818 = vunpack.c.l.b16 %v3985
        %v5819 = vunpack.c.h.b16 %v3985
        %v5820 = vunpack.c.l.b16 %v3986
        %v5821 = vunpack.c.h.b16 %v3986
        %v5822 = vunpack.c.l.b16 %v3987
        %v5823 = vunpack.c.h.b16 %v3987
        %v5824 = vunpack.c.l.b16 %v3988
        %v5825 = vunpack.c.h.b16 %v3988
        %v5826 = vunpack.c.l.b16 %v3989
        %v5827 = vunpack.c.h.b16 %v3989
        %v5828 = vunpack.c.l.b16 %v3990
        %v5829 = vunpack.c.h.b16 %v3990
        %v5830 = vunpack.c.l.b16 %v3991
        %v5831 = vunpack.c.h.b16 %v3991
        %v5832 = vunpack.c.l.b16 %v3992
        %v5833 = vunpack.c.h.b16 %v3992
        %v5834 = vunpack.c.l.b16 %v3993
        %v5835 = vunpack.c.h.b16 %v3993
        %v5836 = vunpack.c.l.b16 %v3994
        %v5837 = vunpack.c.h.b16 %v3994
        %v5838 = vunpack.c.l.b16 %v3995
        %v5839 = vunpack.c.h.b16 %v3995
        %v5840 = vunpack.c.l.b16 %v3996
        %v5841 = vunpack.c.h.b16 %v3996
        %v5842 = vunpack.c.l.b16 %v3997
        %v5843 = vunpack.c.h.b16 %v3997
        %v5844 = vunpack.c.l.b16 %v3998
        %v5845 = vunpack.c.h.b16 %v3998
        %v5846 = vunpack.c.l.b16 %v3999
        %v5847 = vunpack.c.h.b16 %v3999
        %v5848 = vunpack.c.l.b16 %v4000
        %v5849 = vunpack.c.h.b16 %v4000
        %v5850 = vunpack.c.l.b16 %v4001
        %v5851 = vunpack.c.h.b16 %v4001
        %v5852 = vunpack.c.l.b16 %v4002
        %v5853 = vunpack.c.h.b16 %v4002
        %v5854 = vunpack.c.l.b16 %v4003
        %v5855 = vunpack.c.h.b16 %v4003
        %v5856 = vunpack.c.l.b16 %v4004
        %v5857 = vunpack.c.h.b16 %v4004
        %v5858 = vunpack.c.l.b16 %v4005
        %v5859 = vunpack.c.h.b16 %v4005
        %v5860 = vunpack.c.l.b16 %v4006
        %v5861 = vunpack.c.h.b16 %v4006
        %v5862 = vunpack.c.l.b16 %v4007
        %v5863 = vunpack.c.h.b16 %v4007
        %v5864 = vunpack.c.l.b16 %v4008
        %v5865 = vunpack.c.h.b16 %v4008
        %v5866 = vunpack.c.l.b16 %v4009
        %v5867 = vunpack.c.h.b16 %v4009
        %v5868 = vunpack.c.l.b16 %v4010
        %v5869 = vunpack.c.h.b16 %v4010
        %v5870 = vunpack.c.l.b16 %v4011
        %v5871 = vunpack.c.h.b16 %v4011
        %v5872 = vunpack.c.l.b16 %v4012
        %v5873 = vunpack.c.h.b16 %v4012
        %v5874 = vunpack.c.l.b16 %v4013
        %v5875 = vunpack.c.h.b16 %v4013
        %v5876 = vunpack.c.l.b16 %v4014
        %v5877 = vunpack.c.h.b16 %v4014
        %v5878 = vunpack.c.l.b16 %v4015
        %v5879 = vunpack.c.h.b16 %v4015
        %v5880 = vunpack.c.l.b16 %v4016
        %v5881 = vunpack.c.h.b16 %v4016
        %v5882 = vunpack.c.l.b16 %v4017
        %v5883 = vunpack.c.h.b16 %v4017
        %v5884 = vunpack.c.l.b16 %v4018
        %v5885 = vunpack.c.h.b16 %v4018
        %v5886 = vunpack.c.l.b16 %v4019
        %v5887 = vunpack.c.h.b16 %v4019
        %v5888 = vunpack.c.l.b16 %v4020
        %v5889 = vunpack.c.h.b16 %v4020
        %v5890 = vunpack.c.l.b16 %v4021
        %v5891 = vunpack.c.h.b16 %v4021
        %v5892 = vunpack.c.l.b16 %v4022
        %v5893 = vunpack.c.h.b16 %v4022
        %v5894 = vunpack.c.l.b16 %v4023
        %v5895 = vunpack.c.h.b16 %v4023
        %v5896 = vunpack.c.l.b16 %v4024
        %v5897 = vunpack.c.h.b16 %v4024
        %v5898 = vunpack.c.l.b16 %v4025
        %v5899 = vunpack.c.h.b16 %v4025
        %v5900 = vunpack.c.l.b16 %v4026
        %v5901 = vunpack.c.h.b16 %v4026
        %v5902 = vunpack.c.l.b16 %v4027
        %v5903 = vunpack.c.h.b16 %v4027
        %v5904 = vunpack.c.l.b16 %v4028
        %v5905 = vunpack.c.h.b16 %v4028
        %v5906 = vunpack.c.l.b16 %v4029
        %v5907 = vunpack.c.h.b16 %v4029
        %v5908 = vunpack.c.l.b16 %v4030
        %v5909 = vunpack.c.h.b16 %v4030
        %v5910 = vunpack.c.l.b16 %v4031
        %v5911 = vunpack.c.h.b16 %v4031
        %v5912 = vunpack.c.l.b16 %v4032
        %v5913 = vunpack.c.h.b16 %v4032
        %v5914 = vunpack.c.l.b16 %v4033
        %v5915 = vunpack.c.h.b16 %v4033
        %v5916 = vunpack.c.l.b16 %v4034
        %v5917 = vunpack.c.h.b16 %v4034
        %v5918 = vunpack.c.l.b16 %v4035
        %v5919 = vunpack.c.h.b16 %v4035
        %v5920 = vunpack.c.l.b16 %v4036
        %v5921 = vunpack.c.h.b16 %v4036
        %v5922 = vunpack.c.l.b16 %v4037
        %v5923 = vunpack.c.h.b16 %v4037
        %v5924 = vunpack.c.l.b16 %v4038
        %v5925 = vunpack.c.h.b16 %v4038
        %v5926 = vunpack.c.l.b16 %v4039
        %v5927 = vunpack.c.h.b16 %v4039
        %v5928 = vunpack.c.l.b16 %v4040
        %v5929 = vunpack.c.h.b16 %v4040
        %v5930 = vunpack.c.l.b16 %v4041
        %v5931 = vunpack.c.h.b16 %v4041
        %v5932 = vunpack.c.l.b16 %v4042
        %v5933 = vunpack.c.h.b16 %v4042
        %v5934 = vunpack.c.l.b16 %v4043
        %v5935 = vunpack.c.h.b16 %v4043
        %v5936 = vunpack.c.l.b16 %v4044
        %v5937 = vunpack.c.h.b16 %v4044
        %v5938 = vunpack.c.l.b16 %v4045
        %v5939 = vunpack.c.h.b16 %v4045
        %v5940 = vunpack.c.l.b16 %v4046
        %v5941 = vunpack.c.h.b16 %v4046
        %v5942 = vunpack.c.l.b16 %v4047
        %v5943 = vunpack.c.h.b16 %v4047
        %v5944 = vunpack.c.l.b16 %v4048
        %v5945 = vunpack.c.h.b16 %v4048
        %v5946 = vunpack.c.l.b16 %v4049
        %v5947 = vunpack.c.h.b16 %v4049
        %v5948 = vunpack.c.l.b16 %v4050
        %v5949 = vunpack.c.h.b16 %v4050
        %v5950 = vunpack.c.l.b16 %v4051
        %v5951 = vunpack.c.h.b16 %v4051
        %v5952 = vunpack.c.l.b16 %v4052
        %v5953 = vunpack.c.h.b16 %v4052
        %v5954 = vunpack.c.l.b16 %v4053
        %v5955 = vunpack.c.h.b16 %v4053
        %v5956 = vunpack.c.l.b16 %v4054
        %v5957 = vunpack.c.h.b16 %v4054
        %v5958 = vunpack.c.l.b16 %v4055
        %v5959 = vunpack.c.h.b16 %v4055
        %v5960 = vunpack.c.l.b16 %v4056
        %v5961 = vunpack.c.h.b16 %v4056
        %v5962 = vunpack.c.l.b16 %v4057
        %v5963 = vunpack.c.h.b16 %v4057
        %v5964 = vunpack.c.l.b16 %v4058
        %v5965 = vunpack.c.h.b16 %v4058
        %v5966 = vunpack.c.l.b16 %v4059
        %v5967 = vunpack.c.h.b16 %v4059
        %v5968 = vunpack.c.l.b16 %v4060
        %v5969 = vunpack.c.h.b16 %v4060
        %v5970 = vunpack.c.l.b16 %v4061
        %v5971 = vunpack.c.h.b16 %v4061
        %v5972 = vunpack.c.l.b16 %v4062
        %v5973 = vunpack.c.h.b16 %v4062
        %v5974 = vunpack.c.l.b16 %v4063
        %v5975 = vunpack.c.h.b16 %v4063
        %v5976 = vunpack.c.l.b16 %v4064
        %v5977 = vunpack.c.h.b16 %v4064
        %v5978 = vunpack.c.l.b16 %v4065
        %v5979 = vunpack.c.h.b16 %v4065
        %v5980 = vunpack.c.l.b16 %v4066
        %v5981 = vunpack.c.h.b16 %v4066
        %v5982 = vunpack.c.l.b16 %v4067
        %v5983 = vunpack.c.h.b16 %v4067
        %v5984 = vunpack.c.l.b16 %v4068
        %v5985 = vunpack.c.h.b16 %v4068
        %v5986 = vunpack.c.l.b16 %v4069
        %v5987 = vunpack.c.h.b16 %v4069
        %v5988 = vunpack.c.l.b16 %v4070
        %v5989 = vunpack.c.h.b16 %v4070
        %v5990 = vunpack.c.l.b16 %v4071
        %v5991 = vunpack.c.h.b16 %v4071
        %v5992 = vunpack.c.l.b16 %v4072
        %v5993 = vunpack.c.h.b16 %v4072
        %v5994 = vunpack.c.l.b16 %v4073
        %v5995 = vunpack.c.h.b16 %v4073
        %v5996 = vunpack.c.l.b16 %v4074
        %v5997 = vunpack.c.h.b16 %v4074
        %v5998 = vunpack.c.l.b16 %v4075
        %v5999 = vunpack.c.h.b16 %v4075
        %v6000 = vunpack.c.l.b16 %v4076
        %v6001 = vunpack.c.h.b16 %v4076
        %v6002 = vunpack.c.l.b16 %v4077
        %v6003 = vunpack.c.h.b16 %v4077
        %v6004 = vunpack.c.l.b16 %v4078
        %v6005 = vunpack.c.h.b16 %v4078
        %v6006 = vunpack.c.l.b16 %v4079
        %v6007 = vunpack.c.h.b16 %v4079
        %v6008 = vunpack.c.l.b16 %v4080
        %v6009 = vunpack.c.h.b16 %v4080
        %v6010 = vunpack.c.l.b16 %v4081
        %v6011 = vunpack.c.h.b16 %v4081
        %v6012 = vunpack.c.l.b16 %v4082
        %v6013 = vunpack.c.h.b16 %v4082
        %v6014 = vunpack.c.l.b16 %v4083
        %v6015 = vunpack.c.h.b16 %v4083
        %v6016 = vunpack.c.l.b16 %v4084
        %v6017 = vunpack.c.h.b16 %v4084
        %v6018 = vunpack.c.l.b16 %v4085
        %v6019 = vunpack.c.h.b16 %v4085
        %v6020 = vunpack.c.l.b16 %v4086
        %v6021 = vunpack.c.h.b16 %v4086
        %v6022 = vunpack.c.l.b16 %v4087
        %v6023 = vunpack.c.h.b16 %v4087
        %v6024 = vunpack.c.l.b16 %v4088
        %v6025 = vunpack.c.h.b16 %v4088
        %v6026 = vunpack.c.l.b16 %v4089
        %v6027 = vunpack.c.h.b16 %v4089
        %v6028 = vunpack.c.l.b16 %v4090
        %v6029 = vunpack.c.h.b16 %v4090
        %v6030 = vunpack.c.l.b16 %v4091
        %v6031 = vunpack.c.h.b16 %v4091
        %v6032 = vunpack.c.l.b16 %v4092
        %v6033 = vunpack.c.h.b16 %v4092
        %v6034 = vunpack.c.l.b16 %v4093
        %v6035 = vunpack.c.h.b16 %v4093
        %v6036 = vunpack.c.l.b16 %v4094
        %v6037 = vunpack.c.h.b16 %v4094
        %v6038 = vunpack.c.l.b16 %v4095
        %v6039 = vunpack.c.h.b16 %v4095
        %v6040 = vunpack.c.l.b16 %v4096
        %v6041 = vunpack.c.h.b16 %v4096
        %v6042 = vunpack.c.l.b16 %v4097
        %v6043 = vunpack.c.h.b16 %v4097
        %v6044 = vunpack.c.l.b16 %v4098
        %v6045 = vunpack.c.h.b16 %v4098
        %v6046 = vunpack.c.l.b16 %v4099
        %v6047 = vunpack.c.h.b16 %v4099
        %v6048 = vunpack.c.l.b16 %v4100
        %v6049 = vunpack.c.h.b16 %v4100
        %v6050 = vunpack.c.l.b16 %v4101
        %v6051 = vunpack.c.h.b16 %v4101
        %v6052 = vunpack.c.l.b16 %v4102
        %v6053 = vunpack.c.h.b16 %v4102
        %v6054 = vunpack.c.l.b16 %v4103
        %v6055 = vunpack.c.h.b16 %v4103
        %v6056 = vunpack.c.l.b16 %v4104
        %v6057 = vunpack.c.h.b16 %v4104
        %v6058 = vunpack.c.l.b16 %v4105
        %v6059 = vunpack.c.h.b16 %v4105
        %v6060 = vunpack.c.l.b16 %v4106
        %v6061 = vunpack.c.h.b16 %v4106
        %v6062 = vunpack.c.l.b16 %v4107
        %v6063 = vunpack.c.h.b16 %v4107
        %v6064 = vunpack.c.l.b16 %v4108
        %v6065 = vunpack.c.h.b16 %v4108
        %v6066 = vunpack.c.l.b16 %v4109
        %v6067 = vunpack.c.h.b16 %v4109
        %v6068 = vunpack.c.l.b16 %v4110
        %v6069 = vunpack.c.h.b16 %v4110
        %v6070 = vunpack.c.l.b16 %v4111
        %v6071 = vunpack.c.h.b16 %v4111
        %v6072 = vunpack.c.l.b16 %v4112
        %v6073 = vunpack.c.h.b16 %v4112
        %v6074 = vunpack.c.l.b16 %v4113
        %v6075 = vunpack.c.h.b16 %v4113
        %v6076 = vunpack.c.l.b16 %v4114
        %v6077 = vunpack.c.h.b16 %v4114
        %v6078 = vunpack.c.l.b16 %v4115
        %v6079 = vunpack.c.h.b16 %v4115
        %v6080 = vunpack.c.l.b16 %v4116
        %v6081 = vunpack.c.h.b16 %v4116
        %v6082 = vunpack.c.l.b16 %v4117
        %v6083 = vunpack.c.h.b16 %v4117
        %v6084 = vunpack.c.l.b16 %v4118
        %v6085 = vunpack.c.h.b16 %v4118
        %v6086 = vunpack.c.l.b16 %v4119
        %v6087 = vunpack.c.h.b16 %v4119
        %v6088 = vunpack.c.l.b16 %v4120
        %v6089 = vunpack.c.h.b16 %v4120
        %v6090 = vunpack.c.l.b16 %v4121
        %v6091 = vunpack.c.h.b16 %v4121
        %v6092 = vunpack.c.l.b16 %v4122
        %v6093 = vunpack.c.h.b16 %v4122
        %v6094 = vunpack.c.l.b16 %v4123
        %v6095 = vunpack.c.h.b16 %v4123
        %v6096 = vunpack.c.l.b16 %v4124
        %v6097 = vunpack.c.h.b16 %v4124
        %v6098 = vunpack.c.l.b16 %v4125
        %v6099 = vunpack.c.h.b16 %v4125
        %v6100 = vunpack.c.l.b16 %v4126
        %v6101 = vunpack.c.h.b16 %v4126
        %v6102 = vunpack.c.l.b16 %v4127
        %v6103 = vunpack.c.h.b16 %v4127
        %v6104 = vunpack.c.l.b16 %v4128
        %v6105 = vunpack.c.h.b16 %v4128
        %v6106 = vunpack.c.l.b16 %v4129
        %v6107 = vunpack.c.h.b16 %v4129
        %v6108 = vunpack.c.l.b16 %v4130
        %v6109 = vunpack.c.h.b16 %v4130
        %v6110 = vunpack.c.l.b16 %v4131
        %v6111 = vunpack.c.h.b16 %v4131
        %v6112 = vunpack.c.l.b16 %v4132
        %v6113 = vunpack.c.h.b16 %v4132
        %v6114 = vunpack.c.l.b16 %v4133
        %v6115 = vunpack.c.h.b16 %v4133
        %v6116 = vunpack.c.l.b16 %v4134
        %v6117 = vunpack.c.h.b16 %v4134
        %v6118 = vunpack.c.l.b16 %v4135
        %v6119 = vunpack.c.h.b16 %v4135
        %v6120 = vunpack.c.l.b16 %v4136
        %v6121 = vunpack.c.h.b16 %v4136
        %v6122 = vunpack.c.l.b16 %v4137
        %v6123 = vunpack.c.h.b16 %v4137
        %v6124 = vunpack.c.l.b16 %v4138
        %v6125 = vunpack.c.h.b16 %v4138
        %v6126 = vunpack.c.l.b16 %v4139
        %v6127 = vunpack.c.h.b16 %v4139
        %v6128 = vunpack.c.l.b16 %v4140
        %v6129 = vunpack.c.h.b16 %v4140
        %v6130 = vunpack.c.l.b16 %v4141
        %v6131 = vunpack.c.h.b16 %v4141
        %v6132 = vunpack.c.l.b16 %v4142
        %v6133 = vunpack.c.h.b16 %v4142
        %v6134 = vunpack.c.l.b16 %v4143
        %v6135 = vunpack.c.h.b16 %v4143
        %v6136 = vunpack.c.l.b16 %v4144
        %v6137 = vunpack.c.h.b16 %v4144
        %v6138 = vunpack.c.l.b16 %v4145
        %v6139 = vunpack.c.h.b16 %v4145
        %v6140 = vunpack.c.l.b16 %v4146
        %v6141 = vunpack.c.h.b16 %v4146
        %v6142 = vunpack.c.l.b16 %v4147
        %v6143 = vunpack.c.h.b16 %v4147
        %v6144 = vunpack.c.l.b16 %v4148
        %v6145 = vunpack.c.h.b16 %v4148
        %v6146 = vunpack.c.l.b16 %v4149
        %v6147 = vunpack.c.h.b16 %v4149
        %v6148 = vunpack.c.l.b16 %v4150
        %v6149 = vunpack.c.h.b16 %v4150
        %v6150 = vunpack.c.l.b16 %v4151
        %v6151 = vunpack.c.h.b16 %v4151
        %v6152 = vunpack.c.l.b16 %v4152
        %v6153 = vunpack.c.h.b16 %v4152
        %v6154 = vunpack.c.l.b16 %v4153
        %v6155 = vunpack.c.h.b16 %v4153
        %v6156 = vunpack.c.l.b16 %v4154
        %v6157 = vunpack.c.h.b16 %v4154
        %v6158 = vunpack.c.l.b16 %v4155
        %v6159 = vunpack.c.h.b16 %v4155
        %v6160 = vunpack.c.l.b16 %v4156
        %v6161 = vunpack.c.h.b16 %v4156
        %v6162 = vunpack.c.l.b16 %v4157
        %v6163 = vunpack.c.h.b16 %v4157
        %v6164 = vunpack.c.l.b16 %v4158
        %v6165 = vunpack.c.h.b16 %v4158
        %v6166 = vunpack.c.l.b16 %v4159
        %v6167 = vunpack.c.h.b16 %v4159
        %v6168 = vunpack.c.l.b16 %v4160
        %v6169 = vunpack.c.h.b16 %v4160
        %v6170 = vunpack.c.l.b16 %v4161
        %v6171 = vunpack.c.h.b16 %v4161
        %v6172 = vunpack.c.l.b16 %v4162
        %v6173 = vunpack.c.h.b16 %v4162
        %v6174 = vunpack.c.l.b16 %v4163
        %v6175 = vunpack.c.h.b16 %v4163
        %v6176 = vunpack.c.l.b16 %v4164
        %v6177 = vunpack.c.h.b16 %v4164
        %v6178 = vunpack.c.l.b16 %v4165
        %v6179 = vunpack.c.h.b16 %v4165
        %v6180 = vunpack.c.l.b16 %v4166
        %v6181 = vunpack.c.h.b16 %v4166
        %v6182 = vunpack.c.l.b16 %v4167
        %v6183 = vunpack.c.h.b16 %v4167
        %v6184 = vunpack.c.l.b16 %v4168
        %v6185 = vunpack.c.h.b16 %v4168
        %v6186 = vunpack.c.l.b16 %v4169
        %v6187 = vunpack.c.h.b16 %v4169
        %v6188 = vunpack.c.l.b16 %v4170
        %v6189 = vunpack.c.h.b16 %v4170
        %v6190 = vunpack.c.l.b16 %v4171
        %v6191 = vunpack.c.h.b16 %v4171
        %v6192 = vunpack.c.l.b16 %v4172
        %v6193 = vunpack.c.h.b16 %v4172
        %v6194 = vunpack.c.l.b16 %v4173
        %v6195 = vunpack.c.h.b16 %v4173
        %v6196 = vunpack.c.l.b16 %v4174
        %v6197 = vunpack.c.h.b16 %v4174
        %v6198 = vunpack.c.l.b16 %v4175
        %v6199 = vunpack.c.h.b16 %v4175
        %v6200 = vunpack.c.l.b16 %v4176
        %v6201 = vunpack.c.h.b16 %v4176
        %v6202 = vunpack.c.l.b16 %v4177
        %v6203 = vunpack.c.h.b16 %v4177
        %v6204 = vunpack.c.l.b16 %v4178
        %v6205 = vunpack.c.h.b16 %v4178
        %v6206 = vunpack.c.l.b16 %v4179
        %v6207 = vunpack.c.h.b16 %v4179
        %v6208 = vunpack.c.l.b16 %v4180
        %v6209 = vunpack.c.h.b16 %v4180
        %v6210 = vunpack.c.l.b16 %v4181
        %v6211 = vunpack.c.h.b16 %v4181
        %v6212 = vunpack.c.l.b16 %v4182
        %v6213 = vunpack.c.h.b16 %v4182
        %v6214 = vunpack.c.l.b16 %v4183
        %v6215 = vunpack.c.h.b16 %v4183
        %v6216 = vunpack.c.l.b16 %v4184
        %v6217 = vunpack.c.h.b16 %v4184
        %v6218 = vunpack.c.l.b16 %v4185
        %v6219 = vunpack.c.h.b16 %v4185
        %v6220 = vunpack.c.l.b16 %v4186
        %v6221 = vunpack.c.h.b16 %v4186
        %v6222 = vunpack.c.l.b16 %v4187
        %v6223 = vunpack.c.h.b16 %v4187
        %v6224 = vunpack.c.l.b16 %v4188
        %v6225 = vunpack.c.h.b16 %v4188
        %v6226 = vunpack.c.l.b16 %v4189
        %v6227 = vunpack.c.h.b16 %v4189
        %v6228 = vunpack.c.l.b16 %v4190
        %v6229 = vunpack.c.h.b16 %v4190
        %v6230 = vunpack.c.l.b16 %v4191
        %v6231 = vunpack.c.h.b16 %v4191
        %v6232 = vunpack.c.l.b16 %v4192
        %v6233 = vunpack.c.h.b16 %v4192
        %v6234 = vunpack.c.l.b16 %v4193
        %v6235 = vunpack.c.h.b16 %v4193
        %v6236 = vunpack.c.l.b16 %v4194
        %v6237 = vunpack.c.h.b16 %v4194
        %v6238 = vunpack.c.l.b16 %v4195
        %v6239 = vunpack.c.h.b16 %v4195
        %v6240 = vunpack.c.l.b16 %v4196
        %v6241 = vunpack.c.h.b16 %v4196
        %v6242 = vunpack.c.l.b16 %v4197
        %v6243 = vunpack.c.h.b16 %v4197
        %v6244 = vunpack.c.l.b16 %v4198
        %v6245 = vunpack.c.h.b16 %v4198
        %v6246 = vunpack.c.l.b16 %v4199
        %v6247 = vunpack.c.h.b16 %v4199
        %v6248 = vunpack.c.l.b16 %v4200
        %v6249 = vunpack.c.h.b16 %v4200
        %v6250 = vunpack.c.l.b16 %v4201
        %v6251 = vunpack.c.h.b16 %v4201
        %v6252 = vunpack.c.l.b16 %v4202
        %v6253 = vunpack.c.h.b16 %v4202
        %v6254 = vunpack.c.l.b16 %v4203
        %v6255 = vunpack.c.h.b16 %v4203
        %v6256 = vunpack.c.l.b16 %v4204
        %v6257 = vunpack.c.h.b16 %v4204
        %v6258 = vunpack.c.l.b16 %v4205
        %v6259 = vunpack.c.h.b16 %v4205
        %v6260 = vunpack.c.l.b16 %v4206
        %v6261 = vunpack.c.h.b16 %v4206
        %v6262 = vunpack.c.l.b16 %v4207
        %v6263 = vunpack.c.h.b16 %v4207
        %v6264 = vunpack.c.l.b16 %v4208
        %v6265 = vunpack.c.h.b16 %v4208
        %v6266 = vunpack.c.l.b16 %v4209
        %v6267 = vunpack.c.h.b16 %v4209
        %v6268 = vunpack.c.l.b16 %v4210
        %v6269 = vunpack.c.h.b16 %v4210
        %v6270 = vunpack.c.l.b16 %v4211
        %v6271 = vunpack.c.h.b16 %v4211
        %v6272 = vunpack.c.l.b16 %v4212
        %v6273 = vunpack.c.h.b16 %v4212
        %v6274 = vunpack.c.l.b16 %v4213
        %v6275 = vunpack.c.h.b16 %v4213
        %v6276 = vunpack.c.l.b16 %v4214
        %v6277 = vunpack.c.h.b16 %v4214
        %v6278 = vunpack.c.l.b16 %v4215
        %v6279 = vunpack.c.h.b16 %v4215
        %v6280 = vunpack.c.l.b16 %v4216
        %v6281 = vunpack.c.h.b16 %v4216
        %v6282 = vunpack.c.l.b16 %v4217
        %v6283 = vunpack.c.h.b16 %v4217
        %v6284 = vunpack.c.l.b16 %v4218
        %v6285 = vunpack.c.h.b16 %v4218
        %v6286 = vunpack.c.l.b16 %v4219
        %v6287 = vunpack.c.h.b16 %v4219
        %v6288 = vunpack.c.l.b16 %v4220
        %v6289 = vunpack.c.h.b16 %v4220
        %v6290 = vunpack.c.l.b16 %v4221
        %v6291 = vunpack.c.h.b16 %v4221
        %v6292 = vunpack.c.l.b16 %v4222
        %v6293 = vunpack.c.h.b16 %v4222
        %v6294 = vunpack.c.l.b16 %v4223
        %v6295 = vunpack.c.h.b16 %v4223
        %v6296 = vunpack.c.l.b16 %v4224
        %v6297 = vunpack.c.h.b16 %v4224
        %v6298 = vunpack.c.l.b16 %v4225
        %v6299 = vunpack.c.h.b16 %v4225
        %v6300 = vunpack.c.l.b16 %v4226
        %v6301 = vunpack.c.h.b16 %v4226
        %v6302 = vunpack.c.l.b16 %v4227
        %v6303 = vunpack.c.h.b16 %v4227
        %v6304 = vunpack.c.l.b16 %v4228
        %v6305 = vunpack.c.h.b16 %v4228
        %v6306 = vunpack.c.l.b16 %v4229
        %v6307 = vunpack.c.h.b16 %v4229
        %v6308 = vunpack.c.l.b16 %v4230
        %v6309 = vunpack.c.h.b16 %v4230
        %v6310 = vunpack.c.l.b16 %v4231
        %v6311 = vunpack.c.h.b16 %v4231
        %v6312 = vunpack.c.l.b16 %v4232
        %v6313 = vunpack.c.h.b16 %v4232
        %v6314 = vunpack.c.l.b16 %v4233
        %v6315 = vunpack.c.h.b16 %v4233
        %v6316 = vunpack.c.l.b16 %v4234
        %v6317 = vunpack.c.h.b16 %v4234
        %v6318 = vunpack.c.l.b16 %v4235
        %v6319 = vunpack.c.h.b16 %v4235
        %v6320 = vunpack.c.l.b16 %v4236
        %v6321 = vunpack.c.h.b16 %v4236
        %v6322 = vunpack.c.l.b16 %v4237
        %v6323 = vunpack.c.h.b16 %v4237
        %v6324 = vunpack.c.l.b16 %v4238
        %v6325 = vunpack.c.h.b16 %v4238
        %v6326 = vunpack.c.l.b16 %v4239
        %v6327 = vunpack.c.h.b16 %v4239
        %v6328 = vunpack.c.l.b16 %v4240
        %v6329 = vunpack.c.h.b16 %v4240
        %v6330 = vunpack.c.l.b16 %v4241
        %v6331 = vunpack.c.h.b16 %v4241
        %v6332 = vunpack.c.l.b16 %v4242
        %v6333 = vunpack.c.h.b16 %v4242
        %v6334 = vunpack.c.l.b16 %v4243
        %v6335 = vunpack.c.h.b16 %v4243
        %v6336 = vunpack.c.l.b16 %v4244
        %v6337 = vunpack.c.h.b16 %v4244
        %v6338 = vunpack.c.l.b16 %v4245
        %v6339 = vunpack.c.h.b16 %v4245
        %v6340 = vunpack.c.l.b16 %v4246
        %v6341 = vunpack.c.h.b16 %v4246
        %v6342 = vunpack.c.l.b16 %v4247
        %v6343 = vunpack.c.h.b16 %v4247
        %v6344 = vunpack.c.l.b16 %v4248
        %v6345 = vunpack.c.h.b16 %v4248
        %v6346 = vunpack.c.l.b16 %v4249
        %v6347 = vunpack.c.h.b16 %v4249
        %v6348 = vunpack.c.l.b16 %v4250
        %v6349 = vunpack.c.h.b16 %v4250
        %v6350 = vunpack.c.l.b16 %v4251
        %v6351 = vunpack.c.h.b16 %v4251
        %v6352 = vunpack.c.l.b16 %v4252
        %v6353 = vunpack.c.h.b16 %v4252
        %v6354 = vunpack.c.l.b16 %v4253
        %v6355 = vunpack.c.h.b16 %v4253
        %v6356 = vunpack.c.l.b16 %v4254
        %v6357 = vunpack.c.h.b16 %v4254
        %v6358 = vunpack.c.l.b16 %v4255
        %v6359 = vunpack.c.h.b16 %v4255
        %v6360 = vunpack.c.l.b16 %v4256
        %v6361 = vunpack.c.h.b16 %v4256
        %v6362 = vunpack.c.l.b16 %v4257
        %v6363 = vunpack.c.h.b16 %v4257
        %v6364 = vunpack.c.l.b16 %v4258
        %v6365 = vunpack.c.h.b16 %v4258
        %v6366 = vunpack.c.l.b16 %v4259
        %v6367 = vunpack.c.h.b16 %v4259
        %v6368 = vunpack.c.l.b16 %v4260
        %v6369 = vunpack.c.h.b16 %v4260
        %v6370 = vunpack.c.l.b16 %v4261
        %v6371 = vunpack.c.h.b16 %v4261
        %v6372 = vunpack.c.l.b16 %v4262
        %v6373 = vunpack.c.h.b16 %v4262
        %v6374 = vunpack.c.l.b16 %v4263
        %v6375 = vunpack.c.h.b16 %v4263
        %v6376 = vunpack.c.l.b16 %v4264
        %v6377 = vunpack.c.h.b16 %v4264
        %v6378 = vunpack.c.l.b16 %v4265
        %v6379 = vunpack.c.h.b16 %v4265
        %v6380 = vunpack.c.l.b16 %v4266
        %v6381 = vunpack.c.h.b16 %v4266
        %v6382 = vunpack.c.l.b16 %v4267
        %v6383 = vunpack.c.h.b16 %v4267
        %v6384 = vunpack.c.l.b16 %v4268
        %v6385 = vunpack.c.h.b16 %v4268
        %v6386 = vunpack.c.l.b16 %v4269
        %v6387 = vunpack.c.h.b16 %v4269
        %v6388 = vunpack.c.l.b16 %v4270
        %v6389 = vunpack.c.h.b16 %v4270
        %v6390 = vunpack.c.l.b16 %v4271
        %v6391 = vunpack.c.h.b16 %v4271
        %v6392 = vunpack.c.l.b16 %v4272
        %v6393 = vunpack.c.h.b16 %v4272
        %v6394 = vunpack.c.l.b16 %v4273
        %v6395 = vunpack.c.h.b16 %v4273
        %v6396 = vunpack.c.l.b16 %v4274
        %v6397 = vunpack.c.h.b16 %v4274
        %v6398 = vunpack.c.l.b16 %v4275
        %v6399 = vunpack.c.h.b16 %v4275
        %v6400 = vunpack.c.l.b16 %v4276
        %v6401 = vunpack.c.h.b16 %v4276
        %v6402 = vunpack.c.l.b16 %v4277
        %v6403 = vunpack.c.h.b16 %v4277
        %v6404 = vunpack.c.l.b16 %v4278
        %v6405 = vunpack.c.h.b16 %v4278
        %v6406 = vunpack.c.l.b16 %v4279
        %v6407 = vunpack.c.h.b16 %v4279
        %v6408 = vunpack.c.l.b16 %v4280
        %v6409 = vunpack.c.h.b16 %v4280
        %v6410 = vunpack.c.l.b16 %v4281
        %v6411 = vunpack.c.h.b16 %v4281
        %v6412 = vunpack.c.l.b16 %v4282
        %v6413 = vunpack.c.h.b16 %v4282
        %v6414 = vunpack.c.l.b16 %v4283
        %v6415 = vunpack.c.h.b16 %v4283
        %v6416 = vunpack.c.l.b16 %v4284
        %v6417 = vunpack.c.h.b16 %v4284
        %v6418 = vunpack.c.l.b16 %v4285
        %v6419 = vunpack.c.h.b16 %v4285
        %v6420 = vunpack.c.l.b16 %v4286
        %v6421 = vunpack.c.h.b16 %v4286
        %v6422 = vunpack.c.l.b16 %v4287
        %v6423 = vunpack.c.h.b16 %v4287
        %v6424 = vunpack.c.l.b16 %v4288
        %v6425 = vunpack.c.h.b16 %v4288
        %v6426 = vunpack.c.l.b16 %v4289
        %v6427 = vunpack.c.h.b16 %v4289
        %v6428 = vunpack.c.l.b16 %v4290
        %v6429 = vunpack.c.h.b16 %v4290
        %v6430 = vunpack.c.l.b16 %v4291
        %v6431 = vunpack.c.h.b16 %v4291
        %v6432 = vunpack.c.l.b16 %v4292
        %v6433 = vunpack.c.h.b16 %v4292
        %v6434 = vunpack.c.l.b16 %v4293
        %v6435 = vunpack.c.h.b16 %v4293
        %v6436 = vunpack.c.l.b16 %v4294
        %v6437 = vunpack.c.h.b16 %v4294
        %v6438 = vunpack.c.l.b16 %v4295
        %v6439 = vunpack.c.h.b16 %v4295
        %v6440 = vunpack.c.l.b16 %v4296
        %v6441 = vunpack.c.h.b16 %v4296
        %v6442 = vunpack.c.l.b16 %v4297
        %v6443 = vunpack.c.h.b16 %v4297
        %v6444 = vunpack.c.l.b16 %v4298
        %v6445 = vunpack.c.h.b16 %v4298
        %v6446 = vunpack.c.l.b16 %v4299
        %v6447 = vunpack.c.h.b16 %v4299
        %v6448 = vunpack.c.l.b16 %v4300
        %v6449 = vunpack.c.h.b16 %v4300
        %v6450 = vunpack.c.l.b16 %v4301
        %v6451 = vunpack.c.h.b16 %v4301
        %v6452 = vunpack.c.l.b16 %v4302
        %v6453 = vunpack.c.h.b16 %v4302
        %v6454 = vunpack.c.l.b16 %v4303
        %v6455 = vunpack.c.h.b16 %v4303
        %v6456 = vunpack.c.l.b16 %v4304
        %v6457 = vunpack.c.h.b16 %v4304
        %v6458 = vunpack.c.l.b16 %v4305
        %v6459 = vunpack.c.h.b16 %v4305
        %v6460 = vunpack.c.l.b16 %v4306
        %v6461 = vunpack.c.h.b16 %v4306
        %v6462 = vunpack.c.l.b16 %v4307
        %v6463 = vunpack.c.h.b16 %v4307
        %v6464 = vunpack.c.l.b16 %v4308
        %v6465 = vunpack.c.h.b16 %v4308
        %v6466 = vunpack.c.l.b16 %v4309
        %v6467 = vunpack.c.h.b16 %v4309
        %v6468 = vunpack.c.l.b16 %v4310
        %v6469 = vunpack.c.h.b16 %v4310
        %v6470 = vunpack.c.l.b16 %v4311
        %v6471 = vunpack.c.h.b16 %v4311
        %v6472 = vunpack.c.l.b16 %v4312
        %v6473 = vunpack.c.h.b16 %v4312
        %v6474 = vunpack.c.l.b16 %v4313
        %v6475 = vunpack.c.h.b16 %v4313
        %v6476 = vunpack.c.l.b16 %v4314
        %v6477 = vunpack.c.h.b16 %v4314
        %v6478 = vunpack.c.l.b16 %v4315
        %v6479 = vunpack.c.h.b16 %v4315
        %v6480 = vunpack.c.l.b16 %v4316
        %v6481 = vunpack.c.h.b16 %v4316
        %v6482 = vunpack.c.l.b16 %v4317
        %v6483 = vunpack.c.h.b16 %v4317
        %v6484 = vunpack.c.l.b16 %v4318
        %v6485 = vunpack.c.h.b16 %v4318
        %v6486 = vunpack.c.l.b16 %v4319
        %v6487 = vunpack.c.h.b16 %v4319
        %v6488 = vunpack.c.l.b16 %v4320
        %v6489 = vunpack.c.h.b16 %v4320
        %v6490 = vunpack.c.l.b16 %v4321
        %v6491 = vunpack.c.h.b16 %v4321
        %v6492 = vunpack.c.l.b16 %v4322
        %v6493 = vunpack.c.h.b16 %v4322
        %v6494 = vunpack.c.l.b16 %v4323
        %v6495 = vunpack.c.h.b16 %v4323
        %v6496 = vunpack.c.l.b16 %v4324
        %v6497 = vunpack.c.h.b16 %v4324
        %v6498 = vunpack.c.l.b16 %v4325
        %v6499 = vunpack.c.h.b16 %v4325
        %v6500 = vunpack.c.l.b16 %v4326
        %v6501 = vunpack.c.h.b16 %v4326
        %v6502 = vunpack.c.l.b16 %v4327
        %v6503 = vunpack.c.h.b16 %v4327
        %v6504 = vunpack.c.l.b16 %v4328
        %v6505 = vunpack.c.h.b16 %v4328
        %v6506 = vunpack.c.l.b16 %v4329
        %v6507 = vunpack.c.h.b16 %v4329
        %v6508 = vunpack.c.l.b16 %v4330
        %v6509 = vunpack.c.h.b16 %v4330
        %v6510 = vunpack.c.l.b16 %v4331
        %v6511 = vunpack.c.h.b16 %v4331
        %v6512 = vunpack.c.l.b16 %v4332
        %v6513 = vunpack.c.h.b16 %v4332
        %v6514 = vunpack.c.l.b16 %v4333
        %v6515 = vunpack.c.h.b16 %v4333
        %v6516 = vunpack.c.l.b16 %v4334
        %v6517 = vunpack.c.h.b16 %v4334
        %v6518 = vunpack.c.l.b16 %v4335
        %v6519 = vunpack.c.h.b16 %v4335
        %v6520 = vunpack.c.l.b16 %v4336
        %v6521 = vunpack.c.h.b16 %v4336
        %v6522 = vunpack.c.l.b16 %v4337
        %v6523 = vunpack.c.h.b16 %v4337
        %v6524 = vunpack.c.l.b16 %v4338
        %v6525 = vunpack.c.h.b16 %v4338
        %v6526 = vunpack.c.l.b16 %v4339
        %v6527 = vunpack.c.h.b16 %v4339
        %v6528 = vunpack.c.l.b16 %v4340
        %v6529 = vunpack.c.h.b16 %v4340
        %v6530 = vunpack.c.l.b16 %v4341
        %v6531 = vunpack.c.h.b16 %v4341
        %v6532 = vunpack.c.l.b16 %v4342
        %v6533 = vunpack.c.h.b16 %v4342
        %v6534 = vunpack.c.l.b16 %v4343
        %v6535 = vunpack.c.h.b16 %v4343
        %v6536 = vunpack.c.l.b16 %v4344
        %v6537 = vunpack.c.h.b16 %v4344
        %v6538 = vunpack.c.l.b16 %v4345
        %v6539 = vunpack.c.h.b16 %v4345
        %v6540 = vunpack.c.l.b16 %v4346
        %v6541 = vunpack.c.h.b16 %v4346
        %v6542 = vunpack.c.l.b16 %v4347
        %v6543 = vunpack.c.h.b16 %v4347
        %v6544 = vunpack.c.l.b16 %v4348
        %v6545 = vunpack.c.h.b16 %v4348
        %v6546 = vunpack.c.l.b16 %v4349
        %v6547 = vunpack.c.h.b16 %v4349
        %v6548 = vunpack.c.l.b16 %v4350
        %v6549 = vunpack.c.h.b16 %v4350
        %v6550 = vunpack.c.l.b16 %v4351
        %v6551 = vunpack.c.h.b16 %v4351
        %v6552 = vunpack.c.l.b16 %v4352
        %v6553 = vunpack.c.h.b16 %v4352
        %v6554 = vunpack.c.l.b16 %v4353
        %v6555 = vunpack.c.h.b16 %v4353
        %v6556 = vunpack.c.l.b16 %v4354
        %v6557 = vunpack.c.h.b16 %v4354
        %v6558 = vunpack.c.l.b16 %v4355
        %v6559 = vunpack.c.h.b16 %v4355
        %v6560 = vunpack.c.l.b16 %v4356
        %v6561 = vunpack.c.h.b16 %v4356
        %v6562 = vunpack.c.l.b16 %v4357
        %v6563 = vunpack.c.h.b16 %v4357
        %v6564 = vunpack.c.l.b16 %v4358
        %v6565 = vunpack.c.h.b16 %v4358
        %v6566 = vunpack.c.l.b16 %v4359
        %v6567 = vunpack.c.h.b16 %v4359
        %v6568 = vunpack.c.l.b16 %v4360
        %v6569 = vunpack.c.h.b16 %v4360
        %v6570 = vunpack.c.l.b16 %v4361
        %v6571 = vunpack.c.h.b16 %v4361
        %v6572 = vunpack.c.l.b16 %v4362
        %v6573 = vunpack.c.h.b16 %v4362
        %v6574 = vunpack.c.l.b16 %v4363
        %v6575 = vunpack.c.h.b16 %v4363
        %v6576 = vunpack.c.l.b16 %v4364
        %v6577 = vunpack.c.h.b16 %v4364
        %v6578 = vunpack.c.l.b16 %v4365
        %v6579 = vunpack.c.h.b16 %v4365
        %v6580 = vunpack.c.l.b16 %v4366
        %v6581 = vunpack.c.h.b16 %v4366
        %v6582 = vunpack.c.l.b16 %v4367
        %v6583 = vunpack.c.h.b16 %v4367
        %v6584 = vunpack.c.l.b16 %v4368
        %v6585 = vunpack.c.h.b16 %v4368
        %v6586 = vunpack.c.l.b16 %v4369
        %v6587 = vunpack.c.h.b16 %v4369
        %v6588 = vunpack.c.l.b16 %v4370
        %v6589 = vunpack.c.h.b16 %v4370
        %v6590 = vunpack.c.l.b16 %v4371
        %v6591 = vunpack.c.h.b16 %v4371
        %v6592 = vunpack.c.l.b16 %v4372
        %v6593 = vunpack.c.h.b16 %v4372
        %v6594 = vunpack.c.l.b16 %v4373
        %v6595 = vunpack.c.h.b16 %v4373
        %v6596 = vunpack.c.l.b16 %v4374
        %v6597 = vunpack.c.h.b16 %v4374
        %v6598 = vunpack.c.l.b16 %v4375
        %v6599 = vunpack.c.h.b16 %v4375
        %v6600 = vunpack.c.l.b16 %v4376
        %v6601 = vunpack.c.h.b16 %v4376
        %v6602 = vunpack.c.l.b16 %v4377
        %v6603 = vunpack.c.h.b16 %v4377
        %v6604 = vunpack.c.l.b16 %v4378
        %v6605 = vunpack.c.h.b16 %v4378
        %v6606 = vunpack.c.l.b16 %v4379
        %v6607 = vunpack.c.h.b16 %v4379
        %v6608 = vunpack.c.l.b16 %v4380
        %v6609 = vunpack.c.h.b16 %v4380
        %v6610 = vunpack.c.l.b16 %v4381
        %v6611 = vunpack.c.h.b16 %v4381
        %v6612 = vunpack.c.l.b16 %v4382
        %v6613 = vunpack.c.h.b16 %v4382
        %v6614 = vunpack.c.l.b16 %v4383
        %v6615 = vunpack.c.h.b16 %v4383
        %v6616 = vunpack.c.l.b16 %v4384
        %v6617 = vunpack.c.h.b16 %v4384
        %v6618 = vunpack.c.l.b16 %v4385
        %v6619 = vunpack.c.h.b16 %v4385
        %v6620 = vunpack.c.l.b16 %v4386
        %v6621 = vunpack.c.h.b16 %v4386
        %v6622 = vunpack.c.l.b16 %v4387
        %v6623 = vunpack.c.h.b16 %v4387
        %v6624 = vunpack.c.l.b16 %v4388
        %v6625 = vunpack.c.h.b16 %v4388
        %v6626 = vunpack.c.l.b16 %v4389
        %v6627 = vunpack.c.h.b16 %v4389
        %v6628 = vunpack.c.l.b16 %v4390
        %v6629 = vunpack.c.h.b16 %v4390
        %v6630 = vunpack.c.l.b16 %v4391
        %v6631 = vunpack.c.h.b16 %v4391
        %v6632 = vunpack.c.l.b16 %v4392
        %v6633 = vunpack.c.h.b16 %v4392
        %v6634 = vunpack.c.l.b16 %v4393
        %v6635 = vunpack.c.h.b16 %v4393
        %v6636 = vunpack.c.l.b16 %v4394
        %v6637 = vunpack.c.h.b16 %v4394
        %v6638 = vunpack.c.l.b16 %v4395
        %v6639 = vunpack.c.h.b16 %v4395
        %v6640 = vunpack.c.l.b16 %v4396
        %v6641 = vunpack.c.h.b16 %v4396
        %v6642 = vunpack.c.l.b16 %v4397
        %v6643 = vunpack.c.h.b16 %v4397
        %v6644 = vunpack.c.l.b16 %v4398
        %v6645 = vunpack.c.h.b16 %v4398
        %v6646 = vunpack.c.l.b16 %v4399
        %v6647 = vunpack.c.h.b16 %v4399
        %v6648 = vunpack.c.l.b16 %v4400
        %v6649 = vunpack.c.h.b16 %v4400
        %v6650 = vunpack.c.l.b16 %v4401
        %v6651 = vunpack.c.h.b16 %v4401
        %v6652 = vunpack.c.l.b16 %v4402
        %v6653 = vunpack.c.h.b16 %v4402
        %v6654 = vunpack.c.l.b16 %v4403
        %v6655 = vunpack.c.h.b16 %v4403
        %v6656 = vunpack.c.l.b16 %v4404
        %v6657 = vunpack.c.h.b16 %v4404
        %v6658 = vunpack.c.l.b16 %v4405
        %v6659 = vunpack.c.h.b16 %v4405
        %v6660 = vunpack.c.l.b16 %v4406
        %v6661 = vunpack.c.h.b16 %v4406
        %v6662 = vunpack.c.l.b16 %v4407
        %v6663 = vunpack.c.h.b16 %v4407
        %v6664 = vunpack.c.l.b16 %v4408
        %v6665 = vunpack.c.h.b16 %v4408
        %v6666 = vunpack.c.l.b16 %v4409
        %v6667 = vunpack.c.h.b16 %v4409
        %v6668 = vunpack.c.l.b16 %v4410
        %v6669 = vunpack.c.h.b16 %v4410
        %v6670 = vunpack.c.l.b16 %v4411
        %v6671 = vunpack.c.h.b16 %v4411
        %v6672 = vunpack.c.l.b16 %v4412
        %v6673 = vunpack.c.h.b16 %v4412
        %v6674 = vunpack.c.l.b16 %v4413
        %v6675 = vunpack.c.h.b16 %v4413
        %v6676 = vunpack.c.l.b16 %v4414
        %v6677 = vunpack.c.h.b16 %v4414
        %v6678 = vunpack.c.l.b16 %v4415
        %v6679 = vunpack.c.h.b16 %v4415
        %v6680 = vunpack.c.l.b16 %v4416
        %v6681 = vunpack.c.h.b16 %v4416
        %v6682 = vunpack.c.l.b16 %v4417
        %v6683 = vunpack.c.h.b16 %v4417
        %v6684 = vunpack.c.l.b16 %v4418
        %v6685 = vunpack.c.h.b16 %v4418
        %v6686 = vunpack.c.l.b16 %v4419
        %v6687 = vunpack.c.h.b16 %v4419
        %v6688 = vunpack.c.l.b16 %v4420
        %v6689 = vunpack.c.h.b16 %v4420
        %v6690 = vunpack.c.l.b16 %v4421
        %v6691 = vunpack.c.h.b16 %v4421
        %v6692 = vunpack.c.l.b16 %v4422
        %v6693 = vunpack.c.h.b16 %v4422
        %v6694 = vunpack.c.l.b16 %v4423
        %v6695 = vunpack.c.h.b16 %v4423
        %v6696 = vunpack.c.l.b16 %v4424
        %v6697 = vunpack.c.h.b16 %v4424
        %v6698 = vunpack.c.l.b16 %v4425
        %v6699 = vunpack.c.h.b16 %v4425
        %v6700 = vunpack.c.l.b16 %v4426
        %v6701 = vunpack.c.h.b16 %v4426
        %v6702 = vunpack.c.l.b16 %v4427
        %v6703 = vunpack.c.h.b16 %v4427
        %v6704 = vunpack.c.l.b16 %v4428
        %v6705 = vunpack.c.h.b16 %v4428
        %v6706 = vunpack.c.l.b16 %v4429
        %v6707 = vunpack.c.h.b16 %v4429
        %v6708 = vunpack.c.l.b16 %v4430
        %v6709 = vunpack.c.h.b16 %v4430
        %v6710 = vunpack.c.l.b16 %v4431
        %v6711 = vunpack.c.h.b16 %v4431
        %v6712 = vunpack.c.l.b16 %v4432
        %v6713 = vunpack.c.h.b16 %v4432
        %v6714 = vunpack.c.l.b16 %v4433
        %v6715 = vunpack.c.h.b16 %v4433
        %v6716 = vunpack.c.l.b16 %v4434
        %v6717 = vunpack.c.h.b16 %v4434
        %v6718 = vunpack.c.l.b16 %v4435
        %v6719 = vunpack.c.h.b16 %v4435
        %v6720 = vunpack.c.l.b16 %v4436
        %v6721 = vunpack.c.h.b16 %v4436
        %v6722 = vunpack.c.l.b16 %v4437
        %v6723 = vunpack.c.h.b16 %v4437
        %v6724 = vunpack.c.l.b16 %v4438
        %v6725 = vunpack.c.h.b16 %v4438
        %v6726 = vunpack.c.l.b16 %v4439
        %v6727 = vunpack.c.h.b16 %v4439
        %v6728 = vunpack.c.l.b16 %v4440
        %v6729 = vunpack.c.h.b16 %v4440
        %v6730 = vunpack.c.l.b16 %v4441
        %v6731 = vunpack.c.h.b16 %v4441
        %v6732 = vunpack.c.l.b16 %v4442
        %v6733 = vunpack.c.h.b16 %v4442
        %v6734 = vunpack.c.l.b16 %v4443
        %v6735 = vunpack.c.h.b16 %v4443
        %v6736 = vunpack.c.l.b16 %v4444
        %v6737 = vunpack.c.h.b16 %v4444
        %v6738 = vunpack.c.l.b16 %v4445
        %v6739 = vunpack.c.h.b16 %v4445
        %v6740 = vunpack.c.l.b16 %v4446
        %v6741 = vunpack.c.h.b16 %v4446
        %v6742 = vunpack.c.l.b16 %v4447
        %v6743 = vunpack.c.h.b16 %v4447
        %v6744 = vunpack.c.l.b16 %v4448
        %v6745 = vunpack.c.h.b16 %v4448
        %v6746 = vunpack.c.l.b16 %v4449
        %v6747 = vunpack.c.h.b16 %v4449
        %v6748 = vunpack.c.l.b16 %v4450
        %v6749 = vunpack.c.h.b16 %v4450
        %v6750 = vunpack.c.l.b16 %v4451
        %v6751 = vunpack.c.h.b16 %v4451
        %v6752 = vunpack.c.l.b16 %v4452
        %v6753 = vunpack.c.h.b16 %v4452
        %v6754 = vunpack.c.l.b16 %v4453
        %v6755 = vunpack.c.h.b16 %v4453
        %v6756 = vunpack.c.l.b16 %v4454
        %v6757 = vunpack.c.h.b16 %v4454
        %v6758 = vunpack.c.l.b16 %v4455
        %v6759 = vunpack.c.h.b16 %v4455
        %v6760 = vunpack.c.l.b16 %v4456
        %v6761 = vunpack.c.h.b16 %v4456
        %v6762 = vunpack.c.l.b16 %v4457
        %v6763 = vunpack.c.h.b16 %v4457
        %v6764 = vunpack.c.l.b16 %v4458
        %v6765 = vunpack.c.h.b16 %v4458
        %v6766 = vunpack.c.l.b16 %v4459
        %v6767 = vunpack.c.h.b16 %v4459
        %v6768 = vunpack.c.l.b16 %v4460
        %v6769 = vunpack.c.h.b16 %v4460
        %v6770 = vunpack.c.l.b16 %v4461
        %v6771 = vunpack.c.h.b16 %v4461
        %v6772 = vunpack.c.l.b16 %v4462
        %v6773 = vunpack.c.h.b16 %v4462
        %v6774 = vunpack.c.l.b16 %v4463
        %v6775 = vunpack.c.h.b16 %v4463
        %v6776 = vunpack.c.l.b16 %v4464
        %v6777 = vunpack.c.h.b16 %v4464
        %v6778 = vunpack.c.l.b16 %v4465
        %v6779 = vunpack.c.h.b16 %v4465
        %v6780 = vunpack.c.l.b16 %v4466
        %v6781 = vunpack.c.h.b16 %v4466
        %v6782 = vunpack.c.l.b16 %v4467
        %v6783 = vunpack.c.h.b16 %v4467
        %v6784 = vunpack.c.l.b16 %v4468
        %v6785 = vunpack.c.h.b16 %v4468
        %v6786 = vunpack.c.l.b16 %v4469
        %v6787 = vunpack.c.h.b16 %v4469
        %v6788 = vunpack.c.l.b16 %v4470
        %v6789 = vunpack.c.h.b16 %v4470
        %v6790 = vunpack.c.l.b16 %v4471
        %v6791 = vunpack.c.h.b16 %v4471
        %v6792 = vunpack.c.l.b16 %v4472
        %v6793 = vunpack.c.h.b16 %v4472
        %v6794 = vunpack.c.l.b16 %v4473
        %v6795 = vunpack.c.h.b16 %v4473
        %v6796 = vunpack.c.l.b16 %v4474
        %v6797 = vunpack.c.h.b16 %v4474
        %v6798 = vunpack.c.l.b16 %v4475
        %v6799 = vunpack.c.h.b16 %v4475
        %v6800 = vunpack.c.l.b16 %v4476
        %v6801 = vunpack.c.h.b16 %v4476
        %v6802 = vunpack.c.l.b16 %v4477
        %v6803 = vunpack.c.h.b16 %v4477
        %v6804 = vunpack.c.l.b16 %v4478
        %v6805 = vunpack.c.h.b16 %v4478
        %v6806 = vunpack.c.l.b16 %v4479
        %v6807 = vunpack.c.h.b16 %v4479
        %v6808 = vunpack.c.l.b16 %v4480
        %v6809 = vunpack.c.h.b16 %v4480
        %v6810 = vunpack.c.l.b16 %v4481
        %v6811 = vunpack.c.h.b16 %v4481
        %v6812 = vunpack.c.l.b16 %v4482
        %v6813 = vunpack.c.h.b16 %v4482
        %v6814 = vunpack.c.l.b16 %v4483
        %v6815 = vunpack.c.h.b16 %v4483
        %v6816 = vunpack.c.l.b16 %v4484
        %v6817 = vunpack.c.h.b16 %v4484
        %v6818 = vunpack.c.l.b16 %v4485
        %v6819 = vunpack.c.h.b16 %v4485
        %v6820 = vunpack.c.l.b16 %v4486
        %v6821 = vunpack.c.h.b16 %v4486
        %v6822 = vunpack.c.l.b16 %v4487
        %v6823 = vunpack.c.h.b16 %v4487
        %v6824 = vunpack.c.l.b16 %v4488
        %v6825 = vunpack.c.h.b16 %v4488
        %v6826 = vunpack.c.l.b16 %v4489
        %v6827 = vunpack.c.h.b16 %v4489
        %v6828 = vunpack.c.l.b16 %v4490
        %v6829 = vunpack.c.h.b16 %v4490
        %v6830 = vunpack.c.l.b16 %v4491
        %v6831 = vunpack.c.h.b16 %v4491
        %v6832 = vunpack.c.l.b16 %v4492
        %v6833 = vunpack.c.h.b16 %v4492
        %v6834 = vunpack.c.l.b16 %v4493
        %v6835 = vunpack.c.h.b16 %v4493
        %v6836 = vunpack.c.l.b16 %v4494
        %v6837 = vunpack.c.h.b16 %v4494
        %v6838 = vunpack.c.l.b16 %v4495
        %v6839 = vunpack.c.h.b16 %v4495
        %v6840 = vunpack.c.l.b16 %v4496
        %v6841 = vunpack.c.h.b16 %v4496
        %v6842 = vunpack.c.l.b16 %v4497
        %v6843 = vunpack.c.h.b16 %v4497
        %v6844 = vpack.c.b16 %v5316, %v5308
        %v6845 = vpack.c.b16 %v5317, %v5309
        %v6846 = vpack.c.b16 %v5318, %v5310
        %v6847 = vpack.c.b16 %v5319, %v5311
        %v6848 = vpack.c.b16 %v5320, %v5312
        %v6849 = vpack.c.b16 %v5321, %v5313
        %v6850 = vpack.c.b16 %v5322, %v5314
        %v6851 = vpack.c.b16 %v5323, %v5315
        %v6852 = vpack.c.b16 %v5332, %v5324
        %v6853 = vpack.c.b16 %v5333, %v5325
        %v6854 = vpack.c.b16 %v5334, %v5326
        %v6855 = vpack.c.b16 %v5335, %v5327
        %v6856 = vpack.c.b16 %v5336, %v5328
        %v6857 = vpack.c.b16 %v5337, %v5329
        %v6858 = vpack.c.b16 %v5338, %v5330
        %v6859 = vpack.c.b16 %v5339, %v5331
        %v6860 = vpack.c.b16 %v5348, %v5340
        %v6861 = vpack.c.b16 %v5349, %v5341
        %v6862 = vpack.c.b16 %v5350, %v5342
        %v6863 = vpack.c.b16 %v5351, %v5343
        %v6864 = vpack.c.b16 %v5352, %v5344
        %v6865 = vpack.c.b16 %v5353, %v5345
        %v6866 = vpack.c.b16 %v5354, %v5346
        %v6867 = vpack.c.b16 %v5355, %v5347
        %v6868 = vpack.c.b16 %v5364, %v5356
        %v6869 = vpack.c.b16 %v5365, %v5357
        %v6870 = vpack.c.b16 %v5366, %v5358
        %v6871 = vpack.c.b16 %v5367, %v5359
        %v6872 = vpack.c.b16 %v5368, %v5360
        %v6873 = vpack.c.b16 %v5369, %v5361
        %v6874 = vpack.c.b16 %v5370, %v5362
        %v6875 = vpack.c.b16 %v5371, %v5363
        %v6876 = vpack.c.b16 %v5380, %v5372
        %v6877 = vpack.c.b16 %v5381, %v5373
        %v6878 = vpack.c.b16 %v5382, %v5374
        %v6879 = vpack.c.b16 %v5383, %v5375
        %v6880 = vpack.c.b16 %v5384, %v5376
        %v6881 = vpack.c.b16 %v5385, %v5377
        %v6882 = vpack.c.b16 %v5386, %v5378
        %v6883 = vpack.c.b16 %v5387, %v5379
        %v6884 = vpack.c.b16 %v5396, %v5388
        %v6885 = vpack.c.b16 %v5397, %v5389
        %v6886 = vpack.c.b16 %v5398, %v5390
        %v6887 = vpack.c.b16 %v5399, %v5391
        %v6888 = vpack.c.b16 %v5400, %v5392
        %v6889 = vpack.c.b16 %v5401, %v5393
        %v6890 = vpack.c.b16 %v5402, %v5394
        %v6891 = vpack.c.b16 %v5403, %v5395
        %v6892 = vpack.c.b16 %v5412, %v5404
        %v6893 = vpack.c.b16 %v5413, %v5405
        %v6894 = vpack.c.b16 %v5414, %v5406
        %v6895 = vpack.c.b16 %v5415, %v5407
        %v6896 = vpack.c.b16 %v5416, %v5408
        %v6897 = vpack.c.b16 %v5417, %v5409
        %v6898 = vpack.c.b16 %v5418, %v5410
        %v6899 = vpack.c.b16 %v5419, %v5411
        %v6900 = vpack.c.b16 %v5428, %v5420
        %v6901 = vpack.c.b16 %v5429, %v5421
        %v6902 = vpack.c.b16 %v5430, %v5422
        %v6903 = vpack.c.b16 %v5431, %v5423
        %v6904 = vpack.c.b16 %v5432, %v5424
        %v6905 = vpack.c.b16 %v5433, %v5425
        %v6906 = vpack.c.b16 %v5434, %v5426
        %v6907 = vpack.c.b16 %v5435, %v5427
        %v6908 = vpack.c.b16 %v5444, %v5436
        %v6909 = vpack.c.b16 %v5445, %v5437
        %v6910 = vpack.c.b16 %v5446, %v5438
        %v6911 = vpack.c.b16 %v5447, %v5439
        %v6912 = vpack.c.b16 %v5448, %v5440
        %v6913 = vpack.c.b16 %v5449, %v5441
        %v6914 = vpack.c.b16 %v5450, %v5442
        %v6915 = vpack.c.b16 %v5451, %v5443
        %v6916 = vpack.c.b16 %v5460, %v5452
        %v6917 = vpack.c.b16 %v5461, %v5453
        %v6918 = vpack.c.b16 %v5462, %v5454
        %v6919 = vpack.c.b16 %v5463, %v5455
        %v6920 = vpack.c.b16 %v5464, %v5456
        %v6921 = vpack.c.b16 %v5465, %v5457
        %v6922 = vpack.c.b16 %v5466, %v5458
        %v6923 = vpack.c.b16 %v5467, %v5459
        %v6924 = vpack.c.b16 %v5476, %v5468
        %v6925 = vpack.c.b16 %v5477, %v5469
        %v6926 = vpack.c.b16 %v5478, %v5470
        %v6927 = vpack.c.b16 %v5479, %v5471
        %v6928 = vpack.c.b16 %v5480, %v5472
        %v6929 = vpack.c.b16 %v5481, %v5473
        %v6930 = vpack.c.b16 %v5482, %v5474
        %v6931 = vpack.c.b16 %v5483, %v5475
        %v6932 = vpack.c.b16 %v5492, %v5484
        %v6933 = vpack.c.b16 %v5493, %v5485
        %v6934 = vpack.c.b16 %v5494, %v5486
        %v6935 = vpack.c.b16 %v5495, %v5487
        %v6936 = vpack.c.b16 %v5496, %v5488
        %v6937 = vpack.c.b16 %v5497, %v5489
        %v6938 = vpack.c.b16 %v5498, %v5490
        %v6939 = vpack.c.b16 %v5499, %v5491
        %v6940 = vpack.c.b16 %v5508, %v5500
        %v6941 = vpack.c.b16 %v5509, %v5501
        %v6942 = vpack.c.b16 %v5510, %v5502
        %v6943 = vpack.c.b16 %v5511, %v5503
        %v6944 = vpack.c.b16 %v5512, %v5504
        %v6945 = vpack.c.b16 %v5513, %v5505
        %v6946 = vpack.c.b16 %v5514, %v5506
        %v6947 = vpack.c.b16 %v5515, %v5507
        %v6948 = vpack.c.b16 %v5524, %v5516
        %v6949 = vpack.c.b16 %v5525, %v5517
        %v6950 = vpack.c.b16 %v5526, %v5518
        %v6951 = vpack.c.b16 %v5527, %v5519
        %v6952 = vpack.c.b16 %v5528, %v5520
        %v6953 = vpack.c.b16 %v5529, %v5521
        %v6954 = vpack.c.b16 %v5530, %v5522
        %v6955 = vpack.c.b16 %v5531, %v5523
        %v6956 = vpack.c.b16 %v5540, %v5532
        %v6957 = vpack.c.b16 %v5541, %v5533
        %v6958 = vpack.c.b16 %v5542, %v5534
        %v6959 = vpack.c.b16 %v5543, %v5535
        %v6960 = vpack.c.b16 %v5544, %v5536
        %v6961 = vpack.c.b16 %v5545, %v5537
        %v6962 = vpack.c.b16 %v5546, %v5538
        %v6963 = vpack.c.b16 %v5547, %v5539
        %v6964 = vpack.c.b16 %v5556, %v5548
        %v6965 = vpack.c.b16 %v5557, %v5549
        %v6966 = vpack.c.b16 %v5558, %v5550
        %v6967 = vpack.c.b16 %v5559, %v5551
        %v6968 = vpack.c.b16 %v5560, %v5552
        %v6969 = vpack.c.b16 %v5561, %v5553
        %v6970 = vpack.c.b16 %v5562, %v5554
        %v6971 = vpack.c.b16 %v5563, %v5555
        %v6972 = vpack.c.b16 %v5572, %v5564
        %v6973 = vpack.c.b16 %v5573, %v5565
        %v6974 = vpack.c.b16 %v5574, %v5566
        %v6975 = vpack.c.b16 %v5575, %v5567
        %v6976 = vpack.c.b16 %v5576, %v5568
        %v6977 = vpack.c.b16 %v5577, %v5569
        %v6978 = vpack.c.b16 %v5578, %v5570
        %v6979 = vpack.c.b16 %v5579, %v5571
        %v6980 = vpack.c.b16 %v5588, %v5580
        %v6981 = vpack.c.b16 %v5589, %v5581
        %v6982 = vpack.c.b16 %v5590, %v5582
        %v6983 = vpack.c.b16 %v5591, %v5583
        %v6984 = vpack.c.b16 %v5592, %v5584
        %v6985 = vpack.c.b16 %v5593, %v5585
        %v6986 = vpack.c.b16 %v5594, %v5586
        %v6987 = vpack.c.b16 %v5595, %v5587
        %v6988 = vpack.c.b16 %v5604, %v5596
        %v6989 = vpack.c.b16 %v5605, %v5597
        %v6990 = vpack.c.b16 %v5606, %v5598
        %v6991 = vpack.c.b16 %v5607, %v5599
        %v6992 = vpack.c.b16 %v5608, %v5600
        %v6993 = vpack.c.b16 %v5609, %v5601
        %v6994 = vpack.c.b16 %v5610, %v5602
        %v6995 = vpack.c.b16 %v5611, %v5603
        %v6996 = vpack.c.b16 %v5620, %v5612
        %v6997 = vpack.c.b16 %v5621, %v5613
        %v6998 = vpack.c.b16 %v5622, %v5614
        %v6999 = vpack.c.b16 %v5623, %v5615
        %v7000 = vpack.c.b16 %v5624, %v5616
        %v7001 = vpack.c.b16 %v5625, %v5617
        %v7002 = vpack.c.b16 %v5626, %v5618
        %v7003 = vpack.c.b16 %v5627, %v5619
        %v7004 = vpack.c.b16 %v5636, %v5628
        %v7005 = vpack.c.b16 %v5637, %v5629
        %v7006 = vpack.c.b16 %v5638, %v5630
        %v7007 = vpack.c.b16 %v5639, %v5631
        %v7008 = vpack.c.b16 %v5640, %v5632
        %v7009 = vpack.c.b16 %v5641, %v5633
        %v7010 = vpack.c.b16 %v5642, %v5634
        %v7011 = vpack.c.b16 %v5643, %v5635
        %v7012 = vpack.c.b16 %v5652, %v5644
        %v7013 = vpack.c.b16 %v5653, %v5645
        %v7014 = vpack.c.b16 %v5654, %v5646
        %v7015 = vpack.c.b16 %v5655, %v5647
        %v7016 = vpack.c.b16 %v5656, %v5648
        %v7017 = vpack.c.b16 %v5657, %v5649
        %v7018 = vpack.c.b16 %v5658, %v5650
        %v7019 = vpack.c.b16 %v5659, %v5651
        %v7020 = vpack.c.b16 %v5668, %v5660
        %v7021 = vpack.c.b16 %v5669, %v5661
        %v7022 = vpack.c.b16 %v5670, %v5662
        %v7023 = vpack.c.b16 %v5671, %v5663
        %v7024 = vpack.c.b16 %v5672, %v5664
        %v7025 = vpack.c.b16 %v5673, %v5665
        %v7026 = vpack.c.b16 %v5674, %v5666
        %v7027 = vpack.c.b16 %v5675, %v5667
        %v7028 = vpack.c.b16 %v5684, %v5676
        %v7029 = vpack.c.b16 %v5685, %v5677
        %v7030 = vpack.c.b16 %v5686, %v5678
        %v7031 = vpack.c.b16 %v5687, %v5679
        %v7032 = vpack.c.b16 %v5688, %v5680
        %v7033 = vpack.c.b16 %v5689, %v5681
        %v7034 = vpack.c.b16 %v5690, %v5682
        %v7035 = vpack.c.b16 %v5691, %v5683
        %v7036 = vpack.c.b16 %v5700, %v5692
        %v7037 = vpack.c.b16 %v5701, %v5693
        %v7038 = vpack.c.b16 %v5702, %v5694
        %v7039 = vpack.c.b16 %v5703, %v5695
        %v7040 = vpack.c.b16 %v5704, %v5696
        %v7041 = vpack.c.b16 %v5705, %v5697
        %v7042 = vpack.c.b16 %v5706, %v5698
        %v7043 = vpack.c.b16 %v5707, %v5699
        %v7044 = vpack.c.b16 %v5716, %v5708
        %v7045 = vpack.c.b16 %v5717, %v5709
        %v7046 = vpack.c.b16 %v5718, %v5710
        %v7047 = vpack.c.b16 %v5719, %v5711
        %v7048 = vpack.c.b16 %v5720, %v5712
        %v7049 = vpack.c.b16 %v5721, %v5713
        %v7050 = vpack.c.b16 %v5722, %v5714
        %v7051 = vpack.c.b16 %v5723, %v5715
        %v7052 = vpack.c.b16 %v5732, %v5724
        %v7053 = vpack.c.b16 %v5733, %v5725
        %v7054 = vpack.c.b16 %v5734, %v5726
        %v7055 = vpack.c.b16 %v5735, %v5727
        %v7056 = vpack.c.b16 %v5736, %v5728
        %v7057 = vpack.c.b16 %v5737, %v5729
        %v7058 = vpack.c.b16 %v5738, %v5730
        %v7059 = vpack.c.b16 %v5739, %v5731
        %v7060 = vpack.c.b16 %v5748, %v5740
        %v7061 = vpack.c.b16 %v5749, %v5741
        %v7062 = vpack.c.b16 %v5750, %v5742
        %v7063 = vpack.c.b16 %v5751, %v5743
        %v7064 = vpack.c.b16 %v5752, %v5744
        %v7065 = vpack.c.b16 %v5753, %v5745
        %v7066 = vpack.c.b16 %v5754, %v5746
        %v7067 = vpack.c.b16 %v5755, %v5747
        %v7068 = vpack.c.b16 %v5764, %v5756
        %v7069 = vpack.c.b16 %v5765, %v5757
        %v7070 = vpack.c.b16 %v5766, %v5758
        %v7071 = vpack.c.b16 %v5767, %v5759
        %v7072 = vpack.c.b16 %v5768, %v5760
        %v7073 = vpack.c.b16 %v5769, %v5761
        %v7074 = vpack.c.b16 %v5770, %v5762
        %v7075 = vpack.c.b16 %v5771, %v5763
        %v7076 = vpack.c.b16 %v5780, %v5772
        %v7077 = vpack.c.b16 %v5781, %v5773
        %v7078 = vpack.c.b16 %v5782, %v5774
        %v7079 = vpack.c.b16 %v5783, %v5775
        %v7080 = vpack.c.b16 %v5784, %v5776
        %v7081 = vpack.c.b16 %v5785, %v5777
        %v7082 = vpack.c.b16 %v5786, %v5778
        %v7083 = vpack.c.b16 %v5787, %v5779
        %v7084 = vpack.c.b16 %v5796, %v5788
        %v7085 = vpack.c.b16 %v5797, %v5789
        %v7086 = vpack.c.b16 %v5798, %v5790
        %v7087 = vpack.c.b16 %v5799, %v5791
        %v7088 = vpack.c.b16 %v5800, %v5792
        %v7089 = vpack.c.b16 %v5801, %v5793
        %v7090 = vpack.c.b16 %v5802, %v5794
        %v7091 = vpack.c.b16 %v5803, %v5795
        %v7092 = vpack.c.b16 %v5812, %v5804
        %v7093 = vpack.c.b16 %v5813, %v5805
        %v7094 = vpack.c.b16 %v5814, %v5806
        %v7095 = vpack.c.b16 %v5815, %v5807
        %v7096 = vpack.c.b16 %v5816, %v5808
        %v7097 = vpack.c.b16 %v5817, %v5809
        %v7098 = vpack.c.b16 %v5818, %v5810
        %v7099 = vpack.c.b16 %v5819, %v5811
        %v7100 = vpack.c.b16 %v5828, %v5820
        %v7101 = vpack.c.b16 %v5829, %v5821
        %v7102 = vpack.c.b16 %v5830, %v5822
        %v7103 = vpack.c.b16 %v5831, %v5823
        %v7104 = vpack.c.b16 %v5832, %v5824
        %v7105 = vpack.c.b16 %v5833, %v5825
        %v7106 = vpack.c.b16 %v5834, %v5826
        %v7107 = vpack.c.b16 %v5835, %v5827
        %v7108 = vpack.c.b16 %v5844, %v5836
        %v7109 = vpack.c.b16 %v5845, %v5837
        %v7110 = vpack.c.b16 %v5846, %v5838
        %v7111 = vpack.c.b16 %v5847, %v5839
        %v7112 = vpack.c.b16 %v5848, %v5840
        %v7113 = vpack.c.b16 %v5849, %v5841
        %v7114 = vpack.c.b16 %v5850, %v5842
        %v7115 = vpack.c.b16 %v5851, %v5843
        %v7116 = vpack.c.b16 %v5860, %v5852
        %v7117 = vpack.c.b16 %v5861, %v5853
        %v7118 = vpack.c.b16 %v5862, %v5854
        %v7119 = vpack.c.b16 %v5863, %v5855
        %v7120 = vpack.c.b16 %v5864, %v5856
        %v7121 = vpack.c.b16 %v5865, %v5857
        %v7122 = vpack.c.b16 %v5866, %v5858
        %v7123 = vpack.c.b16 %v5867, %v5859
        %v7124 = vpack.c.b16 %v5876, %v5868
        %v7125 = vpack.c.b16 %v5877, %v5869
        %v7126 = vpack.c.b16 %v5878, %v5870
        %v7127 = vpack.c.b16 %v5879, %v5871
        %v7128 = vpack.c.b16 %v5880, %v5872
        %v7129 = vpack.c.b16 %v5881, %v5873
        %v7130 = vpack.c.b16 %v5882, %v5874
        %v7131 = vpack.c.b16 %v5883, %v5875
        %v7132 = vpack.c.b16 %v5892, %v5884
        %v7133 = vpack.c.b16 %v5893, %v5885
        %v7134 = vpack.c.b16 %v5894, %v5886
        %v7135 = vpack.c.b16 %v5895, %v5887
        %v7136 = vpack.c.b16 %v5896, %v5888
        %v7137 = vpack.c.b16 %v5897, %v5889
        %v7138 = vpack.c.b16 %v5898, %v5890
        %v7139 = vpack.c.b16 %v5899, %v5891
        %v7140 = vpack.c.b16 %v5908, %v5900
        %v7141 = vpack.c.b16 %v5909, %v5901
        %v7142 = vpack.c.b16 %v5910, %v5902
        %v7143 = vpack.c.b16 %v5911, %v5903
        %v7144 = vpack.c.b16 %v5912, %v5904
        %v7145 = vpack.c.b16 %v5913, %v5905
        %v7146 = vpack.c.b16 %v5914, %v5906
        %v7147 = vpack.c.b16 %v5915, %v5907
        %v7148 = vpack.c.b16 %v5924, %v5916
        %v7149 = vpack.c.b16 %v5925, %v5917
        %v7150 = vpack.c.b16 %v5926, %v5918
        %v7151 = vpack.c.b16 %v5927, %v5919
        %v7152 = vpack.c.b16 %v5928, %v5920
        %v7153 = vpack.c.b16 %v5929, %v5921
        %v7154 = vpack.c.b16 %v5930, %v5922
        %v7155 = vpack.c.b16 %v5931, %v5923
        %v7156 = vpack.c.b16 %v5940, %v5932
        %v7157 = vpack.c.b16 %v5941, %v5933
        %v7158 = vpack.c.b16 %v5942, %v5934
        %v7159 = vpack.c.b16 %v5943, %v5935
        %v7160 = vpack.c.b16 %v5944, %v5936
        %v7161 = vpack.c.b16 %v5945, %v5937
        %v7162 = vpack.c.b16 %v5946, %v5938
        %v7163 = vpack.c.b16 %v5947, %v5939
        %v7164 = vpack.c.b16 %v5956, %v5948
        %v7165 = vpack.c.b16 %v5957, %v5949
        %v7166 = vpack.c.b16 %v5958, %v5950
        %v7167 = vpack.c.b16 %v5959, %v5951
        %v7168 = vpack.c.b16 %v5960, %v5952
        %v7169 = vpack.c.b16 %v5961, %v5953
        %v7170 = vpack.c.b16 %v5962, %v5954
        %v7171 = vpack.c.b16 %v5963, %v5955
        %v7172 = vpack.c.b16 %v5972, %v5964
        %v7173 = vpack.c.b16 %v5973, %v5965
        %v7174 = vpack.c.b16 %v5974, %v5966
        %v7175 = vpack.c.b16 %v5975, %v5967
        %v7176 = vpack.c.b16 %v5976, %v5968
        %v7177 = vpack.c.b16 %v5977, %v5969
        %v7178 = vpack.c.b16 %v5978, %v5970
        %v7179 = vpack.c.b16 %v5979, %v5971
        %v7180 = vpack.c.b16 %v5988, %v5980
        %v7181 = vpack.c.b16 %v5989, %v5981
        %v7182 = vpack.c.b16 %v5990, %v5982
        %v7183 = vpack.c.b16 %v5991, %v5983
        %v7184 = vpack.c.b16 %v5992, %v5984
        %v7185 = vpack.c.b16 %v5993, %v5985
        %v7186 = vpack.c.b16 %v5994, %v5986
        %v7187 = vpack.c.b16 %v5995, %v5987
        %v7188 = vpack.c.b16 %v6004, %v5996
        %v7189 = vpack.c.b16 %v6005, %v5997
        %v7190 = vpack.c.b16 %v6006, %v5998
        %v7191 = vpack.c.b16 %v6007, %v5999
        %v7192 = vpack.c.b16 %v6008, %v6000
        %v7193 = vpack.c.b16 %v6009, %v6001
        %v7194 = vpack.c.b16 %v6010, %v6002
        %v7195 = vpack.c.b16 %v6011, %v6003
        %v7196 = vpack.c.b16 %v6020, %v6012
        %v7197 = vpack.c.b16 %v6021, %v6013
        %v7198 = vpack.c.b16 %v6022, %v6014
        %v7199 = vpack.c.b16 %v6023, %v6015
        %v7200 = vpack.c.b16 %v6024, %v6016
        %v7201 = vpack.c.b16 %v6025, %v6017
        %v7202 = vpack.c.b16 %v6026, %v6018
        %v7203 = vpack.c.b16 %v6027, %v6019
        %v7204 = vpack.c.b16 %v6036, %v6028
        %v7205 = vpack.c.b16 %v6037, %v6029
        %v7206 = vpack.c.b16 %v6038, %v6030
        %v7207 = vpack.c.b16 %v6039, %v6031
        %v7208 = vpack.c.b16 %v6040, %v6032
        %v7209 = vpack.c.b16 %v6041, %v6033
        %v7210 = vpack.c.b16 %v6042, %v6034
        %v7211 = vpack.c.b16 %v6043, %v6035
        %v7212 = vpack.c.b16 %v6052, %v6044
        %v7213 = vpack.c.b16 %v6053, %v6045
        %v7214 = vpack.c.b16 %v6054, %v6046
        %v7215 = vpack.c.b16 %v6055, %v6047
        %v7216 = vpack.c.b16 %v6056, %v6048
        %v7217 = vpack.c.b16 %v6057, %v6049
        %v7218 = vpack.c.b16 %v6058, %v6050
        %v7219 = vpack.c.b16 %v6059, %v6051
        %v7220 = vpack.c.b16 %v6068, %v6060
        %v7221 = vpack.c.b16 %v6069, %v6061
        %v7222 = vpack.c.b16 %v6070, %v6062
        %v7223 = vpack.c.b16 %v6071, %v6063
        %v7224 = vpack.c.b16 %v6072, %v6064
        %v7225 = vpack.c.b16 %v6073, %v6065
        %v7226 = vpack.c.b16 %v6074, %v6066
        %v7227 = vpack.c.b16 %v6075, %v6067
        %v7228 = vpack.c.b16 %v6084, %v6076
        %v7229 = vpack.c.b16 %v6085, %v6077
        %v7230 = vpack.c.b16 %v6086, %v6078
        %v7231 = vpack.c.b16 %v6087, %v6079
        %v7232 = vpack.c.b16 %v6088, %v6080
        %v7233 = vpack.c.b16 %v6089, %v6081
        %v7234 = vpack.c.b16 %v6090, %v6082
        %v7235 = vpack.c.b16 %v6091, %v6083
        %v7236 = vpack.c.b16 %v6100, %v6092
        %v7237 = vpack.c.b16 %v6101, %v6093
        %v7238 = vpack.c.b16 %v6102, %v6094
        %v7239 = vpack.c.b16 %v6103, %v6095
        %v7240 = vpack.c.b16 %v6104, %v6096
        %v7241 = vpack.c.b16 %v6105, %v6097
        %v7242 = vpack.c.b16 %v6106, %v6098
        %v7243 = vpack.c.b16 %v6107, %v6099
        %v7244 = vpack.c.b16 %v6116, %v6108
        %v7245 = vpack.c.b16 %v6117, %v6109
        %v7246 = vpack.c.b16 %v6118, %v6110
        %v7247 = vpack.c.b16 %v6119, %v6111
        %v7248 = vpack.c.b16 %v6120, %v6112
        %v7249 = vpack.c.b16 %v6121, %v6113
        %v7250 = vpack.c.b16 %v6122, %v6114
        %v7251 = vpack.c.b16 %v6123, %v6115
        %v7252 = vpack.c.b16 %v6132, %v6124
        %v7253 = vpack.c.b16 %v6133, %v6125
        %v7254 = vpack.c.b16 %v6134, %v6126
        %v7255 = vpack.c.b16 %v6135, %v6127
        %v7256 = vpack.c.b16 %v6136, %v6128
        %v7257 = vpack.c.b16 %v6137, %v6129
        %v7258 = vpack.c.b16 %v6138, %v6130
        %v7259 = vpack.c.b16 %v6139, %v6131
        %v7260 = vpack.c.b16 %v6148, %v6140
        %v7261 = vpack.c.b16 %v6149, %v6141
        %v7262 = vpack.c.b16 %v6150, %v6142
        %v7263 = vpack.c.b16 %v6151, %v6143
        %v7264 = vpack.c.b16 %v6152, %v6144
        %v7265 = vpack.c.b16 %v6153, %v6145
        %v7266 = vpack.c.b16 %v6154, %v6146
        %v7267 = vpack.c.b16 %v6155, %v6147
        %v7268 = vpack.c.b16 %v6164, %v6156
        %v7269 = vpack.c.b16 %v6165, %v6157
        %v7270 = vpack.c.b16 %v6166, %v6158
        %v7271 = vpack.c.b16 %v6167, %v6159
        %v7272 = vpack.c.b16 %v6168, %v6160
        %v7273 = vpack.c.b16 %v6169, %v6161
        %v7274 = vpack.c.b16 %v6170, %v6162
        %v7275 = vpack.c.b16 %v6171, %v6163
        %v7276 = vpack.c.b16 %v6180, %v6172
        %v7277 = vpack.c.b16 %v6181, %v6173
        %v7278 = vpack.c.b16 %v6182, %v6174
        %v7279 = vpack.c.b16 %v6183, %v6175
        %v7280 = vpack.c.b16 %v6184, %v6176
        %v7281 = vpack.c.b16 %v6185, %v6177
        %v7282 = vpack.c.b16 %v6186, %v6178
        %v7283 = vpack.c.b16 %v6187, %v6179
        %v7284 = vpack.c.b16 %v6196, %v6188
        %v7285 = vpack.c.b16 %v6197, %v6189
        %v7286 = vpack.c.b16 %v6198, %v6190
        %v7287 = vpack.c.b16 %v6199, %v6191
        %v7288 = vpack.c.b16 %v6200, %v6192
        %v7289 = vpack.c.b16 %v6201, %v6193
        %v7290 = vpack.c.b16 %v6202, %v6194
        %v7291 = vpack.c.b16 %v6203, %v6195
        %v7292 = vpack.c.b16 %v6212, %v6204
        %v7293 = vpack.c.b16 %v6213, %v6205
        %v7294 = vpack.c.b16 %v6214, %v6206
        %v7295 = vpack.c.b16 %v6215, %v6207
        %v7296 = vpack.c.b16 %v6216, %v6208
        %v7297 = vpack.c.b16 %v6217, %v6209
        %v7298 = vpack.c.b16 %v6218, %v6210
        %v7299 = vpack.c.b16 %v6219, %v6211
        %v7300 = vpack.c.b16 %v6228, %v6220
        %v7301 = vpack.c.b16 %v6229, %v6221
        %v7302 = vpack.c.b16 %v6230, %v6222
        %v7303 = vpack.c.b16 %v6231, %v6223
        %v7304 = vpack.c.b16 %v6232, %v6224
        %v7305 = vpack.c.b16 %v6233, %v6225
        %v7306 = vpack.c.b16 %v6234, %v6226
        %v7307 = vpack.c.b16 %v6235, %v6227
        %v7308 = vpack.c.b16 %v6244, %v6236
        %v7309 = vpack.c.b16 %v6245, %v6237
        %v7310 = vpack.c.b16 %v6246, %v6238
        %v7311 = vpack.c.b16 %v6247, %v6239
        %v7312 = vpack.c.b16 %v6248, %v6240
        %v7313 = vpack.c.b16 %v6249, %v6241
        %v7314 = vpack.c.b16 %v6250, %v6242
        %v7315 = vpack.c.b16 %v6251, %v6243
        %v7316 = vpack.c.b16 %v6260, %v6252
        %v7317 = vpack.c.b16 %v6261, %v6253
        %v7318 = vpack.c.b16 %v6262, %v6254
        %v7319 = vpack.c.b16 %v6263, %v6255
        %v7320 = vpack.c.b16 %v6264, %v6256
        %v7321 = vpack.c.b16 %v6265, %v6257
        %v7322 = vpack.c.b16 %v6266, %v6258
        %v7323 = vpack.c.b16 %v6267, %v6259
        %v7324 = vpack.c.b16 %v6276, %v6268
        %v7325 = vpack.c.b16 %v6277, %v6269
        %v7326 = vpack.c.b16 %v6278, %v6270
        %v7327 = vpack.c.b16 %v6279, %v6271
        %v7328 = vpack.c.b16 %v6280, %v6272
        %v7329 = vpack.c.b16 %v6281, %v6273
        %v7330 = vpack.c.b16 %v6282, %v6274
        %v7331 = vpack.c.b16 %v6283, %v6275
        %v7332 = vpack.c.b16 %v6292, %v6284
        %v7333 = vpack.c.b16 %v6293, %v6285
        %v7334 = vpack.c.b16 %v6294, %v6286
        %v7335 = vpack.c.b16 %v6295, %v6287
        %v7336 = vpack.c.b16 %v6296, %v6288
        %v7337 = vpack.c.b16 %v6297, %v6289
        %v7338 = vpack.c.b16 %v6298, %v6290
        %v7339 = vpack.c.b16 %v6299, %v6291
        %v7340 = vpack.c.b16 %v6308, %v6300
        %v7341 = vpack.c.b16 %v6309, %v6301
        %v7342 = vpack.c.b16 %v6310, %v6302
        %v7343 = vpack.c.b16 %v6311, %v6303
        %v7344 = vpack.c.b16 %v6312, %v6304
        %v7345 = vpack.c.b16 %v6313, %v6305
        %v7346 = vpack.c.b16 %v6314, %v6306
        %v7347 = vpack.c.b16 %v6315, %v6307
        %v7348 = vpack.c.b16 %v6324, %v6316
        %v7349 = vpack.c.b16 %v6325, %v6317
        %v7350 = vpack.c.b16 %v6326, %v6318
        %v7351 = vpack.c.b16 %v6327, %v6319
        %v7352 = vpack.c.b16 %v6328, %v6320
        %v7353 = vpack.c.b16 %v6329, %v6321
        %v7354 = vpack.c.b16 %v6330, %v6322
        %v7355 = vpack.c.b16 %v6331, %v6323
        %v7356 = vpack.c.b16 %v6340, %v6332
        %v7357 = vpack.c.b16 %v6341, %v6333
        %v7358 = vpack.c.b16 %v6342, %v6334
        %v7359 = vpack.c.b16 %v6343, %v6335
        %v7360 = vpack.c.b16 %v6344, %v6336
        %v7361 = vpack.c.b16 %v6345, %v6337
        %v7362 = vpack.c.b16 %v6346, %v6338
        %v7363 = vpack.c.b16 %v6347, %v6339
        %v7364 = vpack.c.b16 %v6356, %v6348
        %v7365 = vpack.c.b16 %v6357, %v6349
        %v7366 = vpack.c.b16 %v6358, %v6350
        %v7367 = vpack.c.b16 %v6359, %v6351
        %v7368 = vpack.c.b16 %v6360, %v6352
        %v7369 = vpack.c.b16 %v6361, %v6353
        %v7370 = vpack.c.b16 %v6362, %v6354
        %v7371 = vpack.c.b16 %v6363, %v6355
        %v7372 = vpack.c.b16 %v6372, %v6364
        %v7373 = vpack.c.b16 %v6373, %v6365
        %v7374 = vpack.c.b16 %v6374, %v6366
        %v7375 = vpack.c.b16 %v6375, %v6367
        %v7376 = vpack.c.b16 %v6376, %v6368
        %v7377 = vpack.c.b16 %v6377, %v6369
        %v7378 = vpack.c.b16 %v6378, %v6370
        %v7379 = vpack.c.b16 %v6379, %v6371
        %v7380 = vpack.c.b16 %v6388, %v6380
        %v7381 = vpack.c.b16 %v6389, %v6381
        %v7382 = vpack.c.b16 %v6390, %v6382
        %v7383 = vpack.c.b16 %v6391, %v6383
        %v7384 = vpack.c.b16 %v6392, %v6384
        %v7385 = vpack.c.b16 %v6393, %v6385
        %v7386 = vpack.c.b16 %v6394, %v6386
        %v7387 = vpack.c.b16 %v6395, %v6387
        %v7388 = vpack.c.b16 %v6404, %v6396
        %v7389 = vpack.c.b16 %v6405, %v6397
        %v7390 = vpack.c.b16 %v6406, %v6398
        %v7391 = vpack.c.b16 %v6407, %v6399
        %v7392 = vpack.c.b16 %v6408, %v6400
        %v7393 = vpack.c.b16 %v6409, %v6401
        %v7394 = vpack.c.b16 %v6410, %v6402
        %v7395 = vpack.c.b16 %v6411, %v6403
        %v7396 = vpack.c.b16 %v6420, %v6412
        %v7397 = vpack.c.b16 %v6421, %v6413
        %v7398 = vpack.c.b16 %v6422, %v6414
        %v7399 = vpack.c.b16 %v6423, %v6415
        %v7400 = vpack.c.b16 %v6424, %v6416
        %v7401 = vpack.c.b16 %v6425, %v6417
        %v7402 = vpack.c.b16 %v6426, %v6418
        %v7403 = vpack.c.b16 %v6427, %v6419
        %v7404 = vpack.c.b16 %v6436, %v6428
        %v7405 = vpack.c.b16 %v6437, %v6429
        %v7406 = vpack.c.b16 %v6438, %v6430
        %v7407 = vpack.c.b16 %v6439, %v6431
        %v7408 = vpack.c.b16 %v6440, %v6432
        %v7409 = vpack.c.b16 %v6441, %v6433
        %v7410 = vpack.c.b16 %v6442, %v6434
        %v7411 = vpack.c.b16 %v6443, %v6435
        %v7412 = vpack.c.b16 %v6452, %v6444
        %v7413 = vpack.c.b16 %v6453, %v6445
        %v7414 = vpack.c.b16 %v6454, %v6446
        %v7415 = vpack.c.b16 %v6455, %v6447
        %v7416 = vpack.c.b16 %v6456, %v6448
        %v7417 = vpack.c.b16 %v6457, %v6449
        %v7418 = vpack.c.b16 %v6458, %v6450
        %v7419 = vpack.c.b16 %v6459, %v6451
        %v7420 = vpack.c.b16 %v6468, %v6460
        %v7421 = vpack.c.b16 %v6469, %v6461
        %v7422 = vpack.c.b16 %v6470, %v6462
        %v7423 = vpack.c.b16 %v6471, %v6463
        %v7424 = vpack.c.b16 %v6472, %v6464
        %v7425 = vpack.c.b16 %v6473, %v6465
        %v7426 = vpack.c.b16 %v6474, %v6466
        %v7427 = vpack.c.b16 %v6475, %v6467
        %v7428 = vpack.c.b16 %v6484, %v6476
        %v7429 = vpack.c.b16 %v6485, %v6477
        %v7430 = vpack.c.b16 %v6486, %v6478
        %v7431 = vpack.c.b16 %v6487, %v6479
        %v7432 = vpack.c.b16 %v6488, %v6480
        %v7433 = vpack.c.b16 %v6489, %v6481
        %v7434 = vpack.c.b16 %v6490, %v6482
        %v7435 = vpack.c.b16 %v6491, %v6483
        %v7436 = vpack.c.b16 %v6500, %v6492
        %v7437 = vpack.c.b16 %v6501, %v6493
        %v7438 = vpack.c.b16 %v6502, %v6494
        %v7439 = vpack.c.b16 %v6503, %v6495
        %v7440 = vpack.c.b16 %v6504, %v6496
        %v7441 = vpack.c.b16 %v6505, %v6497
        %v7442 = vpack.c.b16 %v6506, %v6498
        %v7443 = vpack.c.b16 %v6507, %v6499
        %v7444 = vpack.c.b16 %v6516, %v6508
        %v7445 = vpack.c.b16 %v6517, %v6509
        %v7446 = vpack.c.b16 %v6518, %v6510
        %v7447 = vpack.c.b16 %v6519, %v6511
        %v7448 = vpack.c.b16 %v6520, %v6512
        %v7449 = vpack.c.b16 %v6521, %v6513
        %v7450 = vpack.c.b16 %v6522, %v6514
        %v7451 = vpack.c.b16 %v6523, %v6515
        %v7452 = vpack.c.b16 %v6532, %v6524
        %v7453 = vpack.c.b16 %v6533, %v6525
        %v7454 = vpack.c.b16 %v6534, %v6526
        %v7455 = vpack.c.b16 %v6535, %v6527
        %v7456 = vpack.c.b16 %v6536, %v6528
        %v7457 = vpack.c.b16 %v6537, %v6529
        %v7458 = vpack.c.b16 %v6538, %v6530
        %v7459 = vpack.c.b16 %v6539, %v6531
        %v7460 = vpack.c.b16 %v6548, %v6540
        %v7461 = vpack.c.b16 %v6549, %v6541
        %v7462 = vpack.c.b16 %v6550, %v6542
        %v7463 = vpack.c.b16 %v6551, %v6543
        %v7464 = vpack.c.b16 %v6552, %v6544
        %v7465 = vpack.c.b16 %v6553, %v6545
        %v7466 = vpack.c.b16 %v6554, %v6546
        %v7467 = vpack.c.b16 %v6555, %v6547
        %v7468 = vpack.c.b16 %v6564, %v6556
        %v7469 = vpack.c.b16 %v6565, %v6557
        %v7470 = vpack.c.b16 %v6566, %v6558
        %v7471 = vpack.c.b16 %v6567, %v6559
        %v7472 = vpack.c.b16 %v6568, %v6560
        %v7473 = vpack.c.b16 %v6569, %v6561
        %v7474 = vpack.c.b16 %v6570, %v6562
        %v7475 = vpack.c.b16 %v6571, %v6563
        %v7476 = vpack.c.b16 %v6580, %v6572
        %v7477 = vpack.c.b16 %v6581, %v6573
        %v7478 = vpack.c.b16 %v6582, %v6574
        %v7479 = vpack.c.b16 %v6583, %v6575
        %v7480 = vpack.c.b16 %v6584, %v6576
        %v7481 = vpack.c.b16 %v6585, %v6577
        %v7482 = vpack.c.b16 %v6586, %v6578
        %v7483 = vpack.c.b16 %v6587, %v6579
        %v7484 = vpack.c.b16 %v6596, %v6588
        %v7485 = vpack.c.b16 %v6597, %v6589
        %v7486 = vpack.c.b16 %v6598, %v6590
        %v7487 = vpack.c.b16 %v6599, %v6591
        %v7488 = vpack.c.b16 %v6600, %v6592
        %v7489 = vpack.c.b16 %v6601, %v6593
        %v7490 = vpack.c.b16 %v6602, %v6594
        %v7491 = vpack.c.b16 %v6603, %v6595
        %v7492 = vpack.c.b16 %v6612, %v6604
        %v7493 = vpack.c.b16 %v6613, %v6605
        %v7494 = vpack.c.b16 %v6614, %v6606
        %v7495 = vpack.c.b16 %v6615, %v6607
        %v7496 = vpack.c.b16 %v6616, %v6608
        %v7497 = vpack.c.b16 %v6617, %v6609
        %v7498 = vpack.c.b16 %v6618, %v6610
        %v7499 = vpack.c.b16 %v6619, %v6611
        %v7500 = vpack.c.b16 %v6628, %v6620
        %v7501 = vpack.c.b16 %v6629, %v6621
        %v7502 = vpack.c.b16 %v6630, %v6622
        %v7503 = vpack.c.b16 %v6631, %v6623
        %v7504 = vpack.c.b16 %v6632, %v6624
        %v7505 = vpack.c.b16 %v6633, %v6625
        %v7506 = vpack.c.b16 %v6634, %v6626
        %v7507 = vpack.c.b16 %v6635, %v6627
        %v7508 = vpack.c.b16 %v6644, %v6636
        %v7509 = vpack.c.b16 %v6645, %v6637
        %v7510 = vpack.c.b16 %v6646, %v6638
        %v7511 = vpack.c.b16 %v6647, %v6639
        %v7512 = vpack.c.b16 %v6648, %v6640
        %v7513 = vpack.c.b16 %v6649, %v6641
        %v7514 = vpack.c.b16 %v6650, %v6642
        %v7515 = vpack.c.b16 %v6651, %v6643
        %v7516 = vpack.c.b16 %v6660, %v6652
        %v7517 = vpack.c.b16 %v6661, %v6653
        %v7518 = vpack.c.b16 %v6662, %v6654
        %v7519 = vpack.c.b16 %v6663, %v6655
        %v7520 = vpack.c.b16 %v6664, %v6656
        %v7521 = vpack.c.b16 %v6665, %v6657
        %v7522 = vpack.c.b16 %v6666, %v6658
        %v7523 = vpack.c.b16 %v6667, %v6659
        %v7524 = vpack.c.b16 %v6676, %v6668
        %v7525 = vpack.c.b16 %v6677, %v6669
        %v7526 = vpack.c.b16 %v6678, %v6670
        %v7527 = vpack.c.b16 %v6679, %v6671
        %v7528 = vpack.c.b16 %v6680, %v6672
        %v7529 = vpack.c.b16 %v6681, %v6673
        %v7530 = vpack.c.b16 %v6682, %v6674
        %v7531 = vpack.c.b16 %v6683, %v6675
        %v7532 = vpack.c.b16 %v6692, %v6684
        %v7533 = vpack.c.b16 %v6693, %v6685
        %v7534 = vpack.c.b16 %v6694, %v6686
        %v7535 = vpack.c.b16 %v6695, %v6687
        %v7536 = vpack.c.b16 %v6696, %v6688
        %v7537 = vpack.c.b16 %v6697, %v6689
        %v7538 = vpack.c.b16 %v6698, %v6690
        %v7539 = vpack.c.b16 %v6699, %v6691
        %v7540 = vpack.c.b16 %v6708, %v6700
        %v7541 = vpack.c.b16 %v6709, %v6701
        %v7542 = vpack.c.b16 %v6710, %v6702
        %v7543 = vpack.c.b16 %v6711, %v6703
        %v7544 = vpack.c.b16 %v6712, %v6704
        %v7545 = vpack.c.b16 %v6713, %v6705
        %v7546 = vpack.c.b16 %v6714, %v6706
        %v7547 = vpack.c.b16 %v6715, %v6707
        %v7548 = vpack.c.b16 %v6724, %v6716
        %v7549 = vpack.c.b16 %v6725, %v6717
        %v7550 = vpack.c.b16 %v6726, %v6718
        %v7551 = vpack.c.b16 %v6727, %v6719
        %v7552 = vpack.c.b16 %v6728, %v6720
        %v7553 = vpack.c.b16 %v6729, %v6721
        %v7554 = vpack.c.b16 %v6730, %v6722
        %v7555 = vpack.c.b16 %v6731, %v6723
        %v7556 = vpack.c.b16 %v6740, %v6732
        %v7557 = vpack.c.b16 %v6741, %v6733
        %v7558 = vpack.c.b16 %v6742, %v6734
        %v7559 = vpack.c.b16 %v6743, %v6735
        %v7560 = vpack.c.b16 %v6744, %v6736
        %v7561 = vpack.c.b16 %v6745, %v6737
        %v7562 = vpack.c.b16 %v6746, %v6738
        %v7563 = vpack.c.b16 %v6747, %v6739
        %v7564 = vpack.c.b16 %v6756, %v6748
        %v7565 = vpack.c.b16 %v6757, %v6749
        %v7566 = vpack.c.b16 %v6758, %v6750
        %v7567 = vpack.c.b16 %v6759, %v6751
        %v7568 = vpack.c.b16 %v6760, %v6752
        %v7569 = vpack.c.b16 %v6761, %v6753
        %v7570 = vpack.c.b16 %v6762, %v6754
        %v7571 = vpack.c.b16 %v6763, %v6755
        %v7572 = vpack.c.b16 %v6772, %v6764
        %v7573 = vpack.c.b16 %v6773, %v6765
        %v7574 = vpack.c.b16 %v6774, %v6766
        %v7575 = vpack.c.b16 %v6775, %v6767
        %v7576 = vpack.c.b16 %v6776, %v6768
        %v7577 = vpack.c.b16 %v6777, %v6769
        %v7578 = vpack.c.b16 %v6778, %v6770
        %v7579 = vpack.c.b16 %v6779, %v6771
        %v7580 = vpack.c.b16 %v6788, %v6780
        %v7581 = vpack.c.b16 %v6789, %v6781
        %v7582 = vpack.c.b16 %v6790, %v6782
        %v7583 = vpack.c.b16 %v6791, %v6783
        %v7584 = vpack.c.b16 %v6792, %v6784
        %v7585 = vpack.c.b16 %v6793, %v6785
        %v7586 = vpack.c.b16 %v6794, %v6786
        %v7587 = vpack.c.b16 %v6795, %v6787
        %v7588 = vpack.c.b16 %v6804, %v6796
        %v7589 = vpack.c.b16 %v6805, %v6797
        %v7590 = vpack.c.b16 %v6806, %v6798
        %v7591 = vpack.c.b16 %v6807, %v6799
        %v7592 = vpack.c.b16 %v6808, %v6800
        %v7593 = vpack.c.b16 %v6809, %v6801
        %v7594 = vpack.c.b16 %v6810, %v6802
        %v7595 = vpack.c.b16 %v6811, %v6803
        %v7596 = vpack.c.b16 %v6820, %v6812
        %v7597 = vpack.c.b16 %v6821, %v6813
        %v7598 = vpack.c.b16 %v6822, %v6814
        %v7599 = vpack.c.b16 %v6823, %v6815
        %v7600 = vpack.c.b16 %v6824, %v6816
        %v7601 = vpack.c.b16 %v6825, %v6817
        %v7602 = vpack.c.b16 %v6826, %v6818
        %v7603 = vpack.c.b16 %v6827, %v6819
        %v7604 = vpack.c.b16 %v6836, %v6828
        %v7605 = vpack.c.b16 %v6837, %v6829
        %v7606 = vpack.c.b16 %v6838, %v6830
        %v7607 = vpack.c.b16 %v6839, %v6831
        %v7608 = vpack.c.b16 %v6840, %v6832
        %v7609 = vpack.c.b16 %v6841, %v6833
        %v7610 = vpack.c.b16 %v6842, %v6834
        %v7611 = vpack.c.b16 %v6843, %v6835
        %8380 = vmatprep.subr.bf16.mxu0 %v6845
        %8381 = vmatpush1.bf16.msra.mxu0 %v6844
        %8382 = vmatprep.subr.bf16.mxu0 %v6853
        %8383 = vmatpush1.bf16.msra.mxu0 %v6852
        %8384 = vmatprep.subr.bf16.mxu0 %v6861
        %8385 = vmatpush1.bf16.msra.mxu0 %v6860
        %8386 = vmatprep.subr.bf16.mxu0 %v6869
        %8387 = vmatpush1.bf16.msra.mxu0 %v6868
        %8388 = vmatprep.subr.bf16.mxu0 %v6877
        %8389 = vmatpush1.bf16.msra.mxu0 %v6876
        %8390 = vmatprep.subr.bf16.mxu0 %v6885
        %8391 = vmatpush1.bf16.msra.mxu0 %v6884
        %8392 = vmatprep.subr.bf16.mxu0 %v6893
        %8393 = vmatpush1.bf16.msra.mxu0 %v6892
        %8394 = vmatprep.subr.bf16.mxu0 %v6901
        %8395 = vmatpush1.bf16.msra.mxu0 %v6900
        %8396 = vmatprep.subr.bf16.mxu0 %v6909
        %8397 = vmatpush1.bf16.msra.mxu0 %v6908
        %8398 = vmatprep.subr.bf16.mxu0 %v6917
        %8399 = vmatpush1.bf16.msra.mxu0 %v6916
        %8400 = vmatprep.subr.bf16.mxu0 %v6925
        %8401 = vmatpush1.bf16.msra.mxu0 %v6924
        %8402 = vmatprep.subr.bf16.mxu0 %v6933
        %8403 = vmatpush1.bf16.msra.mxu0 %v6932
        %8404 = vmatprep.subr.bf16.mxu0 %v6941
        %8405 = vmatpush1.bf16.msra.mxu0 %v6940
        %8406 = vmatprep.subr.bf16.mxu0 %v6949
        %8407 = vmatpush1.bf16.msra.mxu0 %v6948
        %8408 = vmatprep.subr.bf16.mxu0 %v6957
        %8409 = vmatpush1.bf16.msra.mxu0 %v6956
        %8410 = vmatprep.subr.bf16.mxu0 %v6965
        %8411 = vmatpush1.bf16.msra.mxu0 %v6964
        %8412 = vmatprep.mubr.bf16.mxu0 %v3635
        %8413 = vmatmul.mubr.bf16.gmra.mrb[0].mxu0 %v3634
        %v8414 = vpop.f32.mrb[0].mxu0
        %v8415 = vadd.f32 %v4503, %v8414
        %v8416 = vpop.f32.mrb[0].mxu0
        %v8417 = vadd.f32 %v4507, %v8416
        %v8418 = vpop.f32.mrb[0].mxu0
        %v8419 = vadd.f32 %v4503, %v8418
        %v8420 = vpop.f32.mrb[0].mxu0
        %v8421 = vadd.f32 %v4507, %v8420
        %8422 = vdwg.mxu0
        %8423 = vmatprep.subr.bf16.mxu0 %v6973
        %8424 = vmatpush1.bf16.msra.mxu0 %v6972
        %8425 = vmatprep.subr.bf16.mxu0 %v6981
        %8426 = vmatpush1.bf16.msra.mxu0 %v6980
        %8427 = vmatprep.subr.bf16.mxu0 %v6989
        %8428 = vmatpush1.bf16.msra.mxu0 %v6988
        %8429 = vmatprep.subr.bf16.mxu0 %v6997
        %8430 = vmatpush1.bf16.msra.mxu0 %v6996
        %8431 = vmatprep.subr.bf16.mxu0 %v7005
        %8432 = vmatpush1.bf16.msra.mxu0 %v7004
        %8433 = vmatprep.subr.bf16.mxu0 %v7013
        %8434 = vmatpush1.bf16.msra.mxu0 %v7012
        %8435 = vmatprep.subr.bf16.mxu0 %v7021
        %8436 = vmatpush1.bf16.msra.mxu0 %v7020
        %8437 = vmatprep.subr.bf16.mxu0 %v7029
        %8438 = vmatpush1.bf16.msra.mxu0 %v7028
        %8439 = vmatprep.subr.bf16.mxu0 %v7037
        %8440 = vmatpush1.bf16.msra.mxu0 %v7036
        %8441 = vmatprep.subr.bf16.mxu0 %v7045
        %8442 = vmatpush1.bf16.msra.mxu0 %v7044
        %8443 = vmatprep.subr.bf16.mxu0 %v7053
        %8444 = vmatpush1.bf16.msra.mxu0 %v7052
        %8445 = vmatprep.subr.bf16.mxu0 %v7061
        %8446 = vmatpush1.bf16.msra.mxu0 %v7060
        %8447 = vmatprep.subr.bf16.mxu0 %v7069
        %8448 = vmatpush1.bf16.msra.mxu0 %v7068
        %8449 = vmatprep.subr.bf16.mxu0 %v7077
        %8450 = vmatpush1.bf16.msra.mxu0 %v7076
        %8451 = vmatprep.subr.bf16.mxu0 %v7085
        %8452 = vmatpush1.bf16.msra.mxu0 %v7084
        %8453 = vmatprep.subr.bf16.mxu0 %v7093
        %8454 = vmatpush1.bf16.msra.mxu0 %v7092
        %8455 = vmatprep.mubr.bf16.mxu0 %v3637
        %8456 = vmatmul.mubr.bf16.gmra.mrb[0].mxu0 %v3636
        %v8457 = vpop.f32.mrb[0].mxu0
        %v8458 = vadd.f32 %v8415, %v8457
        %v8459 = vpop.f32.mrb[0].mxu0
        %v8460 = vadd.f32 %v8417, %v8459
        %v8461 = vpop.f32.mrb[0].mxu0
        %v8462 = vadd.f32 %v8419, %v8461
        %v8463 = vpop.f32.mrb[0].mxu0
        %v8464 = vadd.f32 %v8421, %v8463
        %8465 = vdwg.mxu0
        %8466 = vmatprep.subr.bf16.mxu0 %v7101
        %8467 = vmatpush1.bf16.msra.mxu0 %v7100
        %8468 = vmatprep.subr.bf16.mxu0 %v7109
        %8469 = vmatpush1.bf16.msra.mxu0 %v7108
        %8470 = vmatprep.subr.bf16.mxu0 %v7117
        %8471 = vmatpush1.bf16.msra.mxu0 %v7116
        %8472 = vmatprep.subr.bf16.mxu0 %v7125
        %8473 = vmatpush1.bf16.msra.mxu0 %v7124
        %8474 = vmatprep.subr.bf16.mxu0 %v7133
        %8475 = vmatpush1.bf16.msra.mxu0 %v7132
        %8476 = vmatprep.subr.bf16.mxu0 %v7141
        %8477 = vmatpush1.bf16.msra.mxu0 %v7140
        %8478 = vmatprep.subr.bf16.mxu0 %v7149
        %8479 = vmatpush1.bf16.msra.mxu0 %v7148
        %8480 = vmatprep.subr.bf16.mxu0 %v7157
        %8481 = vmatpush1.bf16.msra.mxu0 %v7156
        %8482 = vmatprep.subr.bf16.mxu0 %v7165
        %8483 = vmatpush1.bf16.msra.mxu0 %v7164
        %8484 = vmatprep.subr.bf16.mxu0 %v7173
        %8485 = vmatpush1.bf16.msra.mxu0 %v7172
        %8486 = vmatprep.subr.bf16.mxu0 %v7181
        %8487 = vmatpush1.bf16.msra.mxu0 %v7180
        %8488 = vmatprep.subr.bf16.mxu0 %v7189
        %8489 = vmatpush1.bf16.msra.mxu0 %v7188
        %8490 = vmatprep.subr.bf16.mxu0 %v7197
        %8491 = vmatpush1.bf16.msra.mxu0 %v7196
        %8492 = vmatprep.subr.bf16.mxu0 %v7205
        %8493 = vmatpush1.bf16.msra.mxu0 %v7204
        %8494 = vmatprep.subr.bf16.mxu0 %v7213
        %8495 = vmatpush1.bf16.msra.mxu0 %v7212
        %8496 = vmatprep.subr.bf16.mxu0 %v7221
        %8497 = vmatpush1.bf16.msra.mxu0 %v7220
        %8498 = vmatprep.mubr.bf16.mxu0 %v3675
        %8499 = vmatmul.mubr.bf16.gmra.mrb[0].mxu0 %v3663
        %v8500 = vpop.f32.mrb[0].mxu0
        %v8501 = vadd.f32 %v8458, %v8500
        %v8502 = vpop.f32.mrb[0].mxu0
        %v8503 = vadd.f32 %v8460, %v8502
        %v8504 = vpop.f32.mrb[0].mxu0
        %v8505 = vadd.f32 %v8462, %v8504
        %v8506 = vpop.f32.mrb[0].mxu0
        %v8507 = vadd.f32 %v8464, %v8506
        %8508 = vdwg.mxu0
        %8509 = vmatprep.subr.bf16.mxu0 %v7229
        %8510 = vmatpush1.bf16.msra.mxu0 %v7228
        %8511 = vmatprep.subr.bf16.mxu0 %v7237
        %8512 = vmatpush1.bf16.msra.mxu0 %v7236
        %8513 = vmatprep.subr.bf16.mxu0 %v7245
        %8514 = vmatpush1.bf16.msra.mxu0 %v7244
        %8515 = vmatprep.subr.bf16.mxu0 %v7253
        %8516 = vmatpush1.bf16.msra.mxu0 %v7252
        %8517 = vmatprep.subr.bf16.mxu0 %v7261
        %8518 = vmatpush1.bf16.msra.mxu0 %v7260
        %8519 = vmatprep.subr.bf16.mxu0 %v7269
        %8520 = vmatpush1.bf16.msra.mxu0 %v7268
        %8521 = vmatprep.subr.bf16.mxu0 %v7277
        %8522 = vmatpush1.bf16.msra.mxu0 %v7276
        %8523 = vmatprep.subr.bf16.mxu0 %v7285
        %8524 = vmatpush1.bf16.msra.mxu0 %v7284
        %8525 = vmatprep.subr.bf16.mxu0 %v7293
        %8526 = vmatpush1.bf16.msra.mxu0 %v7292
        %8527 = vmatprep.subr.bf16.mxu0 %v7301
        %8528 = vmatpush1.bf16.msra.mxu0 %v7300
        %8529 = vmatprep.subr.bf16.mxu0 %v7309
        %8530 = vmatpush1.bf16.msra.mxu0 %v7308
        %8531 = vmatprep.subr.bf16.mxu0 %v7317
        %8532 = vmatpush1.bf16.msra.mxu0 %v7316
        %8533 = vmatprep.subr.bf16.mxu0 %v7325
        %8534 = vmatpush1.bf16.msra.mxu0 %v7324
        %8535 = vmatprep.subr.bf16.mxu0 %v7333
        %8536 = vmatpush1.bf16.msra.mxu0 %v7332
        %8537 = vmatprep.subr.bf16.mxu0 %v7341
        %8538 = vmatpush1.bf16.msra.mxu0 %v7340
        %8539 = vmatprep.subr.bf16.mxu0 %v7349
        %8540 = vmatpush1.bf16.msra.mxu0 %v7348
        %8541 = vmatprep.mubr.bf16.mxu0 %v3699
        %8542 = vmatmul.mubr.bf16.gmra.mrb[0].mxu0 %v3687
        %v8543 = vpop.f32.mrb[0].mxu0
        %v8544 = vadd.f32 %v8501, %v8543
        %v8545 = vpop.f32.mrb[0].mxu0
        %v8546 = vadd.f32 %v8503, %v8545
        %v8547 = vpop.f32.mrb[0].mxu0
        %v8548 = vadd.f32 %v8505, %v8547
        %v8549 = vpop.f32.mrb[0].mxu0
        %v8550 = vadd.f32 %v8507, %v8549
        %8551 = vdwg.mxu0
        %8552 = vmatprep.subr.bf16.mxu0 %v7357
        %8553 = vmatpush1.bf16.msra.mxu0 %v7356
        %8554 = vmatprep.subr.bf16.mxu0 %v7365
        %8555 = vmatpush1.bf16.msra.mxu0 %v7364
        %8556 = vmatprep.subr.bf16.mxu0 %v7373
        %8557 = vmatpush1.bf16.msra.mxu0 %v7372
        %8558 = vmatprep.subr.bf16.mxu0 %v7381
        %8559 = vmatpush1.bf16.msra.mxu0 %v7380
        %8560 = vmatprep.subr.bf16.mxu0 %v7389
        %8561 = vmatpush1.bf16.msra.mxu0 %v7388
        %8562 = vmatprep.subr.bf16.mxu0 %v7397
        %8563 = vmatpush1.bf16.msra.mxu0 %v7396
        %8564 = vmatprep.subr.bf16.mxu0 %v7405
        %8565 = vmatpush1.bf16.msra.mxu0 %v7404
        %8566 = vmatprep.subr.bf16.mxu0 %v7413
        %8567 = vmatpush1.bf16.msra.mxu0 %v7412
        %8568 = vmatprep.subr.bf16.mxu0 %v7421
        %8569 = vmatpush1.bf16.msra.mxu0 %v7420
        %8570 = vmatprep.subr.bf16.mxu0 %v7429
        %8571 = vmatpush1.bf16.msra.mxu0 %v7428
        %8572 = vmatprep.subr.bf16.mxu0 %v7437
        %8573 = vmatpush1.bf16.msra.mxu0 %v7436
        %8574 = vmatprep.subr.bf16.mxu0 %v7445
        %8575 = vmatpush1.bf16.msra.mxu0 %v7444
        %8576 = vmatprep.subr.bf16.mxu0 %v7453
        %8577 = vmatpush1.bf16.msra.mxu0 %v7452
        %8578 = vmatprep.subr.bf16.mxu0 %v7461
        %8579 = vmatpush1.bf16.msra.mxu0 %v7460
        %8580 = vmatprep.subr.bf16.mxu0 %v7469
        %8581 = vmatpush1.bf16.msra.mxu0 %v7468
        %8582 = vmatprep.subr.bf16.mxu0 %v7477
        %8583 = vmatpush1.bf16.msra.mxu0 %v7476
        %8584 = vmatprep.mubr.bf16.mxu0 %v3719
        %8585 = vmatmul.mubr.bf16.gmra.mrb[0].mxu0 %v3716
        %v8586 = vpop.f32.mrb[0].mxu0
        %v8587 = vadd.f32 %v8544, %v8586
        %v8588 = vpop.f32.mrb[0].mxu0
        %v8589 = vadd.f32 %v8546, %v8588
        %v8590 = vpop.f32.mrb[0].mxu0
        %v8591 = vadd.f32 %v8548, %v8590
        %v8592 = vpop.f32.mrb[0].mxu0
        %v8593 = vadd.f32 %v8550, %v8592
        %8594 = vdwg.mxu0
        %8595 = vmatprep.subr.bf16.mxu0 %v7485
        %8596 = vmatpush1.bf16.msra.mxu0 %v7484
        %8597 = vmatprep.subr.bf16.mxu0 %v7493
        %8598 = vmatpush1.bf16.msra.mxu0 %v7492
        %8599 = vmatprep.subr.bf16.mxu0 %v7501
        %8600 = vmatpush1.bf16.msra.mxu0 %v7500
        %8601 = vmatprep.subr.bf16.mxu0 %v7509
        %8602 = vmatpush1.bf16.msra.mxu0 %v7508
        %8603 = vmatprep.subr.bf16.mxu0 %v7517
        %8604 = vmatpush1.bf16.msra.mxu0 %v7516
        %8605 = vmatprep.subr.bf16.mxu0 %v7525
        %8606 = vmatpush1.bf16.msra.mxu0 %v7524
        %8607 = vmatprep.subr.bf16.mxu0 %v7533
        %8608 = vmatpush1.bf16.msra.mxu0 %v7532
        %8609 = vmatprep.subr.bf16.mxu0 %v7541
        %8610 = vmatpush1.bf16.msra.mxu0 %v7540
        %8611 = vmatprep.subr.bf16.mxu0 %v7549
        %8612 = vmatpush1.bf16.msra.mxu0 %v7548
        %8613 = vmatprep.subr.bf16.mxu0 %v7557
        %8614 = vmatpush1.bf16.msra.mxu0 %v7556
        %8615 = vmatprep.subr.bf16.mxu0 %v7565
        %8616 = vmatpush1.bf16.msra.mxu0 %v7564
        %8617 = vmatprep.subr.bf16.mxu0 %v7573
        %8618 = vmatpush1.bf16.msra.mxu0 %v7572
        %8619 = vmatprep.subr.bf16.mxu0 %v7581
        %8620 = vmatpush1.bf16.msra.mxu0 %v7580
        %8621 = vmatprep.subr.bf16.mxu0 %v7589
        %8622 = vmatpush1.bf16.msra.mxu0 %v7588
        %8623 = vmatprep.subr.bf16.mxu0 %v7597
        %8624 = vmatpush1.bf16.msra.mxu0 %v7596
        %8625 = vmatprep.subr.bf16.mxu0 %v7605
        %8626 = vmatpush1.bf16.msra.mxu0 %v7604
        %8627 = vmatprep.mubr.bf16.mxu0 %v3725
        %8628 = vmatmul.mubr.bf16.gmra.mrb[0].mxu0 %v3722
        %v8629 = vpop.f32.mrb[0].mxu0
        %v8630 = vadd.f32 %v8587, %v8629
        %v8631 = vpop.f32.mrb[0].mxu0
        %v8632 = vadd.f32 %v8589, %v8631
        %v8633 = vpop.f32.mrb[0].mxu0
        %v8634 = vadd.f32 %v8591, %v8633
        %v8635 = vpop.f32.mrb[0].mxu0
        %v8636 = vadd.f32 %v8593, %v8635
        %8637 = vdwg.mxu0
        %8638 = vmatprep.subr.bf16.mxu0 %v6847
        %8639 = vmatpush1.bf16.msra.mxu0 %v6846
        %8640 = vmatprep.subr.bf16.mxu0 %v6855
        %8641 = vmatpush1.bf16.msra.mxu0 %v6854
        %8642 = vmatprep.subr.bf16.mxu0 %v6863
        %8643 = vmatpush1.bf16.msra.mxu0 %v6862
        %8644 = vmatprep.subr.bf16.mxu0 %v6871
        %8645 = vmatpush1.bf16.msra.mxu0 %v6870
        %8646 = vmatprep.subr.bf16.mxu0 %v6879
        %8647 = vmatpush1.bf16.msra.mxu0 %v6878
        %8648 = vmatprep.subr.bf16.mxu0 %v6887
        %8649 = vmatpush1.bf16.msra.mxu0 %v6886
        %8650 = vmatprep.subr.bf16.mxu0 %v6895
        %8651 = vmatpush1.bf16.msra.mxu0 %v6894
        %8652 = vmatprep.subr.bf16.mxu0 %v6903
        %8653 = vmatpush1.bf16.msra.mxu0 %v6902
        %8654 = vmatprep.subr.bf16.mxu0 %v6911
        %8655 = vmatpush1.bf16.msra.mxu0 %v6910
        %8656 = vmatprep.subr.bf16.mxu0 %v6919
        %8657 = vmatpush1.bf16.msra.mxu0 %v6918
        %8658 = vmatprep.subr.bf16.mxu0 %v6927
        %8659 = vmatpush1.bf16.msra.mxu0 %v6926
        %8660 = vmatprep.subr.bf16.mxu0 %v6935
        %8661 = vmatpush1.bf16.msra.mxu0 %v6934
        %8662 = vmatprep.subr.bf16.mxu0 %v6943
        %8663 = vmatpush1.bf16.msra.mxu0 %v6942
        %8664 = vmatprep.subr.bf16.mxu0 %v6951
        %8665 = vmatpush1.bf16.msra.mxu0 %v6950
        %8666 = vmatprep.subr.bf16.mxu0 %v6959
        %8667 = vmatpush1.bf16.msra.mxu0 %v6958
        %8668 = vmatprep.subr.bf16.mxu0 %v6967
        %8669 = vmatpush1.bf16.msra.mxu0 %v6966
        %8670 = vmatprep.mubr.bf16.mxu0 %v3635
        %8671 = vmatmul.mubr.bf16.gmra.mrb[0].mxu0 %v3634
        %v8672 = vpop.f32.mrb[0].mxu0
        %v8673 = vadd.f32 %v4511, %v8672
        %v8674 = vpop.f32.mrb[0].mxu0
        %v8675 = vadd.f32 %v4515, %v8674
        %v8676 = vpop.f32.mrb[0].mxu0
        %v8677 = vadd.f32 %v4511, %v8676
        %v8678 = vpop.f32.mrb[0].mxu0
        %v8679 = vadd.f32 %v4515, %v8678
        %8680 = vdwg.mxu0
        %8681 = vmatprep.subr.bf16.mxu0 %v6975
        %8682 = vmatpush1.bf16.msra.mxu0 %v6974
        %8683 = vmatprep.subr.bf16.mxu0 %v6983
        %8684 = vmatpush1.bf16.msra.mxu0 %v6982
        %8685 = vmatprep.subr.bf16.mxu0 %v6991
        %8686 = vmatpush1.bf16.msra.mxu0 %v6990
        %8687 = vmatprep.subr.bf16.mxu0 %v6999
        %8688 = vmatpush1.bf16.msra.mxu0 %v6998
        %8689 = vmatprep.subr.bf16.mxu0 %v7007
        %8690 = vmatpush1.bf16.msra.mxu0 %v7006
        %8691 = vmatprep.subr.bf16.mxu0 %v7015
        %8692 = vmatpush1.bf16.msra.mxu0 %v7014
        %8693 = vmatprep.subr.bf16.mxu0 %v7023
        %8694 = vmatpush1.bf16.msra.mxu0 %v7022
        %8695 = vmatprep.subr.bf16.mxu0 %v7031
        %8696 = vmatpush1.bf16.msra.mxu0 %v7030
        %8697 = vmatprep.subr.bf16.mxu0 %v7039
        %8698 = vmatpush1.bf16.msra.mxu0 %v7038
        %8699 = vmatprep.subr.bf16.mxu0 %v7047
        %8700 = vmatpush1.bf16.msra.mxu0 %v7046
        %8701 = vmatprep.subr.bf16.mxu0 %v7055
        %8702 = vmatpush1.bf16.msra.mxu0 %v7054
        %8703 = vmatprep.subr.bf16.mxu0 %v7063
        %8704 = vmatpush1.bf16.msra.mxu0 %v7062
        %8705 = vmatprep.subr.bf16.mxu0 %v7071
        %8706 = vmatpush1.bf16.msra.mxu0 %v7070
        %8707 = vmatprep.subr.bf16.mxu0 %v7079
        %8708 = vmatpush1.bf16.msra.mxu0 %v7078
        %8709 = vmatprep.subr.bf16.mxu0 %v7087
        %8710 = vmatpush1.bf16.msra.mxu0 %v7086
        %8711 = vmatprep.subr.bf16.mxu0 %v7095
        %8712 = vmatpush1.bf16.msra.mxu0 %v7094
        %8713 = vmatprep.mubr.bf16.mxu0 %v3637
        %8714 = vmatmul.mubr.bf16.gmra.mrb[0].mxu0 %v3636
        %v8715 = vpop.f32.mrb[0].mxu0
        %v8716 = vadd.f32 %v8673, %v8715
        %v8717 = vpop.f32.mrb[0].mxu0
        %v8718 = vadd.f32 %v8675, %v8717
        %v8719 = vpop.f32.mrb[0].mxu0
        %v8720 = vadd.f32 %v8677, %v8719
        %v8721 = vpop.f32.mrb[0].mxu0
        %v8722 = vadd.f32 %v8679, %v8721
        %8723 = vdwg.mxu0
        %8724 = vmatprep.subr.bf16.mxu0 %v7103
        %8725 = vmatpush1.bf16.msra.mxu0 %v7102
        %8726 = vmatprep.subr.bf16.mxu0 %v7111
        %8727 = vmatpush1.bf16.msra.mxu0 %v7110
        %8728 = vmatprep.subr.bf16.mxu0 %v7119
        %8729 = vmatpush1.bf16.msra.mxu0 %v7118
        %8730 = vmatprep.subr.bf16.mxu0 %v7127
        %8731 = vmatpush1.bf16.msra.mxu0 %v7126
        %8732 = vmatprep.subr.bf16.mxu0 %v7135
        %8733 = vmatpush1.bf16.msra.mxu0 %v7134
        %8734 = vmatprep.subr.bf16.mxu0 %v7143
        %8735 = vmatpush1.bf16.msra.mxu0 %v7142
        %8736 = vmatprep.subr.bf16.mxu0 %v7151
        %8737 = vmatpush1.bf16.msra.mxu0 %v7150
        %8738 = vmatprep.subr.bf16.mxu0 %v7159
        %8739 = vmatpush1.bf16.msra.mxu0 %v7158
        %8740 = vmatprep.subr.bf16.mxu0 %v7167
        %8741 = vmatpush1.bf16.msra.mxu0 %v7166
        %8742 = vmatprep.subr.bf16.mxu0 %v7175
        %8743 = vmatpush1.bf16.msra.mxu0 %v7174
        %8744 = vmatprep.subr.bf16.mxu0 %v7183
        %8745 = vmatpush1.bf16.msra.mxu0 %v7182
        %8746 = vmatprep.subr.bf16.mxu0 %v7191
        %8747 = vmatpush1.bf16.msra.mxu0 %v7190
        %8748 = vmatprep.subr.bf16.mxu0 %v7199
        %8749 = vmatpush1.bf16.msra.mxu0 %v7198
        %8750 = vmatprep.subr.bf16.mxu0 %v7207
        %8751 = vmatpush1.bf16.msra.mxu0 %v7206
        %8752 = vmatprep.subr.bf16.mxu0 %v7215
        %8753 = vmatpush1.bf16.msra.mxu0 %v7214
        %8754 = vmatprep.subr.bf16.mxu0 %v7223
        %8755 = vmatpush1.bf16.msra.mxu0 %v7222
        %8756 = vmatprep.mubr.bf16.mxu0 %v3675
        %8757 = vmatmul.mubr.bf16.gmra.mrb[0].mxu0 %v3663
        %v8758 = vpop.f32.mrb[0].mxu0
        %v8759 = vadd.f32 %v8716, %v8758
        %v8760 = vpop.f32.mrb[0].mxu0
        %v8761 = vadd.f32 %v8718, %v8760
        %v8762 = vpop.f32.mrb[0].mxu0
        %v8763 = vadd.f32 %v8720, %v8762
        %v8764 = vpop.f32.mrb[0].mxu0
        %v8765 = vadd.f32 %v8722, %v8764
        %8766 = vdwg.mxu0
        %8767 = vmatprep.subr.bf16.mxu0 %v7231
        %8768 = vmatpush1.bf16.msra.mxu0 %v7230
        %8769 = vmatprep.subr.bf16.mxu0 %v7239
        %8770 = vmatpush1.bf16.msra.mxu0 %v7238
        %8771 = vmatprep.subr.bf16.mxu0 %v7247
        %8772 = vmatpush1.bf16.msra.mxu0 %v7246
        %8773 = vmatprep.subr.bf16.mxu0 %v7255
        %8774 = vmatpush1.bf16.msra.mxu0 %v7254
        %8775 = vmatprep.subr.bf16.mxu0 %v7263
        %8776 = vmatpush1.bf16.msra.mxu0 %v7262
        %8777 = vmatprep.subr.bf16.mxu0 %v7271
        %8778 = vmatpush1.bf16.msra.mxu0 %v7270
        %8779 = vmatprep.subr.bf16.mxu0 %v7279
        %8780 = vmatpush1.bf16.msra.mxu0 %v7278
        %8781 = vmatprep.subr.bf16.mxu0 %v7287
        %8782 = vmatpush1.bf16.msra.mxu0 %v7286
        %8783 = vmatprep.subr.bf16.mxu0 %v7295
        %8784 = vmatpush1.bf16.msra.mxu0 %v7294
        %8785 = vmatprep.subr.bf16.mxu0 %v7303
        %8786 = vmatpush1.bf16.msra.mxu0 %v7302
        %8787 = vmatprep.subr.bf16.mxu0 %v7311
        %8788 = vmatpush1.bf16.msra.mxu0 %v7310
        %8789 = vmatprep.subr.bf16.mxu0 %v7319
        %8790 = vmatpush1.bf16.msra.mxu0 %v7318
        %8791 = vmatprep.subr.bf16.mxu0 %v7327
        %8792 = vmatpush1.bf16.msra.mxu0 %v7326
        %8793 = vmatprep.subr.bf16.mxu0 %v7335
        %8794 = vmatpush1.bf16.msra.mxu0 %v7334
        %8795 = vmatprep.subr.bf16.mxu0 %v7343
        %8796 = vmatpush1.bf16.msra.mxu0 %v7342
        %8797 = vmatprep.subr.bf16.mxu0 %v7351
        %8798 = vmatpush1.bf16.msra.mxu0 %v7350
        %8799 = vmatprep.mubr.bf16.mxu0 %v3699
        %8800 = vmatmul.mubr.bf16.gmra.mrb[0].mxu0 %v3687
        %v8801 = vpop.f32.mrb[0].mxu0
        %v8802 = vadd.f32 %v8759, %v8801
        %v8803 = vpop.f32.mrb[0].mxu0
        %v8804 = vadd.f32 %v8761, %v8803
        %v8805 = vpop.f32.mrb[0].mxu0
        %v8806 = vadd.f32 %v8763, %v8805
        %v8807 = vpop.f32.mrb[0].mxu0
        %v8808 = vadd.f32 %v8765, %v8807
        %8809 = vdwg.mxu0
        %8810 = vmatprep.subr.bf16.mxu0 %v7359
        %8811 = vmatpush1.bf16.msra.mxu0 %v7358
        %8812 = vmatprep.subr.bf16.mxu0 %v7367
        %8813 = vmatpush1.bf16.msra.mxu0 %v7366
        %8814 = vmatprep.subr.bf16.mxu0 %v7375
        %8815 = vmatpush1.bf16.msra.mxu0 %v7374
        %8816 = vmatprep.subr.bf16.mxu0 %v7383
        %8817 = vmatpush1.bf16.msra.mxu0 %v7382
        %8818 = vmatprep.subr.bf16.mxu0 %v7391
        %8819 = vmatpush1.bf16.msra.mxu0 %v7390
        %8820 = vmatprep.subr.bf16.mxu0 %v7399
        %8821 = vmatpush1.bf16.msra.mxu0 %v7398
        %8822 = vmatprep.subr.bf16.mxu0 %v7407
        %8823 = vmatpush1.bf16.msra.mxu0 %v7406
        %8824 = vmatprep.subr.bf16.mxu0 %v7415
        %8825 = vmatpush1.bf16.msra.mxu0 %v7414
        %8826 = vmatprep.subr.bf16.mxu0 %v7423
        %8827 = vmatpush1.bf16.msra.mxu0 %v7422
        %8828 = vmatprep.subr.bf16.mxu0 %v7431
        %8829 = vmatpush1.bf16.msra.mxu0 %v7430
        %8830 = vmatprep.subr.bf16.mxu0 %v7439
        %8831 = vmatpush1.bf16.msra.mxu0 %v7438
        %8832 = vmatprep.subr.bf16.mxu0 %v7447
        %8833 = vmatpush1.bf16.msra.mxu0 %v7446
        %8834 = vmatprep.subr.bf16.mxu0 %v7455
        %8835 = vmatpush1.bf16.msra.mxu0 %v7454
        %8836 = vmatprep.subr.bf16.mxu0 %v7463
        %8837 = vmatpush1.bf16.msra.mxu0 %v7462
        %8838 = vmatprep.subr.bf16.mxu0 %v7471
        %8839 = vmatpush1.bf16.msra.mxu0 %v7470
        %8840 = vmatprep.subr.bf16.mxu0 %v7479
        %8841 = vmatpush1.bf16.msra.mxu0 %v7478
        %8842 = vmatprep.mubr.bf16.mxu0 %v3719
        %8843 = vmatmul.mubr.bf16.gmra.mrb[0].mxu0 %v3716
        %v8844 = vpop.f32.mrb[0].mxu0
        %v8845 = vadd.f32 %v8802, %v8844
        %v8846 = vpop.f32.mrb[0].mxu0
        %v8847 = vadd.f32 %v8804, %v8846
        %v8848 = vpop.f32.mrb[0].mxu0
        %v8849 = vadd.f32 %v8806, %v8848
        %v8850 = vpop.f32.mrb[0].mxu0
        %v8851 = vadd.f32 %v8808, %v8850
        %8852 = vdwg.mxu0
        %8853 = vmatprep.subr.bf16.mxu0 %v7487
        %8854 = vmatpush1.bf16.msra.mxu0 %v7486
        %8855 = vmatprep.subr.bf16.mxu0 %v7495
        %8856 = vmatpush1.bf16.msra.mxu0 %v7494
        %8857 = vmatprep.subr.bf16.mxu0 %v7503
        %8858 = vmatpush1.bf16.msra.mxu0 %v7502
        %8859 = vmatprep.subr.bf16.mxu0 %v7511
        %8860 = vmatpush1.bf16.msra.mxu0 %v7510
        %8861 = vmatprep.subr.bf16.mxu0 %v7519
        %8862 = vmatpush1.bf16.msra.mxu0 %v7518
        %8863 = vmatprep.subr.bf16.mxu0 %v7527
        %8864 = vmatpush1.bf16.msra.mxu0 %v7526
        %8865 = vmatprep.subr.bf16.mxu0 %v7535
        %8866 = vmatpush1.bf16.msra.mxu0 %v7534
        %8867 = vmatprep.subr.bf16.mxu0 %v7543
        %8868 = vmatpush1.bf16.msra.mxu0 %v7542
        %8869 = vmatprep.subr.bf16.mxu0 %v7551
        %8870 = vmatpush1.bf16.msra.mxu0 %v7550
        %8871 = vmatprep.subr.bf16.mxu0 %v7559
        %8872 = vmatpush1.bf16.msra.mxu0 %v7558
        %8873 = vmatprep.subr.bf16.mxu0 %v7567
        %8874 = vmatpush1.bf16.msra.mxu0 %v7566
        %8875 = vmatprep.subr.bf16.mxu0 %v7575
        %8876 = vmatpush1.bf16.msra.mxu0 %v7574
        %8877 = vmatprep.subr.bf16.mxu0 %v7583
        %8878 = vmatpush1.bf16.msra.mxu0 %v7582
        %8879 = vmatprep.subr.bf16.mxu0 %v7591
        %8880 = vmatpush1.bf16.msra.mxu0 %v7590
        %8881 = vmatprep.subr.bf16.mxu0 %v7599
        %8882 = vmatpush1.bf16.msra.mxu0 %v7598
        %8883 = vmatprep.subr.bf16.mxu0 %v7607
        %8884 = vmatpush1.bf16.msra.mxu0 %v7606
        %8885 = vmatprep.mubr.bf16.mxu0 %v3725
        %8886 = vmatmul.mubr.bf16.gmra.mrb[0].mxu0 %v3722
        %v8887 = vpop.f32.mrb[0].mxu0
        %v8888 = vadd.f32 %v8845, %v8887
        %v8889 = vpop.f32.mrb[0].mxu0
        %v8890 = vadd.f32 %v8847, %v8889
        %v8891 = vpop.f32.mrb[0].mxu0
        %v8892 = vadd.f32 %v8849, %v8891
        %v8893 = vpop.f32.mrb[0].mxu0
        %v8894 = vadd.f32 %v8851, %v8893
        %8895 = vdwg.mxu0
        %8896 = vmatprep.subr.bf16.mxu0 %v6849
        %8897 = vmatpush1.bf16.msra.mxu0 %v6848
        %8898 = vmatprep.subr.bf16.mxu0 %v6857
        %8899 = vmatpush1.bf16.msra.mxu0 %v6856
        %8900 = vmatprep.subr.bf16.mxu0 %v6865
        %8901 = vmatpush1.bf16.msra.mxu0 %v6864
        %8902 = vmatprep.subr.bf16.mxu0 %v6873
        %8903 = vmatpush1.bf16.msra.mxu0 %v6872
        %8904 = vmatprep.subr.bf16.mxu0 %v6881
        %8905 = vmatpush1.bf16.msra.mxu0 %v6880
        %8906 = vmatprep.subr.bf16.mxu0 %v6889
        %8907 = vmatpush1.bf16.msra.mxu0 %v6888
        %8908 = vmatprep.subr.bf16.mxu0 %v6897
        %8909 = vmatpush1.bf16.msra.mxu0 %v6896
        %8910 = vmatprep.subr.bf16.mxu0 %v6905
        %8911 = vmatpush1.bf16.msra.mxu0 %v6904
        %8912 = vmatprep.subr.bf16.mxu0 %v6913
        %8913 = vmatpush1.bf16.msra.mxu0 %v6912
        %8914 = vmatprep.subr.bf16.mxu0 %v6921
        %8915 = vmatpush1.bf16.msra.mxu0 %v6920
        %8916 = vmatprep.subr.bf16.mxu0 %v6929
        %8917 = vmatpush1.bf16.msra.mxu0 %v6928
        %8918 = vmatprep.subr.bf16.mxu0 %v6937
        %8919 = vmatpush1.bf16.msra.mxu0 %v6936
        %8920 = vmatprep.subr.bf16.mxu0 %v6945
        %8921 = vmatpush1.bf16.msra.mxu0 %v6944
        %8922 = vmatprep.subr.bf16.mxu0 %v6953
        %8923 = vmatpush1.bf16.msra.mxu0 %v6952
        %8924 = vmatprep.subr.bf16.mxu0 %v6961
        %8925 = vmatpush1.bf16.msra.mxu0 %v6960
        %8926 = vmatprep.subr.bf16.mxu0 %v6969
        %8927 = vmatpush1.bf16.msra.mxu0 %v6968
        %8928 = vmatprep.mubr.bf16.mxu0 %v3635
        %8929 = vmatmul.mubr.bf16.gmra.mrb[0].mxu0 %v3634
        %v8930 = vpop.f32.mrb[0].mxu0
        %v8931 = vadd.f32 %v4519, %v8930
        %v8932 = vpop.f32.mrb[0].mxu0
        %v8933 = vadd.f32 %v4523, %v8932
        %v8934 = vpop.f32.mrb[0].mxu0
        %v8935 = vadd.f32 %v4519, %v8934
        %v8936 = vpop.f32.mrb[0].mxu0
        %v8937 = vadd.f32 %v4523, %v8936
        %8938 = vdwg.mxu0
        %8939 = vmatprep.subr.bf16.mxu0 %v6977
        %8940 = vmatpush1.bf16.msra.mxu0 %v6976
        %8941 = vmatprep.subr.bf16.mxu0 %v6985
        %8942 = vmatpush1.bf16.msra.mxu0 %v6984
        %8943 = vmatprep.subr.bf16.mxu0 %v6993
        %8944 = vmatpush1.bf16.msra.mxu0 %v6992
        %8945 = vmatprep.subr.bf16.mxu0 %v7001
        %8946 = vmatpush1.bf16.msra.mxu0 %v7000
        %8947 = vmatprep.subr.bf16.mxu0 %v7009
        %8948 = vmatpush1.bf16.msra.mxu0 %v7008
        %8949 = vmatprep.subr.bf16.mxu0 %v7017
        %8950 = vmatpush1.bf16.msra.mxu0 %v7016
        %8951 = vmatprep.subr.bf16.mxu0 %v7025
        %8952 = vmatpush1.bf16.msra.mxu0 %v7024
        %8953 = vmatprep.subr.bf16.mxu0 %v7033
        %8954 = vmatpush1.bf16.msra.mxu0 %v7032
        %8955 = vmatprep.subr.bf16.mxu0 %v7041
        %8956 = vmatpush1.bf16.msra.mxu0 %v7040
        %8957 = vmatprep.subr.bf16.mxu0 %v7049
        %8958 = vmatpush1.bf16.msra.mxu0 %v7048
        %8959 = vmatprep.subr.bf16.mxu0 %v7057
        %8960 = vmatpush1.bf16.msra.mxu0 %v7056
        %8961 = vmatprep.subr.bf16.mxu0 %v7065
        %8962 = vmatpush1.bf16.msra.mxu0 %v7064
        %8963 = vmatprep.subr.bf16.mxu0 %v7073
        %8964 = vmatpush1.bf16.msra.mxu0 %v7072
        %8965 = vmatprep.subr.bf16.mxu0 %v7081
        %8966 = vmatpush1.bf16.msra.mxu0 %v7080
        %8967 = vmatprep.subr.bf16.mxu0 %v7089
        %8968 = vmatpush1.bf16.msra.mxu0 %v7088
        %8969 = vmatprep.subr.bf16.mxu0 %v7097
        %8970 = vmatpush1.bf16.msra.mxu0 %v7096
        %8971 = vmatprep.mubr.bf16.mxu0 %v3637
        %8972 = vmatmul.mubr.bf16.gmra.mrb[0].mxu0 %v3636
        %v8973 = vpop.f32.mrb[0].mxu0
        %v8974 = vadd.f32 %v8931, %v8973
        %v8975 = vpop.f32.mrb[0].mxu0
        %v8976 = vadd.f32 %v8933, %v8975
        %v8977 = vpop.f32.mrb[0].mxu0
        %v8978 = vadd.f32 %v8935, %v8977
        %v8979 = vpop.f32.mrb[0].mxu0
        %v8980 = vadd.f32 %v8937, %v8979
        %8981 = vdwg.mxu0
        %8982 = vmatprep.subr.bf16.mxu0 %v7105
        %8983 = vmatpush1.bf16.msra.mxu0 %v7104
        %8984 = vmatprep.subr.bf16.mxu0 %v7113
        %8985 = vmatpush1.bf16.msra.mxu0 %v7112
        %8986 = vmatprep.subr.bf16.mxu0 %v7121
        %8987 = vmatpush1.bf16.msra.mxu0 %v7120
        %8988 = vmatprep.subr.bf16.mxu0 %v7129
        %8989 = vmatpush1.bf16.msra.mxu0 %v7128
        %8990 = vmatprep.subr.bf16.mxu0 %v7137
        %8991 = vmatpush1.bf16.msra.mxu0 %v7136
        %8992 = vmatprep.subr.bf16.mxu0 %v7145
        %8993 = vmatpush1.bf16.msra.mxu0 %v7144
        %8994 = vmatprep.subr.bf16.mxu0 %v7153
        %8995 = vmatpush1.bf16.msra.mxu0 %v7152
        %8996 = vmatprep.subr.bf16.mxu0 %v7161
        %8997 = vmatpush1.bf16.msra.mxu0 %v7160
        %8998 = vmatprep.subr.bf16.mxu0 %v7169
        %8999 = vmatpush1.bf16.msra.mxu0 %v7168
        %9000 = vmatprep.subr.bf16.mxu0 %v7177
        %9001 = vmatpush1.bf16.msra.mxu0 %v7176
        %9002 = vmatprep.subr.bf16.mxu0 %v7185
        %9003 = vmatpush1.bf16.msra.mxu0 %v7184
        %9004 = vmatprep.subr.bf16.mxu0 %v7193
        %9005 = vmatpush1.bf16.msra.mxu0 %v7192
        %9006 = vmatprep.subr.bf16.mxu0 %v7201
        %9007 = vmatpush1.bf16.msra.mxu0 %v7200
        %9008 = vmatprep.subr.bf16.mxu0 %v7209
        %9009 = vmatpush1.bf16.msra.mxu0 %v7208
        %9010 = vmatprep.subr.bf16.mxu0 %v7217
        %9011 = vmatpush1.bf16.msra.mxu0 %v7216
        %9012 = vmatprep.subr.bf16.mxu0 %v7225
        %9013 = vmatpush1.bf16.msra.mxu0 %v7224
        %9014 = vmatprep.mubr.bf16.mxu0 %v3675
        %9015 = vmatmul.mubr.bf16.gmra.mrb[0].mxu0 %v3663
        %v9016 = vpop.f32.mrb[0].mxu0
        %v9017 = vadd.f32 %v8974, %v9016
        %v9018 = vpop.f32.mrb[0].mxu0
        %v9019 = vadd.f32 %v8976, %v9018
        %v9020 = vpop.f32.mrb[0].mxu0
        %v9021 = vadd.f32 %v8978, %v9020
        %v9022 = vpop.f32.mrb[0].mxu0
        %v9023 = vadd.f32 %v8980, %v9022
        %9024 = vdwg.mxu0
        %9025 = vmatprep.subr.bf16.mxu0 %v7233
        %9026 = vmatpush1.bf16.msra.mxu0 %v7232
        %9027 = vmatprep.subr.bf16.mxu0 %v7241
        %9028 = vmatpush1.bf16.msra.mxu0 %v7240
        %9029 = vmatprep.subr.bf16.mxu0 %v7249
        %9030 = vmatpush1.bf16.msra.mxu0 %v7248
        %9031 = vmatprep.subr.bf16.mxu0 %v7257
        %9032 = vmatpush1.bf16.msra.mxu0 %v7256
        %9033 = vmatprep.subr.bf16.mxu0 %v7265
        %9034 = vmatpush1.bf16.msra.mxu0 %v7264
        %9035 = vmatprep.subr.bf16.mxu0 %v7273
        %9036 = vmatpush1.bf16.msra.mxu0 %v7272
        %9037 = vmatprep.subr.bf16.mxu0 %v7281
        %9038 = vmatpush1.bf16.msra.mxu0 %v7280
        %9039 = vmatprep.subr.bf16.mxu0 %v7289
        %9040 = vmatpush1.bf16.msra.mxu0 %v7288
        %9041 = vmatprep.subr.bf16.mxu0 %v7297
        %9042 = vmatpush1.bf16.msra.mxu0 %v7296
        %9043 = vmatprep.subr.bf16.mxu0 %v7305
        %9044 = vmatpush1.bf16.msra.mxu0 %v7304
        %9045 = vmatprep.subr.bf16.mxu0 %v7313
        %9046 = vmatpush1.bf16.msra.mxu0 %v7312
        %9047 = vmatprep.subr.bf16.mxu0 %v7321
        %9048 = vmatpush1.bf16.msra.mxu0 %v7320
        %9049 = vmatprep.subr.bf16.mxu0 %v7329
        %9050 = vmatpush1.bf16.msra.mxu0 %v7328
        %9051 = vmatprep.subr.bf16.mxu0 %v7337
        %9052 = vmatpush1.bf16.msra.mxu0 %v7336
        %9053 = vmatprep.subr.bf16.mxu0 %v7345
        %9054 = vmatpush1.bf16.msra.mxu0 %v7344
        %9055 = vmatprep.subr.bf16.mxu0 %v7353
        %9056 = vmatpush1.bf16.msra.mxu0 %v7352
        %9057 = vmatprep.mubr.bf16.mxu0 %v3699
        %9058 = vmatmul.mubr.bf16.gmra.mrb[0].mxu0 %v3687
        %v9059 = vpop.f32.mrb[0].mxu0
        %v9060 = vadd.f32 %v9017, %v9059
        %v9061 = vpop.f32.mrb[0].mxu0
        %v9062 = vadd.f32 %v9019, %v9061
        %v9063 = vpop.f32.mrb[0].mxu0
        %v9064 = vadd.f32 %v9021, %v9063
        %v9065 = vpop.f32.mrb[0].mxu0
        %v9066 = vadd.f32 %v9023, %v9065
        %9067 = vdwg.mxu0
        %9068 = vmatprep.subr.bf16.mxu0 %v7361
        %9069 = vmatpush1.bf16.msra.mxu0 %v7360
        %9070 = vmatprep.subr.bf16.mxu0 %v7369
        %9071 = vmatpush1.bf16.msra.mxu0 %v7368
        %9072 = vmatprep.subr.bf16.mxu0 %v7377
        %9073 = vmatpush1.bf16.msra.mxu0 %v7376
        %9074 = vmatprep.subr.bf16.mxu0 %v7385
        %9075 = vmatpush1.bf16.msra.mxu0 %v7384
        %9076 = vmatprep.subr.bf16.mxu0 %v7393
        %9077 = vmatpush1.bf16.msra.mxu0 %v7392
        %9078 = vmatprep.subr.bf16.mxu0 %v7401
        %9079 = vmatpush1.bf16.msra.mxu0 %v7400
        %9080 = vmatprep.subr.bf16.mxu0 %v7409
        %9081 = vmatpush1.bf16.msra.mxu0 %v7408
        %9082 = vmatprep.subr.bf16.mxu0 %v7417
        %9083 = vmatpush1.bf16.msra.mxu0 %v7416
        %9084 = vmatprep.subr.bf16.mxu0 %v7425
        %9085 = vmatpush1.bf16.msra.mxu0 %v7424
        %9086 = vmatprep.subr.bf16.mxu0 %v7433
        %9087 = vmatpush1.bf16.msra.mxu0 %v7432
        %9088 = vmatprep.subr.bf16.mxu0 %v7441
        %9089 = vmatpush1.bf16.msra.mxu0 %v7440
        %9090 = vmatprep.subr.bf16.mxu0 %v7449
        %9091 = vmatpush1.bf16.msra.mxu0 %v7448
        %9092 = vmatprep.subr.bf16.mxu0 %v7457
        %9093 = vmatpush1.bf16.msra.mxu0 %v7456
        %9094 = vmatprep.subr.bf16.mxu0 %v7465
        %9095 = vmatpush1.bf16.msra.mxu0 %v7464
        %9096 = vmatprep.subr.bf16.mxu0 %v7473
        %9097 = vmatpush1.bf16.msra.mxu0 %v7472
        %9098 = vmatprep.subr.bf16.mxu0 %v7481
        %9099 = vmatpush1.bf16.msra.mxu0 %v7480
        %9100 = vmatprep.mubr.bf16.mxu0 %v3719
        %9101 = vmatmul.mubr.bf16.gmra.mrb[0].mxu0 %v3716
        %v9102 = vpop.f32.mrb[0].mxu0
        %v9103 = vadd.f32 %v9060, %v9102
        %v9104 = vpop.f32.mrb[0].mxu0
        %v9105 = vadd.f32 %v9062, %v9104
        %v9106 = vpop.f32.mrb[0].mxu0
        %v9107 = vadd.f32 %v9064, %v9106
        %v9108 = vpop.f32.mrb[0].mxu0
        %v9109 = vadd.f32 %v9066, %v9108
        %9110 = vdwg.mxu0
        %9111 = vmatprep.subr.bf16.mxu0 %v7489
        %9112 = vmatpush1.bf16.msra.mxu0 %v7488
        %9113 = vmatprep.subr.bf16.mxu0 %v7497
        %9114 = vmatpush1.bf16.msra.mxu0 %v7496
        %9115 = vmatprep.subr.bf16.mxu0 %v7505
        %9116 = vmatpush1.bf16.msra.mxu0 %v7504
        %9117 = vmatprep.subr.bf16.mxu0 %v7513
        %9118 = vmatpush1.bf16.msra.mxu0 %v7512
        %9119 = vmatprep.subr.bf16.mxu0 %v7521
        %9120 = vmatpush1.bf16.msra.mxu0 %v7520
        %9121 = vmatprep.subr.bf16.mxu0 %v7529
        %9122 = vmatpush1.bf16.msra.mxu0 %v7528
        %9123 = vmatprep.subr.bf16.mxu0 %v7537
        %9124 = vmatpush1.bf16.msra.mxu0 %v7536
        %9125 = vmatprep.subr.bf16.mxu0 %v7545
        %9126 = vmatpush1.bf16.msra.mxu0 %v7544
        %9127 = vmatprep.subr.bf16.mxu0 %v7553
        %9128 = vmatpush1.bf16.msra.mxu0 %v7552
        %9129 = vmatprep.subr.bf16.mxu0 %v7561
        %9130 = vmatpush1.bf16.msra.mxu0 %v7560
        %9131 = vmatprep.subr.bf16.mxu0 %v7569
        %9132 = vmatpush1.bf16.msra.mxu0 %v7568
        %9133 = vmatprep.subr.bf16.mxu0 %v7577
        %9134 = vmatpush1.bf16.msra.mxu0 %v7576
        %9135 = vmatprep.subr.bf16.mxu0 %v7585
        %9136 = vmatpush1.bf16.msra.mxu0 %v7584
        %9137 = vmatprep.subr.bf16.mxu0 %v7593
        %9138 = vmatpush1.bf16.msra.mxu0 %v7592
        %9139 = vmatprep.subr.bf16.mxu0 %v7601
        %9140 = vmatpush1.bf16.msra.mxu0 %v7600
        %9141 = vmatprep.subr.bf16.mxu0 %v7609
        %9142 = vmatpush1.bf16.msra.mxu0 %v7608
        %9143 = vmatprep.mubr.bf16.mxu0 %v3725
        %9144 = vmatmul.mubr.bf16.gmra.mrb[0].mxu0 %v3722
        %v9145 = vpop.f32.mrb[0].mxu0
        %v9146 = vadd.f32 %v9103, %v9145
        %v9147 = vpop.f32.mrb[0].mxu0
        %v9148 = vadd.f32 %v9105, %v9147
        %v9149 = vpop.f32.mrb[0].mxu0
        %v9150 = vadd.f32 %v9107, %v9149
        %v9151 = vpop.f32.mrb[0].mxu0
        %v9152 = vadd.f32 %v9109, %v9151
        %9153 = vdwg.mxu0
        %9154 = vmatprep.subr.bf16.mxu0 %v6851
        %9155 = vmatpush1.bf16.msra.mxu0 %v6850
        %9156 = vmatprep.subr.bf16.mxu0 %v6859
        %9157 = vmatpush1.bf16.msra.mxu0 %v6858
        %9158 = vmatprep.subr.bf16.mxu0 %v6867
        %9159 = vmatpush1.bf16.msra.mxu0 %v6866
        %9160 = vmatprep.subr.bf16.mxu0 %v6875
        %9161 = vmatpush1.bf16.msra.mxu0 %v6874
        %9162 = vmatprep.subr.bf16.mxu0 %v6883
        %9163 = vmatpush1.bf16.msra.mxu0 %v6882
        %9164 = vmatprep.subr.bf16.mxu0 %v6891
        %9165 = vmatpush1.bf16.msra.mxu0 %v6890
        %9166 = vmatprep.subr.bf16.mxu0 %v6899
        %9167 = vmatpush1.bf16.msra.mxu0 %v6898
        %9168 = vmatprep.subr.bf16.mxu0 %v6907
        %9169 = vmatpush1.bf16.msra.mxu0 %v6906
        %9170 = vmatprep.subr.bf16.mxu0 %v6915
        %9171 = vmatpush1.bf16.msra.mxu0 %v6914
        %9172 = vmatprep.subr.bf16.mxu0 %v6923
        %9173 = vmatpush1.bf16.msra.mxu0 %v6922
        %9174 = vmatprep.subr.bf16.mxu0 %v6931
        %9175 = vmatpush1.bf16.msra.mxu0 %v6930
        %9176 = vmatprep.subr.bf16.mxu0 %v6939
        %9177 = vmatpush1.bf16.msra.mxu0 %v6938
        %9178 = vmatprep.subr.bf16.mxu0 %v6947
        %9179 = vmatpush1.bf16.msra.mxu0 %v6946
        %9180 = vmatprep.subr.bf16.mxu0 %v6955
        %9181 = vmatpush1.bf16.msra.mxu0 %v6954
        %9182 = vmatprep.subr.bf16.mxu0 %v6963
        %9183 = vmatpush1.bf16.msra.mxu0 %v6962
        %9184 = vmatprep.subr.bf16.mxu0 %v6971
        %9185 = vmatpush1.bf16.msra.mxu0 %v6970
        %9186 = vmatprep.mubr.bf16.mxu0 %v3635
        %9187 = vmatmul.mubr.bf16.gmra.mrb[0].mxu0 %v3634
        %v9188 = vpop.f32.mrb[0].mxu0
        %v9189 = vadd.f32 %v4527, %v9188
        %v9190 = vpop.f32.mrb[0].mxu0
        %v9191 = vadd.f32 %v4531, %v9190
        %v9192 = vpop.f32.mrb[0].mxu0
        %v9193 = vadd.f32 %v4527, %v9192
        %v9194 = vpop.f32.mrb[0].mxu0
        %v9195 = vadd.f32 %v4531, %v9194
        %9196 = vdwg.mxu0
        %9197 = vmatprep.subr.bf16.mxu0 %v6979
        %9198 = vmatpush1.bf16.msra.mxu0 %v6978
        %9199 = vmatprep.subr.bf16.mxu0 %v6987
        %9200 = vmatpush1.bf16.msra.mxu0 %v6986
        %9201 = vmatprep.subr.bf16.mxu0 %v6995
        %9202 = vmatpush1.bf16.msra.mxu0 %v6994
        %9203 = vmatprep.subr.bf16.mxu0 %v7003
        %9204 = vmatpush1.bf16.msra.mxu0 %v7002
        %9205 = vmatprep.subr.bf16.mxu0 %v7011
        %9206 = vmatpush1.bf16.msra.mxu0 %v7010
        %9207 = vmatprep.subr.bf16.mxu0 %v7019
        %9208 = vmatpush1.bf16.msra.mxu0 %v7018
        %9209 = vmatprep.subr.bf16.mxu0 %v7027
        %9210 = vmatpush1.bf16.msra.mxu0 %v7026
        %9211 = vmatprep.subr.bf16.mxu0 %v7035
        %9212 = vmatpush1.bf16.msra.mxu0 %v7034
        %9213 = vmatprep.subr.bf16.mxu0 %v7043
        %9214 = vmatpush1.bf16.msra.mxu0 %v7042
        %9215 = vmatprep.subr.bf16.mxu0 %v7051
        %9216 = vmatpush1.bf16.msra.mxu0 %v7050
        %9217 = vmatprep.subr.bf16.mxu0 %v7059
        %9218 = vmatpush1.bf16.msra.mxu0 %v7058
        %9219 = vmatprep.subr.bf16.mxu0 %v7067
        %9220 = vmatpush1.bf16.msra.mxu0 %v7066
        %9221 = vmatprep.subr.bf16.mxu0 %v7075
        %9222 = vmatpush1.bf16.msra.mxu0 %v7074
        %9223 = vmatprep.subr.bf16.mxu0 %v7083
        %9224 = vmatpush1.bf16.msra.mxu0 %v7082
        %9225 = vmatprep.subr.bf16.mxu0 %v7091
        %9226 = vmatpush1.bf16.msra.mxu0 %v7090
        %9227 = vmatprep.subr.bf16.mxu0 %v7099
        %9228 = vmatpush1.bf16.msra.mxu0 %v7098
        %9229 = vmatprep.mubr.bf16.mxu0 %v3637
        %9230 = vmatmul.mubr.bf16.gmra.mrb[0].mxu0 %v3636
        %v9231 = vpop.f32.mrb[0].mxu0
        %v9232 = vadd.f32 %v9189, %v9231
        %v9233 = vpop.f32.mrb[0].mxu0
        %v9234 = vadd.f32 %v9191, %v9233
        %v9235 = vpop.f32.mrb[0].mxu0
        %v9236 = vadd.f32 %v9193, %v9235
        %v9237 = vpop.f32.mrb[0].mxu0
        %v9238 = vadd.f32 %v9195, %v9237
        %9239 = vdwg.mxu0
        %9240 = vmatprep.subr.bf16.mxu0 %v7107
        %9241 = vmatpush1.bf16.msra.mxu0 %v7106
        %9242 = vmatprep.subr.bf16.mxu0 %v7115
        %9243 = vmatpush1.bf16.msra.mxu0 %v7114
        %9244 = vmatprep.subr.bf16.mxu0 %v7123
        %9245 = vmatpush1.bf16.msra.mxu0 %v7122
        %9246 = vmatprep.subr.bf16.mxu0 %v7131
        %9247 = vmatpush1.bf16.msra.mxu0 %v7130
        %9248 = vmatprep.subr.bf16.mxu0 %v7139
        %9249 = vmatpush1.bf16.msra.mxu0 %v7138
        %9250 = vmatprep.subr.bf16.mxu0 %v7147
        %9251 = vmatpush1.bf16.msra.mxu0 %v7146
        %9252 = vmatprep.subr.bf16.mxu0 %v7155
        %9253 = vmatpush1.bf16.msra.mxu0 %v7154
        %9254 = vmatprep.subr.bf16.mxu0 %v7163
        %9255 = vmatpush1.bf16.msra.mxu0 %v7162
        %9256 = vmatprep.subr.bf16.mxu0 %v7171
        %9257 = vmatpush1.bf16.msra.mxu0 %v7170
        %9258 = vmatprep.subr.bf16.mxu0 %v7179
        %9259 = vmatpush1.bf16.msra.mxu0 %v7178
        %9260 = vmatprep.subr.bf16.mxu0 %v7187
        %9261 = vmatpush1.bf16.msra.mxu0 %v7186
        %9262 = vmatprep.subr.bf16.mxu0 %v7195
        %9263 = vmatpush1.bf16.msra.mxu0 %v7194
        %9264 = vmatprep.subr.bf16.mxu0 %v7203
        %9265 = vmatpush1.bf16.msra.mxu0 %v7202
        %9266 = vmatprep.subr.bf16.mxu0 %v7211
        %9267 = vmatpush1.bf16.msra.mxu0 %v7210
        %9268 = vmatprep.subr.bf16.mxu0 %v7219
        %9269 = vmatpush1.bf16.msra.mxu0 %v7218
        %9270 = vmatprep.subr.bf16.mxu0 %v7227
        %9271 = vmatpush1.bf16.msra.mxu0 %v7226
        %9272 = vmatprep.mubr.bf16.mxu0 %v3675
        %9273 = vmatmul.mubr.bf16.gmra.mrb[0].mxu0 %v3663
        %v9274 = vpop.f32.mrb[0].mxu0
        %v9275 = vadd.f32 %v9232, %v9274
        %v9276 = vpop.f32.mrb[0].mxu0
        %v9277 = vadd.f32 %v9234, %v9276
        %v9278 = vpop.f32.mrb[0].mxu0
        %v9279 = vadd.f32 %v9236, %v9278
        %v9280 = vpop.f32.mrb[0].mxu0
        %v9281 = vadd.f32 %v9238, %v9280
        %9282 = vdwg.mxu0
        %9283 = vmatprep.subr.bf16.mxu0 %v7235
        %9284 = vmatpush1.bf16.msra.mxu0 %v7234
        %9285 = vmatprep.subr.bf16.mxu0 %v7243
        %9286 = vmatpush1.bf16.msra.mxu0 %v7242
        %9287 = vmatprep.subr.bf16.mxu0 %v7251
        %9288 = vmatpush1.bf16.msra.mxu0 %v7250
        %9289 = vmatprep.subr.bf16.mxu0 %v7259
        %9290 = vmatpush1.bf16.msra.mxu0 %v7258
        %9291 = vmatprep.subr.bf16.mxu0 %v7267
        %9292 = vmatpush1.bf16.msra.mxu0 %v7266
        %9293 = vmatprep.subr.bf16.mxu0 %v7275
        %9294 = vmatpush1.bf16.msra.mxu0 %v7274
        %9295 = vmatprep.subr.bf16.mxu0 %v7283
        %9296 = vmatpush1.bf16.msra.mxu0 %v7282
        %9297 = vmatprep.subr.bf16.mxu0 %v7291
        %9298 = vmatpush1.bf16.msra.mxu0 %v7290
        %9299 = vmatprep.subr.bf16.mxu0 %v7299
        %9300 = vmatpush1.bf16.msra.mxu0 %v7298
        %9301 = vmatprep.subr.bf16.mxu0 %v7307
        %9302 = vmatpush1.bf16.msra.mxu0 %v7306
        %9303 = vmatprep.subr.bf16.mxu0 %v7315
        %9304 = vmatpush1.bf16.msra.mxu0 %v7314
        %9305 = vmatprep.subr.bf16.mxu0 %v7323
        %9306 = vmatpush1.bf16.msra.mxu0 %v7322
        %9307 = vmatprep.subr.bf16.mxu0 %v7331
        %9308 = vmatpush1.bf16.msra.mxu0 %v7330
        %9309 = vmatprep.subr.bf16.mxu0 %v7339
        %9310 = vmatpush1.bf16.msra.mxu0 %v7338
        %9311 = vmatprep.subr.bf16.mxu0 %v7347
        %9312 = vmatpush1.bf16.msra.mxu0 %v7346
        %9313 = vmatprep.subr.bf16.mxu0 %v7355
        %9314 = vmatpush1.bf16.msra.mxu0 %v7354
        %9315 = vmatprep.mubr.bf16.mxu0 %v3699
        %9316 = vmatmul.mubr.bf16.gmra.mrb[0].mxu0 %v3687
        %v9317 = vpop.f32.mrb[0].mxu0
        %v9318 = vadd.f32 %v9275, %v9317
        %v9319 = vpop.f32.mrb[0].mxu0
        %v9320 = vadd.f32 %v9277, %v9319
        %v9321 = vpop.f32.mrb[0].mxu0
        %v9322 = vadd.f32 %v9279, %v9321
        %v9323 = vpop.f32.mrb[0].mxu0
        %v9324 = vadd.f32 %v9281, %v9323
        %9325 = vdwg.mxu0
        %9326 = vmatprep.subr.bf16.mxu0 %v7363
        %9327 = vmatpush1.bf16.msra.mxu0 %v7362
        %9328 = vmatprep.subr.bf16.mxu0 %v7371
        %9329 = vmatpush1.bf16.msra.mxu0 %v7370
        %9330 = vmatprep.subr.bf16.mxu0 %v7379
        %9331 = vmatpush1.bf16.msra.mxu0 %v7378
        %9332 = vmatprep.subr.bf16.mxu0 %v7387
        %9333 = vmatpush1.bf16.msra.mxu0 %v7386
        %9334 = vmatprep.subr.bf16.mxu0 %v7395
        %9335 = vmatpush1.bf16.msra.mxu0 %v7394
        %9336 = vmatprep.subr.bf16.mxu0 %v7403
        %9337 = vmatpush1.bf16.msra.mxu0 %v7402
        %9338 = vmatprep.subr.bf16.mxu0 %v7411
        %9339 = vmatpush1.bf16.msra.mxu0 %v7410
        %9340 = vmatprep.subr.bf16.mxu0 %v7419
        %9341 = vmatpush1.bf16.msra.mxu0 %v7418
        %9342 = vmatprep.subr.bf16.mxu0 %v7427
        %9343 = vmatpush1.bf16.msra.mxu0 %v7426
        %9344 = vmatprep.subr.bf16.mxu0 %v7435
        %9345 = vmatpush1.bf16.msra.mxu0 %v7434
        %9346 = vmatprep.subr.bf16.mxu0 %v7443
        %9347 = vmatpush1.bf16.msra.mxu0 %v7442
        %9348 = vmatprep.subr.bf16.mxu0 %v7451
        %9349 = vmatpush1.bf16.msra.mxu0 %v7450
        %9350 = vmatprep.subr.bf16.mxu0 %v7459
        %9351 = vmatpush1.bf16.msra.mxu0 %v7458
        %9352 = vmatprep.subr.bf16.mxu0 %v7467
        %9353 = vmatpush1.bf16.msra.mxu0 %v7466
        %9354 = vmatprep.subr.bf16.mxu0 %v7475
        %9355 = vmatpush1.bf16.msra.mxu0 %v7474
        %9356 = vmatprep.subr.bf16.mxu0 %v7483
        %9357 = vmatpush1.bf16.msra.mxu0 %v7482
        %9358 = vmatprep.mubr.bf16.mxu0 %v3719
        %9359 = vmatmul.mubr.bf16.gmra.mrb[0].mxu0 %v3716
        %v9360 = vpop.f32.mrb[0].mxu0
        %v9361 = vadd.f32 %v9318, %v9360
        %v9362 = vpop.f32.mrb[0].mxu0
        %v9363 = vadd.f32 %v9320, %v9362
        %v9364 = vpop.f32.mrb[0].mxu0
        %v9365 = vadd.f32 %v9322, %v9364
        %v9366 = vpop.f32.mrb[0].mxu0
        %v9367 = vadd.f32 %v9324, %v9366
        %9368 = vdwg.mxu0
        %9369 = vmatprep.subr.bf16.mxu0 %v7491
        %9370 = vmatpush1.bf16.msra.mxu0 %v7490
        %9371 = vmatprep.subr.bf16.mxu0 %v7499
        %9372 = vmatpush1.bf16.msra.mxu0 %v7498
        %9373 = vmatprep.subr.bf16.mxu0 %v7507
        %9374 = vmatpush1.bf16.msra.mxu0 %v7506
        %9375 = vmatprep.subr.bf16.mxu0 %v7515
        %9376 = vmatpush1.bf16.msra.mxu0 %v7514
        %9377 = vmatprep.subr.bf16.mxu0 %v7523
        %9378 = vmatpush1.bf16.msra.mxu0 %v7522
        %9379 = vmatprep.subr.bf16.mxu0 %v7531
        %9380 = vmatpush1.bf16.msra.mxu0 %v7530
        %9381 = vmatprep.subr.bf16.mxu0 %v7539
        %9382 = vmatpush1.bf16.msra.mxu0 %v7538
        %9383 = vmatprep.subr.bf16.mxu0 %v7547
        %9384 = vmatpush1.bf16.msra.mxu0 %v7546
        %9385 = vmatprep.subr.bf16.mxu0 %v7555
        %9386 = vmatpush1.bf16.msra.mxu0 %v7554
        %9387 = vmatprep.subr.bf16.mxu0 %v7563
        %9388 = vmatpush1.bf16.msra.mxu0 %v7562
        %9389 = vmatprep.subr.bf16.mxu0 %v7571
        %9390 = vmatpush1.bf16.msra.mxu0 %v7570
        %9391 = vmatprep.subr.bf16.mxu0 %v7579
        %9392 = vmatpush1.bf16.msra.mxu0 %v7578
        %9393 = vmatprep.subr.bf16.mxu0 %v7587
        %9394 = vmatpush1.bf16.msra.mxu0 %v7586
        %9395 = vmatprep.subr.bf16.mxu0 %v7595
        %9396 = vmatpush1.bf16.msra.mxu0 %v7594
        %9397 = vmatprep.subr.bf16.mxu0 %v7603
        %9398 = vmatpush1.bf16.msra.mxu0 %v7602
        %9399 = vmatprep.subr.bf16.mxu0 %v7611
        %9400 = vmatpush1.bf16.msra.mxu0 %v7610
        %9401 = vmatprep.mubr.bf16.mxu0 %v3725
        %9402 = vmatmul.mubr.bf16.gmra.mrb[0].mxu0 %v3722
        %v9403 = vpop.f32.mrb[0].mxu0
        %v9404 = vadd.f32 %v9361, %v9403
        %v9405 = vpop.f32.mrb[0].mxu0
        %v9406 = vadd.f32 %v9363, %v9405
        %v9407 = vpop.f32.mrb[0].mxu0
        %v9408 = vadd.f32 %v9365, %v9407
        %v9409 = vpop.f32.mrb[0].mxu0
        %v9410 = vadd.f32 %v9367, %v9409
        %9411 = vdwg.mxu0
        %v9412 = vmax.f32 %v8630, 0.0
        %v9413 = vmax.f32 %v8632, 0.0
        %v9414 = vmax.f32 %v8888, 0.0
        %v9415 = vmax.f32 %v8890, 0.0
        %v9416 = vmax.f32 %v9146, 0.0
        %v9417 = vmax.f32 %v9148, 0.0
        %v9418 = vmax.f32 %v9404, 0.0
        %v9419 = vmax.f32 %v9406, 0.0
        %v9420 = vmax.f32 %v8634, 0.0
        %v9421 = vmax.f32 %v8636, 0.0
        %v9422 = vmax.f32 %v8892, 0.0
        %v9423 = vmax.f32 %v8894, 0.0
        %v9424 = vmax.f32 %v9150, 0.0
        %v9425 = vmax.f32 %v9152, 0.0
        %v9426 = vmax.f32 %v9408, 0.0
        %v9427 = vmax.f32 %v9410, 0.0
        %v9444 = vcombine.low %v9412, %v9413
        %v9445 = vcombine.high %v9412, %v9413
        %v9446 = vcombine.low %v9414, %v9415
        %v9447 = vcombine.high %v9414, %v9415
        %v9449 = vunpack.c.l.s4 1983009808
        %v9450 = vunpack.c.0.s8 %v9449
        %v9451 = vlaneseq
        %v9452 = vshrl.u32 %v9451, 7
        %v9453 = vsub.s32 %v9450, %v9452
        %v9454 = vrot.slane %v9444, %v9453
        %v9456 = vunpack.c.l.s4 1983009808
        %v9457 = vunpack.c.0.s8 %v9456
        %v9458 = vlaneseq
        %v9459 = vshrl.u32 %v9458, 7
        %v9460 = vsub.s32 %v9457, %v9459
        %v9461 = vrot.slane %v9445, %v9460
        %v9463 = vunpack.c.l.s4 1983009808
        %v9464 = vunpack.c.0.s8 %v9463
        %v9465 = vlaneseq
        %v9466 = vshrl.u32 %v9465, 7
        %v9467 = vsub.s32 %v9464, %v9466
        %v9468 = vrot.slane %v9446, %v9467
        %v9470 = vunpack.c.l.s4 1983009808
        %v9471 = vunpack.c.0.s8 %v9470
        %v9472 = vlaneseq
        %v9473 = vshrl.u32 %v9472, 7
        %v9474 = vsub.s32 %v9471, %v9473
        %v9475 = vrot.slane %v9447, %v9474
        %v9476 = vcombine.low %v9454, %v9468
        %v9477 = vcombine.high %v9454, %v9468
        %v9478 = vcombine.low %v9461, %v9475
        %v9479 = vcombine.high %v9461, %v9475
        %v9480 = vcombine.low %v9416, %v9417
        %v9481 = vcombine.high %v9416, %v9417
        %v9482 = vcombine.low %v9418, %v9419
        %v9483 = vcombine.high %v9418, %v9419
        %v9485 = vunpack.c.l.s4 1983009808
        %v9486 = vunpack.c.0.s8 %v9485
        %v9487 = vlaneseq
        %v9488 = vshrl.u32 %v9487, 7
        %v9489 = vsub.s32 %v9486, %v9488
        %v9490 = vrot.slane %v9480, %v9489
        %v9492 = vunpack.c.l.s4 1983009808
        %v9493 = vunpack.c.0.s8 %v9492
        %v9494 = vlaneseq
        %v9495 = vshrl.u32 %v9494, 7
        %v9496 = vsub.s32 %v9493, %v9495
        %v9497 = vrot.slane %v9481, %v9496
        %v9499 = vunpack.c.l.s4 1983009808
        %v9500 = vunpack.c.0.s8 %v9499
        %v9501 = vlaneseq
        %v9502 = vshrl.u32 %v9501, 7
        %v9503 = vsub.s32 %v9500, %v9502
        %v9504 = vrot.slane %v9482, %v9503
        %v9506 = vunpack.c.l.s4 1983009808
        %v9507 = vunpack.c.0.s8 %v9506
        %v9508 = vlaneseq
        %v9509 = vshrl.u32 %v9508, 7
        %v9510 = vsub.s32 %v9507, %v9509
        %v9511 = vrot.slane %v9483, %v9510
        %v9512 = vcombine.low %v9490, %v9504
        %v9513 = vcombine.high %v9490, %v9504
        %v9514 = vcombine.low %v9497, %v9511
        %v9515 = vcombine.high %v9497, %v9511
        %v9516 = vcombine.low %v9420, %v9421
        %v9517 = vcombine.high %v9420, %v9421
        %v9518 = vcombine.low %v9422, %v9423
        %v9519 = vcombine.high %v9422, %v9423
        %v9521 = vunpack.c.l.s4 1983009808
        %v9522 = vunpack.c.0.s8 %v9521
        %v9523 = vlaneseq
        %v9524 = vshrl.u32 %v9523, 7
        %v9525 = vsub.s32 %v9522, %v9524
        %v9526 = vrot.slane %v9516, %v9525
        %v9528 = vunpack.c.l.s4 1983009808
        %v9529 = vunpack.c.0.s8 %v9528
        %v9530 = vlaneseq
        %v9531 = vshrl.u32 %v9530, 7
        %v9532 = vsub.s32 %v9529, %v9531
        %v9533 = vrot.slane %v9517, %v9532
        %v9535 = vunpack.c.l.s4 1983009808
        %v9536 = vunpack.c.0.s8 %v9535
        %v9537 = vlaneseq
        %v9538 = vshrl.u32 %v9537, 7
        %v9539 = vsub.s32 %v9536, %v9538
        %v9540 = vrot.slane %v9518, %v9539
        %v9542 = vunpack.c.l.s4 1983009808
        %v9543 = vunpack.c.0.s8 %v9542
        %v9544 = vlaneseq
        %v9545 = vshrl.u32 %v9544, 7
        %v9546 = vsub.s32 %v9543, %v9545
        %v9547 = vrot.slane %v9519, %v9546
        %v9548 = vcombine.low %v9526, %v9540
        %v9549 = vcombine.high %v9526, %v9540
        %v9550 = vcombine.low %v9533, %v9547
        %v9551 = vcombine.high %v9533, %v9547
        %v9552 = vcombine.low %v9424, %v9425
        %v9553 = vcombine.high %v9424, %v9425
        %v9554 = vcombine.low %v9426, %v9427
        %v9555 = vcombine.high %v9426, %v9427
        %v9557 = vunpack.c.l.s4 1983009808
        %v9558 = vunpack.c.0.s8 %v9557
        %v9559 = vlaneseq
        %v9560 = vshrl.u32 %v9559, 7
        %v9561 = vsub.s32 %v9558, %v9560
        %v9562 = vrot.slane %v9552, %v9561
        %v9564 = vunpack.c.l.s4 1983009808
        %v9565 = vunpack.c.0.s8 %v9564
        %v9566 = vlaneseq
        %v9567 = vshrl.u32 %v9566, 7
        %v9568 = vsub.s32 %v9565, %v9567
        %v9569 = vrot.slane %v9553, %v9568
        %v9571 = vunpack.c.l.s4 1983009808
        %v9572 = vunpack.c.0.s8 %v9571
        %v9573 = vlaneseq
        %v9574 = vshrl.u32 %v9573, 7
        %v9575 = vsub.s32 %v9572, %v9574
        %v9576 = vrot.slane %v9554, %v9575
        %v9578 = vunpack.c.l.s4 1983009808
        %v9579 = vunpack.c.0.s8 %v9578
        %v9580 = vlaneseq
        %v9581 = vshrl.u32 %v9580, 7
        %v9582 = vsub.s32 %v9579, %v9581
        %v9583 = vrot.slane %v9555, %v9582
        %v9584 = vcombine.low %v9562, %v9576
        %v9585 = vcombine.high %v9562, %v9576
        %v9586 = vcombine.low %v9569, %v9583
        %v9587 = vcombine.high %v9569, %v9583
        %v9588 = vcombine.high %v9476, %v9476
        %v9590 = vunpack.c.l.s4 1983009808
        %v9591 = vunpack.c.0.s8 %v9590
        %v9592 = vlaneseq
        %v9593 = vshrl.u32 %v9592, 7
        %v9594 = vsub.s32 %v9591, %v9593
        %v9595 = vrot.slane %v9476, %v9594
        %v9597 = vunpack.c.l.s4 1983009808
        %v9598 = vunpack.c.0.s8 %v9597
        %v9599 = vlaneseq
        %v9600 = vshrl.u32 %v9599, 7
        %v9601 = vsub.s32 %v9598, %v9600
        %v9602 = vrot.slane %v9588, %v9601
        %v9603 = vcombine.high %v9595, %v9595
        %v9604 = vcombine.high %v9602, %v9602
        %v9605 = vcombine.high %v9512, %v9512
        %v9607 = vunpack.c.l.s4 1983009808
        %v9608 = vunpack.c.0.s8 %v9607
        %v9609 = vlaneseq
        %v9610 = vshrl.u32 %v9609, 7
        %v9611 = vsub.s32 %v9608, %v9610
        %v9612 = vrot.slane %v9512, %v9611
        %v9614 = vunpack.c.l.s4 1983009808
        %v9615 = vunpack.c.0.s8 %v9614
        %v9616 = vlaneseq
        %v9617 = vshrl.u32 %v9616, 7
        %v9618 = vsub.s32 %v9615, %v9617
        %v9619 = vrot.slane %v9605, %v9618
        %v9620 = vcombine.high %v9612, %v9612
        %v9621 = vcombine.high %v9619, %v9619
        %v9622 = vcombine.high %v9477, %v9477
        %v9624 = vunpack.c.l.s4 1983009808
        %v9625 = vunpack.c.0.s8 %v9624
        %v9626 = vlaneseq
        %v9627 = vshrl.u32 %v9626, 7
        %v9628 = vsub.s32 %v9625, %v9627
        %v9629 = vrot.slane %v9477, %v9628
        %v9631 = vunpack.c.l.s4 1983009808
        %v9632 = vunpack.c.0.s8 %v9631
        %v9633 = vlaneseq
        %v9634 = vshrl.u32 %v9633, 7
        %v9635 = vsub.s32 %v9632, %v9634
        %v9636 = vrot.slane %v9622, %v9635
        %v9637 = vcombine.high %v9629, %v9629
        %v9638 = vcombine.high %v9636, %v9636
        %v9639 = vcombine.high %v9513, %v9513
        %v9641 = vunpack.c.l.s4 1983009808
        %v9642 = vunpack.c.0.s8 %v9641
        %v9643 = vlaneseq
        %v9644 = vshrl.u32 %v9643, 7
        %v9645 = vsub.s32 %v9642, %v9644
        %v9646 = vrot.slane %v9513, %v9645
        %v9648 = vunpack.c.l.s4 1983009808
        %v9649 = vunpack.c.0.s8 %v9648
        %v9650 = vlaneseq
        %v9651 = vshrl.u32 %v9650, 7
        %v9652 = vsub.s32 %v9649, %v9651
        %v9653 = vrot.slane %v9639, %v9652
        %v9654 = vcombine.high %v9646, %v9646
        %v9655 = vcombine.high %v9653, %v9653
        %v9656 = vcombine.high %v9478, %v9478
        %v9658 = vunpack.c.l.s4 1983009808
        %v9659 = vunpack.c.0.s8 %v9658
        %v9660 = vlaneseq
        %v9661 = vshrl.u32 %v9660, 7
        %v9662 = vsub.s32 %v9659, %v9661
        %v9663 = vrot.slane %v9478, %v9662
        %v9665 = vunpack.c.l.s4 1983009808
        %v9666 = vunpack.c.0.s8 %v9665
        %v9667 = vlaneseq
        %v9668 = vshrl.u32 %v9667, 7
        %v9669 = vsub.s32 %v9666, %v9668
        %v9670 = vrot.slane %v9656, %v9669
        %v9671 = vcombine.high %v9663, %v9663
        %v9672 = vcombine.high %v9670, %v9670
        %v9673 = vcombine.high %v9514, %v9514
        %v9675 = vunpack.c.l.s4 1983009808
        %v9676 = vunpack.c.0.s8 %v9675
        %v9677 = vlaneseq
        %v9678 = vshrl.u32 %v9677, 7
        %v9679 = vsub.s32 %v9676, %v9678
        %v9680 = vrot.slane %v9514, %v9679
        %v9682 = vunpack.c.l.s4 1983009808
        %v9683 = vunpack.c.0.s8 %v9682
        %v9684 = vlaneseq
        %v9685 = vshrl.u32 %v9684, 7
        %v9686 = vsub.s32 %v9683, %v9685
        %v9687 = vrot.slane %v9673, %v9686
        %v9688 = vcombine.high %v9680, %v9680
        %v9689 = vcombine.high %v9687, %v9687
        %v9690 = vcombine.high %v9479, %v9479
        %v9692 = vunpack.c.l.s4 1983009808
        %v9693 = vunpack.c.0.s8 %v9692
        %v9694 = vlaneseq
        %v9695 = vshrl.u32 %v9694, 7
        %v9696 = vsub.s32 %v9693, %v9695
        %v9697 = vrot.slane %v9479, %v9696
        %v9699 = vunpack.c.l.s4 1983009808
        %v9700 = vunpack.c.0.s8 %v9699
        %v9701 = vlaneseq
        %v9702 = vshrl.u32 %v9701, 7
        %v9703 = vsub.s32 %v9700, %v9702
        %v9704 = vrot.slane %v9690, %v9703
        %v9705 = vcombine.high %v9697, %v9697
        %v9706 = vcombine.high %v9704, %v9704
        %v9707 = vcombine.high %v9515, %v9515
        %v9709 = vunpack.c.l.s4 1983009808
        %v9710 = vunpack.c.0.s8 %v9709
        %v9711 = vlaneseq
        %v9712 = vshrl.u32 %v9711, 7
        %v9713 = vsub.s32 %v9710, %v9712
        %v9714 = vrot.slane %v9515, %v9713
        %v9716 = vunpack.c.l.s4 1983009808
        %v9717 = vunpack.c.0.s8 %v9716
        %v9718 = vlaneseq
        %v9719 = vshrl.u32 %v9718, 7
        %v9720 = vsub.s32 %v9717, %v9719
        %v9721 = vrot.slane %v9707, %v9720
        %v9722 = vcombine.high %v9714, %v9714
        %v9723 = vcombine.high %v9721, %v9721
        %v9724 = vcombine.high %v9548, %v9548
        %v9726 = vunpack.c.l.s4 1983009808
        %v9727 = vunpack.c.0.s8 %v9726
        %v9728 = vlaneseq
        %v9729 = vshrl.u32 %v9728, 7
        %v9730 = vsub.s32 %v9727, %v9729
        %v9731 = vrot.slane %v9548, %v9730
        %v9733 = vunpack.c.l.s4 1983009808
        %v9734 = vunpack.c.0.s8 %v9733
        %v9735 = vlaneseq
        %v9736 = vshrl.u32 %v9735, 7
        %v9737 = vsub.s32 %v9734, %v9736
        %v9738 = vrot.slane %v9724, %v9737
        %v9739 = vcombine.high %v9731, %v9731
        %v9740 = vcombine.high %v9738, %v9738
        %v9741 = vcombine.high %v9584, %v9584
        %v9743 = vunpack.c.l.s4 1983009808
        %v9744 = vunpack.c.0.s8 %v9743
        %v9745 = vlaneseq
        %v9746 = vshrl.u32 %v9745, 7
        %v9747 = vsub.s32 %v9744, %v9746
        %v9748 = vrot.slane %v9584, %v9747
        %v9750 = vunpack.c.l.s4 1983009808
        %v9751 = vunpack.c.0.s8 %v9750
        %v9752 = vlaneseq
        %v9753 = vshrl.u32 %v9752, 7
        %v9754 = vsub.s32 %v9751, %v9753
        %v9755 = vrot.slane %v9741, %v9754
        %v9756 = vcombine.high %v9748, %v9748
        %v9757 = vcombine.high %v9755, %v9755
        %v9758 = vcombine.high %v9549, %v9549
        %v9760 = vunpack.c.l.s4 1983009808
        %v9761 = vunpack.c.0.s8 %v9760
        %v9762 = vlaneseq
        %v9763 = vshrl.u32 %v9762, 7
        %v9764 = vsub.s32 %v9761, %v9763
        %v9765 = vrot.slane %v9549, %v9764
        %v9767 = vunpack.c.l.s4 1983009808
        %v9768 = vunpack.c.0.s8 %v9767
        %v9769 = vlaneseq
        %v9770 = vshrl.u32 %v9769, 7
        %v9771 = vsub.s32 %v9768, %v9770
        %v9772 = vrot.slane %v9758, %v9771
        %v9773 = vcombine.high %v9765, %v9765
        %v9774 = vcombine.high %v9772, %v9772
        %v9775 = vcombine.high %v9585, %v9585
        %v9777 = vunpack.c.l.s4 1983009808
        %v9778 = vunpack.c.0.s8 %v9777
        %v9779 = vlaneseq
        %v9780 = vshrl.u32 %v9779, 7
        %v9781 = vsub.s32 %v9778, %v9780
        %v9782 = vrot.slane %v9585, %v9781
        %v9784 = vunpack.c.l.s4 1983009808
        %v9785 = vunpack.c.0.s8 %v9784
        %v9786 = vlaneseq
        %v9787 = vshrl.u32 %v9786, 7
        %v9788 = vsub.s32 %v9785, %v9787
        %v9789 = vrot.slane %v9775, %v9788
        %v9790 = vcombine.high %v9782, %v9782
        %v9791 = vcombine.high %v9789, %v9789
        %v9792 = vcombine.high %v9550, %v9550
        %v9794 = vunpack.c.l.s4 1983009808
        %v9795 = vunpack.c.0.s8 %v9794
        %v9796 = vlaneseq
        %v9797 = vshrl.u32 %v9796, 7
        %v9798 = vsub.s32 %v9795, %v9797
        %v9799 = vrot.slane %v9550, %v9798
        %v9801 = vunpack.c.l.s4 1983009808
        %v9802 = vunpack.c.0.s8 %v9801
        %v9803 = vlaneseq
        %v9804 = vshrl.u32 %v9803, 7
        %v9805 = vsub.s32 %v9802, %v9804
        %v9806 = vrot.slane %v9792, %v9805
        %v9807 = vcombine.high %v9799, %v9799
        %v9808 = vcombine.high %v9806, %v9806
        %v9809 = vcombine.high %v9586, %v9586
        %v9811 = vunpack.c.l.s4 1983009808
        %v9812 = vunpack.c.0.s8 %v9811
        %v9813 = vlaneseq
        %v9814 = vshrl.u32 %v9813, 7
        %v9815 = vsub.s32 %v9812, %v9814
        %v9816 = vrot.slane %v9586, %v9815
        %v9818 = vunpack.c.l.s4 1983009808
        %v9819 = vunpack.c.0.s8 %v9818
        %v9820 = vlaneseq
        %v9821 = vshrl.u32 %v9820, 7
        %v9822 = vsub.s32 %v9819, %v9821
        %v9823 = vrot.slane %v9809, %v9822
        %v9824 = vcombine.high %v9816, %v9816
        %v9825 = vcombine.high %v9823, %v9823
        %v9826 = vcombine.high %v9551, %v9551
        %v9828 = vunpack.c.l.s4 1983009808
        %v9829 = vunpack.c.0.s8 %v9828
        %v9830 = vlaneseq
        %v9831 = vshrl.u32 %v9830, 7
        %v9832 = vsub.s32 %v9829, %v9831
        %v9833 = vrot.slane %v9551, %v9832
        %v9835 = vunpack.c.l.s4 1983009808
        %v9836 = vunpack.c.0.s8 %v9835
        %v9837 = vlaneseq
        %v9838 = vshrl.u32 %v9837, 7
        %v9839 = vsub.s32 %v9836, %v9838
        %v9840 = vrot.slane %v9826, %v9839
        %v9841 = vcombine.high %v9833, %v9833
        %v9842 = vcombine.high %v9840, %v9840
        %v9843 = vcombine.high %v9587, %v9587
        %v9845 = vunpack.c.l.s4 1983009808
        %v9846 = vunpack.c.0.s8 %v9845
        %v9847 = vlaneseq
        %v9848 = vshrl.u32 %v9847, 7
        %v9849 = vsub.s32 %v9846, %v9848
        %v9850 = vrot.slane %v9587, %v9849
        %v9852 = vunpack.c.l.s4 1983009808
        %v9853 = vunpack.c.0.s8 %v9852
        %v9854 = vlaneseq
        %v9855 = vshrl.u32 %v9854, 7
        %v9856 = vsub.s32 %v9853, %v9855
        %v9857 = vrot.slane %v9843, %v9856
        %v9858 = vcombine.high %v9850, %v9850
        %v9859 = vcombine.high %v9857, %v9857
        %v9924 = vsel %vm2198, %v9595, -inf
        %v9925 = vrot.slane %v9924, 4
        %v9926 = vmax.f32 %v9924, %v9925
        %v9927 = vrot.slane %v9926, 2
        %v9928 = vmax.f32 %v9926, %v9927
        %v9929 = vrot.slane %v9928, 1
        %v9930 = vmax.f32 %v9928, %v9929
        %v9931 = vsel %vm2198, %v9603, -inf
        %v9932 = vrot.slane %v9931, 4
        %v9933 = vmax.f32 %v9931, %v9932
        %v9934 = vrot.slane %v9933, 2
        %v9935 = vmax.f32 %v9933, %v9934
        %v9936 = vrot.slane %v9935, 1
        %v9937 = vmax.f32 %v9935, %v9936
        %v9938 = vsel %vm2198, %v9602, -inf
        %v9939 = vrot.slane %v9938, 4
        %v9940 = vmax.f32 %v9938, %v9939
        %v9941 = vrot.slane %v9940, 2
        %v9942 = vmax.f32 %v9940, %v9941
        %v9943 = vrot.slane %v9942, 1
        %v9944 = vmax.f32 %v9942, %v9943
        %v9945 = vsel %vm2198, %v9604, -inf
        %v9946 = vrot.slane %v9945, 4
        %v9947 = vmax.f32 %v9945, %v9946
        %v9948 = vrot.slane %v9947, 2
        %v9949 = vmax.f32 %v9947, %v9948
        %v9950 = vrot.slane %v9949, 1
        %v9951 = vmax.f32 %v9949, %v9950
        %v9952 = vsel %vm2198, %v9612, -inf
        %v9953 = vrot.slane %v9952, 4
        %v9954 = vmax.f32 %v9952, %v9953
        %v9955 = vrot.slane %v9954, 2
        %v9956 = vmax.f32 %v9954, %v9955
        %v9957 = vrot.slane %v9956, 1
        %v9958 = vmax.f32 %v9956, %v9957
        %v9959 = vsel %vm2198, %v9620, -inf
        %v9960 = vrot.slane %v9959, 4
        %v9961 = vmax.f32 %v9959, %v9960
        %v9962 = vrot.slane %v9961, 2
        %v9963 = vmax.f32 %v9961, %v9962
        %v9964 = vrot.slane %v9963, 1
        %v9965 = vmax.f32 %v9963, %v9964
        %v9966 = vsel %vm2198, %v9619, -inf
        %v9967 = vrot.slane %v9966, 4
        %v9968 = vmax.f32 %v9966, %v9967
        %v9969 = vrot.slane %v9968, 2
        %v9970 = vmax.f32 %v9968, %v9969
        %v9971 = vrot.slane %v9970, 1
        %v9972 = vmax.f32 %v9970, %v9971
        %v9973 = vsel %vm2198, %v9621, -inf
        %v9974 = vrot.slane %v9973, 4
        %v9975 = vmax.f32 %v9973, %v9974
        %v9976 = vrot.slane %v9975, 2
        %v9977 = vmax.f32 %v9975, %v9976
        %v9978 = vrot.slane %v9977, 1
        %v9979 = vmax.f32 %v9977, %v9978
        %v9980 = vsel %vm2198, %v9629, -inf
        %v9981 = vrot.slane %v9980, 4
        %v9982 = vmax.f32 %v9980, %v9981
        %v9983 = vrot.slane %v9982, 2
        %v9984 = vmax.f32 %v9982, %v9983
        %v9985 = vrot.slane %v9984, 1
        %v9986 = vmax.f32 %v9984, %v9985
        %v9987 = vsel %vm2198, %v9637, -inf
        %v9988 = vrot.slane %v9987, 4
        %v9989 = vmax.f32 %v9987, %v9988
        %v9990 = vrot.slane %v9989, 2
        %v9991 = vmax.f32 %v9989, %v9990
        %v9992 = vrot.slane %v9991, 1
        %v9993 = vmax.f32 %v9991, %v9992
        %v9994 = vsel %vm2198, %v9636, -inf
        %v9995 = vrot.slane %v9994, 4
        %v9996 = vmax.f32 %v9994, %v9995
        %v9997 = vrot.slane %v9996, 2
        %v9998 = vmax.f32 %v9996, %v9997
        %v9999 = vrot.slane %v9998, 1
        %v10000 = vmax.f32 %v9998, %v9999
        %v10001 = vsel %vm2198, %v9638, -inf
        %v10002 = vrot.slane %v10001, 4
        %v10003 = vmax.f32 %v10001, %v10002
        %v10004 = vrot.slane %v10003, 2
        %v10005 = vmax.f32 %v10003, %v10004
        %v10006 = vrot.slane %v10005, 1
        %v10007 = vmax.f32 %v10005, %v10006
        %v10008 = vsel %vm2198, %v9646, -inf
        %v10009 = vrot.slane %v10008, 4
        %v10010 = vmax.f32 %v10008, %v10009
        %v10011 = vrot.slane %v10010, 2
        %v10012 = vmax.f32 %v10010, %v10011
        %v10013 = vrot.slane %v10012, 1
        %v10014 = vmax.f32 %v10012, %v10013
        %v10015 = vsel %vm2198, %v9654, -inf
        %v10016 = vrot.slane %v10015, 4
        %v10017 = vmax.f32 %v10015, %v10016
        %v10018 = vrot.slane %v10017, 2
        %v10019 = vmax.f32 %v10017, %v10018
        %v10020 = vrot.slane %v10019, 1
        %v10021 = vmax.f32 %v10019, %v10020
        %v10022 = vsel %vm2198, %v9653, -inf
        %v10023 = vrot.slane %v10022, 4
        %v10024 = vmax.f32 %v10022, %v10023
        %v10025 = vrot.slane %v10024, 2
        %v10026 = vmax.f32 %v10024, %v10025
        %v10027 = vrot.slane %v10026, 1
        %v10028 = vmax.f32 %v10026, %v10027
        %v10029 = vsel %vm2198, %v9655, -inf
        %v10030 = vrot.slane %v10029, 4
        %v10031 = vmax.f32 %v10029, %v10030
        %v10032 = vrot.slane %v10031, 2
        %v10033 = vmax.f32 %v10031, %v10032
        %v10034 = vrot.slane %v10033, 1
        %v10035 = vmax.f32 %v10033, %v10034
        %v10036 = vsel %vm2198, %v9663, -inf
        %v10037 = vrot.slane %v10036, 4
        %v10038 = vmax.f32 %v10036, %v10037
        %v10039 = vrot.slane %v10038, 2
        %v10040 = vmax.f32 %v10038, %v10039
        %v10041 = vrot.slane %v10040, 1
        %v10042 = vmax.f32 %v10040, %v10041
        %v10043 = vsel %vm2198, %v9671, -inf
        %v10044 = vrot.slane %v10043, 4
        %v10045 = vmax.f32 %v10043, %v10044
        %v10046 = vrot.slane %v10045, 2
        %v10047 = vmax.f32 %v10045, %v10046
        %v10048 = vrot.slane %v10047, 1
        %v10049 = vmax.f32 %v10047, %v10048
        %v10050 = vsel %vm2198, %v9670, -inf
        %v10051 = vrot.slane %v10050, 4
        %v10052 = vmax.f32 %v10050, %v10051
        %v10053 = vrot.slane %v10052, 2
        %v10054 = vmax.f32 %v10052, %v10053
        %v10055 = vrot.slane %v10054, 1
        %v10056 = vmax.f32 %v10054, %v10055
        %v10057 = vsel %vm2198, %v9672, -inf
        %v10058 = vrot.slane %v10057, 4
        %v10059 = vmax.f32 %v10057, %v10058
        %v10060 = vrot.slane %v10059, 2
        %v10061 = vmax.f32 %v10059, %v10060
        %v10062 = vrot.slane %v10061, 1
        %v10063 = vmax.f32 %v10061, %v10062
        %v10064 = vsel %vm2198, %v9680, -inf
        %v10065 = vrot.slane %v10064, 4
        %v10066 = vmax.f32 %v10064, %v10065
        %v10067 = vrot.slane %v10066, 2
        %v10068 = vmax.f32 %v10066, %v10067
        %v10069 = vrot.slane %v10068, 1
        %v10070 = vmax.f32 %v10068, %v10069
        %v10071 = vsel %vm2198, %v9688, -inf
        %v10072 = vrot.slane %v10071, 4
        %v10073 = vmax.f32 %v10071, %v10072
        %v10074 = vrot.slane %v10073, 2
        %v10075 = vmax.f32 %v10073, %v10074
        %v10076 = vrot.slane %v10075, 1
        %v10077 = vmax.f32 %v10075, %v10076
        %v10078 = vsel %vm2198, %v9687, -inf
        %v10079 = vrot.slane %v10078, 4
        %v10080 = vmax.f32 %v10078, %v10079
        %v10081 = vrot.slane %v10080, 2
        %v10082 = vmax.f32 %v10080, %v10081
        %v10083 = vrot.slane %v10082, 1
        %v10084 = vmax.f32 %v10082, %v10083
        %v10085 = vsel %vm2198, %v9689, -inf
        %v10086 = vrot.slane %v10085, 4
        %v10087 = vmax.f32 %v10085, %v10086
        %v10088 = vrot.slane %v10087, 2
        %v10089 = vmax.f32 %v10087, %v10088
        %v10090 = vrot.slane %v10089, 1
        %v10091 = vmax.f32 %v10089, %v10090
        %v10092 = vsel %vm2198, %v9697, -inf
        %v10093 = vrot.slane %v10092, 4
        %v10094 = vmax.f32 %v10092, %v10093
        %v10095 = vrot.slane %v10094, 2
        %v10096 = vmax.f32 %v10094, %v10095
        %v10097 = vrot.slane %v10096, 1
        %v10098 = vmax.f32 %v10096, %v10097
        %v10099 = vsel %vm2198, %v9705, -inf
        %v10100 = vrot.slane %v10099, 4
        %v10101 = vmax.f32 %v10099, %v10100
        %v10102 = vrot.slane %v10101, 2
        %v10103 = vmax.f32 %v10101, %v10102
        %v10104 = vrot.slane %v10103, 1
        %v10105 = vmax.f32 %v10103, %v10104
        %v10106 = vsel %vm2198, %v9704, -inf
        %v10107 = vrot.slane %v10106, 4
        %v10108 = vmax.f32 %v10106, %v10107
        %v10109 = vrot.slane %v10108, 2
        %v10110 = vmax.f32 %v10108, %v10109
        %v10111 = vrot.slane %v10110, 1
        %v10112 = vmax.f32 %v10110, %v10111
        %v10113 = vsel %vm2198, %v9706, -inf
        %v10114 = vrot.slane %v10113, 4
        %v10115 = vmax.f32 %v10113, %v10114
        %v10116 = vrot.slane %v10115, 2
        %v10117 = vmax.f32 %v10115, %v10116
        %v10118 = vrot.slane %v10117, 1
        %v10119 = vmax.f32 %v10117, %v10118
        %v10120 = vsel %vm2198, %v9714, -inf
        %v10121 = vrot.slane %v10120, 4
        %v10122 = vmax.f32 %v10120, %v10121
        %v10123 = vrot.slane %v10122, 2
        %v10124 = vmax.f32 %v10122, %v10123
        %v10125 = vrot.slane %v10124, 1
        %v10126 = vmax.f32 %v10124, %v10125
        %v10127 = vsel %vm2198, %v9722, -inf
        %v10128 = vrot.slane %v10127, 4
        %v10129 = vmax.f32 %v10127, %v10128
        %v10130 = vrot.slane %v10129, 2
        %v10131 = vmax.f32 %v10129, %v10130
        %v10132 = vrot.slane %v10131, 1
        %v10133 = vmax.f32 %v10131, %v10132
        %v10134 = vsel %vm2198, %v9721, -inf
        %v10135 = vrot.slane %v10134, 4
        %v10136 = vmax.f32 %v10134, %v10135
        %v10137 = vrot.slane %v10136, 2
        %v10138 = vmax.f32 %v10136, %v10137
        %v10139 = vrot.slane %v10138, 1
        %v10140 = vmax.f32 %v10138, %v10139
        %v10141 = vsel %vm2198, %v9723, -inf
        %v10142 = vrot.slane %v10141, 4
        %v10143 = vmax.f32 %v10141, %v10142
        %v10144 = vrot.slane %v10143, 2
        %v10145 = vmax.f32 %v10143, %v10144
        %v10146 = vrot.slane %v10145, 1
        %v10147 = vmax.f32 %v10145, %v10146
        %v10148 = vsel %vm2198, %v9731, -inf
        %v10149 = vrot.slane %v10148, 4
        %v10150 = vmax.f32 %v10148, %v10149
        %v10151 = vrot.slane %v10150, 2
        %v10152 = vmax.f32 %v10150, %v10151
        %v10153 = vrot.slane %v10152, 1
        %v10154 = vmax.f32 %v10152, %v10153
        %v10155 = vsel %vm2198, %v9739, -inf
        %v10156 = vrot.slane %v10155, 4
        %v10157 = vmax.f32 %v10155, %v10156
        %v10158 = vrot.slane %v10157, 2
        %v10159 = vmax.f32 %v10157, %v10158
        %v10160 = vrot.slane %v10159, 1
        %v10161 = vmax.f32 %v10159, %v10160
        %v10162 = vsel %vm2198, %v9738, -inf
        %v10163 = vrot.slane %v10162, 4
        %v10164 = vmax.f32 %v10162, %v10163
        %v10165 = vrot.slane %v10164, 2
        %v10166 = vmax.f32 %v10164, %v10165
        %v10167 = vrot.slane %v10166, 1
        %v10168 = vmax.f32 %v10166, %v10167
        %v10169 = vsel %vm2198, %v9740, -inf
        %v10170 = vrot.slane %v10169, 4
        %v10171 = vmax.f32 %v10169, %v10170
        %v10172 = vrot.slane %v10171, 2
        %v10173 = vmax.f32 %v10171, %v10172
        %v10174 = vrot.slane %v10173, 1
        %v10175 = vmax.f32 %v10173, %v10174
        %v10176 = vsel %vm2198, %v9748, -inf
        %v10177 = vrot.slane %v10176, 4
        %v10178 = vmax.f32 %v10176, %v10177
        %v10179 = vrot.slane %v10178, 2
        %v10180 = vmax.f32 %v10178, %v10179
        %v10181 = vrot.slane %v10180, 1
        %v10182 = vmax.f32 %v10180, %v10181
        %v10183 = vsel %vm2198, %v9756, -inf
        %v10184 = vrot.slane %v10183, 4
        %v10185 = vmax.f32 %v10183, %v10184
        %v10186 = vrot.slane %v10185, 2
        %v10187 = vmax.f32 %v10185, %v10186
        %v10188 = vrot.slane %v10187, 1
        %v10189 = vmax.f32 %v10187, %v10188
        %v10190 = vsel %vm2198, %v9755, -inf
        %v10191 = vrot.slane %v10190, 4
        %v10192 = vmax.f32 %v10190, %v10191
        %v10193 = vrot.slane %v10192, 2
        %v10194 = vmax.f32 %v10192, %v10193
        %v10195 = vrot.slane %v10194, 1
        %v10196 = vmax.f32 %v10194, %v10195
        %v10197 = vsel %vm2198, %v9757, -inf
        %v10198 = vrot.slane %v10197, 4
        %v10199 = vmax.f32 %v10197, %v10198
        %v10200 = vrot.slane %v10199, 2
        %v10201 = vmax.f32 %v10199, %v10200
        %v10202 = vrot.slane %v10201, 1
        %v10203 = vmax.f32 %v10201, %v10202
        %v10204 = vsel %vm2198, %v9765, -inf
        %v10205 = vrot.slane %v10204, 4
        %v10206 = vmax.f32 %v10204, %v10205
        %v10207 = vrot.slane %v10206, 2
        %v10208 = vmax.f32 %v10206, %v10207
        %v10209 = vrot.slane %v10208, 1
        %v10210 = vmax.f32 %v10208, %v10209
        %v10211 = vsel %vm2198, %v9773, -inf
        %v10212 = vrot.slane %v10211, 4
        %v10213 = vmax.f32 %v10211, %v10212
        %v10214 = vrot.slane %v10213, 2
        %v10215 = vmax.f32 %v10213, %v10214
        %v10216 = vrot.slane %v10215, 1
        %v10217 = vmax.f32 %v10215, %v10216
        %v10218 = vsel %vm2198, %v9772, -inf
        %v10219 = vrot.slane %v10218, 4
        %v10220 = vmax.f32 %v10218, %v10219
        %v10221 = vrot.slane %v10220, 2
        %v10222 = vmax.f32 %v10220, %v10221
        %v10223 = vrot.slane %v10222, 1
        %v10224 = vmax.f32 %v10222, %v10223
        %v10225 = vsel %vm2198, %v9774, -inf
        %v10226 = vrot.slane %v10225, 4
        %v10227 = vmax.f32 %v10225, %v10226
        %v10228 = vrot.slane %v10227, 2
        %v10229 = vmax.f32 %v10227, %v10228
        %v10230 = vrot.slane %v10229, 1
        %v10231 = vmax.f32 %v10229, %v10230
        %v10232 = vsel %vm2198, %v9782, -inf
        %v10233 = vrot.slane %v10232, 4
        %v10234 = vmax.f32 %v10232, %v10233
        %v10235 = vrot.slane %v10234, 2
        %v10236 = vmax.f32 %v10234, %v10235
        %v10237 = vrot.slane %v10236, 1
        %v10238 = vmax.f32 %v10236, %v10237
        %v10239 = vsel %vm2198, %v9790, -inf
        %v10240 = vrot.slane %v10239, 4
        %v10241 = vmax.f32 %v10239, %v10240
        %v10242 = vrot.slane %v10241, 2
        %v10243 = vmax.f32 %v10241, %v10242
        %v10244 = vrot.slane %v10243, 1
        %v10245 = vmax.f32 %v10243, %v10244
        %v10246 = vsel %vm2198, %v9789, -inf
        %v10247 = vrot.slane %v10246, 4
        %v10248 = vmax.f32 %v10246, %v10247
        %v10249 = vrot.slane %v10248, 2
        %v10250 = vmax.f32 %v10248, %v10249
        %v10251 = vrot.slane %v10250, 1
        %v10252 = vmax.f32 %v10250, %v10251
        %v10253 = vsel %vm2198, %v9791, -inf
        %v10254 = vrot.slane %v10253, 4
        %v10255 = vmax.f32 %v10253, %v10254
        %v10256 = vrot.slane %v10255, 2
        %v10257 = vmax.f32 %v10255, %v10256
        %v10258 = vrot.slane %v10257, 1
        %v10259 = vmax.f32 %v10257, %v10258
        %v10260 = vsel %vm2198, %v9799, -inf
        %v10261 = vrot.slane %v10260, 4
        %v10262 = vmax.f32 %v10260, %v10261
        %v10263 = vrot.slane %v10262, 2
        %v10264 = vmax.f32 %v10262, %v10263
        %v10265 = vrot.slane %v10264, 1
        %v10266 = vmax.f32 %v10264, %v10265
        %v10267 = vsel %vm2198, %v9807, -inf
        %v10268 = vrot.slane %v10267, 4
        %v10269 = vmax.f32 %v10267, %v10268
        %v10270 = vrot.slane %v10269, 2
        %v10271 = vmax.f32 %v10269, %v10270
        %v10272 = vrot.slane %v10271, 1
        %v10273 = vmax.f32 %v10271, %v10272
        %v10274 = vsel %vm2198, %v9806, -inf
        %v10275 = vrot.slane %v10274, 4
        %v10276 = vmax.f32 %v10274, %v10275
        %v10277 = vrot.slane %v10276, 2
        %v10278 = vmax.f32 %v10276, %v10277
        %v10279 = vrot.slane %v10278, 1
        %v10280 = vmax.f32 %v10278, %v10279
        %v10281 = vsel %vm2198, %v9808, -inf
        %v10282 = vrot.slane %v10281, 4
        %v10283 = vmax.f32 %v10281, %v10282
        %v10284 = vrot.slane %v10283, 2
        %v10285 = vmax.f32 %v10283, %v10284
        %v10286 = vrot.slane %v10285, 1
        %v10287 = vmax.f32 %v10285, %v10286
        %v10288 = vsel %vm2198, %v9816, -inf
        %v10289 = vrot.slane %v10288, 4
        %v10290 = vmax.f32 %v10288, %v10289
        %v10291 = vrot.slane %v10290, 2
        %v10292 = vmax.f32 %v10290, %v10291
        %v10293 = vrot.slane %v10292, 1
        %v10294 = vmax.f32 %v10292, %v10293
        %v10295 = vsel %vm2198, %v9824, -inf
        %v10296 = vrot.slane %v10295, 4
        %v10297 = vmax.f32 %v10295, %v10296
        %v10298 = vrot.slane %v10297, 2
        %v10299 = vmax.f32 %v10297, %v10298
        %v10300 = vrot.slane %v10299, 1
        %v10301 = vmax.f32 %v10299, %v10300
        %v10302 = vsel %vm2198, %v9823, -inf
        %v10303 = vrot.slane %v10302, 4
        %v10304 = vmax.f32 %v10302, %v10303
        %v10305 = vrot.slane %v10304, 2
        %v10306 = vmax.f32 %v10304, %v10305
        %v10307 = vrot.slane %v10306, 1
        %v10308 = vmax.f32 %v10306, %v10307
        %v10309 = vsel %vm2198, %v9825, -inf
        %v10310 = vrot.slane %v10309, 4
        %v10311 = vmax.f32 %v10309, %v10310
        %v10312 = vrot.slane %v10311, 2
        %v10313 = vmax.f32 %v10311, %v10312
        %v10314 = vrot.slane %v10313, 1
        %v10315 = vmax.f32 %v10313, %v10314
        %v10316 = vsel %vm2198, %v9833, -inf
        %v10317 = vrot.slane %v10316, 4
        %v10318 = vmax.f32 %v10316, %v10317
        %v10319 = vrot.slane %v10318, 2
        %v10320 = vmax.f32 %v10318, %v10319
        %v10321 = vrot.slane %v10320, 1
        %v10322 = vmax.f32 %v10320, %v10321
        %v10323 = vsel %vm2198, %v9841, -inf
        %v10324 = vrot.slane %v10323, 4
        %v10325 = vmax.f32 %v10323, %v10324
        %v10326 = vrot.slane %v10325, 2
        %v10327 = vmax.f32 %v10325, %v10326
        %v10328 = vrot.slane %v10327, 1
        %v10329 = vmax.f32 %v10327, %v10328
        %v10330 = vsel %vm2198, %v9840, -inf
        %v10331 = vrot.slane %v10330, 4
        %v10332 = vmax.f32 %v10330, %v10331
        %v10333 = vrot.slane %v10332, 2
        %v10334 = vmax.f32 %v10332, %v10333
        %v10335 = vrot.slane %v10334, 1
        %v10336 = vmax.f32 %v10334, %v10335
        %v10337 = vsel %vm2198, %v9842, -inf
        %v10338 = vrot.slane %v10337, 4
        %v10339 = vmax.f32 %v10337, %v10338
        %v10340 = vrot.slane %v10339, 2
        %v10341 = vmax.f32 %v10339, %v10340
        %v10342 = vrot.slane %v10341, 1
        %v10343 = vmax.f32 %v10341, %v10342
        %v10344 = vsel %vm2198, %v9850, -inf
        %v10345 = vrot.slane %v10344, 4
        %v10346 = vmax.f32 %v10344, %v10345
        %v10347 = vrot.slane %v10346, 2
        %v10348 = vmax.f32 %v10346, %v10347
        %v10349 = vrot.slane %v10348, 1
        %v10350 = vmax.f32 %v10348, %v10349
        %v10351 = vsel %vm2198, %v9858, -inf
        %v10352 = vrot.slane %v10351, 4
        %v10353 = vmax.f32 %v10351, %v10352
        %v10354 = vrot.slane %v10353, 2
        %v10355 = vmax.f32 %v10353, %v10354
        %v10356 = vrot.slane %v10355, 1
        %v10357 = vmax.f32 %v10355, %v10356
        %v10358 = vsel %vm2198, %v9857, -inf
        %v10359 = vrot.slane %v10358, 4
        %v10360 = vmax.f32 %v10358, %v10359
        %v10361 = vrot.slane %v10360, 2
        %v10362 = vmax.f32 %v10360, %v10361
        %v10363 = vrot.slane %v10362, 1
        %v10364 = vmax.f32 %v10362, %v10363
        %v10365 = vsel %vm2198, %v9859, -inf
        %v10366 = vrot.slane %v10365, 4
        %v10367 = vmax.f32 %v10365, %v10366
        %v10368 = vrot.slane %v10367, 2
        %v10369 = vmax.f32 %v10367, %v10368
        %v10370 = vrot.slane %v10369, 1
        %v10371 = vmax.f32 %v10369, %v10370
        %v10380 = vsel %vm3111, %v9986, %v9930
        %v10381 = vsel %vm3113, %v10042, %v10380
        %v10382 = vsel %vm3115, %v10098, %v10381
        %v10383 = vsel %vm3117, %v10154, %v10382
        %v10384 = vsel %vm3119, %v10210, %v10383
        %v10385 = vsel %vm3121, %v10266, %v10384
        %v10386 = vsel %vm3123, %v10322, %v10385
        %v10396 = vsel %vm3111, %v9993, %v9937
        %v10397 = vsel %vm3113, %v10049, %v10396
        %v10398 = vsel %vm3115, %v10105, %v10397
        %v10399 = vsel %vm3117, %v10161, %v10398
        %v10400 = vsel %vm3119, %v10217, %v10399
        %v10401 = vsel %vm3121, %v10273, %v10400
        %v10402 = vsel %vm3123, %v10329, %v10401
        %10403 = vrot.lane.b32.xlu0 %v10402, 64
        %v10404 = vpop.permute.xlu0 %10403
        %v10414 = vsel %vm3111, %v10000, %v9944
        %v10415 = vsel %vm3113, %v10056, %v10414
        %v10416 = vsel %vm3115, %v10112, %v10415
        %v10417 = vsel %vm3117, %v10168, %v10416
        %v10418 = vsel %vm3119, %v10224, %v10417
        %v10419 = vsel %vm3121, %v10280, %v10418
        %v10420 = vsel %vm3123, %v10336, %v10419
        %v10430 = vsel %vm3111, %v10007, %v9951
        %v10431 = vsel %vm3113, %v10063, %v10430
        %v10432 = vsel %vm3115, %v10119, %v10431
        %v10433 = vsel %vm3117, %v10175, %v10432
        %v10434 = vsel %vm3119, %v10231, %v10433
        %v10435 = vsel %vm3121, %v10287, %v10434
        %v10436 = vsel %vm3123, %v10343, %v10435
        %10437 = vrot.lane.b32.xlu0 %v10436, 64
        %v10438 = vpop.permute.xlu0 %10437
        %v10448 = vsel %vm3111, %v10014, %v9958
        %v10449 = vsel %vm3113, %v10070, %v10448
        %v10450 = vsel %vm3115, %v10126, %v10449
        %v10451 = vsel %vm3117, %v10182, %v10450
        %v10452 = vsel %vm3119, %v10238, %v10451
        %v10453 = vsel %vm3121, %v10294, %v10452
        %v10454 = vsel %vm3123, %v10350, %v10453
        %v10464 = vsel %vm3111, %v10021, %v9965
        %v10465 = vsel %vm3113, %v10077, %v10464
        %v10466 = vsel %vm3115, %v10133, %v10465
        %v10467 = vsel %vm3117, %v10189, %v10466
        %v10468 = vsel %vm3119, %v10245, %v10467
        %v10469 = vsel %vm3121, %v10301, %v10468
        %v10470 = vsel %vm3123, %v10357, %v10469
        %10471 = vrot.lane.b32.xlu0 %v10470, 64
        %v10472 = vpop.permute.xlu0 %10471
        %v10482 = vsel %vm3111, %v10028, %v9972
        %v10483 = vsel %vm3113, %v10084, %v10482
        %v10484 = vsel %vm3115, %v10140, %v10483
        %v10485 = vsel %vm3117, %v10196, %v10484
        %v10486 = vsel %vm3119, %v10252, %v10485
        %v10487 = vsel %vm3121, %v10308, %v10486
        %v10488 = vsel %vm3123, %v10364, %v10487
        %v10498 = vsel %vm3111, %v10035, %v9979
        %v10499 = vsel %vm3113, %v10091, %v10498
        %v10500 = vsel %vm3115, %v10147, %v10499
        %v10501 = vsel %vm3117, %v10203, %v10500
        %v10502 = vsel %vm3119, %v10259, %v10501
        %v10503 = vsel %vm3121, %v10315, %v10502
        %v10504 = vsel %vm3123, %v10371, %v10503
        %10505 = vrot.lane.b32.xlu0 %v10504, 64
        %v10506 = vpop.permute.xlu0 %10505
        %v10508 = vsel %vm3425, %v10386, %v10404
        %v10509 = vsel %vm3425, %v10420, %v10438
        %v10510 = vsel %vm3425, %v10454, %v10472
        %v10511 = vsel %vm3425, %v10488, %v10506
        %10512 = vrot.lane.b32.xlu0 %v10386, 64
        %v10513 = vpop.permute.xlu0 %10512
        %10516 = vrot.lane.b32.xlu0 %v10420, 64
        %v10517 = vpop.permute.xlu0 %10516
        %10520 = vrot.lane.b32.xlu0 %v10454, 64
        %v10521 = vpop.permute.xlu0 %10520
        %10524 = vrot.lane.b32.xlu0 %v10488, 64
        %v10525 = vpop.permute.xlu0 %10524
        %v10528 = vsel %vm3425, %v10513, %v10402
        %v10529 = vsel %vm3425, %v10517, %v10436
        %v10530 = vsel %vm3425, %v10521, %v10470
        %v10531 = vsel %vm3425, %v10525, %v10504
        %v10532 = vmax.f32 %v10508, %v10528
        %v10533 = vmax.f32 %v10509, %v10529
        %v10534 = vmax.f32 %v10510, %v10530
        %v10535 = vmax.f32 %v10511, %v10531
        %v10536 = vpack.c.bf16 %v10532, %v10532
        %v10537 = vpack.c.bf16 %v10533, %v10533
        %v10538 = vpack.c.bf16 %v10534, %v10534
        %v10539 = vpack.c.bf16 %v10535, %v10535
        %v10540 = vld [vmem:[#allocation13] sm:$0xf]
        %v10541 = vld [vmem:[#allocation13 + $0x4] sm:$0xf]
        %v10542 = vld [vmem:[#allocation13 + $0x8] sm:$0xf]
        %v10543 = vld [vmem:[#allocation13 + $0xc] sm:$0xf]
        %v10544 = vld [vmem:[#allocation13 + $0x10] sm:$0xf]
        %v10545 = vld [vmem:[#allocation13 + $0x14] sm:$0xf]
        %v10546 = vld [vmem:[#allocation13 + $0x18] sm:$0xf]
        %v10547 = vld [vmem:[#allocation13 + $0x1c] sm:$0xf]
        %v10548 = vld [vmem:[#allocation13 + $0x20] sm:$0xf]
        %v10549 = vld [vmem:[#allocation13 + $0x24] sm:$0xf]
        %v10550 = vld [vmem:[#allocation13 + $0x28] sm:$0xf]
        %v10551 = vld [vmem:[#allocation13 + $0x2c] sm:$0xf]
        %v10552 = vld [vmem:[#allocation13 + $0x30] sm:$0xf]
        %v10553 = vld [vmem:[#allocation13 + $0x34] sm:$0xf]
        %v10554 = vld [vmem:[#allocation13 + $0x38] sm:$0xf]
        %v10555 = vld [vmem:[#allocation13 + $0x3c] sm:$0xf]
        %v10556 = vld [vmem:[#allocation13 + $0x40] sm:$0xf]
        %v10557 = vld [vmem:[#allocation13 + $0x44] sm:$0xf]
        %v10558 = vld [vmem:[#allocation13 + $0x48] sm:$0xf]
        %v10559 = vld [vmem:[#allocation13 + $0x4c] sm:$0xf]
        %v10560 = vld [vmem:[#allocation13 + $0x50] sm:$0xf]
        %v10561 = vld [vmem:[#allocation13 + $0x54] sm:$0xf]
        %v10562 = vld [vmem:[#allocation13 + $0x58] sm:$0xf]
        %v10563 = vld [vmem:[#allocation13 + $0x5c] sm:$0xf]
        %v10564 = vld [vmem:[#allocation13 + $0x60] sm:$0xf]
        %v10565 = vld [vmem:[#allocation13 + $0x64] sm:$0xf]
        %v10566 = vld [vmem:[#allocation13 + $0x68] sm:$0xf]
        %v10567 = vld [vmem:[#allocation13 + $0x6c] sm:$0xf]
        %v10568 = vld [vmem:[#allocation13 + $0x70] sm:$0xf]
        %v10569 = vld [vmem:[#allocation13 + $0x74] sm:$0xf]
        %v10570 = vld [vmem:[#allocation13 + $0x78] sm:$0xf]
        %v10571 = vld [vmem:[#allocation13 + $0x7c] sm:$0xf]
        %v10572 = vld [vmem:[#allocation13 + $0x80] sm:$0xf]
        %v10573 = vld [vmem:[#allocation13 + $0x84] sm:$0xf]
        %v10574 = vld [vmem:[#allocation13 + $0x88] sm:$0xf]
        %v10575 = vld [vmem:[#allocation13 + $0x8c] sm:$0xf]
        %v10576 = vld [vmem:[#allocation13 + $0x90] sm:$0xf]
        %v10577 = vld [vmem:[#allocation13 + $0x94] sm:$0xf]
        %v10578 = vld [vmem:[#allocation13 + $0x98] sm:$0xf]
        %v10579 = vld [vmem:[#allocation13 + $0x9c] sm:$0xf]
        %v10580 = vld [vmem:[#allocation13 + $0xa0] sm:$0xf]
        %v10581 = vld [vmem:[#allocation13 + $0xa4] sm:$0xf]
        %v10582 = vld [vmem:[#allocation13 + $0xa8] sm:$0xf]
        %v10583 = vld [vmem:[#allocation13 + $0xac] sm:$0xf]
        %v10584 = vld [vmem:[#allocation13 + $0xb0] sm:$0xf]
        %v10585 = vld [vmem:[#allocation13 + $0xb4] sm:$0xf]
        %v10586 = vld [vmem:[#allocation13 + $0xb8] sm:$0xf]
        %v10587 = vld [vmem:[#allocation13 + $0xbc] sm:$0xf]
        %v10588 = vld [vmem:[#allocation13 + $0xc0] sm:$0xf]
        %v10589 = vld [vmem:[#allocation13 + $0xc4] sm:$0xf]
        %v10590 = vld [vmem:[#allocation13 + $0xc8] sm:$0xf]
        %v10591 = vld [vmem:[#allocation13 + $0xcc] sm:$0xf]
        %v10592 = vld [vmem:[#allocation13 + $0xd0] sm:$0xf]
        %v10593 = vld [vmem:[#allocation13 + $0xd4] sm:$0xf]
        %v10594 = vld [vmem:[#allocation13 + $0xd8] sm:$0xf]
        %v10595 = vld [vmem:[#allocation13 + $0xdc] sm:$0xf]
        %v10596 = vld [vmem:[#allocation13 + $0xe0] sm:$0xf]
        %v10597 = vld [vmem:[#allocation13 + $0xe4] sm:$0xf]
        %v10598 = vld [vmem:[#allocation13 + $0xe8] sm:$0xf]
        %v10599 = vld [vmem:[#allocation13 + $0xec] sm:$0xf]
        %v10600 = vld [vmem:[#allocation13 + $0xf0] sm:$0xf]
        %v10601 = vld [vmem:[#allocation13 + $0xf4] sm:$0xf]
        %v10602 = vld [vmem:[#allocation13 + $0xf8] sm:$0xf]
        %v10603 = vld [vmem:[#allocation13 + $0xfc] sm:$0xf]
        %v10668 = vunpack.c.l.b16 %v10540
        %v10669 = vunpack.c.l.b16 %v10541
        %v10670 = vunpack.c.l.b16 %v10542
        %v10671 = vunpack.c.l.b16 %v10543
        %v10672 = vunpack.c.l.b16 %v10544
        %v10673 = vunpack.c.l.b16 %v10545
        %v10674 = vunpack.c.l.b16 %v10546
        %v10675 = vunpack.c.l.b16 %v10547
        %v10676 = vunpack.c.l.b16 %v10548
        %v10677 = vunpack.c.l.b16 %v10549
        %v10678 = vunpack.c.l.b16 %v10550
        %v10679 = vunpack.c.l.b16 %v10551
        %v10680 = vunpack.c.l.b16 %v10552
        %v10681 = vunpack.c.l.b16 %v10553
        %v10682 = vunpack.c.l.b16 %v10554
        %v10683 = vunpack.c.l.b16 %v10555
        %v10684 = vunpack.c.l.b16 %v10556
        %v10685 = vunpack.c.l.b16 %v10557
        %v10686 = vunpack.c.l.b16 %v10558
        %v10687 = vunpack.c.l.b16 %v10559
        %v10688 = vunpack.c.l.b16 %v10560
        %v10689 = vunpack.c.l.b16 %v10561
        %v10690 = vunpack.c.l.b16 %v10562
        %v10691 = vunpack.c.l.b16 %v10563
        %v10692 = vunpack.c.l.b16 %v10564
        %v10693 = vunpack.c.l.b16 %v10565
        %v10694 = vunpack.c.l.b16 %v10566
        %v10695 = vunpack.c.l.b16 %v10567
        %v10696 = vunpack.c.l.b16 %v10568
        %v10697 = vunpack.c.l.b16 %v10569
        %v10698 = vunpack.c.l.b16 %v10570
        %v10699 = vunpack.c.l.b16 %v10571
        %v10700 = vunpack.c.l.b16 %v10572
        %v10701 = vunpack.c.l.b16 %v10573
        %v10702 = vunpack.c.l.b16 %v10574
        %v10703 = vunpack.c.l.b16 %v10575
        %v10704 = vunpack.c.l.b16 %v10576
        %v10705 = vunpack.c.l.b16 %v10577
        %v10706 = vunpack.c.l.b16 %v10578
        %v10707 = vunpack.c.l.b16 %v10579
        %v10708 = vunpack.c.l.b16 %v10580
        %v10709 = vunpack.c.l.b16 %v10581
        %v10710 = vunpack.c.l.b16 %v10582
        %v10711 = vunpack.c.l.b16 %v10583
        %v10712 = vunpack.c.l.b16 %v10584
        %v10713 = vunpack.c.l.b16 %v10585
        %v10714 = vunpack.c.l.b16 %v10586
        %v10715 = vunpack.c.l.b16 %v10587
        %v10716 = vunpack.c.l.b16 %v10588
        %v10717 = vunpack.c.l.b16 %v10589
        %v10718 = vunpack.c.l.b16 %v10590
        %v10719 = vunpack.c.l.b16 %v10591
        %v10720 = vunpack.c.l.b16 %v10592
        %v10721 = vunpack.c.l.b16 %v10593
        %v10722 = vunpack.c.l.b16 %v10594
        %v10723 = vunpack.c.l.b16 %v10595
        %v10724 = vunpack.c.l.b16 %v10596
        %v10725 = vunpack.c.l.b16 %v10597
        %v10726 = vunpack.c.l.b16 %v10598
        %v10727 = vunpack.c.l.b16 %v10599
        %v10728 = vunpack.c.l.b16 %v10600
        %v10729 = vunpack.c.l.b16 %v10601
        %v10730 = vunpack.c.l.b16 %v10602
        %v10731 = vunpack.c.l.b16 %v10603
        %v10732 = vpack.c.b16 %v10669, %v10668
        %v10733 = vpack.c.b16 %v10671, %v10670
        %v10734 = vpack.c.b16 %v10673, %v10672
        %v10735 = vpack.c.b16 %v10675, %v10674
        %v10736 = vpack.c.b16 %v10677, %v10676
        %v10737 = vpack.c.b16 %v10679, %v10678
        %v10738 = vpack.c.b16 %v10681, %v10680
        %v10739 = vpack.c.b16 %v10683, %v10682
        %v10740 = vpack.c.b16 %v10685, %v10684
        %v10741 = vpack.c.b16 %v10687, %v10686
        %v10742 = vpack.c.b16 %v10689, %v10688
        %v10743 = vpack.c.b16 %v10691, %v10690
        %v10744 = vpack.c.b16 %v10693, %v10692
        %v10745 = vpack.c.b16 %v10695, %v10694
        %v10746 = vpack.c.b16 %v10697, %v10696
        %v10747 = vpack.c.b16 %v10699, %v10698
        %v10748 = vpack.c.b16 %v10701, %v10700
        %v10749 = vpack.c.b16 %v10703, %v10702
        %v10750 = vpack.c.b16 %v10705, %v10704
        %v10751 = vpack.c.b16 %v10707, %v10706
        %v10752 = vpack.c.b16 %v10709, %v10708
        %v10753 = vpack.c.b16 %v10711, %v10710
        %v10754 = vpack.c.b16 %v10713, %v10712
        %v10755 = vpack.c.b16 %v10715, %v10714
        %v10756 = vpack.c.b16 %v10717, %v10716
        %v10757 = vpack.c.b16 %v10719, %v10718
        %v10758 = vpack.c.b16 %v10721, %v10720
        %v10759 = vpack.c.b16 %v10723, %v10722
        %v10760 = vpack.c.b16 %v10725, %v10724
        %v10761 = vpack.c.b16 %v10727, %v10726
        %v10762 = vpack.c.b16 %v10729, %v10728
        %v10763 = vpack.c.b16 %v10731, %v10730
        %10796 = vmatprep.subr.bf16.mxu0 0
        %10797 = vmatpush1.bf16.msra.mxu0 %v10732
        %10798 = vmatprep.subr.bf16.mxu0 0
        %10799 = vmatpush1.bf16.msra.mxu0 %v10733
        %10800 = vmatprep.subr.bf16.mxu0 0
        %10801 = vmatpush1.bf16.msra.mxu0 %v10734
        %10802 = vmatprep.subr.bf16.mxu0 0
        %10803 = vmatpush1.bf16.msra.mxu0 %v10735
        %10804 = vmatprep.subr.bf16.mxu0 0
        %10805 = vmatpush1.bf16.msra.mxu0 %v10736
        %10806 = vmatprep.subr.bf16.mxu0 0
        %10807 = vmatpush1.bf16.msra.mxu0 %v10737
        %10808 = vmatprep.subr.bf16.mxu0 0
        %10809 = vmatpush1.bf16.msra.mxu0 %v10738
        %10810 = vmatprep.subr.bf16.mxu0 0
        %10811 = vmatpush1.bf16.msra.mxu0 %v10739
        %10812 = vmatprep.subr.bf16.mxu0 0
        %10813 = vmatpush1.bf16.msra.mxu0 %v10740
        %10814 = vmatprep.subr.bf16.mxu0 0
        %10815 = vmatpush1.bf16.msra.mxu0 %v10741
        %10816 = vmatprep.subr.bf16.mxu0 0
        %10817 = vmatpush1.bf16.msra.mxu0 %v10742
        %10818 = vmatprep.subr.bf16.mxu0 0
        %10819 = vmatpush1.bf16.msra.mxu0 %v10743
        %10820 = vmatprep.subr.bf16.mxu0 0
        %10821 = vmatpush1.bf16.msra.mxu0 %v10744
        %10822 = vmatprep.subr.bf16.mxu0 0
        %10823 = vmatpush1.bf16.msra.mxu0 %v10745
        %10824 = vmatprep.subr.bf16.mxu0 0
        %10825 = vmatpush1.bf16.msra.mxu0 %v10746
        %10826 = vmatprep.subr.bf16.mxu0 0
        %10827 = vmatpush1.bf16.msra.mxu0 %v10747
        %10828 = vmatprep.mubr.bf16.mxu0 %v10537
        %10829 = vmatmul.mubr.bf16.gmra.mrb[0].mxu0 %v10536
        %v10830 = vpop.f32.mrb[0].mxu0
        %v10831 = vadd.f32 0.0, %v10830
        %v10832 = vpop.f32.mrb[0].mxu0
        %v10833 = vpop.f32.mrb[0].mxu0
        %v10834 = vpop.f32.mrb[0].mxu0
        %10835 = vdwg.mxu0
        %10836 = vmatprep.subr.bf16.mxu0 0
        %10837 = vmatpush1.bf16.msra.mxu0 %v10748
        %10838 = vmatprep.subr.bf16.mxu0 0
        %10839 = vmatpush1.bf16.msra.mxu0 %v10749
        %10840 = vmatprep.subr.bf16.mxu0 0
        %10841 = vmatpush1.bf16.msra.mxu0 %v10750
        %10842 = vmatprep.subr.bf16.mxu0 0
        %10843 = vmatpush1.bf16.msra.mxu0 %v10751
        %10844 = vmatprep.subr.bf16.mxu0 0
        %10845 = vmatpush1.bf16.msra.mxu0 %v10752
        %10846 = vmatprep.subr.bf16.mxu0 0
        %10847 = vmatpush1.bf16.msra.mxu0 %v10753
        %10848 = vmatprep.subr.bf16.mxu0 0
        %10849 = vmatpush1.bf16.msra.mxu0 %v10754
        %10850 = vmatprep.subr.bf16.mxu0 0
        %10851 = vmatpush1.bf16.msra.mxu0 %v10755
        %10852 = vmatprep.subr.bf16.mxu0 0
        %10853 = vmatpush1.bf16.msra.mxu0 %v10756
        %10854 = vmatprep.subr.bf16.mxu0 0
        %10855 = vmatpush1.bf16.msra.mxu0 %v10757
        %10856 = vmatprep.subr.bf16.mxu0 0
        %10857 = vmatpush1.bf16.msra.mxu0 %v10758
        %10858 = vmatprep.subr.bf16.mxu0 0
        %10859 = vmatpush1.bf16.msra.mxu0 %v10759
        %10860 = vmatprep.subr.bf16.mxu0 0
        %10861 = vmatpush1.bf16.msra.mxu0 %v10760
        %10862 = vmatprep.subr.bf16.mxu0 0
        %10863 = vmatpush1.bf16.msra.mxu0 %v10761
        %10864 = vmatprep.subr.bf16.mxu0 0
        %10865 = vmatpush1.bf16.msra.mxu0 %v10762
        %10866 = vmatprep.subr.bf16.mxu0 0
        %10867 = vmatpush1.bf16.msra.mxu0 %v10763
        %10868 = vmatprep.mubr.bf16.mxu0 %v10539
        %10869 = vmatmul.mubr.bf16.gmra.mrb[0].mxu0 %v10538
        %v10870 = vpop.f32.mrb[0].mxu0
        %v10871 = vadd.f32 %v10831, %v10870
        %v10872 = vpop.f32.mrb[0].mxu0
        %v10873 = vpop.f32.mrb[0].mxu0
        %v10874 = vpop.f32.mrb[0].mxu0
        %10875 = vdwg.mxu0
        %v10876 = vlaneseq
        %v10877 = vshrl.u32 %v10876, 7
        %v10878 = vlaneseq
        %v10879 = vand.u32 %v10878, 127
        %vm10880 = vcmp.lt.s32.totalorder %v10877, 0
        %v10881 = vsub.s32 0, %v10877
        %v10882 = vsel %vm10880, %v10881, %v10877
        %v10883 = vshrl.u32 %v10882, 3
        %v10884 = vand.u32 %v10882, 7
        %v10885 = vsub.s32 0, %v10884
        %v10886 = vsel %vm10880, %v10885, %v10884
        %vm10887 = vcmp.ne.s32.totalorder %v10886, 0
        %vm10888 = vcmp.lt.s32.totalorder %v10886, 0
        %vm10889 = vmand %vm10888, %vm10887
        %v10890 = vadd.s32 %v10886, 8
        %v10891 = vsel %vm10889, %v10890, %v10886
        %vm10892 = vcmp.lt.s32.totalorder %v10879, 0
        %v10893 = vsub.s32 0, %v10879
        %v10894 = vsel %vm10892, %v10893, %v10879
        %v10895 = vshrl.u32 %v10894, 3
        %v10896 = vand.u32 %v10894, 7
        %v10897 = vsub.s32 0, %v10896
        %v10898 = vsel %vm10892, %v10897, %v10896
        %vm10899 = vcmp.ne.s32.totalorder %v10898, 0
        %vm10900 = vcmp.lt.s32.totalorder %v10898, 0
        %vm10901 = vmand %vm10900, %vm10899
        %v10902 = vadd.s32 %v10898, 8
        %v10903 = vsel %vm10901, %v10902, %v10898
        %vm10904 = vcmp.eq.s32.totalorder %v10891, %v10903
        %v10905 = vsel %vm10904, %v10871, 0.0
        %v10906 = vrot.slane %v10905, 4
        %v10907 = vadd.f32 %v10905, %v10906
        %v10908 = vrot.slane %v10907, 2
        %v10909 = vadd.f32 %v10907, %v10908
        %v10910 = vrot.slane %v10909, 1
        %v10911 = vadd.f32 %v10909, %v10910
        %v10912 = vld [vmem:[#allocation15] sm:$0xff]
        %v10913 = vld [vmem:[#allocation15 + $0x8] sm:$0xff]
        %v10914 = vld [vmem:[#allocation15 + $0x10] sm:$0xff]
        %v10915 = vld [vmem:[#allocation15 + $0x18] sm:$0xff]
        %v10916 = vld [vmem:[#allocation15 + $0x20] sm:$0xff]
        %v10917 = vld [vmem:[#allocation15 + $0x28] sm:$0xff]
        %v10918 = vld [vmem:[#allocation15 + $0x30] sm:$0xff]
        %v10919 = vld [vmem:[#allocation15 + $0x38] sm:$0xff]
        %v10920 = vld [vmem:[#allocation15 + $0x40] sm:$0xff]
        %v10921 = vld [vmem:[#allocation15 + $0x48] sm:$0xff]
        %v10922 = vld [vmem:[#allocation15 + $0x50] sm:$0xff]
        %v10923 = vld [vmem:[#allocation15 + $0x58] sm:$0xff]
        %v10924 = vld [vmem:[#allocation15 + $0x60] sm:$0xff]
        %v10925 = vld [vmem:[#allocation15 + $0x68] sm:$0xff]
        %v10926 = vld [vmem:[#allocation15 + $0x70] sm:$0xff]
        %v10927 = vld [vmem:[#allocation15 + $0x78] sm:$0xff]
        %v10928 = vld [vmem:[#allocation16] sm:$0x1]
        %10929 = vmatprep.subr.mxu0 0.0
        %v10930 = vand.u32 %v10912, 4294901760
        %10931 = vmatpush1.msra.mxu0 %v10930
        %10932 = vmatprep.subr.mxu0 0.0
        %v10933 = vand.u32 %v10913, 4294901760
        %10934 = vmatpush1.msra.mxu0 %v10933
        %10935 = vmatprep.subr.mxu0 0.0
        %v10936 = vand.u32 %v10914, 4294901760
        %10937 = vmatpush1.msra.mxu0 %v10936
        %10938 = vmatprep.subr.mxu0 0.0
        %v10939 = vand.u32 %v10915, 4294901760
        %10940 = vmatpush1.msra.mxu0 %v10939
        %10941 = vmatprep.subr.mxu0 0.0
        %v10942 = vand.u32 %v10916, 4294901760
        %10943 = vmatpush1.msra.mxu0 %v10942
        %10944 = vmatprep.subr.mxu0 0.0
        %v10945 = vand.u32 %v10917, 4294901760
        %10946 = vmatpush1.msra.mxu0 %v10945
        %10947 = vmatprep.subr.mxu0 0.0
        %v10948 = vand.u32 %v10918, 4294901760
        %10949 = vmatpush1.msra.mxu0 %v10948
        %10950 = vmatprep.subr.mxu0 0.0
        %v10951 = vand.u32 %v10919, 4294901760
        %10952 = vmatpush1.msra.mxu0 %v10951
        %10953 = vmatprep.subr.mxu0 0.0
        %v10954 = vand.u32 %v10920, 4294901760
        %10955 = vmatpush1.msra.mxu0 %v10954
        %10956 = vmatprep.subr.mxu0 0.0
        %v10957 = vand.u32 %v10921, 4294901760
        %10958 = vmatpush1.msra.mxu0 %v10957
        %10959 = vmatprep.subr.mxu0 0.0
        %v10960 = vand.u32 %v10922, 4294901760
        %10961 = vmatpush1.msra.mxu0 %v10960
        %10962 = vmatprep.subr.mxu0 0.0
        %v10963 = vand.u32 %v10923, 4294901760
        %10964 = vmatpush1.msra.mxu0 %v10963
        %10965 = vmatprep.subr.mxu0 0.0
        %v10966 = vand.u32 %v10924, 4294901760
        %10967 = vmatpush1.msra.mxu0 %v10966
        %10968 = vmatprep.subr.mxu0 0.0
        %v10969 = vand.u32 %v10925, 4294901760
        %10970 = vmatpush1.msra.mxu0 %v10969
        %10971 = vmatprep.subr.mxu0 0.0
        %v10972 = vand.u32 %v10926, 4294901760
        %10973 = vmatpush1.msra.mxu0 %v10972
        %10974 = vmatprep.subr.mxu0 0.0
        %v10975 = vand.u32 %v10927, 4294901760
        %10976 = vmatpush1.msra.mxu0 %v10975
        %10977 = vmatprep.subr.mxu0 0.0
        %10978 = vmatpush1.msra.mxu0 0.0
        %10979 = vmatprep.subr.mxu0 0.0
        %10980 = vmatpush1.msra.mxu0 0.0
        %10981 = vmatprep.subr.mxu0 0.0
        %10982 = vmatpush1.msra.mxu0 0.0
        %10983 = vmatprep.subr.mxu0 0.0
        %10984 = vmatpush1.msra.mxu0 0.0
        %10985 = vmatprep.subr.mxu0 0.0
        %10986 = vmatpush1.msra.mxu0 0.0
        %10987 = vmatprep.subr.mxu0 0.0
        %10988 = vmatpush1.msra.mxu0 0.0
        %10989 = vmatprep.subr.mxu0 0.0
        %10990 = vmatpush1.msra.mxu0 0.0
        %10991 = vmatprep.subr.mxu0 0.0
        %10992 = vmatpush1.msra.mxu0 0.0
        %10993 = vmatprep.subr.mxu0 0.0
        %10994 = vmatpush1.msra.mxu0 0.0
        %10995 = vmatprep.subr.mxu0 0.0
        %10996 = vmatpush1.msra.mxu0 0.0
        %10997 = vmatprep.subr.mxu0 0.0
        %10998 = vmatpush1.msra.mxu0 0.0
        %10999 = vmatprep.subr.mxu0 0.0
        %11000 = vmatpush1.msra.mxu0 0.0
        %11001 = vmatprep.subr.mxu0 0.0
        %11002 = vmatpush1.msra.mxu0 0.0
        %11003 = vmatprep.subr.mxu0 0.0
        %11004 = vmatpush1.msra.mxu0 0.0
        %11005 = vmatprep.subr.mxu0 0.0
        %11006 = vmatpush1.msra.mxu0 0.0
        %11007 = vmatprep.subr.mxu0 0.0
        %11008 = vmatpush1.msra.mxu0 0.0
        %11009 = vmatprep.mubr.f32.mxu0 0.0
        %v11010 = vand.u32 %v10911, 4294901760
        %v11011 = vsub.f32 %v10911, %v11010
        %v11012 = vand.u32 %v11011, 4294901760
        %v11013 = vsub.f32 %v11011, %v11012
        %v11014 = vand.u32 %v11013, 4294901760
        %11015 = vmatmul.mubr.f32.gmra.mrb[0].mxu0 %v11014
        %v11016 = vpop.f32.mrb[0].mxu0
        %v11017 = vadd.f32 %v10928, %v11016
        %v11018 = vpop.f32.mrb[0].mxu0
        %11019 = vdwg.mxu0
        %11020 = vmatprep.subr.mxu0 0.0
        %v11021 = vand.u32 %v10912, 4294901760
        %v11022 = vsub.f32 %v10912, %v11021
        %v11023 = vand.u32 %v11022, 4294901760
        %v11024 = vsub.f32 %v11022, %v11023
        %v11025 = vand.u32 %v11024, 4294901760
        %11026 = vmatpush1.msra.mxu0 %v11025
        %11027 = vmatprep.subr.mxu0 0.0
        %v11028 = vand.u32 %v10913, 4294901760
        %v11029 = vsub.f32 %v10913, %v11028
        %v11030 = vand.u32 %v11029, 4294901760
        %v11031 = vsub.f32 %v11029, %v11030
        %v11032 = vand.u32 %v11031, 4294901760
        %11033 = vmatpush1.msra.mxu0 %v11032
        %11034 = vmatprep.subr.mxu0 0.0
        %v11035 = vand.u32 %v10914, 4294901760
        %v11036 = vsub.f32 %v10914, %v11035
        %v11037 = vand.u32 %v11036, 4294901760
        %v11038 = vsub.f32 %v11036, %v11037
        %v11039 = vand.u32 %v11038, 4294901760
        %11040 = vmatpush1.msra.mxu0 %v11039
        %11041 = vmatprep.subr.mxu0 0.0
        %v11042 = vand.u32 %v10915, 4294901760
        %v11043 = vsub.f32 %v10915, %v11042
        %v11044 = vand.u32 %v11043, 4294901760
        %v11045 = vsub.f32 %v11043, %v11044
        %v11046 = vand.u32 %v11045, 4294901760
        %11047 = vmatpush1.msra.mxu0 %v11046
        %11048 = vmatprep.subr.mxu0 0.0
        %v11049 = vand.u32 %v10916, 4294901760
        %v11050 = vsub.f32 %v10916, %v11049
        %v11051 = vand.u32 %v11050, 4294901760
        %v11052 = vsub.f32 %v11050, %v11051
        %v11053 = vand.u32 %v11052, 4294901760
        %11054 = vmatpush1.msra.mxu0 %v11053
        %11055 = vmatprep.subr.mxu0 0.0
        %v11056 = vand.u32 %v10917, 4294901760
        %v11057 = vsub.f32 %v10917, %v11056
        %v11058 = vand.u32 %v11057, 4294901760
        %v11059 = vsub.f32 %v11057, %v11058
        %v11060 = vand.u32 %v11059, 4294901760
        %11061 = vmatpush1.msra.mxu0 %v11060
        %11062 = vmatprep.subr.mxu0 0.0
        %v11063 = vand.u32 %v10918, 4294901760
        %v11064 = vsub.f32 %v10918, %v11063
        %v11065 = vand.u32 %v11064, 4294901760
        %v11066 = vsub.f32 %v11064, %v11065
        %v11067 = vand.u32 %v11066, 4294901760
        %11068 = vmatpush1.msra.mxu0 %v11067
        %11069 = vmatprep.subr.mxu0 0.0
        %v11070 = vand.u32 %v10919, 4294901760
        %v11071 = vsub.f32 %v10919, %v11070
        %v11072 = vand.u32 %v11071, 4294901760
        %v11073 = vsub.f32 %v11071, %v11072
        %v11074 = vand.u32 %v11073, 4294901760
        %11075 = vmatpush1.msra.mxu0 %v11074
        %11076 = vmatprep.subr.mxu0 0.0
        %v11077 = vand.u32 %v10920, 4294901760
        %v11078 = vsub.f32 %v10920, %v11077
        %v11079 = vand.u32 %v11078, 4294901760
        %v11080 = vsub.f32 %v11078, %v11079
        %v11081 = vand.u32 %v11080, 4294901760
        %11082 = vmatpush1.msra.mxu0 %v11081
        %11083 = vmatprep.subr.mxu0 0.0
        %v11084 = vand.u32 %v10921, 4294901760
        %v11085 = vsub.f32 %v10921, %v11084
        %v11086 = vand.u32 %v11085, 4294901760
        %v11087 = vsub.f32 %v11085, %v11086
        %v11088 = vand.u32 %v11087, 4294901760
        %11089 = vmatpush1.msra.mxu0 %v11088
        %11090 = vmatprep.subr.mxu0 0.0
        %v11091 = vand.u32 %v10922, 4294901760
        %v11092 = vsub.f32 %v10922, %v11091
        %v11093 = vand.u32 %v11092, 4294901760
        %v11094 = vsub.f32 %v11092, %v11093
        %v11095 = vand.u32 %v11094, 4294901760
        %11096 = vmatpush1.msra.mxu0 %v11095
        %11097 = vmatprep.subr.mxu0 0.0
        %v11098 = vand.u32 %v10923, 4294901760
        %v11099 = vsub.f32 %v10923, %v11098
        %v11100 = vand.u32 %v11099, 4294901760
        %v11101 = vsub.f32 %v11099, %v11100
        %v11102 = vand.u32 %v11101, 4294901760
        %11103 = vmatpush1.msra.mxu0 %v11102
        %11104 = vmatprep.subr.mxu0 0.0
        %v11105 = vand.u32 %v10924, 4294901760
        %v11106 = vsub.f32 %v10924, %v11105
        %v11107 = vand.u32 %v11106, 4294901760
        %v11108 = vsub.f32 %v11106, %v11107
        %v11109 = vand.u32 %v11108, 4294901760
        %11110 = vmatpush1.msra.mxu0 %v11109
        %11111 = vmatprep.subr.mxu0 0.0
        %v11112 = vand.u32 %v10925, 4294901760
        %v11113 = vsub.f32 %v10925, %v11112
        %v11114 = vand.u32 %v11113, 4294901760
        %v11115 = vsub.f32 %v11113, %v11114
        %v11116 = vand.u32 %v11115, 4294901760
        %11117 = vmatpush1.msra.mxu0 %v11116
        %11118 = vmatprep.subr.mxu0 0.0
        %v11119 = vand.u32 %v10926, 4294901760
        %v11120 = vsub.f32 %v10926, %v11119
        %v11121 = vand.u32 %v11120, 4294901760
        %v11122 = vsub.f32 %v11120, %v11121
        %v11123 = vand.u32 %v11122, 4294901760
        %11124 = vmatpush1.msra.mxu0 %v11123
        %11125 = vmatprep.subr.mxu0 0.0
        %v11126 = vand.u32 %v10927, 4294901760
        %v11127 = vsub.f32 %v10927, %v11126
        %v11128 = vand.u32 %v11127, 4294901760
        %v11129 = vsub.f32 %v11127, %v11128
        %v11130 = vand.u32 %v11129, 4294901760
        %11131 = vmatpush1.msra.mxu0 %v11130
        %11132 = vmatprep.subr.mxu0 0.0
        %11133 = vmatpush1.msra.mxu0 0.0
        %11134 = vmatprep.subr.mxu0 0.0
        %11135 = vmatpush1.msra.mxu0 0.0
        %11136 = vmatprep.subr.mxu0 0.0
        %11137 = vmatpush1.msra.mxu0 0.0
        %11138 = vmatprep.subr.mxu0 0.0
        %11139 = vmatpush1.msra.mxu0 0.0
        %11140 = vmatprep.subr.mxu0 0.0
        %11141 = vmatpush1.msra.mxu0 0.0
        %11142 = vmatprep.subr.mxu0 0.0
        %11143 = vmatpush1.msra.mxu0 0.0
        %11144 = vmatprep.subr.mxu0 0.0
        %11145 = vmatpush1.msra.mxu0 0.0
        %11146 = vmatprep.subr.mxu0 0.0
        %11147 = vmatpush1.msra.mxu0 0.0
        %11148 = vmatprep.subr.mxu0 0.0
        %11149 = vmatpush1.msra.mxu0 0.0
        %11150 = vmatprep.subr.mxu0 0.0
        %11151 = vmatpush1.msra.mxu0 0.0
        %11152 = vmatprep.subr.mxu0 0.0
        %11153 = vmatpush1.msra.mxu0 0.0
        %11154 = vmatprep.subr.mxu0 0.0
        %11155 = vmatpush1.msra.mxu0 0.0
        %11156 = vmatprep.subr.mxu0 0.0
        %11157 = vmatpush1.msra.mxu0 0.0
        %11158 = vmatprep.subr.mxu0 0.0
        %11159 = vmatpush1.msra.mxu0 0.0
        %11160 = vmatprep.subr.mxu0 0.0
        %11161 = vmatpush1.msra.mxu0 0.0
        %11162 = vmatprep.subr.mxu0 0.0
        %11163 = vmatpush1.msra.mxu0 0.0
        %11164 = vmatprep.mubr.f32.mxu0 0.0
        %v11165 = vand.u32 %v10911, 4294901760
        %11166 = vmatmul.mubr.f32.gmra.mrb[0].mxu0 %v11165
        %v11167 = vpop.f32.mrb[0].mxu0
        %v11168 = vadd.f32 %v11017, %v11167
        %v11169 = vpop.f32.mrb[0].mxu0
        %11170 = vdwg.mxu0
        %11171 = vmatprep.subr.mxu0 0.0
        %v11172 = vand.u32 %v10912, 4294901760
        %v11173 = vsub.f32 %v10912, %v11172
        %11174 = vmatpush1.msra.mxu0 %v11173
        %11175 = vmatprep.subr.mxu0 0.0
        %v11176 = vand.u32 %v10913, 4294901760
        %v11177 = vsub.f32 %v10913, %v11176
        %11178 = vmatpush1.msra.mxu0 %v11177
        %11179 = vmatprep.subr.mxu0 0.0
        %v11180 = vand.u32 %v10914, 4294901760
        %v11181 = vsub.f32 %v10914, %v11180
        %11182 = vmatpush1.msra.mxu0 %v11181
        %11183 = vmatprep.subr.mxu0 0.0
        %v11184 = vand.u32 %v10915, 4294901760
        %v11185 = vsub.f32 %v10915, %v11184
        %11186 = vmatpush1.msra.mxu0 %v11185
        %11187 = vmatprep.subr.mxu0 0.0
        %v11188 = vand.u32 %v10916, 4294901760
        %v11189 = vsub.f32 %v10916, %v11188
        %11190 = vmatpush1.msra.mxu0 %v11189
        %11191 = vmatprep.subr.mxu0 0.0
        %v11192 = vand.u32 %v10917, 4294901760
        %v11193 = vsub.f32 %v10917, %v11192
        %11194 = vmatpush1.msra.mxu0 %v11193
        %11195 = vmatprep.subr.mxu0 0.0
        %v11196 = vand.u32 %v10918, 4294901760
        %v11197 = vsub.f32 %v10918, %v11196
        %11198 = vmatpush1.msra.mxu0 %v11197
        %11199 = vmatprep.subr.mxu0 0.0
        %v11200 = vand.u32 %v10919, 4294901760
        %v11201 = vsub.f32 %v10919, %v11200
        %11202 = vmatpush1.msra.mxu0 %v11201
        %11203 = vmatprep.subr.mxu0 0.0
        %v11204 = vand.u32 %v10920, 4294901760
        %v11205 = vsub.f32 %v10920, %v11204
        %11206 = vmatpush1.msra.mxu0 %v11205
        %11207 = vmatprep.subr.mxu0 0.0
        %v11208 = vand.u32 %v10921, 4294901760
        %v11209 = vsub.f32 %v10921, %v11208
        %11210 = vmatpush1.msra.mxu0 %v11209
        %11211 = vmatprep.subr.mxu0 0.0
        %v11212 = vand.u32 %v10922, 4294901760
        %v11213 = vsub.f32 %v10922, %v11212
        %11214 = vmatpush1.msra.mxu0 %v11213
        %11215 = vmatprep.subr.mxu0 0.0
        %v11216 = vand.u32 %v10923, 4294901760
        %v11217 = vsub.f32 %v10923, %v11216
        %11218 = vmatpush1.msra.mxu0 %v11217
        %11219 = vmatprep.subr.mxu0 0.0
        %v11220 = vand.u32 %v10924, 4294901760
        %v11221 = vsub.f32 %v10924, %v11220
        %11222 = vmatpush1.msra.mxu0 %v11221
        %11223 = vmatprep.subr.mxu0 0.0
        %v11224 = vand.u32 %v10925, 4294901760
        %v11225 = vsub.f32 %v10925, %v11224
        %11226 = vmatpush1.msra.mxu0 %v11225
        %11227 = vmatprep.subr.mxu0 0.0
        %v11228 = vand.u32 %v10926, 4294901760
        %v11229 = vsub.f32 %v10926, %v11228
        %11230 = vmatpush1.msra.mxu0 %v11229
        %11231 = vmatprep.subr.mxu0 0.0
        %v11232 = vand.u32 %v10927, 4294901760
        %v11233 = vsub.f32 %v10927, %v11232
        %11234 = vmatpush1.msra.mxu0 %v11233
        %11235 = vmatprep.subr.mxu0 0.0
        %11236 = vmatpush1.msra.mxu0 0.0
        %11237 = vmatprep.subr.mxu0 0.0
        %11238 = vmatpush1.msra.mxu0 0.0
        %11239 = vmatprep.subr.mxu0 0.0
        %11240 = vmatpush1.msra.mxu0 0.0
        %11241 = vmatprep.subr.mxu0 0.0
        %11242 = vmatpush1.msra.mxu0 0.0
        %11243 = vmatprep.subr.mxu0 0.0
        %11244 = vmatpush1.msra.mxu0 0.0
        %11245 = vmatprep.subr.mxu0 0.0
        %11246 = vmatpush1.msra.mxu0 0.0
        %11247 = vmatprep.subr.mxu0 0.0
        %11248 = vmatpush1.msra.mxu0 0.0
        %11249 = vmatprep.subr.mxu0 0.0
        %11250 = vmatpush1.msra.mxu0 0.0
        %11251 = vmatprep.subr.mxu0 0.0
        %11252 = vmatpush1.msra.mxu0 0.0
        %11253 = vmatprep.subr.mxu0 0.0
        %11254 = vmatpush1.msra.mxu0 0.0
        %11255 = vmatprep.subr.mxu0 0.0
        %11256 = vmatpush1.msra.mxu0 0.0
        %11257 = vmatprep.subr.mxu0 0.0
        %11258 = vmatpush1.msra.mxu0 0.0
        %11259 = vmatprep.subr.mxu0 0.0
        %11260 = vmatpush1.msra.mxu0 0.0
        %11261 = vmatprep.subr.mxu0 0.0
        %11262 = vmatpush1.msra.mxu0 0.0
        %11263 = vmatprep.subr.mxu0 0.0
        %11264 = vmatpush1.msra.mxu0 0.0
        %11265 = vmatprep.subr.mxu0 0.0
        %11266 = vmatpush1.msra.mxu0 0.0
        %11267 = vmatprep.mubr.f32.mxu0 0.0
        %v11268 = vand.u32 %v10911, 4294901760
        %v11269 = vsub.f32 %v10911, %v11268
        %11270 = vmatmul.mubr.f32.gmra.mrb[0].mxu0 %v11269
        %v11271 = vpop.f32.mrb[0].mxu0
        %v11272 = vadd.f32 %v11168, %v11271
        %v11273 = vpop.f32.mrb[0].mxu0
        %11274 = vdwg.mxu0
        %11275 = vmatprep.subr.mxu0 0.0
        %v11276 = vand.u32 %v10912, 4294901760
        %11277 = vmatpush1.msra.mxu0 %v11276
        %11278 = vmatprep.subr.mxu0 0.0
        %v11279 = vand.u32 %v10913, 4294901760
        %11280 = vmatpush1.msra.mxu0 %v11279
        %11281 = vmatprep.subr.mxu0 0.0
        %v11282 = vand.u32 %v10914, 4294901760
        %11283 = vmatpush1.msra.mxu0 %v11282
        %11284 = vmatprep.subr.mxu0 0.0
        %v11285 = vand.u32 %v10915, 4294901760
        %11286 = vmatpush1.msra.mxu0 %v11285
        %11287 = vmatprep.subr.mxu0 0.0
        %v11288 = vand.u32 %v10916, 4294901760
        %11289 = vmatpush1.msra.mxu0 %v11288
        %11290 = vmatprep.subr.mxu0 0.0
        %v11291 = vand.u32 %v10917, 4294901760
        %11292 = vmatpush1.msra.mxu0 %v11291
        %11293 = vmatprep.subr.mxu0 0.0
        %v11294 = vand.u32 %v10918, 4294901760
        %11295 = vmatpush1.msra.mxu0 %v11294
        %11296 = vmatprep.subr.mxu0 0.0
        %v11297 = vand.u32 %v10919, 4294901760
        %11298 = vmatpush1.msra.mxu0 %v11297
        %11299 = vmatprep.subr.mxu0 0.0
        %v11300 = vand.u32 %v10920, 4294901760
        %11301 = vmatpush1.msra.mxu0 %v11300
        %11302 = vmatprep.subr.mxu0 0.0
        %v11303 = vand.u32 %v10921, 4294901760
        %11304 = vmatpush1.msra.mxu0 %v11303
        %11305 = vmatprep.subr.mxu0 0.0
        %v11306 = vand.u32 %v10922, 4294901760
        %11307 = vmatpush1.msra.mxu0 %v11306
        %11308 = vmatprep.subr.mxu0 0.0
        %v11309 = vand.u32 %v10923, 4294901760
        %11310 = vmatpush1.msra.mxu0 %v11309
        %11311 = vmatprep.subr.mxu0 0.0
        %v11312 = vand.u32 %v10924, 4294901760
        %11313 = vmatpush1.msra.mxu0 %v11312
        %11314 = vmatprep.subr.mxu0 0.0
        %v11315 = vand.u32 %v10925, 4294901760
        %11316 = vmatpush1.msra.mxu0 %v11315
        %11317 = vmatprep.subr.mxu0 0.0
        %v11318 = vand.u32 %v10926, 4294901760
        %11319 = vmatpush1.msra.mxu0 %v11318
        %11320 = vmatprep.subr.mxu0 0.0
        %v11321 = vand.u32 %v10927, 4294901760
        %11322 = vmatpush1.msra.mxu0 %v11321
        %11323 = vmatprep.subr.mxu0 0.0
        %11324 = vmatpush1.msra.mxu0 0.0
        %11325 = vmatprep.subr.mxu0 0.0
        %11326 = vmatpush1.msra.mxu0 0.0
        %11327 = vmatprep.subr.mxu0 0.0
        %11328 = vmatpush1.msra.mxu0 0.0
        %11329 = vmatprep.subr.mxu0 0.0
        %11330 = vmatpush1.msra.mxu0 0.0
        %11331 = vmatprep.subr.mxu0 0.0
        %11332 = vmatpush1.msra.mxu0 0.0
        %11333 = vmatprep.subr.mxu0 0.0
        %11334 = vmatpush1.msra.mxu0 0.0
        %11335 = vmatprep.subr.mxu0 0.0
        %11336 = vmatpush1.msra.mxu0 0.0
        %11337 = vmatprep.subr.mxu0 0.0
        %11338 = vmatpush1.msra.mxu0 0.0
        %11339 = vmatprep.subr.mxu0 0.0
        %11340 = vmatpush1.msra.mxu0 0.0
        %11341 = vmatprep.subr.mxu0 0.0
        %11342 = vmatpush1.msra.mxu0 0.0
        %11343 = vmatprep.subr.mxu0 0.0
        %11344 = vmatpush1.msra.mxu0 0.0
        %11345 = vmatprep.subr.mxu0 0.0
        %11346 = vmatpush1.msra.mxu0 0.0
        %11347 = vmatprep.subr.mxu0 0.0
        %11348 = vmatpush1.msra.mxu0 0.0
        %11349 = vmatprep.subr.mxu0 0.0
        %11350 = vmatpush1.msra.mxu0 0.0
        %11351 = vmatprep.subr.mxu0 0.0
        %11352 = vmatpush1.msra.mxu0 0.0
        %11353 = vmatprep.subr.mxu0 0.0
        %11354 = vmatpush1.msra.mxu0 0.0
        %11355 = vmatprep.mubr.f32.mxu0 0.0
        %v11356 = vand.u32 %v10911, 4294901760
        %v11357 = vsub.f32 %v10911, %v11356
        %v11358 = vand.u32 %v11357, 4294901760
        %11359 = vmatmul.mubr.f32.gmra.mrb[0].mxu0 %v11358
        %v11360 = vpop.f32.mrb[0].mxu0
        %v11361 = vadd.f32 %v11272, %v11360
        %v11362 = vpop.f32.mrb[0].mxu0
        %11363 = vdwg.mxu0
        %11364 = vmatprep.subr.mxu0 0.0
        %v11365 = vand.u32 %v10912, 4294901760
        %v11366 = vsub.f32 %v10912, %v11365
        %v11367 = vand.u32 %v11366, 4294901760
        %11368 = vmatpush1.msra.mxu0 %v11367
        %11369 = vmatprep.subr.mxu0 0.0
        %v11370 = vand.u32 %v10913, 4294901760
        %v11371 = vsub.f32 %v10913, %v11370
        %v11372 = vand.u32 %v11371, 4294901760
        %11373 = vmatpush1.msra.mxu0 %v11372
        %11374 = vmatprep.subr.mxu0 0.0
        %v11375 = vand.u32 %v10914, 4294901760
        %v11376 = vsub.f32 %v10914, %v11375
        %v11377 = vand.u32 %v11376, 4294901760
        %11378 = vmatpush1.msra.mxu0 %v11377
        %11379 = vmatprep.subr.mxu0 0.0
        %v11380 = vand.u32 %v10915, 4294901760
        %v11381 = vsub.f32 %v10915, %v11380
        %v11382 = vand.u32 %v11381, 4294901760
        %11383 = vmatpush1.msra.mxu0 %v11382
        %11384 = vmatprep.subr.mxu0 0.0
        %v11385 = vand.u32 %v10916, 4294901760
        %v11386 = vsub.f32 %v10916, %v11385
        %v11387 = vand.u32 %v11386, 4294901760
        %11388 = vmatpush1.msra.mxu0 %v11387
        %11389 = vmatprep.subr.mxu0 0.0
        %v11390 = vand.u32 %v10917, 4294901760
        %v11391 = vsub.f32 %v10917, %v11390
        %v11392 = vand.u32 %v11391, 4294901760
        %11393 = vmatpush1.msra.mxu0 %v11392
        %11394 = vmatprep.subr.mxu0 0.0
        %v11395 = vand.u32 %v10918, 4294901760
        %v11396 = vsub.f32 %v10918, %v11395
        %v11397 = vand.u32 %v11396, 4294901760
        %11398 = vmatpush1.msra.mxu0 %v11397
        %11399 = vmatprep.subr.mxu0 0.0
        %v11400 = vand.u32 %v10919, 4294901760
        %v11401 = vsub.f32 %v10919, %v11400
        %v11402 = vand.u32 %v11401, 4294901760
        %11403 = vmatpush1.msra.mxu0 %v11402
        %11404 = vmatprep.subr.mxu0 0.0
        %v11405 = vand.u32 %v10920, 4294901760
        %v11406 = vsub.f32 %v10920, %v11405
        %v11407 = vand.u32 %v11406, 4294901760
        %11408 = vmatpush1.msra.mxu0 %v11407
        %11409 = vmatprep.subr.mxu0 0.0
        %v11410 = vand.u32 %v10921, 4294901760
        %v11411 = vsub.f32 %v10921, %v11410
        %v11412 = vand.u32 %v11411, 4294901760
        %11413 = vmatpush1.msra.mxu0 %v11412
        %11414 = vmatprep.subr.mxu0 0.0
        %v11415 = vand.u32 %v10922, 4294901760
        %v11416 = vsub.f32 %v10922, %v11415
        %v11417 = vand.u32 %v11416, 4294901760
        %11418 = vmatpush1.msra.mxu0 %v11417
        %11419 = vmatprep.subr.mxu0 0.0
        %v11420 = vand.u32 %v10923, 4294901760
        %v11421 = vsub.f32 %v10923, %v11420
        %v11422 = vand.u32 %v11421, 4294901760
        %11423 = vmatpush1.msra.mxu0 %v11422
        %11424 = vmatprep.subr.mxu0 0.0
        %v11425 = vand.u32 %v10924, 4294901760
        %v11426 = vsub.f32 %v10924, %v11425
        %v11427 = vand.u32 %v11426, 4294901760
        %11428 = vmatpush1.msra.mxu0 %v11427
        %11429 = vmatprep.subr.mxu0 0.0
        %v11430 = vand.u32 %v10925, 4294901760
        %v11431 = vsub.f32 %v10925, %v11430
        %v11432 = vand.u32 %v11431, 4294901760
        %11433 = vmatpush1.msra.mxu0 %v11432
        %11434 = vmatprep.subr.mxu0 0.0
        %v11435 = vand.u32 %v10926, 4294901760
        %v11436 = vsub.f32 %v10926, %v11435
        %v11437 = vand.u32 %v11436, 4294901760
        %11438 = vmatpush1.msra.mxu0 %v11437
        %11439 = vmatprep.subr.mxu0 0.0
        %v11440 = vand.u32 %v10927, 4294901760
        %v11441 = vsub.f32 %v10927, %v11440
        %v11442 = vand.u32 %v11441, 4294901760
        %11443 = vmatpush1.msra.mxu0 %v11442
        %11444 = vmatprep.subr.mxu0 0.0
        %11445 = vmatpush1.msra.mxu0 0.0
        %11446 = vmatprep.subr.mxu0 0.0
        %11447 = vmatpush1.msra.mxu0 0.0
        %11448 = vmatprep.subr.mxu0 0.0
        %11449 = vmatpush1.msra.mxu0 0.0
        %11450 = vmatprep.subr.mxu0 0.0
        %11451 = vmatpush1.msra.mxu0 0.0
        %11452 = vmatprep.subr.mxu0 0.0
        %11453 = vmatpush1.msra.mxu0 0.0
        %11454 = vmatprep.subr.mxu0 0.0
        %11455 = vmatpush1.msra.mxu0 0.0
        %11456 = vmatprep.subr.mxu0 0.0
        %11457 = vmatpush1.msra.mxu0 0.0
        %11458 = vmatprep.subr.mxu0 0.0
        %11459 = vmatpush1.msra.mxu0 0.0
        %11460 = vmatprep.subr.mxu0 0.0
        %11461 = vmatpush1.msra.mxu0 0.0
        %11462 = vmatprep.subr.mxu0 0.0
        %11463 = vmatpush1.msra.mxu0 0.0
        %11464 = vmatprep.subr.mxu0 0.0
        %11465 = vmatpush1.msra.mxu0 0.0
        %11466 = vmatprep.subr.mxu0 0.0
        %11467 = vmatpush1.msra.mxu0 0.0
        %11468 = vmatprep.subr.mxu0 0.0
        %11469 = vmatpush1.msra.mxu0 0.0
        %11470 = vmatprep.subr.mxu0 0.0
        %11471 = vmatpush1.msra.mxu0 0.0
        %11472 = vmatprep.subr.mxu0 0.0
        %11473 = vmatpush1.msra.mxu0 0.0
        %11474 = vmatprep.subr.mxu0 0.0
        %11475 = vmatpush1.msra.mxu0 0.0
        %11476 = vmatprep.mubr.f32.mxu0 0.0
        %v11477 = vand.u32 %v10911, 4294901760
        %11478 = vmatmul.mubr.f32.gmra.mrb[0].mxu0 %v11477
        %v11479 = vpop.f32.mrb[0].mxu0
        %v11480 = vadd.f32 %v11361, %v11479
        %v11481 = vpop.f32.mrb[0].mxu0
        %11482 = vdwg.mxu0
        %11483 = vmatprep.subr.mxu0 0.0
        %v11484 = vand.u32 %v10912, 4294901760
        %11485 = vmatpush1.msra.mxu0 %v11484
        %11486 = vmatprep.subr.mxu0 0.0
        %v11487 = vand.u32 %v10913, 4294901760
        %11488 = vmatpush1.msra.mxu0 %v11487
        %11489 = vmatprep.subr.mxu0 0.0
        %v11490 = vand.u32 %v10914, 4294901760
        %11491 = vmatpush1.msra.mxu0 %v11490
        %11492 = vmatprep.subr.mxu0 0.0
        %v11493 = vand.u32 %v10915, 4294901760
        %11494 = vmatpush1.msra.mxu0 %v11493
        %11495 = vmatprep.subr.mxu0 0.0
        %v11496 = vand.u32 %v10916, 4294901760
        %11497 = vmatpush1.msra.mxu0 %v11496
        %11498 = vmatprep.subr.mxu0 0.0
        %v11499 = vand.u32 %v10917, 4294901760
        %11500 = vmatpush1.msra.mxu0 %v11499
        %11501 = vmatprep.subr.mxu0 0.0
        %v11502 = vand.u32 %v10918, 4294901760
        %11503 = vmatpush1.msra.mxu0 %v11502
        %11504 = vmatprep.subr.mxu0 0.0
        %v11505 = vand.u32 %v10919, 4294901760
        %11506 = vmatpush1.msra.mxu0 %v11505
        %11507 = vmatprep.subr.mxu0 0.0
        %v11508 = vand.u32 %v10920, 4294901760
        %11509 = vmatpush1.msra.mxu0 %v11508
        %11510 = vmatprep.subr.mxu0 0.0
        %v11511 = vand.u32 %v10921, 4294901760
        %11512 = vmatpush1.msra.mxu0 %v11511
        %11513 = vmatprep.subr.mxu0 0.0
        %v11514 = vand.u32 %v10922, 4294901760
        %11515 = vmatpush1.msra.mxu0 %v11514
        %11516 = vmatprep.subr.mxu0 0.0
        %v11517 = vand.u32 %v10923, 4294901760
        %11518 = vmatpush1.msra.mxu0 %v11517
        %11519 = vmatprep.subr.mxu0 0.0
        %v11520 = vand.u32 %v10924, 4294901760
        %11521 = vmatpush1.msra.mxu0 %v11520
        %11522 = vmatprep.subr.mxu0 0.0
        %v11523 = vand.u32 %v10925, 4294901760
        %11524 = vmatpush1.msra.mxu0 %v11523
        %11525 = vmatprep.subr.mxu0 0.0
        %v11526 = vand.u32 %v10926, 4294901760
        %11527 = vmatpush1.msra.mxu0 %v11526
        %11528 = vmatprep.subr.mxu0 0.0
        %v11529 = vand.u32 %v10927, 4294901760
        %11530 = vmatpush1.msra.mxu0 %v11529
        %11531 = vmatprep.subr.mxu0 0.0
        %11532 = vmatpush1.msra.mxu0 0.0
        %11533 = vmatprep.subr.mxu0 0.0
        %11534 = vmatpush1.msra.mxu0 0.0
        %11535 = vmatprep.subr.mxu0 0.0
        %11536 = vmatpush1.msra.mxu0 0.0
        %11537 = vmatprep.subr.mxu0 0.0
        %11538 = vmatpush1.msra.mxu0 0.0
        %11539 = vmatprep.subr.mxu0 0.0
        %11540 = vmatpush1.msra.mxu0 0.0
        %11541 = vmatprep.subr.mxu0 0.0
        %11542 = vmatpush1.msra.mxu0 0.0
        %11543 = vmatprep.subr.mxu0 0.0
        %11544 = vmatpush1.msra.mxu0 0.0
        %11545 = vmatprep.subr.mxu0 0.0
        %11546 = vmatpush1.msra.mxu0 0.0
        %11547 = vmatprep.subr.mxu0 0.0
        %11548 = vmatpush1.msra.mxu0 0.0
        %11549 = vmatprep.subr.mxu0 0.0
        %11550 = vmatpush1.msra.mxu0 0.0
        %11551 = vmatprep.subr.mxu0 0.0
        %11552 = vmatpush1.msra.mxu0 0.0
        %11553 = vmatprep.subr.mxu0 0.0
        %11554 = vmatpush1.msra.mxu0 0.0
        %11555 = vmatprep.subr.mxu0 0.0
        %11556 = vmatpush1.msra.mxu0 0.0
        %11557 = vmatprep.subr.mxu0 0.0
        %11558 = vmatpush1.msra.mxu0 0.0
        %11559 = vmatprep.subr.mxu0 0.0
        %11560 = vmatpush1.msra.mxu0 0.0
        %11561 = vmatprep.subr.mxu0 0.0
        %11562 = vmatpush1.msra.mxu0 0.0
        %11563 = vmatprep.mubr.f32.mxu0 0.0
        %v11564 = vand.u32 %v10911, 4294901760
        %11565 = vmatmul.mubr.f32.gmra.mrb[0].mxu0 %v11564
        %v11566 = vpop.f32.mrb[0].mxu0
        %v11567 = vadd.f32 %v11480, %v11566
        %v11568 = vpop.f32.mrb[0].mxu0
        %11569 = vdwg.mxu0
        %11570 = vst [vmem:[%s418] sm:$0x1] %v11567
        %s11571 = sand.u32 %s210, 1
        %s11572 = scalar_lea.sflag [#allocation6], %s11571
        %s11573 = sand.u32 %s210, 1
        %s11574 = scalar_lea.vmem [#allocation18], %s11573
        // Predicated region
        $region85: #{classifier_forward.1} parent=51 // pred_check
          %p11575 = pneg %p220
        $region86: #{classifier_forward.1} parent=51 // pred_check_branch
          %11577 = sbr.rel (%p11575) target = $region88
        $region87: #{classifier_forward.1} parent=51 // pred_region
          %s11579 = ssub.s32 16, 16
          %11580 = vsyncadd %s11572, %s11579
          %s11581 = smul.addr %s29, 16
          %s11582 = scalar_lea.hbm %s8, %s11581
          %s11584 = sshll.u32 %s11574, 4
          %s11585 = int_to_ptr.vmem [resolvable:$true] %s11584
          %11587 = dma.vmem_to_hbm [thread:$0]  %s11585, 16, %s11582, %s11572
        $region88: #{classifier_forward.1} parent=51 // pred_fallthru
          _
      $region52: #{classifier_forward.1} parent=5 // pred_fallthru
        _
      %p11588 = scmp.le.s32.totalorder 2, %s24
      // Predicated region
      $region89: #{classifier_forward.1} parent=5 // pred_check
        %p11589 = pneg %p11588
      $region90: #{classifier_forward.1} parent=5 // pred_check_branch
        %11591 = sbr.rel (%p11589) target = $region92
      $region91: #{classifier_forward.1} parent=5 // pred_region
        %s11592 = ssub.s32 %s24, 2
        // Predicated region
        $region93: #{classifier_forward.1} parent=91 // pred_check
          %p11593 = pneg %p226
        $region94: #{classifier_forward.1} parent=91 // pred_check_branch
          %11595 = sbr.rel (%p11593) target = $region96
        $region95: #{classifier_forward.1} parent=91 // pred_region
          %s11596 = sand.u32 %s211, 1
          %s11597 = scalar_lea.sflag [#allocation6], %s11596
          %s11598 = sand.u32 %s211, 1
          %s11599 = scalar_lea.vmem [#allocation18], %s11598
          %11600 = dma.done %s11597, 16
        $region96: #{classifier_forward.1} parent=91 // pred_fallthru
          _
      $region92: #{classifier_forward.1} parent=5 // pred_fallthru
        _
    $region6: #{classifier_forward.1} parent=1 // loop_footer
      %s28 = sadd.s32 1, %s24
    $region7: #{classifier_forward.1} parent=1 // loop_footer_branch
      %23 = sbr.rel target = $region3
    $region8: #{classifier_forward.1} parent=1 // loop_exit
      _
    %11601 = vsyncpa [#allocation5], 1
    %s11602 = scalar_lea.sflag [#allocation5], 1
    %11603 = vsyncpa %s11602, 1
    %11604 = vsyncpa [#allocation8], 1
    %11605 = vsyncpa [#allocation11], 1
    %11606 = vsyncpa [#allocation14], 1
    %11607 = vsyncpa [#allocation17], 1
    %11608 = vsyncpa [#allocation6], 1
    %s11609 = scalar_lea.sflag [#allocation6], 1
    %11610 = vsyncpa %s11609, 1

</llo_original>
